<compile_context>
chip_gen: v7x
topology: tpu7x:2x2x1
jax: 0.10.0
libtpu: 0.0.40
codegen_flags: <defaults>
</compile_context>

<pallas_src>
import functools

import jax
import jax.numpy as jnp
import numpy as np
from jax import lax
from jax.experimental import pallas as pl
from jax.experimental.pallas import tpu as pltpu


def _gcn_kernel(x_ref, wl1_ref, bl1_ref, wl2_ref, bl2_ref,
                wr1_ref, br1_ref, wr2_ref, br2_ref,
                o_ref, xpad_ref, y_ref,
                *, H, W, Cin, Cout, kh, kw, ph, pw):
    Hp = H + 2 * ph
    Wp = W + 2 * pw

    # ---- Zero-padded copy of this batch element, built in VMEM -------------
    xpad_ref[...] = jnp.zeros_like(xpad_ref)
    xpad_ref[:, ph:ph + H, pw:pw + W] = x_ref[0].astype(jnp.float32)

    # ---- Left branch: (kh x 1) conv then (1 x kw) conv ----------------------
    # Stage 1: (Cin, Hp, Wp) -> (Cout, H, Wp)
    accs = [None] * Cout
    for t in range(kh):
        for ci in range(Cin):
            slab = xpad_ref[ci, t:t + H, :]                       # (H, Wp)
            for co in range(Cout):
                w = wl1_ref[(t * Cin + ci) * Cout + co]
                term = slab * w
                accs[co] = term if accs[co] is None else accs[co] + term
    for co in range(Cout):
        y_ref[co, 0:H, :] = accs[co]
        # conv_l1's bias exists only on the real image; the padded W columns
        # that conv_l2's zero padding would see must stay exactly zero.
        y_ref[co, 0:H, pw:pw + W] = y_ref[co, 0:H, pw:pw + W] + bl1_ref[co]

    # Stage 2: (Cout, H, Wp) -> (Cout, H, W), plus bl2; write left result.
    accs = [jnp.full((H, W), bl2_ref[co], jnp.float32) for co in range(Cout)]
    for t in range(kw):
        for c1 in range(Cout):
            slab = y_ref[c1, 0:H, t:t + W]                        # (H, W)
            for c2 in range(Cout):
                w = wl2_ref[(t * Cout + c1) * Cout + c2]
                accs[c2] = accs[c2] + slab * w
    for co in range(Cout):
        o_ref[0, co] = accs[co]

    # ---- Right branch: (1 x kw) conv then (kh x 1) conv (reuses y_ref) ------
    # Stage 1: (Cin, Hp, Wp) -> (Cout, Hp, W)
    accs = [None] * Cout
    for t in range(kw):
        for ci in range(Cin):
            slab = xpad_ref[ci, :, t:t + W]                       # (Hp, W)
            for co in range(Cout):
                w = wr1_ref[(t * Cin + ci) * Cout + co]
                term = slab * w
                accs[co] = term if accs[co] is None else accs[co] + term
    for co in range(Cout):
        y_ref[co, :, 0:W] = accs[co]
        # conv_r1's bias only on real rows; padded H rows stay exactly zero.
        y_ref[co, ph:ph + H, 0:W] = y_ref[co, ph:ph + H, 0:W] + br1_ref[co]

    # Stage 2: (Cout, Hp, W) -> (Cout, H, W), plus br2, accumulated into o_ref.
    accs = [jnp.full((H, W), br2_ref[co], jnp.float32) for co in range(Cout)]
    for t in range(kh):
        for c1 in range(Cout):
            slab = y_ref[c1, t:t + H, 0:W]                        # (H, W)
            for c2 in range(Cout):
                w = wr2_ref[(t * Cout + c1) * Cout + c2]
                accs[c2] = accs[c2] + slab * w
    for co in range(Cout):
        o_ref[0, co] = o_ref[0, co] + accs[co]


def init_params(key, in_dim, out_dim, kernel_size):
    kh, kw = kernel_size
    k = jax.random.split(key, 8)
    s = 0.1
    return {
        "wl1": s * jax.random.normal(k[0], (out_dim, in_dim, kh, 1), jnp.float32),
        "bl1": s * jax.random.normal(k[1], (out_dim,), jnp.float32),
        "wl2": s * jax.random.normal(k[2], (out_dim, out_dim, 1, kw), jnp.float32),
        "bl2": s * jax.random.normal(k[3], (out_dim,), jnp.float32),
        "wr1": s * jax.random.normal(k[4], (out_dim, in_dim, 1, kw), jnp.float32),
        "br1": s * jax.random.normal(k[5], (out_dim,), jnp.float32),
        "wr2": s * jax.random.normal(k[6], (out_dim, out_dim, kh, 1), jnp.float32),
        "br2": s * jax.random.normal(k[7], (out_dim,), jnp.float32),
    }


def global_conv_forward(x_nchw, params, kernel_size):
    kh, kw = kernel_size
    ph, pw = (kh - 1) // 2, (kw - 1) // 2
    N, Cin, H, W = x_nchw.shape
    Cout = params["wl1"].shape[0]
    Hp, Wp = H + 2 * ph, W + 2 * pw

    # PyTorch OIHW weights -> tap-major (k, Cin, Cout) flattened for SMEM
    # scalar reads:  w[(t*Cin + ci)*Cout + co] == W_pt[co, ci, t].
    wl1 = jnp.transpose(params["wl1"][:, :, :, 0], (2, 1, 0)).reshape(-1)  # kh*Cin*Cout
    wl2 = jnp.transpose(params["wl2"][:, :, 0, :], (2, 1, 0)).reshape(-1)  # kw*Cout*Cout
    wr1 = jnp.transpose(params["wr1"][:, :, 0, :], (2, 1, 0)).reshape(-1)  # kw*Cin*Cout
    wr2 = jnp.transpose(params["wr2"][:, :, :, 0], (2, 1, 0)).reshape(-1)  # kh*Cout*Cout
    bl1, bl2 = params["bl1"], params["bl2"]
    br1, br2 = params["br1"], params["br2"]

    kernel = functools.partial(_gcn_kernel, H=H, W=W, Cin=Cin, Cout=Cout,
                               kh=kh, kw=kw, ph=ph, pw=pw)

    smem = pl.BlockSpec(memory_space=pltpu.MemorySpace.SMEM)

    flops = 2 * N * (H * Wp * Cin * Cout * kh       # left stage 1
                     + H * W * Cout * Cout * kw     # left stage 2
                     + Hp * W * Cin * Cout * kw     # right stage 1
                     + H * W * Cout * Cout * kh)    # right stage 2
    bytes_accessed = 4 * (x_nchw.size + N * Cout * H * W
                          + wl1.size + wl2.size + wr1.size + wr2.size + 4 * Cout)

    out = pl.pallas_call(
        kernel,
        out_shape=jax.ShapeDtypeStruct((N, Cout, H, W), jnp.float32),
        grid=(N,),
        in_specs=[
            pl.BlockSpec((1, Cin, H, W), lambda n: (n, 0, 0, 0)),
            smem, smem, smem, smem, smem, smem, smem, smem,
        ],
        out_specs=pl.BlockSpec((1, Cout, H, W), lambda n: (n, 0, 0, 0)),
        scratch_shapes=[
            pltpu.VMEM((Cin, Hp, Wp), jnp.float32),    # zero-padded input
            pltpu.VMEM((Cout, Hp, Wp), jnp.float32),   # shared branch scratch
        ],
        compiler_params=pltpu.CompilerParams(
            dimension_semantics=("parallel",),
            vmem_limit_bytes=48 * 1024 * 1024),
        cost_estimate=pl.CostEstimate(flops=flops, transcendentals=0,
                                      bytes_accessed=bytes_accessed),
    )(x_nchw.astype(jnp.float32), wl1, bl1, wl2, bl2, wr1, br1, wr2, br2)

    return out  # already NCHW


def _ref_forward(x, p, kernel_size):
    """Pure-JAX reference matching the PyTorch forward (NCHW)."""
    kh, kw = kernel_size
    ph, pw = (kh - 1) // 2, (kw - 1) // 2
    dn = ("NCHW", "OIHW", "NCHW")

    def conv(inp, w, b, pad):
        y = lax.conv_general_dilated(inp, w, (1, 1), pad, dimension_numbers=dn)
        return y + b.reshape(1, -1, 1, 1)

    xl = conv(x, p["wl1"], p["bl1"], [(ph, ph), (0, 0)])
    xl = conv(xl, p["wl2"], p["bl2"], [(0, 0), (pw, pw)])
    xr = conv(x, p["wr1"], p["br1"], [(0, 0), (pw, pw)])
    xr = conv(xr, p["wr2"], p["br2"], [(ph, ph), (0, 0)])
    return xl + xr


if __name__ == "__main__":
    key = jax.random.PRNGKey(0)
    k_x, k_p = jax.random.split(key)

    N, Cin, Cout, H, W = 2, 4, 4, 16, 16
    kernel_size = (7, 7)

    x = jax.random.normal(k_x, (N, Cin, H, W), jnp.float32)
    params = init_params(k_p, Cin, Cout, kernel_size)

    out = global_conv_forward(x, params, kernel_size)
    out = jax.block_until_ready(out)

    ref = _ref_forward(x, params, kernel_size)
    assert out.shape == ref.shape == (N, Cout, H, W)
    np.testing.assert_allclose(np.asarray(out), np.asarray(ref), rtol=1e-4, atol=1e-4)

    print("KERNEL_OK")
</pallas_src>

<mosaic_0001>
module attributes {stable_mosaic.version = 11 : i64} {
  func.func @_gcn_kernel(%arg0: i32, %arg1: memref<1x4x16x16xf32, #tpu.memory_space<vmem>>, %arg2: memref<112xf32, #tpu.memory_space<smem>>, %arg3: memref<4xf32, #tpu.memory_space<smem>>, %arg4: memref<112xf32, #tpu.memory_space<smem>>, %arg5: memref<4xf32, #tpu.memory_space<smem>>, %arg6: memref<112xf32, #tpu.memory_space<smem>>, %arg7: memref<4xf32, #tpu.memory_space<smem>>, %arg8: memref<112xf32, #tpu.memory_space<smem>>, %arg9: memref<4xf32, #tpu.memory_space<smem>>, %arg10: memref<1x4x16x16xf32, #tpu.memory_space<vmem>>, %arg11: memref<4x22x22xf32, #tpu.memory_space<vmem>>, %arg12: memref<4x22x22xf32, #tpu.memory_space<vmem>>) attributes {dimension_semantics = [#tpu.dimension_semantics<parallel>], iteration_bounds = array<i64: 2>, scalar_prefetch = 0 : i64, scratch_operands = 2 : i64, tpu.core_type = #tpu.core_type<tc>, window_params = [{transform_indices = @transform_0, window_bounds = array<i64: 1, 4, 16, 16>}, {transform_indices = @transform_1, window_bounds = array<i64: 112>}, {transform_indices = @transform_2, window_bounds = array<i64: 4>}, {transform_indices = @transform_3, window_bounds = array<i64: 112>}, {transform_indices = @transform_4, window_bounds = array<i64: 4>}, {transform_indices = @transform_5, window_bounds = array<i64: 112>}, {transform_indices = @transform_6, window_bounds = array<i64: 4>}, {transform_indices = @transform_7, window_bounds = array<i64: 112>}, {transform_indices = @transform_8, window_bounds = array<i64: 4>}, {transform_indices = @transform_9, window_bounds = array<i64: 1, 4, 16, 16>}]} {
    %cst = arith.constant 0.000000e+00 : f32
    %0 = vector.broadcast %cst : f32 to vector<4x22x22xf32>
    %c0 = arith.constant 0 : index
    %c0_0 = arith.constant 0 : index
    %c0_1 = arith.constant 0 : index
    %1 = vector.load %arg11[%c0, %c0_0, %c0_1] : memref<4x22x22xf32, #tpu.memory_space<vmem>>, vector<4x22x22xf32>
    tpu.vector_store %arg11[%c0, %c0_0, %c0_1], %0 {strides = array<i32>} : memref<4x22x22xf32, #tpu.memory_space<vmem>>, vector<4x22x22xf32>,
    %c0_2 = arith.constant 0 : index
    %c0_3 = arith.constant 0 : index
    %c0_4 = arith.constant 0 : index
    %c0_5 = arith.constant 0 : index
    %2 = vector.load %arg1[%c0_2, %c0_3, %c0_4, %c0_5] : memref<1x4x16x16xf32, #tpu.memory_space<vmem>>, vector<1x4x16x16xf32>
    %3 = vector.shape_cast %2 : vector<1x4x16x16xf32> to vector<4x16x16xf32>
    %c0_6 = arith.constant 0 : index
    %c3 = arith.constant 3 : index
    %c3_7 = arith.constant 3 : index
    %4 = vector.load %arg11[%c0_6, %c3, %c3_7] : memref<4x22x22xf32, #tpu.memory_space<vmem>>, vector<4x16x16xf32>
    tpu.vector_store %arg11[%c0_6, %c3, %c3_7], %3 {strides = array<i32>} : memref<4x22x22xf32, #tpu.memory_space<vmem>>, vector<4x16x16xf32>,
    %c0_8 = arith.constant 0 : index
    %c0_9 = arith.constant 0 : index
    %c0_10 = arith.constant 0 : index
    %5 = vector.load %arg11[%c0_8, %c0_9, %c0_10] : memref<4x22x22xf32, #tpu.memory_space<vmem>>, vector<1x16x22xf32>
    %6 = vector.shape_cast %5 : vector<1x16x22xf32> to vector<16x22xf32>
    %c0_11 = arith.constant 0 : index
    %7 = memref.load %arg2[%c0_11] : memref<112xf32, #tpu.memory_space<smem>>
    %8 = vector.broadcast %7 : f32 to vector<16x22xf32>
    %9 = arith.mulf %6, %8 : vector<16x22xf32>
    %c1 = arith.constant 1 : index
    %10 = memref.load %arg2[%c1] : memref<112xf32, #tpu.memory_space<smem>>
    %11 = vector.broadcast %10 : f32 to vector<16x22xf32>
    %12 = arith.mulf %6, %11 : vector<16x22xf32>
    %c2 = arith.constant 2 : index
    %13 = memref.load %arg2[%c2] : memref<112xf32, #tpu.memory_space<smem>>
    %14 = vector.broadcast %13 : f32 to vector<16x22xf32>
    %15 = arith.mulf %6, %14 : vector<16x22xf32>
    %c3_12 = arith.constant 3 : index
    %16 = memref.load %arg2[%c3_12] : memref<112xf32, #tpu.memory_space<smem>>
    %17 = vector.broadcast %16 : f32 to vector<16x22xf32>
    %18 = arith.mulf %6, %17 : vector<16x22xf32>
    %c1_13 = arith.constant 1 : index
    %c0_14 = arith.constant 0 : index
    %c0_15 = arith.constant 0 : index
    %19 = vector.load %arg11[%c1_13, %c0_14, %c0_15] : memref<4x22x22xf32, #tpu.memory_space<vmem>>, vector<1x16x22xf32>
    %20 = vector.shape_cast %19 : vector<1x16x22xf32> to vector<16x22xf32>
    %c4 = arith.constant 4 : index
    %21 = memref.load %arg2[%c4] : memref<112xf32, #tpu.memory_space<smem>>
    %22 = vector.broadcast %21 : f32 to vector<16x22xf32>
    %23 = arith.mulf %20, %22 : vector<16x22xf32>
    %24 = arith.addf %9, %23 : vector<16x22xf32>
    %c5 = arith.constant 5 : index
    %25 = memref.load %arg2[%c5] : memref<112xf32, #tpu.memory_space<smem>>
    %26 = vector.broadcast %25 : f32 to vector<16x22xf32>
    %27 = arith.mulf %20, %26 : vector<16x22xf32>
    %28 = arith.addf %12, %27 : vector<16x22xf32>
    %c6 = arith.constant 6 : index
    %29 = memref.load %arg2[%c6] : memref<112xf32, #tpu.memory_space<smem>>
    %30 = vector.broadcast %29 : f32 to vector<16x22xf32>
    %31 = arith.mulf %20, %30 : vector<16x22xf32>
    %32 = arith.addf %15, %31 : vector<16x22xf32>
    %c7 = arith.constant 7 : index
    %33 = memref.load %arg2[%c7] : memref<112xf32, #tpu.memory_space<smem>>
    %34 = vector.broadcast %33 : f32 to vector<16x22xf32>
    %35 = arith.mulf %20, %34 : vector<16x22xf32>
    %36 = arith.addf %18, %35 : vector<16x22xf32>
    %c2_16 = arith.constant 2 : index
    %c0_17 = arith.constant 0 : index
    %c0_18 = arith.constant 0 : index
    %37 = vector.load %arg11[%c2_16, %c0_17, %c0_18] : memref<4x22x22xf32, #tpu.memory_space<vmem>>, vector<1x16x22xf32>
    %38 = vector.shape_cast %37 : vector<1x16x22xf32> to vector<16x22xf32>
    %c8 = arith.constant 8 : index
    %39 = memref.load %arg2[%c8] : memref<112xf32, #tpu.memory_space<smem>>
    %40 = vector.broadcast %39 : f32 to vector<16x22xf32>
    %41 = arith.mulf %38, %40 : vector<16x22xf32>
    %42 = arith.addf %24, %41 : vector<16x22xf32>
    %c9 = arith.constant 9 : index
    %43 = memref.load %arg2[%c9] : memref<112xf32, #tpu.memory_space<smem>>
    %44 = vector.broadcast %43 : f32 to vector<16x22xf32>
    %45 = arith.mulf %38, %44 : vector<16x22xf32>
    %46 = arith.addf %28, %45 : vector<16x22xf32>
    %c10 = arith.constant 10 : index
    %47 = memref.load %arg2[%c10] : memref<112xf32, #tpu.memory_space<smem>>
    %48 = vector.broadcast %47 : f32 to vector<16x22xf32>
    %49 = arith.mulf %38, %48 : vector<16x22xf32>
    %50 = arith.addf %32, %49 : vector<16x22xf32>
    %c11 = arith.constant 11 : index
    %51 = memref.load %arg2[%c11] : memref<112xf32, #tpu.memory_space<smem>>
    %52 = vector.broadcast %51 : f32 to vector<16x22xf32>
    %53 = arith.mulf %38, %52 : vector<16x22xf32>
    %54 = arith.addf %36, %53 : vector<16x22xf32>
    %c3_19 = arith.constant 3 : index
    %c0_20 = arith.constant 0 : index
    %c0_21 = arith.constant 0 : index
    %55 = vector.load %arg11[%c3_19, %c0_20, %c0_21] : memref<4x22x22xf32, #tpu.memory_space<vmem>>, vector<1x16x22xf32>
    %56 = vector.shape_cast %55 : vector<1x16x22xf32> to vector<16x22xf32>
    %c12 = arith.constant 12 : index
    %57 = memref.load %arg2[%c12] : memref<112xf32, #tpu.memory_space<smem>>
    %58 = vector.broadcast %57 : f32 to vector<16x22xf32>
    %59 = arith.mulf %56, %58 : vector<16x22xf32>
    %60 = arith.addf %42, %59 : vector<16x22xf32>
    %c13 = arith.constant 13 : index
    %61 = memref.load %arg2[%c13] : memref<112xf32, #tpu.memory_space<smem>>
    %62 = vector.broadcast %61 : f32 to vector<16x22xf32>
    %63 = arith.mulf %56, %62 : vector<16x22xf32>
    %64 = arith.addf %46, %63 : vector<16x22xf32>
    %c14 = arith.constant 14 : index
    %65 = memref.load %arg2[%c14] : memref<112xf32, #tpu.memory_space<smem>>
    %66 = vector.broadcast %65 : f32 to vector<16x22xf32>
    %67 = arith.mulf %56, %66 : vector<16x22xf32>
    %68 = arith.addf %50, %67 : vector<16x22xf32>
    %c15 = arith.constant 15 : index
    %69 = memref.load %arg2[%c15] : memref<112xf32, #tpu.memory_space<smem>>
    %70 = vector.broadcast %69 : f32 to vector<16x22xf32>
    %71 = arith.mulf %56, %70 : vector<16x22xf32>
    %72 = arith.addf %54, %71 : vector<16x22xf32>
    %c0_22 = arith.constant 0 : index
    %c1_23 = arith.constant 1 : index
    %c0_24 = arith.constant 0 : index
    %73 = vector.load %arg11[%c0_22, %c1_23, %c0_24] : memref<4x22x22xf32, #tpu.memory_space<vmem>>, vector<1x16x22xf32>
    %74 = vector.shape_cast %73 : vector<1x16x22xf32> to vector<16x22xf32>
    %c16 = arith.constant 16 : index
    %75 = memref.load %arg2[%c16] : memref<112xf32, #tpu.memory_space<smem>>
    %76 = vector.broadcast %75 : f32 to vector<16x22xf32>
    %77 = arith.mulf %74, %76 : vector<16x22xf32>
    %78 = arith.addf %60, %77 : vector<16x22xf32>
    %c17 = arith.constant 17 : index
    %79 = memref.load %arg2[%c17] : memref<112xf32, #tpu.memory_space<smem>>
    %80 = vector.broadcast %79 : f32 to vector<16x22xf32>
    %81 = arith.mulf %74, %80 : vector<16x22xf32>
    %82 = arith.addf %64, %81 : vector<16x22xf32>
    %c18 = arith.constant 18 : index
    %83 = memref.load %arg2[%c18] : memref<112xf32, #tpu.memory_space<smem>>
    %84 = vector.broadcast %83 : f32 to vector<16x22xf32>
    %85 = arith.mulf %74, %84 : vector<16x22xf32>
    %86 = arith.addf %68, %85 : vector<16x22xf32>
    %c19 = arith.constant 19 : index
    %87 = memref.load %arg2[%c19] : memref<112xf32, #tpu.memory_space<smem>>
    %88 = vector.broadcast %87 : f32 to vector<16x22xf32>
    %89 = arith.mulf %74, %88 : vector<16x22xf32>
    %90 = arith.addf %72, %89 : vector<16x22xf32>
    %c1_25 = arith.constant 1 : index
    %c1_26 = arith.constant 1 : index
    %c0_27 = arith.constant 0 : index
    %91 = vector.load %arg11[%c1_25, %c1_26, %c0_27] : memref<4x22x22xf32, #tpu.memory_space<vmem>>, vector<1x16x22xf32>
    %92 = vector.shape_cast %91 : vector<1x16x22xf32> to vector<16x22xf32>
    %c20 = arith.constant 20 : index
    %93 = memref.load %arg2[%c20] : memref<112xf32, #tpu.memory_space<smem>>
    %94 = vector.broadcast %93 : f32 to vector<16x22xf32>
    %95 = arith.mulf %92, %94 : vector<16x22xf32>
    %96 = arith.addf %78, %95 : vector<16x22xf32>
    %c21 = arith.constant 21 : index
    %97 = memref.load %arg2[%c21] : memref<112xf32, #tpu.memory_space<smem>>
    %98 = vector.broadcast %97 : f32 to vector<16x22xf32>
    %99 = arith.mulf %92, %98 : vector<16x22xf32>
    %100 = arith.addf %82, %99 : vector<16x22xf32>
    %c22 = arith.constant 22 : index
    %101 = memref.load %arg2[%c22] : memref<112xf32, #tpu.memory_space<smem>>
    %102 = vector.broadcast %101 : f32 to vector<16x22xf32>
    %103 = arith.mulf %92, %102 : vector<16x22xf32>
    %104 = arith.addf %86, %103 : vector<16x22xf32>
    %c23 = arith.constant 23 : index
    %105 = memref.load %arg2[%c23] : memref<112xf32, #tpu.memory_space<smem>>
    %106 = vector.broadcast %105 : f32 to vector<16x22xf32>
    %107 = arith.mulf %92, %106 : vector<16x22xf32>
    %108 = arith.addf %90, %107 : vector<16x22xf32>
    %c2_28 = arith.constant 2 : index
    %c1_29 = arith.constant 1 : index
    %c0_30 = arith.constant 0 : index
    %109 = vector.load %arg11[%c2_28, %c1_29, %c0_30] : memref<4x22x22xf32, #tpu.memory_space<vmem>>, vector<1x16x22xf32>
    %110 = vector.shape_cast %109 : vector<1x16x22xf32> to vector<16x22xf32>
    %c24 = arith.constant 24 : index
    %111 = memref.load %arg2[%c24] : memref<112xf32, #tpu.memory_space<smem>>
    %112 = vector.broadcast %111 : f32 to vector<16x22xf32>
    %113 = arith.mulf %110, %112 : vector<16x22xf32>
    %114 = arith.addf %96, %113 : vector<16x22xf32>
    %c25 = arith.constant 25 : index
    %115 = memref.load %arg2[%c25] : memref<112xf32, #tpu.memory_space<smem>>
    %116 = vector.broadcast %115 : f32 to vector<16x22xf32>
    %117 = arith.mulf %110, %116 : vector<16x22xf32>
    %118 = arith.addf %100, %117 : vector<16x22xf32>
    %c26 = arith.constant 26 : index
    %119 = memref.load %arg2[%c26] : memref<112xf32, #tpu.memory_space<smem>>
    %120 = vector.broadcast %119 : f32 to vector<16x22xf32>
    %121 = arith.mulf %110, %120 : vector<16x22xf32>
    %122 = arith.addf %104, %121 : vector<16x22xf32>
    %c27 = arith.constant 27 : index
    %123 = memref.load %arg2[%c27] : memref<112xf32, #tpu.memory_space<smem>>
    %124 = vector.broadcast %123 : f32 to vector<16x22xf32>
    %125 = arith.mulf %110, %124 : vector<16x22xf32>
    %126 = arith.addf %108, %125 : vector<16x22xf32>
    %c3_31 = arith.constant 3 : index
    %c1_32 = arith.constant 1 : index
    %c0_33 = arith.constant 0 : index
    %127 = vector.load %arg11[%c3_31, %c1_32, %c0_33] : memref<4x22x22xf32, #tpu.memory_space<vmem>>, vector<1x16x22xf32>
    %128 = vector.shape_cast %127 : vector<1x16x22xf32> to vector<16x22xf32>
    %c28 = arith.constant 28 : index
    %129 = memref.load %arg2[%c28] : memref<112xf32, #tpu.memory_space<smem>>
    %130 = vector.broadcast %129 : f32 to vector<16x22xf32>
    %131 = arith.mulf %128, %130 : vector<16x22xf32>
    %132 = arith.addf %114, %131 : vector<16x22xf32>
    %c29 = arith.constant 29 : index
    %133 = memref.load %arg2[%c29] : memref<112xf32, #tpu.memory_space<smem>>
    %134 = vector.broadcast %133 : f32 to vector<16x22xf32>
    %135 = arith.mulf %128, %134 : vector<16x22xf32>
    %136 = arith.addf %118, %135 : vector<16x22xf32>
    %c30 = arith.constant 30 : index
    %137 = memref.load %arg2[%c30] : memref<112xf32, #tpu.memory_space<smem>>
    %138 = vector.broadcast %137 : f32 to vector<16x22xf32>
    %139 = arith.mulf %128, %138 : vector<16x22xf32>
    %140 = arith.addf %122, %139 : vector<16x22xf32>
    %c31 = arith.constant 31 : index
    %141 = memref.load %arg2[%c31] : memref<112xf32, #tpu.memory_space<smem>>
    %142 = vector.broadcast %141 : f32 to vector<16x22xf32>
    %143 = arith.mulf %128, %142 : vector<16x22xf32>
    %144 = arith.addf %126, %143 : vector<16x22xf32>
    %c0_34 = arith.constant 0 : index
    %c2_35 = arith.constant 2 : index
    %c0_36 = arith.constant 0 : index
    %145 = vector.load %arg11[%c0_34, %c2_35, %c0_36] : memref<4x22x22xf32, #tpu.memory_space<vmem>>, vector<1x16x22xf32>
    %146 = vector.shape_cast %145 : vector<1x16x22xf32> to vector<16x22xf32>
    %c32 = arith.constant 32 : index
    %147 = memref.load %arg2[%c32] : memref<112xf32, #tpu.memory_space<smem>>
    %148 = vector.broadcast %147 : f32 to vector<16x22xf32>
    %149 = arith.mulf %146, %148 : vector<16x22xf32>
    %150 = arith.addf %132, %149 : vector<16x22xf32>
    %c33 = arith.constant 33 : index
    %151 = memref.load %arg2[%c33] : memref<112xf32, #tpu.memory_space<smem>>
    %152 = vector.broadcast %151 : f32 to vector<16x22xf32>
    %153 = arith.mulf %146, %152 : vector<16x22xf32>
    %154 = arith.addf %136, %153 : vector<16x22xf32>
    %c34 = arith.constant 34 : index
    %155 = memref.load %arg2[%c34] : memref<112xf32, #tpu.memory_space<smem>>
    %156 = vector.broadcast %155 : f32 to vector<16x22xf32>
    %157 = arith.mulf %146, %156 : vector<16x22xf32>
    %158 = arith.addf %140, %157 : vector<16x22xf32>
    %c35 = arith.constant 35 : index
    %159 = memref.load %arg2[%c35] : memref<112xf32, #tpu.memory_space<smem>>
    %160 = vector.broadcast %159 : f32 to vector<16x22xf32>
    %161 = arith.mulf %146, %160 : vector<16x22xf32>
    %162 = arith.addf %144, %161 : vector<16x22xf32>
    %c1_37 = arith.constant 1 : index
    %c2_38 = arith.constant 2 : index
    %c0_39 = arith.constant 0 : index
    %163 = vector.load %arg11[%c1_37, %c2_38, %c0_39] : memref<4x22x22xf32, #tpu.memory_space<vmem>>, vector<1x16x22xf32>
    %164 = vector.shape_cast %163 : vector<1x16x22xf32> to vector<16x22xf32>
    %c36 = arith.constant 36 : index
    %165 = memref.load %arg2[%c36] : memref<112xf32, #tpu.memory_space<smem>>
    %166 = vector.broadcast %165 : f32 to vector<16x22xf32>
    %167 = arith.mulf %164, %166 : vector<16x22xf32>
    %168 = arith.addf %150, %167 : vector<16x22xf32>
    %c37 = arith.constant 37 : index
    %169 = memref.load %arg2[%c37] : memref<112xf32, #tpu.memory_space<smem>>
    %170 = vector.broadcast %169 : f32 to vector<16x22xf32>
    %171 = arith.mulf %164, %170 : vector<16x22xf32>
    %172 = arith.addf %154, %171 : vector<16x22xf32>
    %c38 = arith.constant 38 : index
    %173 = memref.load %arg2[%c38] : memref<112xf32, #tpu.memory_space<smem>>
    %174 = vector.broadcast %173 : f32 to vector<16x22xf32>
    %175 = arith.mulf %164, %174 : vector<16x22xf32>
    %176 = arith.addf %158, %175 : vector<16x22xf32>
    %c39 = arith.constant 39 : index
    %177 = memref.load %arg2[%c39] : memref<112xf32, #tpu.memory_space<smem>>
    %178 = vector.broadcast %177 : f32 to vector<16x22xf32>
    %179 = arith.mulf %164, %178 : vector<16x22xf32>
    %180 = arith.addf %162, %179 : vector<16x22xf32>
    %c2_40 = arith.constant 2 : index
    %c2_41 = arith.constant 2 : index
    %c0_42 = arith.constant 0 : index
    %181 = vector.load %arg11[%c2_40, %c2_41, %c0_42] : memref<4x22x22xf32, #tpu.memory_space<vmem>>, vector<1x16x22xf32>
    %182 = vector.shape_cast %181 : vector<1x16x22xf32> to vector<16x22xf32>
    %c40 = arith.constant 40 : index
    %183 = memref.load %arg2[%c40] : memref<112xf32, #tpu.memory_space<smem>>
    %184 = vector.broadcast %183 : f32 to vector<16x22xf32>
    %185 = arith.mulf %182, %184 : vector<16x22xf32>
    %186 = arith.addf %168, %185 : vector<16x22xf32>
    %c41 = arith.constant 41 : index
    %187 = memref.load %arg2[%c41] : memref<112xf32, #tpu.memory_space<smem>>
    %188 = vector.broadcast %187 : f32 to vector<16x22xf32>
    %189 = arith.mulf %182, %188 : vector<16x22xf32>
    %190 = arith.addf %172, %189 : vector<16x22xf32>
    %c42 = arith.constant 42 : index
    %191 = memref.load %arg2[%c42] : memref<112xf32, #tpu.memory_space<smem>>
    %192 = vector.broadcast %191 : f32 to vector<16x22xf32>
    %193 = arith.mulf %182, %192 : vector<16x22xf32>
    %194 = arith.addf %176, %193 : vector<16x22xf32>
    %c43 = arith.constant 43 : index
    %195 = memref.load %arg2[%c43] : memref<112xf32, #tpu.memory_space<smem>>
    %196 = vector.broadcast %195 : f32 to vector<16x22xf32>
    %197 = arith.mulf %182, %196 : vector<16x22xf32>
    %198 = arith.addf %180, %197 : vector<16x22xf32>
    %c3_43 = arith.constant 3 : index
    %c2_44 = arith.constant 2 : index
    %c0_45 = arith.constant 0 : index
    %199 = vector.load %arg11[%c3_43, %c2_44, %c0_45] : memref<4x22x22xf32, #tpu.memory_space<vmem>>, vector<1x16x22xf32>
    %200 = vector.shape_cast %199 : vector<1x16x22xf32> to vector<16x22xf32>
    %c44 = arith.constant 44 : index
    %201 = memref.load %arg2[%c44] : memref<112xf32, #tpu.memory_space<smem>>
    %202 = vector.broadcast %201 : f32 to vector<16x22xf32>
    %203 = arith.mulf %200, %202 : vector<16x22xf32>
    %204 = arith.addf %186, %203 : vector<16x22xf32>
    %c45 = arith.constant 45 : index
    %205 = memref.load %arg2[%c45] : memref<112xf32, #tpu.memory_space<smem>>
    %206 = vector.broadcast %205 : f32 to vector<16x22xf32>
    %207 = arith.mulf %200, %206 : vector<16x22xf32>
    %208 = arith.addf %190, %207 : vector<16x22xf32>
    %c46 = arith.constant 46 : index
    %209 = memref.load %arg2[%c46] : memref<112xf32, #tpu.memory_space<smem>>
    %210 = vector.broadcast %209 : f32 to vector<16x22xf32>
    %211 = arith.mulf %200, %210 : vector<16x22xf32>
    %212 = arith.addf %194, %211 : vector<16x22xf32>
    %c47 = arith.constant 47 : index
    %213 = memref.load %arg2[%c47] : memref<112xf32, #tpu.memory_space<smem>>
    %214 = vector.broadcast %213 : f32 to vector<16x22xf32>
    %215 = arith.mulf %200, %214 : vector<16x22xf32>
    %216 = arith.addf %198, %215 : vector<16x22xf32>
    %c0_46 = arith.constant 0 : index
    %c3_47 = arith.constant 3 : index
    %c0_48 = arith.constant 0 : index
    %217 = vector.load %arg11[%c0_46, %c3_47, %c0_48] : memref<4x22x22xf32, #tpu.memory_space<vmem>>, vector<1x16x22xf32>
    %218 = vector.shape_cast %217 : vector<1x16x22xf32> to vector<16x22xf32>
    %c48 = arith.constant 48 : index
    %219 = memref.load %arg2[%c48] : memref<112xf32, #tpu.memory_space<smem>>
    %220 = vector.broadcast %219 : f32 to vector<16x22xf32>
    %221 = arith.mulf %218, %220 : vector<16x22xf32>
    %222 = arith.addf %204, %221 : vector<16x22xf32>
    %c49 = arith.constant 49 : index
    %223 = memref.load %arg2[%c49] : memref<112xf32, #tpu.memory_space<smem>>
    %224 = vector.broadcast %223 : f32 to vector<16x22xf32>
    %225 = arith.mulf %218, %224 : vector<16x22xf32>
    %226 = arith.addf %208, %225 : vector<16x22xf32>
    %c50 = arith.constant 50 : index
    %227 = memref.load %arg2[%c50] : memref<112xf32, #tpu.memory_space<smem>>
    %228 = vector.broadcast %227 : f32 to vector<16x22xf32>
    %229 = arith.mulf %218, %228 : vector<16x22xf32>
    %230 = arith.addf %212, %229 : vector<16x22xf32>
    %c51 = arith.constant 51 : index
    %231 = memref.load %arg2[%c51] : memref<112xf32, #tpu.memory_space<smem>>
    %232 = vector.broadcast %231 : f32 to vector<16x22xf32>
    %233 = arith.mulf %218, %232 : vector<16x22xf32>
    %234 = arith.addf %216, %233 : vector<16x22xf32>
    %c1_49 = arith.constant 1 : index
    %c3_50 = arith.constant 3 : index
    %c0_51 = arith.constant 0 : index
    %235 = vector.load %arg11[%c1_49, %c3_50, %c0_51] : memref<4x22x22xf32, #tpu.memory_space<vmem>>, vector<1x16x22xf32>
    %236 = vector.shape_cast %235 : vector<1x16x22xf32> to vector<16x22xf32>
    %c52 = arith.constant 52 : index
    %237 = memref.load %arg2[%c52] : memref<112xf32, #tpu.memory_space<smem>>
    %238 = vector.broadcast %237 : f32 to vector<16x22xf32>
    %239 = arith.mulf %236, %238 : vector<16x22xf32>
    %240 = arith.addf %222, %239 : vector<16x22xf32>
    %c53 = arith.constant 53 : index
    %241 = memref.load %arg2[%c53] : memref<112xf32, #tpu.memory_space<smem>>
    %242 = vector.broadcast %241 : f32 to vector<16x22xf32>
    %243 = arith.mulf %236, %242 : vector<16x22xf32>
    %244 = arith.addf %226, %243 : vector<16x22xf32>
    %c54 = arith.constant 54 : index
    %245 = memref.load %arg2[%c54] : memref<112xf32, #tpu.memory_space<smem>>
    %246 = vector.broadcast %245 : f32 to vector<16x22xf32>
    %247 = arith.mulf %236, %246 : vector<16x22xf32>
    %248 = arith.addf %230, %247 : vector<16x22xf32>
    %c55 = arith.constant 55 : index
    %249 = memref.load %arg2[%c55] : memref<112xf32, #tpu.memory_space<smem>>
    %250 = vector.broadcast %249 : f32 to vector<16x22xf32>
    %251 = arith.mulf %236, %250 : vector<16x22xf32>
    %252 = arith.addf %234, %251 : vector<16x22xf32>
    %c2_52 = arith.constant 2 : index
    %c3_53 = arith.constant 3 : index
    %c0_54 = arith.constant 0 : index
    %253 = vector.load %arg11[%c2_52, %c3_53, %c0_54] : memref<4x22x22xf32, #tpu.memory_space<vmem>>, vector<1x16x22xf32>
    %254 = vector.shape_cast %253 : vector<1x16x22xf32> to vector<16x22xf32>
    %c56 = arith.constant 56 : index
    %255 = memref.load %arg2[%c56] : memref<112xf32, #tpu.memory_space<smem>>
    %256 = vector.broadcast %255 : f32 to vector<16x22xf32>
    %257 = arith.mulf %254, %256 : vector<16x22xf32>
    %258 = arith.addf %240, %257 : vector<16x22xf32>
    %c57 = arith.constant 57 : index
    %259 = memref.load %arg2[%c57] : memref<112xf32, #tpu.memory_space<smem>>
    %260 = vector.broadcast %259 : f32 to vector<16x22xf32>
    %261 = arith.mulf %254, %260 : vector<16x22xf32>
    %262 = arith.addf %244, %261 : vector<16x22xf32>
    %c58 = arith.constant 58 : index
    %263 = memref.load %arg2[%c58] : memref<112xf32, #tpu.memory_space<smem>>
    %264 = vector.broadcast %263 : f32 to vector<16x22xf32>
    %265 = arith.mulf %254, %264 : vector<16x22xf32>
    %266 = arith.addf %248, %265 : vector<16x22xf32>
    %c59 = arith.constant 59 : index
    %267 = memref.load %arg2[%c59] : memref<112xf32, #tpu.memory_space<smem>>
    %268 = vector.broadcast %267 : f32 to vector<16x22xf32>
    %269 = arith.mulf %254, %268 : vector<16x22xf32>
    %270 = arith.addf %252, %269 : vector<16x22xf32>
    %c3_55 = arith.constant 3 : index
    %c3_56 = arith.constant 3 : index
    %c0_57 = arith.constant 0 : index
    %271 = vector.load %arg11[%c3_55, %c3_56, %c0_57] : memref<4x22x22xf32, #tpu.memory_space<vmem>>, vector<1x16x22xf32>
    %272 = vector.shape_cast %271 : vector<1x16x22xf32> to vector<16x22xf32>
    %c60 = arith.constant 60 : index
    %273 = memref.load %arg2[%c60] : memref<112xf32, #tpu.memory_space<smem>>
    %274 = vector.broadcast %273 : f32 to vector<16x22xf32>
    %275 = arith.mulf %272, %274 : vector<16x22xf32>
    %276 = arith.addf %258, %275 : vector<16x22xf32>
    %c61 = arith.constant 61 : index
    %277 = memref.load %arg2[%c61] : memref<112xf32, #tpu.memory_space<smem>>
    %278 = vector.broadcast %277 : f32 to vector<16x22xf32>
    %279 = arith.mulf %272, %278 : vector<16x22xf32>
    %280 = arith.addf %262, %279 : vector<16x22xf32>
    %c62 = arith.constant 62 : index
    %281 = memref.load %arg2[%c62] : memref<112xf32, #tpu.memory_space<smem>>
    %282 = vector.broadcast %281 : f32 to vector<16x22xf32>
    %283 = arith.mulf %272, %282 : vector<16x22xf32>
    %284 = arith.addf %266, %283 : vector<16x22xf32>
    %c63 = arith.constant 63 : index
    %285 = memref.load %arg2[%c63] : memref<112xf32, #tpu.memory_space<smem>>
    %286 = vector.broadcast %285 : f32 to vector<16x22xf32>
    %287 = arith.mulf %272, %286 : vector<16x22xf32>
    %288 = arith.addf %270, %287 : vector<16x22xf32>
    %c0_58 = arith.constant 0 : index
    %c4_59 = arith.constant 4 : index
    %c0_60 = arith.constant 0 : index
    %289 = vector.load %arg11[%c0_58, %c4_59, %c0_60] : memref<4x22x22xf32, #tpu.memory_space<vmem>>, vector<1x16x22xf32>
    %290 = vector.shape_cast %289 : vector<1x16x22xf32> to vector<16x22xf32>
    %c64 = arith.constant 64 : index
    %291 = memref.load %arg2[%c64] : memref<112xf32, #tpu.memory_space<smem>>
    %292 = vector.broadcast %291 : f32 to vector<16x22xf32>
    %293 = arith.mulf %290, %292 : vector<16x22xf32>
    %294 = arith.addf %276, %293 : vector<16x22xf32>
    %c65 = arith.constant 65 : index
    %295 = memref.load %arg2[%c65] : memref<112xf32, #tpu.memory_space<smem>>
    %296 = vector.broadcast %295 : f32 to vector<16x22xf32>
    %297 = arith.mulf %290, %296 : vector<16x22xf32>
    %298 = arith.addf %280, %297 : vector<16x22xf32>
    %c66 = arith.constant 66 : index
    %299 = memref.load %arg2[%c66] : memref<112xf32, #tpu.memory_space<smem>>
    %300 = vector.broadcast %299 : f32 to vector<16x22xf32>
    %301 = arith.mulf %290, %300 : vector<16x22xf32>
    %302 = arith.addf %284, %301 : vector<16x22xf32>
    %c67 = arith.constant 67 : index
    %303 = memref.load %arg2[%c67] : memref<112xf32, #tpu.memory_space<smem>>
    %304 = vector.broadcast %303 : f32 to vector<16x22xf32>
    %305 = arith.mulf %290, %304 : vector<16x22xf32>
    %306 = arith.addf %288, %305 : vector<16x22xf32>
    %c1_61 = arith.constant 1 : index
    %c4_62 = arith.constant 4 : index
    %c0_63 = arith.constant 0 : index
    %307 = vector.load %arg11[%c1_61, %c4_62, %c0_63] : memref<4x22x22xf32, #tpu.memory_space<vmem>>, vector<1x16x22xf32>
    %308 = vector.shape_cast %307 : vector<1x16x22xf32> to vector<16x22xf32>
    %c68 = arith.constant 68 : index
    %309 = memref.load %arg2[%c68] : memref<112xf32, #tpu.memory_space<smem>>
    %310 = vector.broadcast %309 : f32 to vector<16x22xf32>
    %311 = arith.mulf %308, %310 : vector<16x22xf32>
    %312 = arith.addf %294, %311 : vector<16x22xf32>
    %c69 = arith.constant 69 : index
    %313 = memref.load %arg2[%c69] : memref<112xf32, #tpu.memory_space<smem>>
    %314 = vector.broadcast %313 : f32 to vector<16x22xf32>
    %315 = arith.mulf %308, %314 : vector<16x22xf32>
    %316 = arith.addf %298, %315 : vector<16x22xf32>
    %c70 = arith.constant 70 : index
    %317 = memref.load %arg2[%c70] : memref<112xf32, #tpu.memory_space<smem>>
    %318 = vector.broadcast %317 : f32 to vector<16x22xf32>
    %319 = arith.mulf %308, %318 : vector<16x22xf32>
    %320 = arith.addf %302, %319 : vector<16x22xf32>
    %c71 = arith.constant 71 : index
    %321 = memref.load %arg2[%c71] : memref<112xf32, #tpu.memory_space<smem>>
    %322 = vector.broadcast %321 : f32 to vector<16x22xf32>
    %323 = arith.mulf %308, %322 : vector<16x22xf32>
    %324 = arith.addf %306, %323 : vector<16x22xf32>
    %c2_64 = arith.constant 2 : index
    %c4_65 = arith.constant 4 : index
    %c0_66 = arith.constant 0 : index
    %325 = vector.load %arg11[%c2_64, %c4_65, %c0_66] : memref<4x22x22xf32, #tpu.memory_space<vmem>>, vector<1x16x22xf32>
    %326 = vector.shape_cast %325 : vector<1x16x22xf32> to vector<16x22xf32>
    %c72 = arith.constant 72 : index
    %327 = memref.load %arg2[%c72] : memref<112xf32, #tpu.memory_space<smem>>
    %328 = vector.broadcast %327 : f32 to vector<16x22xf32>
    %329 = arith.mulf %326, %328 : vector<16x22xf32>
    %330 = arith.addf %312, %329 : vector<16x22xf32>
    %c73 = arith.constant 73 : index
    %331 = memref.load %arg2[%c73] : memref<112xf32, #tpu.memory_space<smem>>
    %332 = vector.broadcast %331 : f32 to vector<16x22xf32>
    %333 = arith.mulf %326, %332 : vector<16x22xf32>
    %334 = arith.addf %316, %333 : vector<16x22xf32>
    %c74 = arith.constant 74 : index
    %335 = memref.load %arg2[%c74] : memref<112xf32, #tpu.memory_space<smem>>
    %336 = vector.broadcast %335 : f32 to vector<16x22xf32>
    %337 = arith.mulf %326, %336 : vector<16x22xf32>
    %338 = arith.addf %320, %337 : vector<16x22xf32>
    %c75 = arith.constant 75 : index
    %339 = memref.load %arg2[%c75] : memref<112xf32, #tpu.memory_space<smem>>
    %340 = vector.broadcast %339 : f32 to vector<16x22xf32>
    %341 = arith.mulf %326, %340 : vector<16x22xf32>
    %342 = arith.addf %324, %341 : vector<16x22xf32>
    %c3_67 = arith.constant 3 : index
    %c4_68 = arith.constant 4 : index
    %c0_69 = arith.constant 0 : index
    %343 = vector.load %arg11[%c3_67, %c4_68, %c0_69] : memref<4x22x22xf32, #tpu.memory_space<vmem>>, vector<1x16x22xf32>
    %344 = vector.shape_cast %343 : vector<1x16x22xf32> to vector<16x22xf32>
    %c76 = arith.constant 76 : index
    %345 = memref.load %arg2[%c76] : memref<112xf32, #tpu.memory_space<smem>>
    %346 = vector.broadcast %345 : f32 to vector<16x22xf32>
    %347 = arith.mulf %344, %346 : vector<16x22xf32>
    %348 = arith.addf %330, %347 : vector<16x22xf32>
    %c77 = arith.constant 77 : index
    %349 = memref.load %arg2[%c77] : memref<112xf32, #tpu.memory_space<smem>>
    %350 = vector.broadcast %349 : f32 to vector<16x22xf32>
    %351 = arith.mulf %344, %350 : vector<16x22xf32>
    %352 = arith.addf %334, %351 : vector<16x22xf32>
    %c78 = arith.constant 78 : index
    %353 = memref.load %arg2[%c78] : memref<112xf32, #tpu.memory_space<smem>>
    %354 = vector.broadcast %353 : f32 to vector<16x22xf32>
    %355 = arith.mulf %344, %354 : vector<16x22xf32>
    %356 = arith.addf %338, %355 : vector<16x22xf32>
    %c79 = arith.constant 79 : index
    %357 = memref.load %arg2[%c79] : memref<112xf32, #tpu.memory_space<smem>>
    %358 = vector.broadcast %357 : f32 to vector<16x22xf32>
    %359 = arith.mulf %344, %358 : vector<16x22xf32>
    %360 = arith.addf %342, %359 : vector<16x22xf32>
    %c0_70 = arith.constant 0 : index
    %c5_71 = arith.constant 5 : index
    %c0_72 = arith.constant 0 : index
    %361 = vector.load %arg11[%c0_70, %c5_71, %c0_72] : memref<4x22x22xf32, #tpu.memory_space<vmem>>, vector<1x16x22xf32>
    %362 = vector.shape_cast %361 : vector<1x16x22xf32> to vector<16x22xf32>
    %c80 = arith.constant 80 : index
    %363 = memref.load %arg2[%c80] : memref<112xf32, #tpu.memory_space<smem>>
    %364 = vector.broadcast %363 : f32 to vector<16x22xf32>
    %365 = arith.mulf %362, %364 : vector<16x22xf32>
    %366 = arith.addf %348, %365 : vector<16x22xf32>
    %c81 = arith.constant 81 : index
    %367 = memref.load %arg2[%c81] : memref<112xf32, #tpu.memory_space<smem>>
    %368 = vector.broadcast %367 : f32 to vector<16x22xf32>
    %369 = arith.mulf %362, %368 : vector<16x22xf32>
    %370 = arith.addf %352, %369 : vector<16x22xf32>
    %c82 = arith.constant 82 : index
    %371 = memref.load %arg2[%c82] : memref<112xf32, #tpu.memory_space<smem>>
    %372 = vector.broadcast %371 : f32 to vector<16x22xf32>
    %373 = arith.mulf %362, %372 : vector<16x22xf32>
    %374 = arith.addf %356, %373 : vector<16x22xf32>
    %c83 = arith.constant 83 : index
    %375 = memref.load %arg2[%c83] : memref<112xf32, #tpu.memory_space<smem>>
    %376 = vector.broadcast %375 : f32 to vector<16x22xf32>
    %377 = arith.mulf %362, %376 : vector<16x22xf32>
    %378 = arith.addf %360, %377 : vector<16x22xf32>
    %c1_73 = arith.constant 1 : index
    %c5_74 = arith.constant 5 : index
    %c0_75 = arith.constant 0 : index
    %379 = vector.load %arg11[%c1_73, %c5_74, %c0_75] : memref<4x22x22xf32, #tpu.memory_space<vmem>>, vector<1x16x22xf32>
    %380 = vector.shape_cast %379 : vector<1x16x22xf32> to vector<16x22xf32>
    %c84 = arith.constant 84 : index
    %381 = memref.load %arg2[%c84] : memref<112xf32, #tpu.memory_space<smem>>
    %382 = vector.broadcast %381 : f32 to vector<16x22xf32>
    %383 = arith.mulf %380, %382 : vector<16x22xf32>
    %384 = arith.addf %366, %383 : vector<16x22xf32>
    %c85 = arith.constant 85 : index
    %385 = memref.load %arg2[%c85] : memref<112xf32, #tpu.memory_space<smem>>
    %386 = vector.broadcast %385 : f32 to vector<16x22xf32>
    %387 = arith.mulf %380, %386 : vector<16x22xf32>
    %388 = arith.addf %370, %387 : vector<16x22xf32>
    %c86 = arith.constant 86 : index
    %389 = memref.load %arg2[%c86] : memref<112xf32, #tpu.memory_space<smem>>
    %390 = vector.broadcast %389 : f32 to vector<16x22xf32>
    %391 = arith.mulf %380, %390 : vector<16x22xf32>
    %392 = arith.addf %374, %391 : vector<16x22xf32>
    %c87 = arith.constant 87 : index
    %393 = memref.load %arg2[%c87] : memref<112xf32, #tpu.memory_space<smem>>
    %394 = vector.broadcast %393 : f32 to vector<16x22xf32>
    %395 = arith.mulf %380, %394 : vector<16x22xf32>
    %396 = arith.addf %378, %395 : vector<16x22xf32>
    %c2_76 = arith.constant 2 : index
    %c5_77 = arith.constant 5 : index
    %c0_78 = arith.constant 0 : index
    %397 = vector.load %arg11[%c2_76, %c5_77, %c0_78] : memref<4x22x22xf32, #tpu.memory_space<vmem>>, vector<1x16x22xf32>
    %398 = vector.shape_cast %397 : vector<1x16x22xf32> to vector<16x22xf32>
    %c88 = arith.constant 88 : index
    %399 = memref.load %arg2[%c88] : memref<112xf32, #tpu.memory_space<smem>>
    %400 = vector.broadcast %399 : f32 to vector<16x22xf32>
    %401 = arith.mulf %398, %400 : vector<16x22xf32>
    %402 = arith.addf %384, %401 : vector<16x22xf32>
    %c89 = arith.constant 89 : index
    %403 = memref.load %arg2[%c89] : memref<112xf32, #tpu.memory_space<smem>>
    %404 = vector.broadcast %403 : f32 to vector<16x22xf32>
    %405 = arith.mulf %398, %404 : vector<16x22xf32>
    %406 = arith.addf %388, %405 : vector<16x22xf32>
    %c90 = arith.constant 90 : index
    %407 = memref.load %arg2[%c90] : memref<112xf32, #tpu.memory_space<smem>>
    %408 = vector.broadcast %407 : f32 to vector<16x22xf32>
    %409 = arith.mulf %398, %408 : vector<16x22xf32>
    %410 = arith.addf %392, %409 : vector<16x22xf32>
    %c91 = arith.constant 91 : index
    %411 = memref.load %arg2[%c91] : memref<112xf32, #tpu.memory_space<smem>>
    %412 = vector.broadcast %411 : f32 to vector<16x22xf32>
    %413 = arith.mulf %398, %412 : vector<16x22xf32>
    %414 = arith.addf %396, %413 : vector<16x22xf32>
    %c3_79 = arith.constant 3 : index
    %c5_80 = arith.constant 5 : index
    %c0_81 = arith.constant 0 : index
    %415 = vector.load %arg11[%c3_79, %c5_80, %c0_81] : memref<4x22x22xf32, #tpu.memory_space<vmem>>, vector<1x16x22xf32>
    %416 = vector.shape_cast %415 : vector<1x16x22xf32> to vector<16x22xf32>
    %c92 = arith.constant 92 : index
    %417 = memref.load %arg2[%c92] : memref<112xf32, #tpu.memory_space<smem>>
    %418 = vector.broadcast %417 : f32 to vector<16x22xf32>
    %419 = arith.mulf %416, %418 : vector<16x22xf32>
    %420 = arith.addf %402, %419 : vector<16x22xf32>
    %c93 = arith.constant 93 : index
    %421 = memref.load %arg2[%c93] : memref<112xf32, #tpu.memory_space<smem>>
    %422 = vector.broadcast %421 : f32 to vector<16x22xf32>
    %423 = arith.mulf %416, %422 : vector<16x22xf32>
    %424 = arith.addf %406, %423 : vector<16x22xf32>
    %c94 = arith.constant 94 : index
    %425 = memref.load %arg2[%c94] : memref<112xf32, #tpu.memory_space<smem>>
    %426 = vector.broadcast %425 : f32 to vector<16x22xf32>
    %427 = arith.mulf %416, %426 : vector<16x22xf32>
    %428 = arith.addf %410, %427 : vector<16x22xf32>
    %c95 = arith.constant 95 : index
    %429 = memref.load %arg2[%c95] : memref<112xf32, #tpu.memory_space<smem>>
    %430 = vector.broadcast %429 : f32 to vector<16x22xf32>
    %431 = arith.mulf %416, %430 : vector<16x22xf32>
    %432 = arith.addf %414, %431 : vector<16x22xf32>
    %c0_82 = arith.constant 0 : index
    %c6_83 = arith.constant 6 : index
    %c0_84 = arith.constant 0 : index
    %433 = vector.load %arg11[%c0_82, %c6_83, %c0_84] : memref<4x22x22xf32, #tpu.memory_space<vmem>>, vector<1x16x22xf32>
    %434 = vector.shape_cast %433 : vector<1x16x22xf32> to vector<16x22xf32>
    %c96 = arith.constant 96 : index
    %435 = memref.load %arg2[%c96] : memref<112xf32, #tpu.memory_space<smem>>
    %436 = vector.broadcast %435 : f32 to vector<16x22xf32>
    %437 = arith.mulf %434, %436 : vector<16x22xf32>
    %438 = arith.addf %420, %437 : vector<16x22xf32>
    %c97 = arith.constant 97 : index
    %439 = memref.load %arg2[%c97] : memref<112xf32, #tpu.memory_space<smem>>
    %440 = vector.broadcast %439 : f32 to vector<16x22xf32>
    %441 = arith.mulf %434, %440 : vector<16x22xf32>
    %442 = arith.addf %424, %441 : vector<16x22xf32>
    %c98 = arith.constant 98 : index
    %443 = memref.load %arg2[%c98] : memref<112xf32, #tpu.memory_space<smem>>
    %444 = vector.broadcast %443 : f32 to vector<16x22xf32>
    %445 = arith.mulf %434, %444 : vector<16x22xf32>
    %446 = arith.addf %428, %445 : vector<16x22xf32>
    %c99 = arith.constant 99 : index
    %447 = memref.load %arg2[%c99] : memref<112xf32, #tpu.memory_space<smem>>
    %448 = vector.broadcast %447 : f32 to vector<16x22xf32>
    %449 = arith.mulf %434, %448 : vector<16x22xf32>
    %450 = arith.addf %432, %449 : vector<16x22xf32>
    %c1_85 = arith.constant 1 : index
    %c6_86 = arith.constant 6 : index
    %c0_87 = arith.constant 0 : index
    %451 = vector.load %arg11[%c1_85, %c6_86, %c0_87] : memref<4x22x22xf32, #tpu.memory_space<vmem>>, vector<1x16x22xf32>
    %452 = vector.shape_cast %451 : vector<1x16x22xf32> to vector<16x22xf32>
    %c100 = arith.constant 100 : index
    %453 = memref.load %arg2[%c100] : memref<112xf32, #tpu.memory_space<smem>>
    %454 = vector.broadcast %453 : f32 to vector<16x22xf32>
    %455 = arith.mulf %452, %454 : vector<16x22xf32>
    %456 = arith.addf %438, %455 : vector<16x22xf32>
    %c101 = arith.constant 101 : index
    %457 = memref.load %arg2[%c101] : memref<112xf32, #tpu.memory_space<smem>>
    %458 = vector.broadcast %457 : f32 to vector<16x22xf32>
    %459 = arith.mulf %452, %458 : vector<16x22xf32>
    %460 = arith.addf %442, %459 : vector<16x22xf32>
    %c102 = arith.constant 102 : index
    %461 = memref.load %arg2[%c102] : memref<112xf32, #tpu.memory_space<smem>>
    %462 = vector.broadcast %461 : f32 to vector<16x22xf32>
    %463 = arith.mulf %452, %462 : vector<16x22xf32>
    %464 = arith.addf %446, %463 : vector<16x22xf32>
    %c103 = arith.constant 103 : index
    %465 = memref.load %arg2[%c103] : memref<112xf32, #tpu.memory_space<smem>>
    %466 = vector.broadcast %465 : f32 to vector<16x22xf32>
    %467 = arith.mulf %452, %466 : vector<16x22xf32>
    %468 = arith.addf %450, %467 : vector<16x22xf32>
    %c2_88 = arith.constant 2 : index
    %c6_89 = arith.constant 6 : index
    %c0_90 = arith.constant 0 : index
    %469 = vector.load %arg11[%c2_88, %c6_89, %c0_90] : memref<4x22x22xf32, #tpu.memory_space<vmem>>, vector<1x16x22xf32>
    %470 = vector.shape_cast %469 : vector<1x16x22xf32> to vector<16x22xf32>
    %c104 = arith.constant 104 : index
    %471 = memref.load %arg2[%c104] : memref<112xf32, #tpu.memory_space<smem>>
    %472 = vector.broadcast %471 : f32 to vector<16x22xf32>
    %473 = arith.mulf %470, %472 : vector<16x22xf32>
    %474 = arith.addf %456, %473 : vector<16x22xf32>
    %c105 = arith.constant 105 : index
    %475 = memref.load %arg2[%c105] : memref<112xf32, #tpu.memory_space<smem>>
    %476 = vector.broadcast %475 : f32 to vector<16x22xf32>
    %477 = arith.mulf %470, %476 : vector<16x22xf32>
    %478 = arith.addf %460, %477 : vector<16x22xf32>
    %c106 = arith.constant 106 : index
    %479 = memref.load %arg2[%c106] : memref<112xf32, #tpu.memory_space<smem>>
    %480 = vector.broadcast %479 : f32 to vector<16x22xf32>
    %481 = arith.mulf %470, %480 : vector<16x22xf32>
    %482 = arith.addf %464, %481 : vector<16x22xf32>
    %c107 = arith.constant 107 : index
    %483 = memref.load %arg2[%c107] : memref<112xf32, #tpu.memory_space<smem>>
    %484 = vector.broadcast %483 : f32 to vector<16x22xf32>
    %485 = arith.mulf %470, %484 : vector<16x22xf32>
    %486 = arith.addf %468, %485 : vector<16x22xf32>
    %c3_91 = arith.constant 3 : index
    %c6_92 = arith.constant 6 : index
    %c0_93 = arith.constant 0 : index
    %487 = vector.load %arg11[%c3_91, %c6_92, %c0_93] : memref<4x22x22xf32, #tpu.memory_space<vmem>>, vector<1x16x22xf32>
    %488 = vector.shape_cast %487 : vector<1x16x22xf32> to vector<16x22xf32>
    %c108 = arith.constant 108 : index
    %489 = memref.load %arg2[%c108] : memref<112xf32, #tpu.memory_space<smem>>
    %490 = vector.broadcast %489 : f32 to vector<16x22xf32>
    %491 = arith.mulf %488, %490 : vector<16x22xf32>
    %492 = arith.addf %474, %491 : vector<16x22xf32>
    %c109 = arith.constant 109 : index
    %493 = memref.load %arg2[%c109] : memref<112xf32, #tpu.memory_space<smem>>
    %494 = vector.broadcast %493 : f32 to vector<16x22xf32>
    %495 = arith.mulf %488, %494 : vector<16x22xf32>
    %496 = arith.addf %478, %495 : vector<16x22xf32>
    %c110 = arith.constant 110 : index
    %497 = memref.load %arg2[%c110] : memref<112xf32, #tpu.memory_space<smem>>
    %498 = vector.broadcast %497 : f32 to vector<16x22xf32>
    %499 = arith.mulf %488, %498 : vector<16x22xf32>
    %500 = arith.addf %482, %499 : vector<16x22xf32>
    %c111 = arith.constant 111 : index
    %501 = memref.load %arg2[%c111] : memref<112xf32, #tpu.memory_space<smem>>
    %502 = vector.broadcast %501 : f32 to vector<16x22xf32>
    %503 = arith.mulf %488, %502 : vector<16x22xf32>
    %504 = arith.addf %486, %503 : vector<16x22xf32>
    %c0_94 = arith.constant 0 : index
    %c0_95 = arith.constant 0 : index
    %c0_96 = arith.constant 0 : index
    %505 = vector.load %arg12[%c0_94, %c0_95, %c0_96] : memref<4x22x22xf32, #tpu.memory_space<vmem>>, vector<1x16x22xf32>
    %506 = vector.shape_cast %505 : vector<1x16x22xf32> to vector<16x22xf32>
    %507 = vector.shape_cast %492 : vector<16x22xf32> to vector<1x16x22xf32>
    tpu.vector_store %arg12[%c0_94, %c0_95, %c0_96], %507 {strides = array<i32>} : memref<4x22x22xf32, #tpu.memory_space<vmem>>, vector<1x16x22xf32>,
    %c0_97 = arith.constant 0 : index
    %c0_98 = arith.constant 0 : index
    %c3_99 = arith.constant 3 : index
    %508 = vector.load %arg12[%c0_97, %c0_98, %c3_99] : memref<4x22x22xf32, #tpu.memory_space<vmem>>, vector<1x16x16xf32>
    %509 = vector.shape_cast %508 : vector<1x16x16xf32> to vector<16x16xf32>
    %c0_100 = arith.constant 0 : index
    %510 = memref.load %arg3[%c0_100] : memref<4xf32, #tpu.memory_space<smem>>
    %511 = vector.broadcast %510 : f32 to vector<16x16xf32>
    %512 = arith.addf %509, %511 : vector<16x16xf32>
    %c0_101 = arith.constant 0 : index
    %c0_102 = arith.constant 0 : index
    %c3_103 = arith.constant 3 : index
    %513 = vector.load %arg12[%c0_101, %c0_102, %c3_103] : memref<4x22x22xf32, #tpu.memory_space<vmem>>, vector<1x16x16xf32>
    %514 = vector.shape_cast %513 : vector<1x16x16xf32> to vector<16x16xf32>
    %515 = vector.shape_cast %512 : vector<16x16xf32> to vector<1x16x16xf32>
    tpu.vector_store %arg12[%c0_101, %c0_102, %c3_103], %515 {strides = array<i32>} : memref<4x22x22xf32, #tpu.memory_space<vmem>>, vector<1x16x16xf32>,
    %c1_104 = arith.constant 1 : index
    %c0_105 = arith.constant 0 : index
    %c0_106 = arith.constant 0 : index
    %516 = vector.load %arg12[%c1_104, %c0_105, %c0_106] : memref<4x22x22xf32, #tpu.memory_space<vmem>>, vector<1x16x22xf32>
    %517 = vector.shape_cast %516 : vector<1x16x22xf32> to vector<16x22xf32>
    %518 = vector.shape_cast %496 : vector<16x22xf32> to vector<1x16x22xf32>
    tpu.vector_store %arg12[%c1_104, %c0_105, %c0_106], %518 {strides = array<i32>} : memref<4x22x22xf32, #tpu.memory_space<vmem>>, vector<1x16x22xf32>,
    %c1_107 = arith.constant 1 : index
    %c0_108 = arith.constant 0 : index
    %c3_109 = arith.constant 3 : index
    %519 = vector.load %arg12[%c1_107, %c0_108, %c3_109] : memref<4x22x22xf32, #tpu.memory_space<vmem>>, vector<1x16x16xf32>
    %520 = vector.shape_cast %519 : vector<1x16x16xf32> to vector<16x16xf32>
    %c1_110 = arith.constant 1 : index
    %521 = memref.load %arg3[%c1_110] : memref<4xf32, #tpu.memory_space<smem>>
    %522 = vector.broadcast %521 : f32 to vector<16x16xf32>
    %523 = arith.addf %520, %522 : vector<16x16xf32>
    %c1_111 = arith.constant 1 : index
    %c0_112 = arith.constant 0 : index
    %c3_113 = arith.constant 3 : index
    %524 = vector.load %arg12[%c1_111, %c0_112, %c3_113] : memref<4x22x22xf32, #tpu.memory_space<vmem>>, vector<1x16x16xf32>
    %525 = vector.shape_cast %524 : vector<1x16x16xf32> to vector<16x16xf32>
    %526 = vector.shape_cast %523 : vector<16x16xf32> to vector<1x16x16xf32>
    tpu.vector_store %arg12[%c1_111, %c0_112, %c3_113], %526 {strides = array<i32>} : memref<4x22x22xf32, #tpu.memory_space<vmem>>, vector<1x16x16xf32>,
    %c2_114 = arith.constant 2 : index
    %c0_115 = arith.constant 0 : index
    %c0_116 = arith.constant 0 : index
    %527 = vector.load %arg12[%c2_114, %c0_115, %c0_116] : memref<4x22x22xf32, #tpu.memory_space<vmem>>, vector<1x16x22xf32>
    %528 = vector.shape_cast %527 : vector<1x16x22xf32> to vector<16x22xf32>
    %529 = vector.shape_cast %500 : vector<16x22xf32> to vector<1x16x22xf32>
    tpu.vector_store %arg12[%c2_114, %c0_115, %c0_116], %529 {strides = array<i32>} : memref<4x22x22xf32, #tpu.memory_space<vmem>>, vector<1x16x22xf32>,
    %c2_117 = arith.constant 2 : index
    %c0_118 = arith.constant 0 : index
    %c3_119 = arith.constant 3 : index
    %530 = vector.load %arg12[%c2_117, %c0_118, %c3_119] : memref<4x22x22xf32, #tpu.memory_space<vmem>>, vector<1x16x16xf32>
    %531 = vector.shape_cast %530 : vector<1x16x16xf32> to vector<16x16xf32>
    %c2_120 = arith.constant 2 : index
    %532 = memref.load %arg3[%c2_120] : memref<4xf32, #tpu.memory_space<smem>>
    %533 = vector.broadcast %532 : f32 to vector<16x16xf32>
    %534 = arith.addf %531, %533 : vector<16x16xf32>
    %c2_121 = arith.constant 2 : index
    %c0_122 = arith.constant 0 : index
    %c3_123 = arith.constant 3 : index
    %535 = vector.load %arg12[%c2_121, %c0_122, %c3_123] : memref<4x22x22xf32, #tpu.memory_space<vmem>>, vector<1x16x16xf32>
    %536 = vector.shape_cast %535 : vector<1x16x16xf32> to vector<16x16xf32>
    %537 = vector.shape_cast %534 : vector<16x16xf32> to vector<1x16x16xf32>
    tpu.vector_store %arg12[%c2_121, %c0_122, %c3_123], %537 {strides = array<i32>} : memref<4x22x22xf32, #tpu.memory_space<vmem>>, vector<1x16x16xf32>,
    %c3_124 = arith.constant 3 : index
    %c0_125 = arith.constant 0 : index
    %c0_126 = arith.constant 0 : index
    %538 = vector.load %arg12[%c3_124, %c0_125, %c0_126] : memref<4x22x22xf32, #tpu.memory_space<vmem>>, vector<1x16x22xf32>
    %539 = vector.shape_cast %538 : vector<1x16x22xf32> to vector<16x22xf32>
    %540 = vector.shape_cast %504 : vector<16x22xf32> to vector<1x16x22xf32>
    tpu.vector_store %arg12[%c3_124, %c0_125, %c0_126], %540 {strides = array<i32>} : memref<4x22x22xf32, #tpu.memory_space<vmem>>, vector<1x16x22xf32>,
    %c3_127 = arith.constant 3 : index
    %c0_128 = arith.constant 0 : index
    %c3_129 = arith.constant 3 : index
    %541 = vector.load %arg12[%c3_127, %c0_128, %c3_129] : memref<4x22x22xf32, #tpu.memory_space<vmem>>, vector<1x16x16xf32>
    %542 = vector.shape_cast %541 : vector<1x16x16xf32> to vector<16x16xf32>
    %c3_130 = arith.constant 3 : index
    %543 = memref.load %arg3[%c3_130] : memref<4xf32, #tpu.memory_space<smem>>
    %544 = vector.broadcast %543 : f32 to vector<16x16xf32>
    %545 = arith.addf %542, %544 : vector<16x16xf32>
    %c3_131 = arith.constant 3 : index
    %c0_132 = arith.constant 0 : index
    %c3_133 = arith.constant 3 : index
    %546 = vector.load %arg12[%c3_131, %c0_132, %c3_133] : memref<4x22x22xf32, #tpu.memory_space<vmem>>, vector<1x16x16xf32>
    %547 = vector.shape_cast %546 : vector<1x16x16xf32> to vector<16x16xf32>
    %548 = vector.shape_cast %545 : vector<16x16xf32> to vector<1x16x16xf32>
    tpu.vector_store %arg12[%c3_131, %c0_132, %c3_133], %548 {strides = array<i32>} : memref<4x22x22xf32, #tpu.memory_space<vmem>>, vector<1x16x16xf32>,
    %c0_134 = arith.constant 0 : index
    %549 = memref.load %arg5[%c0_134] : memref<4xf32, #tpu.memory_space<smem>>
    %550 = vector.broadcast %549 : f32 to vector<16x16xf32>
    %c1_135 = arith.constant 1 : index
    %551 = memref.load %arg5[%c1_135] : memref<4xf32, #tpu.memory_space<smem>>
    %552 = vector.broadcast %551 : f32 to vector<16x16xf32>
    %c2_136 = arith.constant 2 : index
    %553 = memref.load %arg5[%c2_136] : memref<4xf32, #tpu.memory_space<smem>>
    %554 = vector.broadcast %553 : f32 to vector<16x16xf32>
    %c3_137 = arith.constant 3 : index
    %555 = memref.load %arg5[%c3_137] : memref<4xf32, #tpu.memory_space<smem>>
    %556 = vector.broadcast %555 : f32 to vector<16x16xf32>
    %c0_138 = arith.constant 0 : index
    %c0_139 = arith.constant 0 : index
    %c0_140 = arith.constant 0 : index
    %557 = vector.load %arg12[%c0_138, %c0_139, %c0_140] : memref<4x22x22xf32, #tpu.memory_space<vmem>>, vector<1x16x16xf32>
    %558 = vector.shape_cast %557 : vector<1x16x16xf32> to vector<16x16xf32>
    %c0_141 = arith.constant 0 : index
    %559 = memref.load %arg4[%c0_141] : memref<112xf32, #tpu.memory_space<smem>>
    %560 = vector.broadcast %559 : f32 to vector<16x16xf32>
    %561 = arith.mulf %558, %560 : vector<16x16xf32>
    %562 = arith.addf %550, %561 : vector<16x16xf32>
    %c1_142 = arith.constant 1 : index
    %563 = memref.load %arg4[%c1_142] : memref<112xf32, #tpu.memory_space<smem>>
    %564 = vector.broadcast %563 : f32 to vector<16x16xf32>
    %565 = arith.mulf %558, %564 : vector<16x16xf32>
    %566 = arith.addf %552, %565 : vector<16x16xf32>
    %c2_143 = arith.constant 2 : index
    %567 = memref.load %arg4[%c2_143] : memref<112xf32, #tpu.memory_space<smem>>
    %568 = vector.broadcast %567 : f32 to vector<16x16xf32>
    %569 = arith.mulf %558, %568 : vector<16x16xf32>
    %570 = arith.addf %554, %569 : vector<16x16xf32>
    %c3_144 = arith.constant 3 : index
    %571 = memref.load %arg4[%c3_144] : memref<112xf32, #tpu.memory_space<smem>>
    %572 = vector.broadcast %571 : f32 to vector<16x16xf32>
    %573 = arith.mulf %558, %572 : vector<16x16xf32>
    %574 = arith.addf %556, %573 : vector<16x16xf32>
    %c1_145 = arith.constant 1 : index
    %c0_146 = arith.constant 0 : index
    %c0_147 = arith.constant 0 : index
    %575 = vector.load %arg12[%c1_145, %c0_146, %c0_147] : memref<4x22x22xf32, #tpu.memory_space<vmem>>, vector<1x16x16xf32>
    %576 = vector.shape_cast %575 : vector<1x16x16xf32> to vector<16x16xf32>
    %c4_148 = arith.constant 4 : index
    %577 = memref.load %arg4[%c4_148] : memref<112xf32, #tpu.memory_space<smem>>
    %578 = vector.broadcast %577 : f32 to vector<16x16xf32>
    %579 = arith.mulf %576, %578 : vector<16x16xf32>
    %580 = arith.addf %562, %579 : vector<16x16xf32>
    %c5_149 = arith.constant 5 : index
    %581 = memref.load %arg4[%c5_149] : memref<112xf32, #tpu.memory_space<smem>>
    %582 = vector.broadcast %581 : f32 to vector<16x16xf32>
    %583 = arith.mulf %576, %582 : vector<16x16xf32>
    %584 = arith.addf %566, %583 : vector<16x16xf32>
    %c6_150 = arith.constant 6 : index
    %585 = memref.load %arg4[%c6_150] : memref<112xf32, #tpu.memory_space<smem>>
    %586 = vector.broadcast %585 : f32 to vector<16x16xf32>
    %587 = arith.mulf %576, %586 : vector<16x16xf32>
    %588 = arith.addf %570, %587 : vector<16x16xf32>
    %c7_151 = arith.constant 7 : index
    %589 = memref.load %arg4[%c7_151] : memref<112xf32, #tpu.memory_space<smem>>
    %590 = vector.broadcast %589 : f32 to vector<16x16xf32>
    %591 = arith.mulf %576, %590 : vector<16x16xf32>
    %592 = arith.addf %574, %591 : vector<16x16xf32>
    %c2_152 = arith.constant 2 : index
    %c0_153 = arith.constant 0 : index
    %c0_154 = arith.constant 0 : index
    %593 = vector.load %arg12[%c2_152, %c0_153, %c0_154] : memref<4x22x22xf32, #tpu.memory_space<vmem>>, vector<1x16x16xf32>
    %594 = vector.shape_cast %593 : vector<1x16x16xf32> to vector<16x16xf32>
    %c8_155 = arith.constant 8 : index
    %595 = memref.load %arg4[%c8_155] : memref<112xf32, #tpu.memory_space<smem>>
    %596 = vector.broadcast %595 : f32 to vector<16x16xf32>
    %597 = arith.mulf %594, %596 : vector<16x16xf32>
    %598 = arith.addf %580, %597 : vector<16x16xf32>
    %c9_156 = arith.constant 9 : index
    %599 = memref.load %arg4[%c9_156] : memref<112xf32, #tpu.memory_space<smem>>
    %600 = vector.broadcast %599 : f32 to vector<16x16xf32>
    %601 = arith.mulf %594, %600 : vector<16x16xf32>
    %602 = arith.addf %584, %601 : vector<16x16xf32>
    %c10_157 = arith.constant 10 : index
    %603 = memref.load %arg4[%c10_157] : memref<112xf32, #tpu.memory_space<smem>>
    %604 = vector.broadcast %603 : f32 to vector<16x16xf32>
    %605 = arith.mulf %594, %604 : vector<16x16xf32>
    %606 = arith.addf %588, %605 : vector<16x16xf32>
    %c11_158 = arith.constant 11 : index
    %607 = memref.load %arg4[%c11_158] : memref<112xf32, #tpu.memory_space<smem>>
    %608 = vector.broadcast %607 : f32 to vector<16x16xf32>
    %609 = arith.mulf %594, %608 : vector<16x16xf32>
    %610 = arith.addf %592, %609 : vector<16x16xf32>
    %c3_159 = arith.constant 3 : index
    %c0_160 = arith.constant 0 : index
    %c0_161 = arith.constant 0 : index
    %611 = vector.load %arg12[%c3_159, %c0_160, %c0_161] : memref<4x22x22xf32, #tpu.memory_space<vmem>>, vector<1x16x16xf32>
    %612 = vector.shape_cast %611 : vector<1x16x16xf32> to vector<16x16xf32>
    %c12_162 = arith.constant 12 : index
    %613 = memref.load %arg4[%c12_162] : memref<112xf32, #tpu.memory_space<smem>>
    %614 = vector.broadcast %613 : f32 to vector<16x16xf32>
    %615 = arith.mulf %612, %614 : vector<16x16xf32>
    %616 = arith.addf %598, %615 : vector<16x16xf32>
    %c13_163 = arith.constant 13 : index
    %617 = memref.load %arg4[%c13_163] : memref<112xf32, #tpu.memory_space<smem>>
    %618 = vector.broadcast %617 : f32 to vector<16x16xf32>
    %619 = arith.mulf %612, %618 : vector<16x16xf32>
    %620 = arith.addf %602, %619 : vector<16x16xf32>
    %c14_164 = arith.constant 14 : index
    %621 = memref.load %arg4[%c14_164] : memref<112xf32, #tpu.memory_space<smem>>
    %622 = vector.broadcast %621 : f32 to vector<16x16xf32>
    %623 = arith.mulf %612, %622 : vector<16x16xf32>
    %624 = arith.addf %606, %623 : vector<16x16xf32>
    %c15_165 = arith.constant 15 : index
    %625 = memref.load %arg4[%c15_165] : memref<112xf32, #tpu.memory_space<smem>>
    %626 = vector.broadcast %625 : f32 to vector<16x16xf32>
    %627 = arith.mulf %612, %626 : vector<16x16xf32>
    %628 = arith.addf %610, %627 : vector<16x16xf32>
    %c0_166 = arith.constant 0 : index
    %c0_167 = arith.constant 0 : index
    %c1_168 = arith.constant 1 : index
    %629 = vector.load %arg12[%c0_166, %c0_167, %c1_168] : memref<4x22x22xf32, #tpu.memory_space<vmem>>, vector<1x16x16xf32>
    %630 = vector.shape_cast %629 : vector<1x16x16xf32> to vector<16x16xf32>
    %c16_169 = arith.constant 16 : index
    %631 = memref.load %arg4[%c16_169] : memref<112xf32, #tpu.memory_space<smem>>
    %632 = vector.broadcast %631 : f32 to vector<16x16xf32>
    %633 = arith.mulf %630, %632 : vector<16x16xf32>
    %634 = arith.addf %616, %633 : vector<16x16xf32>
    %c17_170 = arith.constant 17 : index
    %635 = memref.load %arg4[%c17_170] : memref<112xf32, #tpu.memory_space<smem>>
    %636 = vector.broadcast %635 : f32 to vector<16x16xf32>
    %637 = arith.mulf %630, %636 : vector<16x16xf32>
    %638 = arith.addf %620, %637 : vector<16x16xf32>
    %c18_171 = arith.constant 18 : index
    %639 = memref.load %arg4[%c18_171] : memref<112xf32, #tpu.memory_space<smem>>
    %640 = vector.broadcast %639 : f32 to vector<16x16xf32>
    %641 = arith.mulf %630, %640 : vector<16x16xf32>
    %642 = arith.addf %624, %641 : vector<16x16xf32>
    %c19_172 = arith.constant 19 : index
    %643 = memref.load %arg4[%c19_172] : memref<112xf32, #tpu.memory_space<smem>>
    %644 = vector.broadcast %643 : f32 to vector<16x16xf32>
    %645 = arith.mulf %630, %644 : vector<16x16xf32>
    %646 = arith.addf %628, %645 : vector<16x16xf32>
    %c1_173 = arith.constant 1 : index
    %c0_174 = arith.constant 0 : index
    %c1_175 = arith.constant 1 : index
    %647 = vector.load %arg12[%c1_173, %c0_174, %c1_175] : memref<4x22x22xf32, #tpu.memory_space<vmem>>, vector<1x16x16xf32>
    %648 = vector.shape_cast %647 : vector<1x16x16xf32> to vector<16x16xf32>
    %c20_176 = arith.constant 20 : index
    %649 = memref.load %arg4[%c20_176] : memref<112xf32, #tpu.memory_space<smem>>
    %650 = vector.broadcast %649 : f32 to vector<16x16xf32>
    %651 = arith.mulf %648, %650 : vector<16x16xf32>
    %652 = arith.addf %634, %651 : vector<16x16xf32>
    %c21_177 = arith.constant 21 : index
    %653 = memref.load %arg4[%c21_177] : memref<112xf32, #tpu.memory_space<smem>>
    %654 = vector.broadcast %653 : f32 to vector<16x16xf32>
    %655 = arith.mulf %648, %654 : vector<16x16xf32>
    %656 = arith.addf %638, %655 : vector<16x16xf32>
    %c22_178 = arith.constant 22 : index
    %657 = memref.load %arg4[%c22_178] : memref<112xf32, #tpu.memory_space<smem>>
    %658 = vector.broadcast %657 : f32 to vector<16x16xf32>
    %659 = arith.mulf %648, %658 : vector<16x16xf32>
    %660 = arith.addf %642, %659 : vector<16x16xf32>
    %c23_179 = arith.constant 23 : index
    %661 = memref.load %arg4[%c23_179] : memref<112xf32, #tpu.memory_space<smem>>
    %662 = vector.broadcast %661 : f32 to vector<16x16xf32>
    %663 = arith.mulf %648, %662 : vector<16x16xf32>
    %664 = arith.addf %646, %663 : vector<16x16xf32>
    %c2_180 = arith.constant 2 : index
    %c0_181 = arith.constant 0 : index
    %c1_182 = arith.constant 1 : index
    %665 = vector.load %arg12[%c2_180, %c0_181, %c1_182] : memref<4x22x22xf32, #tpu.memory_space<vmem>>, vector<1x16x16xf32>
    %666 = vector.shape_cast %665 : vector<1x16x16xf32> to vector<16x16xf32>
    %c24_183 = arith.constant 24 : index
    %667 = memref.load %arg4[%c24_183] : memref<112xf32, #tpu.memory_space<smem>>
    %668 = vector.broadcast %667 : f32 to vector<16x16xf32>
    %669 = arith.mulf %666, %668 : vector<16x16xf32>
    %670 = arith.addf %652, %669 : vector<16x16xf32>
    %c25_184 = arith.constant 25 : index
    %671 = memref.load %arg4[%c25_184] : memref<112xf32, #tpu.memory_space<smem>>
    %672 = vector.broadcast %671 : f32 to vector<16x16xf32>
    %673 = arith.mulf %666, %672 : vector<16x16xf32>
    %674 = arith.addf %656, %673 : vector<16x16xf32>
    %c26_185 = arith.constant 26 : index
    %675 = memref.load %arg4[%c26_185] : memref<112xf32, #tpu.memory_space<smem>>
    %676 = vector.broadcast %675 : f32 to vector<16x16xf32>
    %677 = arith.mulf %666, %676 : vector<16x16xf32>
    %678 = arith.addf %660, %677 : vector<16x16xf32>
    %c27_186 = arith.constant 27 : index
    %679 = memref.load %arg4[%c27_186] : memref<112xf32, #tpu.memory_space<smem>>
    %680 = vector.broadcast %679 : f32 to vector<16x16xf32>
    %681 = arith.mulf %666, %680 : vector<16x16xf32>
    %682 = arith.addf %664, %681 : vector<16x16xf32>
    %c3_187 = arith.constant 3 : index
    %c0_188 = arith.constant 0 : index
    %c1_189 = arith.constant 1 : index
    %683 = vector.load %arg12[%c3_187, %c0_188, %c1_189] : memref<4x22x22xf32, #tpu.memory_space<vmem>>, vector<1x16x16xf32>
    %684 = vector.shape_cast %683 : vector<1x16x16xf32> to vector<16x16xf32>
    %c28_190 = arith.constant 28 : index
    %685 = memref.load %arg4[%c28_190] : memref<112xf32, #tpu.memory_space<smem>>
    %686 = vector.broadcast %685 : f32 to vector<16x16xf32>
    %687 = arith.mulf %684, %686 : vector<16x16xf32>
    %688 = arith.addf %670, %687 : vector<16x16xf32>
    %c29_191 = arith.constant 29 : index
    %689 = memref.load %arg4[%c29_191] : memref<112xf32, #tpu.memory_space<smem>>
    %690 = vector.broadcast %689 : f32 to vector<16x16xf32>
    %691 = arith.mulf %684, %690 : vector<16x16xf32>
    %692 = arith.addf %674, %691 : vector<16x16xf32>
    %c30_192 = arith.constant 30 : index
    %693 = memref.load %arg4[%c30_192] : memref<112xf32, #tpu.memory_space<smem>>
    %694 = vector.broadcast %693 : f32 to vector<16x16xf32>
    %695 = arith.mulf %684, %694 : vector<16x16xf32>
    %696 = arith.addf %678, %695 : vector<16x16xf32>
    %c31_193 = arith.constant 31 : index
    %697 = memref.load %arg4[%c31_193] : memref<112xf32, #tpu.memory_space<smem>>
    %698 = vector.broadcast %697 : f32 to vector<16x16xf32>
    %699 = arith.mulf %684, %698 : vector<16x16xf32>
    %700 = arith.addf %682, %699 : vector<16x16xf32>
    %c0_194 = arith.constant 0 : index
    %c0_195 = arith.constant 0 : index
    %c2_196 = arith.constant 2 : index
    %701 = vector.load %arg12[%c0_194, %c0_195, %c2_196] : memref<4x22x22xf32, #tpu.memory_space<vmem>>, vector<1x16x16xf32>
    %702 = vector.shape_cast %701 : vector<1x16x16xf32> to vector<16x16xf32>
    %c32_197 = arith.constant 32 : index
    %703 = memref.load %arg4[%c32_197] : memref<112xf32, #tpu.memory_space<smem>>
    %704 = vector.broadcast %703 : f32 to vector<16x16xf32>
    %705 = arith.mulf %702, %704 : vector<16x16xf32>
    %706 = arith.addf %688, %705 : vector<16x16xf32>
    %c33_198 = arith.constant 33 : index
    %707 = memref.load %arg4[%c33_198] : memref<112xf32, #tpu.memory_space<smem>>
    %708 = vector.broadcast %707 : f32 to vector<16x16xf32>
    %709 = arith.mulf %702, %708 : vector<16x16xf32>
    %710 = arith.addf %692, %709 : vector<16x16xf32>
    %c34_199 = arith.constant 34 : index
    %711 = memref.load %arg4[%c34_199] : memref<112xf32, #tpu.memory_space<smem>>
    %712 = vector.broadcast %711 : f32 to vector<16x16xf32>
    %713 = arith.mulf %702, %712 : vector<16x16xf32>
    %714 = arith.addf %696, %713 : vector<16x16xf32>
    %c35_200 = arith.constant 35 : index
    %715 = memref.load %arg4[%c35_200] : memref<112xf32, #tpu.memory_space<smem>>
    %716 = vector.broadcast %715 : f32 to vector<16x16xf32>
    %717 = arith.mulf %702, %716 : vector<16x16xf32>
    %718 = arith.addf %700, %717 : vector<16x16xf32>
    %c1_201 = arith.constant 1 : index
    %c0_202 = arith.constant 0 : index
    %c2_203 = arith.constant 2 : index
    %719 = vector.load %arg12[%c1_201, %c0_202, %c2_203] : memref<4x22x22xf32, #tpu.memory_space<vmem>>, vector<1x16x16xf32>
    %720 = vector.shape_cast %719 : vector<1x16x16xf32> to vector<16x16xf32>
    %c36_204 = arith.constant 36 : index
    %721 = memref.load %arg4[%c36_204] : memref<112xf32, #tpu.memory_space<smem>>
    %722 = vector.broadcast %721 : f32 to vector<16x16xf32>
    %723 = arith.mulf %720, %722 : vector<16x16xf32>
    %724 = arith.addf %706, %723 : vector<16x16xf32>
    %c37_205 = arith.constant 37 : index
    %725 = memref.load %arg4[%c37_205] : memref<112xf32, #tpu.memory_space<smem>>
    %726 = vector.broadcast %725 : f32 to vector<16x16xf32>
    %727 = arith.mulf %720, %726 : vector<16x16xf32>
    %728 = arith.addf %710, %727 : vector<16x16xf32>
    %c38_206 = arith.constant 38 : index
    %729 = memref.load %arg4[%c38_206] : memref<112xf32, #tpu.memory_space<smem>>
    %730 = vector.broadcast %729 : f32 to vector<16x16xf32>
    %731 = arith.mulf %720, %730 : vector<16x16xf32>
    %732 = arith.addf %714, %731 : vector<16x16xf32>
    %c39_207 = arith.constant 39 : index
    %733 = memref.load %arg4[%c39_207] : memref<112xf32, #tpu.memory_space<smem>>
    %734 = vector.broadcast %733 : f32 to vector<16x16xf32>
    %735 = arith.mulf %720, %734 : vector<16x16xf32>
    %736 = arith.addf %718, %735 : vector<16x16xf32>
    %c2_208 = arith.constant 2 : index
    %c0_209 = arith.constant 0 : index
    %c2_210 = arith.constant 2 : index
    %737 = vector.load %arg12[%c2_208, %c0_209, %c2_210] : memref<4x22x22xf32, #tpu.memory_space<vmem>>, vector<1x16x16xf32>
    %738 = vector.shape_cast %737 : vector<1x16x16xf32> to vector<16x16xf32>
    %c40_211 = arith.constant 40 : index
    %739 = memref.load %arg4[%c40_211] : memref<112xf32, #tpu.memory_space<smem>>
    %740 = vector.broadcast %739 : f32 to vector<16x16xf32>
    %741 = arith.mulf %738, %740 : vector<16x16xf32>
    %742 = arith.addf %724, %741 : vector<16x16xf32>
    %c41_212 = arith.constant 41 : index
    %743 = memref.load %arg4[%c41_212] : memref<112xf32, #tpu.memory_space<smem>>
    %744 = vector.broadcast %743 : f32 to vector<16x16xf32>
    %745 = arith.mulf %738, %744 : vector<16x16xf32>
    %746 = arith.addf %728, %745 : vector<16x16xf32>
    %c42_213 = arith.constant 42 : index
    %747 = memref.load %arg4[%c42_213] : memref<112xf32, #tpu.memory_space<smem>>
    %748 = vector.broadcast %747 : f32 to vector<16x16xf32>
    %749 = arith.mulf %738, %748 : vector<16x16xf32>
    %750 = arith.addf %732, %749 : vector<16x16xf32>
    %c43_214 = arith.constant 43 : index
    %751 = memref.load %arg4[%c43_214] : memref<112xf32, #tpu.memory_space<smem>>
    %752 = vector.broadcast %751 : f32 to vector<16x16xf32>
    %753 = arith.mulf %738, %752 : vector<16x16xf32>
    %754 = arith.addf %736, %753 : vector<16x16xf32>
    %c3_215 = arith.constant 3 : index
    %c0_216 = arith.constant 0 : index
    %c2_217 = arith.constant 2 : index
    %755 = vector.load %arg12[%c3_215, %c0_216, %c2_217] : memref<4x22x22xf32, #tpu.memory_space<vmem>>, vector<1x16x16xf32>
    %756 = vector.shape_cast %755 : vector<1x16x16xf32> to vector<16x16xf32>
    %c44_218 = arith.constant 44 : index
    %757 = memref.load %arg4[%c44_218] : memref<112xf32, #tpu.memory_space<smem>>
    %758 = vector.broadcast %757 : f32 to vector<16x16xf32>
    %759 = arith.mulf %756, %758 : vector<16x16xf32>
    %760 = arith.addf %742, %759 : vector<16x16xf32>
    %c45_219 = arith.constant 45 : index
    %761 = memref.load %arg4[%c45_219] : memref<112xf32, #tpu.memory_space<smem>>
    %762 = vector.broadcast %761 : f32 to vector<16x16xf32>
    %763 = arith.mulf %756, %762 : vector<16x16xf32>
    %764 = arith.addf %746, %763 : vector<16x16xf32>
    %c46_220 = arith.constant 46 : index
    %765 = memref.load %arg4[%c46_220] : memref<112xf32, #tpu.memory_space<smem>>
    %766 = vector.broadcast %765 : f32 to vector<16x16xf32>
    %767 = arith.mulf %756, %766 : vector<16x16xf32>
    %768 = arith.addf %750, %767 : vector<16x16xf32>
    %c47_221 = arith.constant 47 : index
    %769 = memref.load %arg4[%c47_221] : memref<112xf32, #tpu.memory_space<smem>>
    %770 = vector.broadcast %769 : f32 to vector<16x16xf32>
    %771 = arith.mulf %756, %770 : vector<16x16xf32>
    %772 = arith.addf %754, %771 : vector<16x16xf32>
    %c0_222 = arith.constant 0 : index
    %c0_223 = arith.constant 0 : index
    %c3_224 = arith.constant 3 : index
    %773 = vector.load %arg12[%c0_222, %c0_223, %c3_224] : memref<4x22x22xf32, #tpu.memory_space<vmem>>, vector<1x16x16xf32>
    %774 = vector.shape_cast %773 : vector<1x16x16xf32> to vector<16x16xf32>
    %c48_225 = arith.constant 48 : index
    %775 = memref.load %arg4[%c48_225] : memref<112xf32, #tpu.memory_space<smem>>
    %776 = vector.broadcast %775 : f32 to vector<16x16xf32>
    %777 = arith.mulf %774, %776 : vector<16x16xf32>
    %778 = arith.addf %760, %777 : vector<16x16xf32>
    %c49_226 = arith.constant 49 : index
    %779 = memref.load %arg4[%c49_226] : memref<112xf32, #tpu.memory_space<smem>>
    %780 = vector.broadcast %779 : f32 to vector<16x16xf32>
    %781 = arith.mulf %774, %780 : vector<16x16xf32>
    %782 = arith.addf %764, %781 : vector<16x16xf32>
    %c50_227 = arith.constant 50 : index
    %783 = memref.load %arg4[%c50_227] : memref<112xf32, #tpu.memory_space<smem>>
    %784 = vector.broadcast %783 : f32 to vector<16x16xf32>
    %785 = arith.mulf %774, %784 : vector<16x16xf32>
    %786 = arith.addf %768, %785 : vector<16x16xf32>
    %c51_228 = arith.constant 51 : index
    %787 = memref.load %arg4[%c51_228] : memref<112xf32, #tpu.memory_space<smem>>
    %788 = vector.broadcast %787 : f32 to vector<16x16xf32>
    %789 = arith.mulf %774, %788 : vector<16x16xf32>
    %790 = arith.addf %772, %789 : vector<16x16xf32>
    %c1_229 = arith.constant 1 : index
    %c0_230 = arith.constant 0 : index
    %c3_231 = arith.constant 3 : index
    %791 = vector.load %arg12[%c1_229, %c0_230, %c3_231] : memref<4x22x22xf32, #tpu.memory_space<vmem>>, vector<1x16x16xf32>
    %792 = vector.shape_cast %791 : vector<1x16x16xf32> to vector<16x16xf32>
    %c52_232 = arith.constant 52 : index
    %793 = memref.load %arg4[%c52_232] : memref<112xf32, #tpu.memory_space<smem>>
    %794 = vector.broadcast %793 : f32 to vector<16x16xf32>
    %795 = arith.mulf %792, %794 : vector<16x16xf32>
    %796 = arith.addf %778, %795 : vector<16x16xf32>
    %c53_233 = arith.constant 53 : index
    %797 = memref.load %arg4[%c53_233] : memref<112xf32, #tpu.memory_space<smem>>
    %798 = vector.broadcast %797 : f32 to vector<16x16xf32>
    %799 = arith.mulf %792, %798 : vector<16x16xf32>
    %800 = arith.addf %782, %799 : vector<16x16xf32>
    %c54_234 = arith.constant 54 : index
    %801 = memref.load %arg4[%c54_234] : memref<112xf32, #tpu.memory_space<smem>>
    %802 = vector.broadcast %801 : f32 to vector<16x16xf32>
    %803 = arith.mulf %792, %802 : vector<16x16xf32>
    %804 = arith.addf %786, %803 : vector<16x16xf32>
    %c55_235 = arith.constant 55 : index
    %805 = memref.load %arg4[%c55_235] : memref<112xf32, #tpu.memory_space<smem>>
    %806 = vector.broadcast %805 : f32 to vector<16x16xf32>
    %807 = arith.mulf %792, %806 : vector<16x16xf32>
    %808 = arith.addf %790, %807 : vector<16x16xf32>
    %c2_236 = arith.constant 2 : index
    %c0_237 = arith.constant 0 : index
    %c3_238 = arith.constant 3 : index
    %809 = vector.load %arg12[%c2_236, %c0_237, %c3_238] : memref<4x22x22xf32, #tpu.memory_space<vmem>>, vector<1x16x16xf32>
    %810 = vector.shape_cast %809 : vector<1x16x16xf32> to vector<16x16xf32>
    %c56_239 = arith.constant 56 : index
    %811 = memref.load %arg4[%c56_239] : memref<112xf32, #tpu.memory_space<smem>>
    %812 = vector.broadcast %811 : f32 to vector<16x16xf32>
    %813 = arith.mulf %810, %812 : vector<16x16xf32>
    %814 = arith.addf %796, %813 : vector<16x16xf32>
    %c57_240 = arith.constant 57 : index
    %815 = memref.load %arg4[%c57_240] : memref<112xf32, #tpu.memory_space<smem>>
    %816 = vector.broadcast %815 : f32 to vector<16x16xf32>
    %817 = arith.mulf %810, %816 : vector<16x16xf32>
    %818 = arith.addf %800, %817 : vector<16x16xf32>
    %c58_241 = arith.constant 58 : index
    %819 = memref.load %arg4[%c58_241] : memref<112xf32, #tpu.memory_space<smem>>
    %820 = vector.broadcast %819 : f32 to vector<16x16xf32>
    %821 = arith.mulf %810, %820 : vector<16x16xf32>
    %822 = arith.addf %804, %821 : vector<16x16xf32>
    %c59_242 = arith.constant 59 : index
    %823 = memref.load %arg4[%c59_242] : memref<112xf32, #tpu.memory_space<smem>>
    %824 = vector.broadcast %823 : f32 to vector<16x16xf32>
    %825 = arith.mulf %810, %824 : vector<16x16xf32>
    %826 = arith.addf %808, %825 : vector<16x16xf32>
    %c3_243 = arith.constant 3 : index
    %c0_244 = arith.constant 0 : index
    %c3_245 = arith.constant 3 : index
    %827 = vector.load %arg12[%c3_243, %c0_244, %c3_245] : memref<4x22x22xf32, #tpu.memory_space<vmem>>, vector<1x16x16xf32>
    %828 = vector.shape_cast %827 : vector<1x16x16xf32> to vector<16x16xf32>
    %c60_246 = arith.constant 60 : index
    %829 = memref.load %arg4[%c60_246] : memref<112xf32, #tpu.memory_space<smem>>
    %830 = vector.broadcast %829 : f32 to vector<16x16xf32>
    %831 = arith.mulf %828, %830 : vector<16x16xf32>
    %832 = arith.addf %814, %831 : vector<16x16xf32>
    %c61_247 = arith.constant 61 : index
    %833 = memref.load %arg4[%c61_247] : memref<112xf32, #tpu.memory_space<smem>>
    %834 = vector.broadcast %833 : f32 to vector<16x16xf32>
    %835 = arith.mulf %828, %834 : vector<16x16xf32>
    %836 = arith.addf %818, %835 : vector<16x16xf32>
    %c62_248 = arith.constant 62 : index
    %837 = memref.load %arg4[%c62_248] : memref<112xf32, #tpu.memory_space<smem>>
    %838 = vector.broadcast %837 : f32 to vector<16x16xf32>
    %839 = arith.mulf %828, %838 : vector<16x16xf32>
    %840 = arith.addf %822, %839 : vector<16x16xf32>
    %c63_249 = arith.constant 63 : index
    %841 = memref.load %arg4[%c63_249] : memref<112xf32, #tpu.memory_space<smem>>
    %842 = vector.broadcast %841 : f32 to vector<16x16xf32>
    %843 = arith.mulf %828, %842 : vector<16x16xf32>
    %844 = arith.addf %826, %843 : vector<16x16xf32>
    %c0_250 = arith.constant 0 : index
    %c0_251 = arith.constant 0 : index
    %c4_252 = arith.constant 4 : index
    %845 = vector.load %arg12[%c0_250, %c0_251, %c4_252] : memref<4x22x22xf32, #tpu.memory_space<vmem>>, vector<1x16x16xf32>
    %846 = vector.shape_cast %845 : vector<1x16x16xf32> to vector<16x16xf32>
    %c64_253 = arith.constant 64 : index
    %847 = memref.load %arg4[%c64_253] : memref<112xf32, #tpu.memory_space<smem>>
    %848 = vector.broadcast %847 : f32 to vector<16x16xf32>
    %849 = arith.mulf %846, %848 : vector<16x16xf32>
    %850 = arith.addf %832, %849 : vector<16x16xf32>
    %c65_254 = arith.constant 65 : index
    %851 = memref.load %arg4[%c65_254] : memref<112xf32, #tpu.memory_space<smem>>
    %852 = vector.broadcast %851 : f32 to vector<16x16xf32>
    %853 = arith.mulf %846, %852 : vector<16x16xf32>
    %854 = arith.addf %836, %853 : vector<16x16xf32>
    %c66_255 = arith.constant 66 : index
    %855 = memref.load %arg4[%c66_255] : memref<112xf32, #tpu.memory_space<smem>>
    %856 = vector.broadcast %855 : f32 to vector<16x16xf32>
    %857 = arith.mulf %846, %856 : vector<16x16xf32>
    %858 = arith.addf %840, %857 : vector<16x16xf32>
    %c67_256 = arith.constant 67 : index
    %859 = memref.load %arg4[%c67_256] : memref<112xf32, #tpu.memory_space<smem>>
    %860 = vector.broadcast %859 : f32 to vector<16x16xf32>
    %861 = arith.mulf %846, %860 : vector<16x16xf32>
    %862 = arith.addf %844, %861 : vector<16x16xf32>
    %c1_257 = arith.constant 1 : index
    %c0_258 = arith.constant 0 : index
    %c4_259 = arith.constant 4 : index
    %863 = vector.load %arg12[%c1_257, %c0_258, %c4_259] : memref<4x22x22xf32, #tpu.memory_space<vmem>>, vector<1x16x16xf32>
    %864 = vector.shape_cast %863 : vector<1x16x16xf32> to vector<16x16xf32>
    %c68_260 = arith.constant 68 : index
    %865 = memref.load %arg4[%c68_260] : memref<112xf32, #tpu.memory_space<smem>>
    %866 = vector.broadcast %865 : f32 to vector<16x16xf32>
    %867 = arith.mulf %864, %866 : vector<16x16xf32>
    %868 = arith.addf %850, %867 : vector<16x16xf32>
    %c69_261 = arith.constant 69 : index
    %869 = memref.load %arg4[%c69_261] : memref<112xf32, #tpu.memory_space<smem>>
    %870 = vector.broadcast %869 : f32 to vector<16x16xf32>
    %871 = arith.mulf %864, %870 : vector<16x16xf32>
    %872 = arith.addf %854, %871 : vector<16x16xf32>
    %c70_262 = arith.constant 70 : index
    %873 = memref.load %arg4[%c70_262] : memref<112xf32, #tpu.memory_space<smem>>
    %874 = vector.broadcast %873 : f32 to vector<16x16xf32>
    %875 = arith.mulf %864, %874 : vector<16x16xf32>
    %876 = arith.addf %858, %875 : vector<16x16xf32>
    %c71_263 = arith.constant 71 : index
    %877 = memref.load %arg4[%c71_263] : memref<112xf32, #tpu.memory_space<smem>>
    %878 = vector.broadcast %877 : f32 to vector<16x16xf32>
    %879 = arith.mulf %864, %878 : vector<16x16xf32>
    %880 = arith.addf %862, %879 : vector<16x16xf32>
    %c2_264 = arith.constant 2 : index
    %c0_265 = arith.constant 0 : index
    %c4_266 = arith.constant 4 : index
    %881 = vector.load %arg12[%c2_264, %c0_265, %c4_266] : memref<4x22x22xf32, #tpu.memory_space<vmem>>, vector<1x16x16xf32>
    %882 = vector.shape_cast %881 : vector<1x16x16xf32> to vector<16x16xf32>
    %c72_267 = arith.constant 72 : index
    %883 = memref.load %arg4[%c72_267] : memref<112xf32, #tpu.memory_space<smem>>
    %884 = vector.broadcast %883 : f32 to vector<16x16xf32>
    %885 = arith.mulf %882, %884 : vector<16x16xf32>
    %886 = arith.addf %868, %885 : vector<16x16xf32>
    %c73_268 = arith.constant 73 : index
    %887 = memref.load %arg4[%c73_268] : memref<112xf32, #tpu.memory_space<smem>>
    %888 = vector.broadcast %887 : f32 to vector<16x16xf32>
    %889 = arith.mulf %882, %888 : vector<16x16xf32>
    %890 = arith.addf %872, %889 : vector<16x16xf32>
    %c74_269 = arith.constant 74 : index
    %891 = memref.load %arg4[%c74_269] : memref<112xf32, #tpu.memory_space<smem>>
    %892 = vector.broadcast %891 : f32 to vector<16x16xf32>
    %893 = arith.mulf %882, %892 : vector<16x16xf32>
    %894 = arith.addf %876, %893 : vector<16x16xf32>
    %c75_270 = arith.constant 75 : index
    %895 = memref.load %arg4[%c75_270] : memref<112xf32, #tpu.memory_space<smem>>
    %896 = vector.broadcast %895 : f32 to vector<16x16xf32>
    %897 = arith.mulf %882, %896 : vector<16x16xf32>
    %898 = arith.addf %880, %897 : vector<16x16xf32>
    %c3_271 = arith.constant 3 : index
    %c0_272 = arith.constant 0 : index
    %c4_273 = arith.constant 4 : index
    %899 = vector.load %arg12[%c3_271, %c0_272, %c4_273] : memref<4x22x22xf32, #tpu.memory_space<vmem>>, vector<1x16x16xf32>
    %900 = vector.shape_cast %899 : vector<1x16x16xf32> to vector<16x16xf32>
    %c76_274 = arith.constant 76 : index
    %901 = memref.load %arg4[%c76_274] : memref<112xf32, #tpu.memory_space<smem>>
    %902 = vector.broadcast %901 : f32 to vector<16x16xf32>
    %903 = arith.mulf %900, %902 : vector<16x16xf32>
    %904 = arith.addf %886, %903 : vector<16x16xf32>
    %c77_275 = arith.constant 77 : index
    %905 = memref.load %arg4[%c77_275] : memref<112xf32, #tpu.memory_space<smem>>
    %906 = vector.broadcast %905 : f32 to vector<16x16xf32>
    %907 = arith.mulf %900, %906 : vector<16x16xf32>
    %908 = arith.addf %890, %907 : vector<16x16xf32>
    %c78_276 = arith.constant 78 : index
    %909 = memref.load %arg4[%c78_276] : memref<112xf32, #tpu.memory_space<smem>>
    %910 = vector.broadcast %909 : f32 to vector<16x16xf32>
    %911 = arith.mulf %900, %910 : vector<16x16xf32>
    %912 = arith.addf %894, %911 : vector<16x16xf32>
    %c79_277 = arith.constant 79 : index
    %913 = memref.load %arg4[%c79_277] : memref<112xf32, #tpu.memory_space<smem>>
    %914 = vector.broadcast %913 : f32 to vector<16x16xf32>
    %915 = arith.mulf %900, %914 : vector<16x16xf32>
    %916 = arith.addf %898, %915 : vector<16x16xf32>
    %c0_278 = arith.constant 0 : index
    %c0_279 = arith.constant 0 : index
    %c5_280 = arith.constant 5 : index
    %917 = vector.load %arg12[%c0_278, %c0_279, %c5_280] : memref<4x22x22xf32, #tpu.memory_space<vmem>>, vector<1x16x16xf32>
    %918 = vector.shape_cast %917 : vector<1x16x16xf32> to vector<16x16xf32>
    %c80_281 = arith.constant 80 : index
    %919 = memref.load %arg4[%c80_281] : memref<112xf32, #tpu.memory_space<smem>>
    %920 = vector.broadcast %919 : f32 to vector<16x16xf32>
    %921 = arith.mulf %918, %920 : vector<16x16xf32>
    %922 = arith.addf %904, %921 : vector<16x16xf32>
    %c81_282 = arith.constant 81 : index
    %923 = memref.load %arg4[%c81_282] : memref<112xf32, #tpu.memory_space<smem>>
    %924 = vector.broadcast %923 : f32 to vector<16x16xf32>
    %925 = arith.mulf %918, %924 : vector<16x16xf32>
    %926 = arith.addf %908, %925 : vector<16x16xf32>
    %c82_283 = arith.constant 82 : index
    %927 = memref.load %arg4[%c82_283] : memref<112xf32, #tpu.memory_space<smem>>
    %928 = vector.broadcast %927 : f32 to vector<16x16xf32>
    %929 = arith.mulf %918, %928 : vector<16x16xf32>
    %930 = arith.addf %912, %929 : vector<16x16xf32>
    %c83_284 = arith.constant 83 : index
    %931 = memref.load %arg4[%c83_284] : memref<112xf32, #tpu.memory_space<smem>>
    %932 = vector.broadcast %931 : f32 to vector<16x16xf32>
    %933 = arith.mulf %918, %932 : vector<16x16xf32>
    %934 = arith.addf %916, %933 : vector<16x16xf32>
    %c1_285 = arith.constant 1 : index
    %c0_286 = arith.constant 0 : index
    %c5_287 = arith.constant 5 : index
    %935 = vector.load %arg12[%c1_285, %c0_286, %c5_287] : memref<4x22x22xf32, #tpu.memory_space<vmem>>, vector<1x16x16xf32>
    %936 = vector.shape_cast %935 : vector<1x16x16xf32> to vector<16x16xf32>
    %c84_288 = arith.constant 84 : index
    %937 = memref.load %arg4[%c84_288] : memref<112xf32, #tpu.memory_space<smem>>
    %938 = vector.broadcast %937 : f32 to vector<16x16xf32>
    %939 = arith.mulf %936, %938 : vector<16x16xf32>
    %940 = arith.addf %922, %939 : vector<16x16xf32>
    %c85_289 = arith.constant 85 : index
    %941 = memref.load %arg4[%c85_289] : memref<112xf32, #tpu.memory_space<smem>>
    %942 = vector.broadcast %941 : f32 to vector<16x16xf32>
    %943 = arith.mulf %936, %942 : vector<16x16xf32>
    %944 = arith.addf %926, %943 : vector<16x16xf32>
    %c86_290 = arith.constant 86 : index
    %945 = memref.load %arg4[%c86_290] : memref<112xf32, #tpu.memory_space<smem>>
    %946 = vector.broadcast %945 : f32 to vector<16x16xf32>
    %947 = arith.mulf %936, %946 : vector<16x16xf32>
    %948 = arith.addf %930, %947 : vector<16x16xf32>
    %c87_291 = arith.constant 87 : index
    %949 = memref.load %arg4[%c87_291] : memref<112xf32, #tpu.memory_space<smem>>
    %950 = vector.broadcast %949 : f32 to vector<16x16xf32>
    %951 = arith.mulf %936, %950 : vector<16x16xf32>
    %952 = arith.addf %934, %951 : vector<16x16xf32>
    %c2_292 = arith.constant 2 : index
    %c0_293 = arith.constant 0 : index
    %c5_294 = arith.constant 5 : index
    %953 = vector.load %arg12[%c2_292, %c0_293, %c5_294] : memref<4x22x22xf32, #tpu.memory_space<vmem>>, vector<1x16x16xf32>
    %954 = vector.shape_cast %953 : vector<1x16x16xf32> to vector<16x16xf32>
    %c88_295 = arith.constant 88 : index
    %955 = memref.load %arg4[%c88_295] : memref<112xf32, #tpu.memory_space<smem>>
    %956 = vector.broadcast %955 : f32 to vector<16x16xf32>
    %957 = arith.mulf %954, %956 : vector<16x16xf32>
    %958 = arith.addf %940, %957 : vector<16x16xf32>
    %c89_296 = arith.constant 89 : index
    %959 = memref.load %arg4[%c89_296] : memref<112xf32, #tpu.memory_space<smem>>
    %960 = vector.broadcast %959 : f32 to vector<16x16xf32>
    %961 = arith.mulf %954, %960 : vector<16x16xf32>
    %962 = arith.addf %944, %961 : vector<16x16xf32>
    %c90_297 = arith.constant 90 : index
    %963 = memref.load %arg4[%c90_297] : memref<112xf32, #tpu.memory_space<smem>>
    %964 = vector.broadcast %963 : f32 to vector<16x16xf32>
    %965 = arith.mulf %954, %964 : vector<16x16xf32>
    %966 = arith.addf %948, %965 : vector<16x16xf32>
    %c91_298 = arith.constant 91 : index
    %967 = memref.load %arg4[%c91_298] : memref<112xf32, #tpu.memory_space<smem>>
    %968 = vector.broadcast %967 : f32 to vector<16x16xf32>
    %969 = arith.mulf %954, %968 : vector<16x16xf32>
    %970 = arith.addf %952, %969 : vector<16x16xf32>
    %c3_299 = arith.constant 3 : index
    %c0_300 = arith.constant 0 : index
    %c5_301 = arith.constant 5 : index
    %971 = vector.load %arg12[%c3_299, %c0_300, %c5_301] : memref<4x22x22xf32, #tpu.memory_space<vmem>>, vector<1x16x16xf32>
    %972 = vector.shape_cast %971 : vector<1x16x16xf32> to vector<16x16xf32>
    %c92_302 = arith.constant 92 : index
    %973 = memref.load %arg4[%c92_302] : memref<112xf32, #tpu.memory_space<smem>>
    %974 = vector.broadcast %973 : f32 to vector<16x16xf32>
    %975 = arith.mulf %972, %974 : vector<16x16xf32>
    %976 = arith.addf %958, %975 : vector<16x16xf32>
    %c93_303 = arith.constant 93 : index
    %977 = memref.load %arg4[%c93_303] : memref<112xf32, #tpu.memory_space<smem>>
    %978 = vector.broadcast %977 : f32 to vector<16x16xf32>
    %979 = arith.mulf %972, %978 : vector<16x16xf32>
    %980 = arith.addf %962, %979 : vector<16x16xf32>
    %c94_304 = arith.constant 94 : index
    %981 = memref.load %arg4[%c94_304] : memref<112xf32, #tpu.memory_space<smem>>
    %982 = vector.broadcast %981 : f32 to vector<16x16xf32>
    %983 = arith.mulf %972, %982 : vector<16x16xf32>
    %984 = arith.addf %966, %983 : vector<16x16xf32>
    %c95_305 = arith.constant 95 : index
    %985 = memref.load %arg4[%c95_305] : memref<112xf32, #tpu.memory_space<smem>>
    %986 = vector.broadcast %985 : f32 to vector<16x16xf32>
    %987 = arith.mulf %972, %986 : vector<16x16xf32>
    %988 = arith.addf %970, %987 : vector<16x16xf32>
    %c0_306 = arith.constant 0 : index
    %c0_307 = arith.constant 0 : index
    %c6_308 = arith.constant 6 : index
    %989 = vector.load %arg12[%c0_306, %c0_307, %c6_308] : memref<4x22x22xf32, #tpu.memory_space<vmem>>, vector<1x16x16xf32>
    %990 = vector.shape_cast %989 : vector<1x16x16xf32> to vector<16x16xf32>
    %c96_309 = arith.constant 96 : index
    %991 = memref.load %arg4[%c96_309] : memref<112xf32, #tpu.memory_space<smem>>
    %992 = vector.broadcast %991 : f32 to vector<16x16xf32>
    %993 = arith.mulf %990, %992 : vector<16x16xf32>
    %994 = arith.addf %976, %993 : vector<16x16xf32>
    %c97_310 = arith.constant 97 : index
    %995 = memref.load %arg4[%c97_310] : memref<112xf32, #tpu.memory_space<smem>>
    %996 = vector.broadcast %995 : f32 to vector<16x16xf32>
    %997 = arith.mulf %990, %996 : vector<16x16xf32>
    %998 = arith.addf %980, %997 : vector<16x16xf32>
    %c98_311 = arith.constant 98 : index
    %999 = memref.load %arg4[%c98_311] : memref<112xf32, #tpu.memory_space<smem>>
    %1000 = vector.broadcast %999 : f32 to vector<16x16xf32>
    %1001 = arith.mulf %990, %1000 : vector<16x16xf32>
    %1002 = arith.addf %984, %1001 : vector<16x16xf32>
    %c99_312 = arith.constant 99 : index
    %1003 = memref.load %arg4[%c99_312] : memref<112xf32, #tpu.memory_space<smem>>
    %1004 = vector.broadcast %1003 : f32 to vector<16x16xf32>
    %1005 = arith.mulf %990, %1004 : vector<16x16xf32>
    %1006 = arith.addf %988, %1005 : vector<16x16xf32>
    %c1_313 = arith.constant 1 : index
    %c0_314 = arith.constant 0 : index
    %c6_315 = arith.constant 6 : index
    %1007 = vector.load %arg12[%c1_313, %c0_314, %c6_315] : memref<4x22x22xf32, #tpu.memory_space<vmem>>, vector<1x16x16xf32>
    %1008 = vector.shape_cast %1007 : vector<1x16x16xf32> to vector<16x16xf32>
    %c100_316 = arith.constant 100 : index
    %1009 = memref.load %arg4[%c100_316] : memref<112xf32, #tpu.memory_space<smem>>
    %1010 = vector.broadcast %1009 : f32 to vector<16x16xf32>
    %1011 = arith.mulf %1008, %1010 : vector<16x16xf32>
    %1012 = arith.addf %994, %1011 : vector<16x16xf32>
    %c101_317 = arith.constant 101 : index
    %1013 = memref.load %arg4[%c101_317] : memref<112xf32, #tpu.memory_space<smem>>
    %1014 = vector.broadcast %1013 : f32 to vector<16x16xf32>
    %1015 = arith.mulf %1008, %1014 : vector<16x16xf32>
    %1016 = arith.addf %998, %1015 : vector<16x16xf32>
    %c102_318 = arith.constant 102 : index
    %1017 = memref.load %arg4[%c102_318] : memref<112xf32, #tpu.memory_space<smem>>
    %1018 = vector.broadcast %1017 : f32 to vector<16x16xf32>
    %1019 = arith.mulf %1008, %1018 : vector<16x16xf32>
    %1020 = arith.addf %1002, %1019 : vector<16x16xf32>
    %c103_319 = arith.constant 103 : index
    %1021 = memref.load %arg4[%c103_319] : memref<112xf32, #tpu.memory_space<smem>>
    %1022 = vector.broadcast %1021 : f32 to vector<16x16xf32>
    %1023 = arith.mulf %1008, %1022 : vector<16x16xf32>
    %1024 = arith.addf %1006, %1023 : vector<16x16xf32>
    %c2_320 = arith.constant 2 : index
    %c0_321 = arith.constant 0 : index
    %c6_322 = arith.constant 6 : index
    %1025 = vector.load %arg12[%c2_320, %c0_321, %c6_322] : memref<4x22x22xf32, #tpu.memory_space<vmem>>, vector<1x16x16xf32>
    %1026 = vector.shape_cast %1025 : vector<1x16x16xf32> to vector<16x16xf32>
    %c104_323 = arith.constant 104 : index
    %1027 = memref.load %arg4[%c104_323] : memref<112xf32, #tpu.memory_space<smem>>
    %1028 = vector.broadcast %1027 : f32 to vector<16x16xf32>
    %1029 = arith.mulf %1026, %1028 : vector<16x16xf32>
    %1030 = arith.addf %1012, %1029 : vector<16x16xf32>
    %c105_324 = arith.constant 105 : index
    %1031 = memref.load %arg4[%c105_324] : memref<112xf32, #tpu.memory_space<smem>>
    %1032 = vector.broadcast %1031 : f32 to vector<16x16xf32>
    %1033 = arith.mulf %1026, %1032 : vector<16x16xf32>
    %1034 = arith.addf %1016, %1033 : vector<16x16xf32>
    %c106_325 = arith.constant 106 : index
    %1035 = memref.load %arg4[%c106_325] : memref<112xf32, #tpu.memory_space<smem>>
    %1036 = vector.broadcast %1035 : f32 to vector<16x16xf32>
    %1037 = arith.mulf %1026, %1036 : vector<16x16xf32>
    %1038 = arith.addf %1020, %1037 : vector<16x16xf32>
    %c107_326 = arith.constant 107 : index
    %1039 = memref.load %arg4[%c107_326] : memref<112xf32, #tpu.memory_space<smem>>
    %1040 = vector.broadcast %1039 : f32 to vector<16x16xf32>
    %1041 = arith.mulf %1026, %1040 : vector<16x16xf32>
    %1042 = arith.addf %1024, %1041 : vector<16x16xf32>
    %c3_327 = arith.constant 3 : index
    %c0_328 = arith.constant 0 : index
    %c6_329 = arith.constant 6 : index
    %1043 = vector.load %arg12[%c3_327, %c0_328, %c6_329] : memref<4x22x22xf32, #tpu.memory_space<vmem>>, vector<1x16x16xf32>
    %1044 = vector.shape_cast %1043 : vector<1x16x16xf32> to vector<16x16xf32>
    %c108_330 = arith.constant 108 : index
    %1045 = memref.load %arg4[%c108_330] : memref<112xf32, #tpu.memory_space<smem>>
    %1046 = vector.broadcast %1045 : f32 to vector<16x16xf32>
    %1047 = arith.mulf %1044, %1046 : vector<16x16xf32>
    %1048 = arith.addf %1030, %1047 : vector<16x16xf32>
    %c109_331 = arith.constant 109 : index
    %1049 = memref.load %arg4[%c109_331] : memref<112xf32, #tpu.memory_space<smem>>
    %1050 = vector.broadcast %1049 : f32 to vector<16x16xf32>
    %1051 = arith.mulf %1044, %1050 : vector<16x16xf32>
    %1052 = arith.addf %1034, %1051 : vector<16x16xf32>
    %c110_332 = arith.constant 110 : index
    %1053 = memref.load %arg4[%c110_332] : memref<112xf32, #tpu.memory_space<smem>>
    %1054 = vector.broadcast %1053 : f32 to vector<16x16xf32>
    %1055 = arith.mulf %1044, %1054 : vector<16x16xf32>
    %1056 = arith.addf %1038, %1055 : vector<16x16xf32>
    %c111_333 = arith.constant 111 : index
    %1057 = memref.load %arg4[%c111_333] : memref<112xf32, #tpu.memory_space<smem>>
    %1058 = vector.broadcast %1057 : f32 to vector<16x16xf32>
    %1059 = arith.mulf %1044, %1058 : vector<16x16xf32>
    %1060 = arith.addf %1042, %1059 : vector<16x16xf32>
    %c0_334 = arith.constant 0 : index
    %c0_335 = arith.constant 0 : index
    %c0_336 = arith.constant 0 : index
    %c0_337 = arith.constant 0 : index
    %1061 = vector.load %arg10[%c0_334, %c0_335, %c0_336, %c0_337] : memref<1x4x16x16xf32, #tpu.memory_space<vmem>>, vector<1x1x16x16xf32>
    %1062 = vector.shape_cast %1061 : vector<1x1x16x16xf32> to vector<16x16xf32>
    %1063 = vector.shape_cast %1048 : vector<16x16xf32> to vector<1x1x16x16xf32>
    tpu.vector_store %arg10[%c0_334, %c0_335, %c0_336, %c0_337], %1063 {strides = array<i32>} : memref<1x4x16x16xf32, #tpu.memory_space<vmem>>, vector<1x1x16x16xf32>,
    %c0_338 = arith.constant 0 : index
    %c1_339 = arith.constant 1 : index
    %c0_340 = arith.constant 0 : index
    %c0_341 = arith.constant 0 : index
    %1064 = vector.load %arg10[%c0_338, %c1_339, %c0_340, %c0_341] : memref<1x4x16x16xf32, #tpu.memory_space<vmem>>, vector<1x1x16x16xf32>
    %1065 = vector.shape_cast %1064 : vector<1x1x16x16xf32> to vector<16x16xf32>
    %1066 = vector.shape_cast %1052 : vector<16x16xf32> to vector<1x1x16x16xf32>
    tpu.vector_store %arg10[%c0_338, %c1_339, %c0_340, %c0_341], %1066 {strides = array<i32>} : memref<1x4x16x16xf32, #tpu.memory_space<vmem>>, vector<1x1x16x16xf32>,
    %c0_342 = arith.constant 0 : index
    %c2_343 = arith.constant 2 : index
    %c0_344 = arith.constant 0 : index
    %c0_345 = arith.constant 0 : index
    %1067 = vector.load %arg10[%c0_342, %c2_343, %c0_344, %c0_345] : memref<1x4x16x16xf32, #tpu.memory_space<vmem>>, vector<1x1x16x16xf32>
    %1068 = vector.shape_cast %1067 : vector<1x1x16x16xf32> to vector<16x16xf32>
    %1069 = vector.shape_cast %1056 : vector<16x16xf32> to vector<1x1x16x16xf32>
    tpu.vector_store %arg10[%c0_342, %c2_343, %c0_344, %c0_345], %1069 {strides = array<i32>} : memref<1x4x16x16xf32, #tpu.memory_space<vmem>>, vector<1x1x16x16xf32>,
    %c0_346 = arith.constant 0 : index
    %c3_347 = arith.constant 3 : index
    %c0_348 = arith.constant 0 : index
    %c0_349 = arith.constant 0 : index
    %1070 = vector.load %arg10[%c0_346, %c3_347, %c0_348, %c0_349] : memref<1x4x16x16xf32, #tpu.memory_space<vmem>>, vector<1x1x16x16xf32>
    %1071 = vector.shape_cast %1070 : vector<1x1x16x16xf32> to vector<16x16xf32>
    %1072 = vector.shape_cast %1060 : vector<16x16xf32> to vector<1x1x16x16xf32>
    tpu.vector_store %arg10[%c0_346, %c3_347, %c0_348, %c0_349], %1072 {strides = array<i32>} : memref<1x4x16x16xf32, #tpu.memory_space<vmem>>, vector<1x1x16x16xf32>,
    %c0_350 = arith.constant 0 : index
    %c0_351 = arith.constant 0 : index
    %c0_352 = arith.constant 0 : index
    %1073 = vector.load %arg11[%c0_350, %c0_351, %c0_352] : memref<4x22x22xf32, #tpu.memory_space<vmem>>, vector<1x22x16xf32>
    %1074 = vector.shape_cast %1073 : vector<1x22x16xf32> to vector<22x16xf32>
    %c0_353 = arith.constant 0 : index
    %1075 = memref.load %arg6[%c0_353] : memref<112xf32, #tpu.memory_space<smem>>
    %1076 = vector.broadcast %1075 : f32 to vector<22x16xf32>
    %1077 = arith.mulf %1074, %1076 : vector<22x16xf32>
    %c1_354 = arith.constant 1 : index
    %1078 = memref.load %arg6[%c1_354] : memref<112xf32, #tpu.memory_space<smem>>
    %1079 = vector.broadcast %1078 : f32 to vector<22x16xf32>
    %1080 = arith.mulf %1074, %1079 : vector<22x16xf32>
    %c2_355 = arith.constant 2 : index
    %1081 = memref.load %arg6[%c2_355] : memref<112xf32, #tpu.memory_space<smem>>
    %1082 = vector.broadcast %1081 : f32 to vector<22x16xf32>
    %1083 = arith.mulf %1074, %1082 : vector<22x16xf32>
    %c3_356 = arith.constant 3 : index
    %1084 = memref.load %arg6[%c3_356] : memref<112xf32, #tpu.memory_space<smem>>
    %1085 = vector.broadcast %1084 : f32 to vector<22x16xf32>
    %1086 = arith.mulf %1074, %1085 : vector<22x16xf32>
    %c1_357 = arith.constant 1 : index
    %c0_358 = arith.constant 0 : index
    %c0_359 = arith.constant 0 : index
    %1087 = vector.load %arg11[%c1_357, %c0_358, %c0_359] : memref<4x22x22xf32, #tpu.memory_space<vmem>>, vector<1x22x16xf32>
    %1088 = vector.shape_cast %1087 : vector<1x22x16xf32> to vector<22x16xf32>
    %c4_360 = arith.constant 4 : index
    %1089 = memref.load %arg6[%c4_360] : memref<112xf32, #tpu.memory_space<smem>>
    %1090 = vector.broadcast %1089 : f32 to vector<22x16xf32>
    %1091 = arith.mulf %1088, %1090 : vector<22x16xf32>
    %1092 = arith.addf %1077, %1091 : vector<22x16xf32>
    %c5_361 = arith.constant 5 : index
    %1093 = memref.load %arg6[%c5_361] : memref<112xf32, #tpu.memory_space<smem>>
    %1094 = vector.broadcast %1093 : f32 to vector<22x16xf32>
    %1095 = arith.mulf %1088, %1094 : vector<22x16xf32>
    %1096 = arith.addf %1080, %1095 : vector<22x16xf32>
    %c6_362 = arith.constant 6 : index
    %1097 = memref.load %arg6[%c6_362] : memref<112xf32, #tpu.memory_space<smem>>
    %1098 = vector.broadcast %1097 : f32 to vector<22x16xf32>
    %1099 = arith.mulf %1088, %1098 : vector<22x16xf32>
    %1100 = arith.addf %1083, %1099 : vector<22x16xf32>
    %c7_363 = arith.constant 7 : index
    %1101 = memref.load %arg6[%c7_363] : memref<112xf32, #tpu.memory_space<smem>>
    %1102 = vector.broadcast %1101 : f32 to vector<22x16xf32>
    %1103 = arith.mulf %1088, %1102 : vector<22x16xf32>
    %1104 = arith.addf %1086, %1103 : vector<22x16xf32>
    %c2_364 = arith.constant 2 : index
    %c0_365 = arith.constant 0 : index
    %c0_366 = arith.constant 0 : index
    %1105 = vector.load %arg11[%c2_364, %c0_365, %c0_366] : memref<4x22x22xf32, #tpu.memory_space<vmem>>, vector<1x22x16xf32>
    %1106 = vector.shape_cast %1105 : vector<1x22x16xf32> to vector<22x16xf32>
    %c8_367 = arith.constant 8 : index
    %1107 = memref.load %arg6[%c8_367] : memref<112xf32, #tpu.memory_space<smem>>
    %1108 = vector.broadcast %1107 : f32 to vector<22x16xf32>
    %1109 = arith.mulf %1106, %1108 : vector<22x16xf32>
    %1110 = arith.addf %1092, %1109 : vector<22x16xf32>
    %c9_368 = arith.constant 9 : index
    %1111 = memref.load %arg6[%c9_368] : memref<112xf32, #tpu.memory_space<smem>>
    %1112 = vector.broadcast %1111 : f32 to vector<22x16xf32>
    %1113 = arith.mulf %1106, %1112 : vector<22x16xf32>
    %1114 = arith.addf %1096, %1113 : vector<22x16xf32>
    %c10_369 = arith.constant 10 : index
    %1115 = memref.load %arg6[%c10_369] : memref<112xf32, #tpu.memory_space<smem>>
    %1116 = vector.broadcast %1115 : f32 to vector<22x16xf32>
    %1117 = arith.mulf %1106, %1116 : vector<22x16xf32>
    %1118 = arith.addf %1100, %1117 : vector<22x16xf32>
    %c11_370 = arith.constant 11 : index
    %1119 = memref.load %arg6[%c11_370] : memref<112xf32, #tpu.memory_space<smem>>
    %1120 = vector.broadcast %1119 : f32 to vector<22x16xf32>
    %1121 = arith.mulf %1106, %1120 : vector<22x16xf32>
    %1122 = arith.addf %1104, %1121 : vector<22x16xf32>
    %c3_371 = arith.constant 3 : index
    %c0_372 = arith.constant 0 : index
    %c0_373 = arith.constant 0 : index
    %1123 = vector.load %arg11[%c3_371, %c0_372, %c0_373] : memref<4x22x22xf32, #tpu.memory_space<vmem>>, vector<1x22x16xf32>
    %1124 = vector.shape_cast %1123 : vector<1x22x16xf32> to vector<22x16xf32>
    %c12_374 = arith.constant 12 : index
    %1125 = memref.load %arg6[%c12_374] : memref<112xf32, #tpu.memory_space<smem>>
    %1126 = vector.broadcast %1125 : f32 to vector<22x16xf32>
    %1127 = arith.mulf %1124, %1126 : vector<22x16xf32>
    %1128 = arith.addf %1110, %1127 : vector<22x16xf32>
    %c13_375 = arith.constant 13 : index
    %1129 = memref.load %arg6[%c13_375] : memref<112xf32, #tpu.memory_space<smem>>
    %1130 = vector.broadcast %1129 : f32 to vector<22x16xf32>
    %1131 = arith.mulf %1124, %1130 : vector<22x16xf32>
    %1132 = arith.addf %1114, %1131 : vector<22x16xf32>
    %c14_376 = arith.constant 14 : index
    %1133 = memref.load %arg6[%c14_376] : memref<112xf32, #tpu.memory_space<smem>>
    %1134 = vector.broadcast %1133 : f32 to vector<22x16xf32>
    %1135 = arith.mulf %1124, %1134 : vector<22x16xf32>
    %1136 = arith.addf %1118, %1135 : vector<22x16xf32>
    %c15_377 = arith.constant 15 : index
    %1137 = memref.load %arg6[%c15_377] : memref<112xf32, #tpu.memory_space<smem>>
    %1138 = vector.broadcast %1137 : f32 to vector<22x16xf32>
    %1139 = arith.mulf %1124, %1138 : vector<22x16xf32>
    %1140 = arith.addf %1122, %1139 : vector<22x16xf32>
    %c0_378 = arith.constant 0 : index
    %c0_379 = arith.constant 0 : index
    %c1_380 = arith.constant 1 : index
    %1141 = vector.load %arg11[%c0_378, %c0_379, %c1_380] : memref<4x22x22xf32, #tpu.memory_space<vmem>>, vector<1x22x16xf32>
    %1142 = vector.shape_cast %1141 : vector<1x22x16xf32> to vector<22x16xf32>
    %c16_381 = arith.constant 16 : index
    %1143 = memref.load %arg6[%c16_381] : memref<112xf32, #tpu.memory_space<smem>>
    %1144 = vector.broadcast %1143 : f32 to vector<22x16xf32>
    %1145 = arith.mulf %1142, %1144 : vector<22x16xf32>
    %1146 = arith.addf %1128, %1145 : vector<22x16xf32>
    %c17_382 = arith.constant 17 : index
    %1147 = memref.load %arg6[%c17_382] : memref<112xf32, #tpu.memory_space<smem>>
    %1148 = vector.broadcast %1147 : f32 to vector<22x16xf32>
    %1149 = arith.mulf %1142, %1148 : vector<22x16xf32>
    %1150 = arith.addf %1132, %1149 : vector<22x16xf32>
    %c18_383 = arith.constant 18 : index
    %1151 = memref.load %arg6[%c18_383] : memref<112xf32, #tpu.memory_space<smem>>
    %1152 = vector.broadcast %1151 : f32 to vector<22x16xf32>
    %1153 = arith.mulf %1142, %1152 : vector<22x16xf32>
    %1154 = arith.addf %1136, %1153 : vector<22x16xf32>
    %c19_384 = arith.constant 19 : index
    %1155 = memref.load %arg6[%c19_384] : memref<112xf32, #tpu.memory_space<smem>>
    %1156 = vector.broadcast %1155 : f32 to vector<22x16xf32>
    %1157 = arith.mulf %1142, %1156 : vector<22x16xf32>
    %1158 = arith.addf %1140, %1157 : vector<22x16xf32>
    %c1_385 = arith.constant 1 : index
    %c0_386 = arith.constant 0 : index
    %c1_387 = arith.constant 1 : index
    %1159 = vector.load %arg11[%c1_385, %c0_386, %c1_387] : memref<4x22x22xf32, #tpu.memory_space<vmem>>, vector<1x22x16xf32>
    %1160 = vector.shape_cast %1159 : vector<1x22x16xf32> to vector<22x16xf32>
    %c20_388 = arith.constant 20 : index
    %1161 = memref.load %arg6[%c20_388] : memref<112xf32, #tpu.memory_space<smem>>
    %1162 = vector.broadcast %1161 : f32 to vector<22x16xf32>
    %1163 = arith.mulf %1160, %1162 : vector<22x16xf32>
    %1164 = arith.addf %1146, %1163 : vector<22x16xf32>
    %c21_389 = arith.constant 21 : index
    %1165 = memref.load %arg6[%c21_389] : memref<112xf32, #tpu.memory_space<smem>>
    %1166 = vector.broadcast %1165 : f32 to vector<22x16xf32>
    %1167 = arith.mulf %1160, %1166 : vector<22x16xf32>
    %1168 = arith.addf %1150, %1167 : vector<22x16xf32>
    %c22_390 = arith.constant 22 : index
    %1169 = memref.load %arg6[%c22_390] : memref<112xf32, #tpu.memory_space<smem>>
    %1170 = vector.broadcast %1169 : f32 to vector<22x16xf32>
    %1171 = arith.mulf %1160, %1170 : vector<22x16xf32>
    %1172 = arith.addf %1154, %1171 : vector<22x16xf32>
    %c23_391 = arith.constant 23 : index
    %1173 = memref.load %arg6[%c23_391] : memref<112xf32, #tpu.memory_space<smem>>
    %1174 = vector.broadcast %1173 : f32 to vector<22x16xf32>
    %1175 = arith.mulf %1160, %1174 : vector<22x16xf32>
    %1176 = arith.addf %1158, %1175 : vector<22x16xf32>
    %c2_392 = arith.constant 2 : index
    %c0_393 = arith.constant 0 : index
    %c1_394 = arith.constant 1 : index
    %1177 = vector.load %arg11[%c2_392, %c0_393, %c1_394] : memref<4x22x22xf32, #tpu.memory_space<vmem>>, vector<1x22x16xf32>
    %1178 = vector.shape_cast %1177 : vector<1x22x16xf32> to vector<22x16xf32>
    %c24_395 = arith.constant 24 : index
    %1179 = memref.load %arg6[%c24_395] : memref<112xf32, #tpu.memory_space<smem>>
    %1180 = vector.broadcast %1179 : f32 to vector<22x16xf32>
    %1181 = arith.mulf %1178, %1180 : vector<22x16xf32>
    %1182 = arith.addf %1164, %1181 : vector<22x16xf32>
    %c25_396 = arith.constant 25 : index
    %1183 = memref.load %arg6[%c25_396] : memref<112xf32, #tpu.memory_space<smem>>
    %1184 = vector.broadcast %1183 : f32 to vector<22x16xf32>
    %1185 = arith.mulf %1178, %1184 : vector<22x16xf32>
    %1186 = arith.addf %1168, %1185 : vector<22x16xf32>
    %c26_397 = arith.constant 26 : index
    %1187 = memref.load %arg6[%c26_397] : memref<112xf32, #tpu.memory_space<smem>>
    %1188 = vector.broadcast %1187 : f32 to vector<22x16xf32>
    %1189 = arith.mulf %1178, %1188 : vector<22x16xf32>
    %1190 = arith.addf %1172, %1189 : vector<22x16xf32>
    %c27_398 = arith.constant 27 : index
    %1191 = memref.load %arg6[%c27_398] : memref<112xf32, #tpu.memory_space<smem>>
    %1192 = vector.broadcast %1191 : f32 to vector<22x16xf32>
    %1193 = arith.mulf %1178, %1192 : vector<22x16xf32>
    %1194 = arith.addf %1176, %1193 : vector<22x16xf32>
    %c3_399 = arith.constant 3 : index
    %c0_400 = arith.constant 0 : index
    %c1_401 = arith.constant 1 : index
    %1195 = vector.load %arg11[%c3_399, %c0_400, %c1_401] : memref<4x22x22xf32, #tpu.memory_space<vmem>>, vector<1x22x16xf32>
    %1196 = vector.shape_cast %1195 : vector<1x22x16xf32> to vector<22x16xf32>
    %c28_402 = arith.constant 28 : index
    %1197 = memref.load %arg6[%c28_402] : memref<112xf32, #tpu.memory_space<smem>>
    %1198 = vector.broadcast %1197 : f32 to vector<22x16xf32>
    %1199 = arith.mulf %1196, %1198 : vector<22x16xf32>
    %1200 = arith.addf %1182, %1199 : vector<22x16xf32>
    %c29_403 = arith.constant 29 : index
    %1201 = memref.load %arg6[%c29_403] : memref<112xf32, #tpu.memory_space<smem>>
    %1202 = vector.broadcast %1201 : f32 to vector<22x16xf32>
    %1203 = arith.mulf %1196, %1202 : vector<22x16xf32>
    %1204 = arith.addf %1186, %1203 : vector<22x16xf32>
    %c30_404 = arith.constant 30 : index
    %1205 = memref.load %arg6[%c30_404] : memref<112xf32, #tpu.memory_space<smem>>
    %1206 = vector.broadcast %1205 : f32 to vector<22x16xf32>
    %1207 = arith.mulf %1196, %1206 : vector<22x16xf32>
    %1208 = arith.addf %1190, %1207 : vector<22x16xf32>
    %c31_405 = arith.constant 31 : index
    %1209 = memref.load %arg6[%c31_405] : memref<112xf32, #tpu.memory_space<smem>>
    %1210 = vector.broadcast %1209 : f32 to vector<22x16xf32>
    %1211 = arith.mulf %1196, %1210 : vector<22x16xf32>
    %1212 = arith.addf %1194, %1211 : vector<22x16xf32>
    %c0_406 = arith.constant 0 : index
    %c0_407 = arith.constant 0 : index
    %c2_408 = arith.constant 2 : index
    %1213 = vector.load %arg11[%c0_406, %c0_407, %c2_408] : memref<4x22x22xf32, #tpu.memory_space<vmem>>, vector<1x22x16xf32>
    %1214 = vector.shape_cast %1213 : vector<1x22x16xf32> to vector<22x16xf32>
    %c32_409 = arith.constant 32 : index
    %1215 = memref.load %arg6[%c32_409] : memref<112xf32, #tpu.memory_space<smem>>
    %1216 = vector.broadcast %1215 : f32 to vector<22x16xf32>
    %1217 = arith.mulf %1214, %1216 : vector<22x16xf32>
    %1218 = arith.addf %1200, %1217 : vector<22x16xf32>
    %c33_410 = arith.constant 33 : index
    %1219 = memref.load %arg6[%c33_410] : memref<112xf32, #tpu.memory_space<smem>>
    %1220 = vector.broadcast %1219 : f32 to vector<22x16xf32>
    %1221 = arith.mulf %1214, %1220 : vector<22x16xf32>
    %1222 = arith.addf %1204, %1221 : vector<22x16xf32>
    %c34_411 = arith.constant 34 : index
    %1223 = memref.load %arg6[%c34_411] : memref<112xf32, #tpu.memory_space<smem>>
    %1224 = vector.broadcast %1223 : f32 to vector<22x16xf32>
    %1225 = arith.mulf %1214, %1224 : vector<22x16xf32>
    %1226 = arith.addf %1208, %1225 : vector<22x16xf32>
    %c35_412 = arith.constant 35 : index
    %1227 = memref.load %arg6[%c35_412] : memref<112xf32, #tpu.memory_space<smem>>
    %1228 = vector.broadcast %1227 : f32 to vector<22x16xf32>
    %1229 = arith.mulf %1214, %1228 : vector<22x16xf32>
    %1230 = arith.addf %1212, %1229 : vector<22x16xf32>
    %c1_413 = arith.constant 1 : index
    %c0_414 = arith.constant 0 : index
    %c2_415 = arith.constant 2 : index
    %1231 = vector.load %arg11[%c1_413, %c0_414, %c2_415] : memref<4x22x22xf32, #tpu.memory_space<vmem>>, vector<1x22x16xf32>
    %1232 = vector.shape_cast %1231 : vector<1x22x16xf32> to vector<22x16xf32>
    %c36_416 = arith.constant 36 : index
    %1233 = memref.load %arg6[%c36_416] : memref<112xf32, #tpu.memory_space<smem>>
    %1234 = vector.broadcast %1233 : f32 to vector<22x16xf32>
    %1235 = arith.mulf %1232, %1234 : vector<22x16xf32>
    %1236 = arith.addf %1218, %1235 : vector<22x16xf32>
    %c37_417 = arith.constant 37 : index
    %1237 = memref.load %arg6[%c37_417] : memref<112xf32, #tpu.memory_space<smem>>
    %1238 = vector.broadcast %1237 : f32 to vector<22x16xf32>
    %1239 = arith.mulf %1232, %1238 : vector<22x16xf32>
    %1240 = arith.addf %1222, %1239 : vector<22x16xf32>
    %c38_418 = arith.constant 38 : index
    %1241 = memref.load %arg6[%c38_418] : memref<112xf32, #tpu.memory_space<smem>>
    %1242 = vector.broadcast %1241 : f32 to vector<22x16xf32>
    %1243 = arith.mulf %1232, %1242 : vector<22x16xf32>
    %1244 = arith.addf %1226, %1243 : vector<22x16xf32>
    %c39_419 = arith.constant 39 : index
    %1245 = memref.load %arg6[%c39_419] : memref<112xf32, #tpu.memory_space<smem>>
    %1246 = vector.broadcast %1245 : f32 to vector<22x16xf32>
    %1247 = arith.mulf %1232, %1246 : vector<22x16xf32>
    %1248 = arith.addf %1230, %1247 : vector<22x16xf32>
    %c2_420 = arith.constant 2 : index
    %c0_421 = arith.constant 0 : index
    %c2_422 = arith.constant 2 : index
    %1249 = vector.load %arg11[%c2_420, %c0_421, %c2_422] : memref<4x22x22xf32, #tpu.memory_space<vmem>>, vector<1x22x16xf32>
    %1250 = vector.shape_cast %1249 : vector<1x22x16xf32> to vector<22x16xf32>
    %c40_423 = arith.constant 40 : index
    %1251 = memref.load %arg6[%c40_423] : memref<112xf32, #tpu.memory_space<smem>>
    %1252 = vector.broadcast %1251 : f32 to vector<22x16xf32>
    %1253 = arith.mulf %1250, %1252 : vector<22x16xf32>
    %1254 = arith.addf %1236, %1253 : vector<22x16xf32>
    %c41_424 = arith.constant 41 : index
    %1255 = memref.load %arg6[%c41_424] : memref<112xf32, #tpu.memory_space<smem>>
    %1256 = vector.broadcast %1255 : f32 to vector<22x16xf32>
    %1257 = arith.mulf %1250, %1256 : vector<22x16xf32>
    %1258 = arith.addf %1240, %1257 : vector<22x16xf32>
    %c42_425 = arith.constant 42 : index
    %1259 = memref.load %arg6[%c42_425] : memref<112xf32, #tpu.memory_space<smem>>
    %1260 = vector.broadcast %1259 : f32 to vector<22x16xf32>
    %1261 = arith.mulf %1250, %1260 : vector<22x16xf32>
    %1262 = arith.addf %1244, %1261 : vector<22x16xf32>
    %c43_426 = arith.constant 43 : index
    %1263 = memref.load %arg6[%c43_426] : memref<112xf32, #tpu.memory_space<smem>>
    %1264 = vector.broadcast %1263 : f32 to vector<22x16xf32>
    %1265 = arith.mulf %1250, %1264 : vector<22x16xf32>
    %1266 = arith.addf %1248, %1265 : vector<22x16xf32>
    %c3_427 = arith.constant 3 : index
    %c0_428 = arith.constant 0 : index
    %c2_429 = arith.constant 2 : index
    %1267 = vector.load %arg11[%c3_427, %c0_428, %c2_429] : memref<4x22x22xf32, #tpu.memory_space<vmem>>, vector<1x22x16xf32>
    %1268 = vector.shape_cast %1267 : vector<1x22x16xf32> to vector<22x16xf32>
    %c44_430 = arith.constant 44 : index
    %1269 = memref.load %arg6[%c44_430] : memref<112xf32, #tpu.memory_space<smem>>
    %1270 = vector.broadcast %1269 : f32 to vector<22x16xf32>
    %1271 = arith.mulf %1268, %1270 : vector<22x16xf32>
    %1272 = arith.addf %1254, %1271 : vector<22x16xf32>
    %c45_431 = arith.constant 45 : index
    %1273 = memref.load %arg6[%c45_431] : memref<112xf32, #tpu.memory_space<smem>>
    %1274 = vector.broadcast %1273 : f32 to vector<22x16xf32>
    %1275 = arith.mulf %1268, %1274 : vector<22x16xf32>
    %1276 = arith.addf %1258, %1275 : vector<22x16xf32>
    %c46_432 = arith.constant 46 : index
    %1277 = memref.load %arg6[%c46_432] : memref<112xf32, #tpu.memory_space<smem>>
    %1278 = vector.broadcast %1277 : f32 to vector<22x16xf32>
    %1279 = arith.mulf %1268, %1278 : vector<22x16xf32>
    %1280 = arith.addf %1262, %1279 : vector<22x16xf32>
    %c47_433 = arith.constant 47 : index
    %1281 = memref.load %arg6[%c47_433] : memref<112xf32, #tpu.memory_space<smem>>
    %1282 = vector.broadcast %1281 : f32 to vector<22x16xf32>
    %1283 = arith.mulf %1268, %1282 : vector<22x16xf32>
    %1284 = arith.addf %1266, %1283 : vector<22x16xf32>
    %c0_434 = arith.constant 0 : index
    %c0_435 = arith.constant 0 : index
    %c3_436 = arith.constant 3 : index
    %1285 = vector.load %arg11[%c0_434, %c0_435, %c3_436] : memref<4x22x22xf32, #tpu.memory_space<vmem>>, vector<1x22x16xf32>
    %1286 = vector.shape_cast %1285 : vector<1x22x16xf32> to vector<22x16xf32>
    %c48_437 = arith.constant 48 : index
    %1287 = memref.load %arg6[%c48_437] : memref<112xf32, #tpu.memory_space<smem>>
    %1288 = vector.broadcast %1287 : f32 to vector<22x16xf32>
    %1289 = arith.mulf %1286, %1288 : vector<22x16xf32>
    %1290 = arith.addf %1272, %1289 : vector<22x16xf32>
    %c49_438 = arith.constant 49 : index
    %1291 = memref.load %arg6[%c49_438] : memref<112xf32, #tpu.memory_space<smem>>
    %1292 = vector.broadcast %1291 : f32 to vector<22x16xf32>
    %1293 = arith.mulf %1286, %1292 : vector<22x16xf32>
    %1294 = arith.addf %1276, %1293 : vector<22x16xf32>
    %c50_439 = arith.constant 50 : index
    %1295 = memref.load %arg6[%c50_439] : memref<112xf32, #tpu.memory_space<smem>>
    %1296 = vector.broadcast %1295 : f32 to vector<22x16xf32>
    %1297 = arith.mulf %1286, %1296 : vector<22x16xf32>
    %1298 = arith.addf %1280, %1297 : vector<22x16xf32>
    %c51_440 = arith.constant 51 : index
    %1299 = memref.load %arg6[%c51_440] : memref<112xf32, #tpu.memory_space<smem>>
    %1300 = vector.broadcast %1299 : f32 to vector<22x16xf32>
    %1301 = arith.mulf %1286, %1300 : vector<22x16xf32>
    %1302 = arith.addf %1284, %1301 : vector<22x16xf32>
    %c1_441 = arith.constant 1 : index
    %c0_442 = arith.constant 0 : index
    %c3_443 = arith.constant 3 : index
    %1303 = vector.load %arg11[%c1_441, %c0_442, %c3_443] : memref<4x22x22xf32, #tpu.memory_space<vmem>>, vector<1x22x16xf32>
    %1304 = vector.shape_cast %1303 : vector<1x22x16xf32> to vector<22x16xf32>
    %c52_444 = arith.constant 52 : index
    %1305 = memref.load %arg6[%c52_444] : memref<112xf32, #tpu.memory_space<smem>>
    %1306 = vector.broadcast %1305 : f32 to vector<22x16xf32>
    %1307 = arith.mulf %1304, %1306 : vector<22x16xf32>
    %1308 = arith.addf %1290, %1307 : vector<22x16xf32>
    %c53_445 = arith.constant 53 : index
    %1309 = memref.load %arg6[%c53_445] : memref<112xf32, #tpu.memory_space<smem>>
    %1310 = vector.broadcast %1309 : f32 to vector<22x16xf32>
    %1311 = arith.mulf %1304, %1310 : vector<22x16xf32>
    %1312 = arith.addf %1294, %1311 : vector<22x16xf32>
    %c54_446 = arith.constant 54 : index
    %1313 = memref.load %arg6[%c54_446] : memref<112xf32, #tpu.memory_space<smem>>
    %1314 = vector.broadcast %1313 : f32 to vector<22x16xf32>
    %1315 = arith.mulf %1304, %1314 : vector<22x16xf32>
    %1316 = arith.addf %1298, %1315 : vector<22x16xf32>
    %c55_447 = arith.constant 55 : index
    %1317 = memref.load %arg6[%c55_447] : memref<112xf32, #tpu.memory_space<smem>>
    %1318 = vector.broadcast %1317 : f32 to vector<22x16xf32>
    %1319 = arith.mulf %1304, %1318 : vector<22x16xf32>
    %1320 = arith.addf %1302, %1319 : vector<22x16xf32>
    %c2_448 = arith.constant 2 : index
    %c0_449 = arith.constant 0 : index
    %c3_450 = arith.constant 3 : index
    %1321 = vector.load %arg11[%c2_448, %c0_449, %c3_450] : memref<4x22x22xf32, #tpu.memory_space<vmem>>, vector<1x22x16xf32>
    %1322 = vector.shape_cast %1321 : vector<1x22x16xf32> to vector<22x16xf32>
    %c56_451 = arith.constant 56 : index
    %1323 = memref.load %arg6[%c56_451] : memref<112xf32, #tpu.memory_space<smem>>
    %1324 = vector.broadcast %1323 : f32 to vector<22x16xf32>
    %1325 = arith.mulf %1322, %1324 : vector<22x16xf32>
    %1326 = arith.addf %1308, %1325 : vector<22x16xf32>
    %c57_452 = arith.constant 57 : index
    %1327 = memref.load %arg6[%c57_452] : memref<112xf32, #tpu.memory_space<smem>>
    %1328 = vector.broadcast %1327 : f32 to vector<22x16xf32>
    %1329 = arith.mulf %1322, %1328 : vector<22x16xf32>
    %1330 = arith.addf %1312, %1329 : vector<22x16xf32>
    %c58_453 = arith.constant 58 : index
    %1331 = memref.load %arg6[%c58_453] : memref<112xf32, #tpu.memory_space<smem>>
    %1332 = vector.broadcast %1331 : f32 to vector<22x16xf32>
    %1333 = arith.mulf %1322, %1332 : vector<22x16xf32>
    %1334 = arith.addf %1316, %1333 : vector<22x16xf32>
    %c59_454 = arith.constant 59 : index
    %1335 = memref.load %arg6[%c59_454] : memref<112xf32, #tpu.memory_space<smem>>
    %1336 = vector.broadcast %1335 : f32 to vector<22x16xf32>
    %1337 = arith.mulf %1322, %1336 : vector<22x16xf32>
    %1338 = arith.addf %1320, %1337 : vector<22x16xf32>
    %c3_455 = arith.constant 3 : index
    %c0_456 = arith.constant 0 : index
    %c3_457 = arith.constant 3 : index
    %1339 = vector.load %arg11[%c3_455, %c0_456, %c3_457] : memref<4x22x22xf32, #tpu.memory_space<vmem>>, vector<1x22x16xf32>
    %1340 = vector.shape_cast %1339 : vector<1x22x16xf32> to vector<22x16xf32>
    %c60_458 = arith.constant 60 : index
    %1341 = memref.load %arg6[%c60_458] : memref<112xf32, #tpu.memory_space<smem>>
    %1342 = vector.broadcast %1341 : f32 to vector<22x16xf32>
    %1343 = arith.mulf %1340, %1342 : vector<22x16xf32>
    %1344 = arith.addf %1326, %1343 : vector<22x16xf32>
    %c61_459 = arith.constant 61 : index
    %1345 = memref.load %arg6[%c61_459] : memref<112xf32, #tpu.memory_space<smem>>
    %1346 = vector.broadcast %1345 : f32 to vector<22x16xf32>
    %1347 = arith.mulf %1340, %1346 : vector<22x16xf32>
    %1348 = arith.addf %1330, %1347 : vector<22x16xf32>
    %c62_460 = arith.constant 62 : index
    %1349 = memref.load %arg6[%c62_460] : memref<112xf32, #tpu.memory_space<smem>>
    %1350 = vector.broadcast %1349 : f32 to vector<22x16xf32>
    %1351 = arith.mulf %1340, %1350 : vector<22x16xf32>
    %1352 = arith.addf %1334, %1351 : vector<22x16xf32>
    %c63_461 = arith.constant 63 : index
    %1353 = memref.load %arg6[%c63_461] : memref<112xf32, #tpu.memory_space<smem>>
    %1354 = vector.broadcast %1353 : f32 to vector<22x16xf32>
    %1355 = arith.mulf %1340, %1354 : vector<22x16xf32>
    %1356 = arith.addf %1338, %1355 : vector<22x16xf32>
    %c0_462 = arith.constant 0 : index
    %c0_463 = arith.constant 0 : index
    %c4_464 = arith.constant 4 : index
    %1357 = vector.load %arg11[%c0_462, %c0_463, %c4_464] : memref<4x22x22xf32, #tpu.memory_space<vmem>>, vector<1x22x16xf32>
    %1358 = vector.shape_cast %1357 : vector<1x22x16xf32> to vector<22x16xf32>
    %c64_465 = arith.constant 64 : index
    %1359 = memref.load %arg6[%c64_465] : memref<112xf32, #tpu.memory_space<smem>>
    %1360 = vector.broadcast %1359 : f32 to vector<22x16xf32>
    %1361 = arith.mulf %1358, %1360 : vector<22x16xf32>
    %1362 = arith.addf %1344, %1361 : vector<22x16xf32>
    %c65_466 = arith.constant 65 : index
    %1363 = memref.load %arg6[%c65_466] : memref<112xf32, #tpu.memory_space<smem>>
    %1364 = vector.broadcast %1363 : f32 to vector<22x16xf32>
    %1365 = arith.mulf %1358, %1364 : vector<22x16xf32>
    %1366 = arith.addf %1348, %1365 : vector<22x16xf32>
    %c66_467 = arith.constant 66 : index
    %1367 = memref.load %arg6[%c66_467] : memref<112xf32, #tpu.memory_space<smem>>
    %1368 = vector.broadcast %1367 : f32 to vector<22x16xf32>
    %1369 = arith.mulf %1358, %1368 : vector<22x16xf32>
    %1370 = arith.addf %1352, %1369 : vector<22x16xf32>
    %c67_468 = arith.constant 67 : index
    %1371 = memref.load %arg6[%c67_468] : memref<112xf32, #tpu.memory_space<smem>>
    %1372 = vector.broadcast %1371 : f32 to vector<22x16xf32>
    %1373 = arith.mulf %1358, %1372 : vector<22x16xf32>
    %1374 = arith.addf %1356, %1373 : vector<22x16xf32>
    %c1_469 = arith.constant 1 : index
    %c0_470 = arith.constant 0 : index
    %c4_471 = arith.constant 4 : index
    %1375 = vector.load %arg11[%c1_469, %c0_470, %c4_471] : memref<4x22x22xf32, #tpu.memory_space<vmem>>, vector<1x22x16xf32>
    %1376 = vector.shape_cast %1375 : vector<1x22x16xf32> to vector<22x16xf32>
    %c68_472 = arith.constant 68 : index
    %1377 = memref.load %arg6[%c68_472] : memref<112xf32, #tpu.memory_space<smem>>
    %1378 = vector.broadcast %1377 : f32 to vector<22x16xf32>
    %1379 = arith.mulf %1376, %1378 : vector<22x16xf32>
    %1380 = arith.addf %1362, %1379 : vector<22x16xf32>
    %c69_473 = arith.constant 69 : index
    %1381 = memref.load %arg6[%c69_473] : memref<112xf32, #tpu.memory_space<smem>>
    %1382 = vector.broadcast %1381 : f32 to vector<22x16xf32>
    %1383 = arith.mulf %1376, %1382 : vector<22x16xf32>
    %1384 = arith.addf %1366, %1383 : vector<22x16xf32>
    %c70_474 = arith.constant 70 : index
    %1385 = memref.load %arg6[%c70_474] : memref<112xf32, #tpu.memory_space<smem>>
    %1386 = vector.broadcast %1385 : f32 to vector<22x16xf32>
    %1387 = arith.mulf %1376, %1386 : vector<22x16xf32>
    %1388 = arith.addf %1370, %1387 : vector<22x16xf32>
    %c71_475 = arith.constant 71 : index
    %1389 = memref.load %arg6[%c71_475] : memref<112xf32, #tpu.memory_space<smem>>
    %1390 = vector.broadcast %1389 : f32 to vector<22x16xf32>
    %1391 = arith.mulf %1376, %1390 : vector<22x16xf32>
    %1392 = arith.addf %1374, %1391 : vector<22x16xf32>
    %c2_476 = arith.constant 2 : index
    %c0_477 = arith.constant 0 : index
    %c4_478 = arith.constant 4 : index
    %1393 = vector.load %arg11[%c2_476, %c0_477, %c4_478] : memref<4x22x22xf32, #tpu.memory_space<vmem>>, vector<1x22x16xf32>
    %1394 = vector.shape_cast %1393 : vector<1x22x16xf32> to vector<22x16xf32>
    %c72_479 = arith.constant 72 : index
    %1395 = memref.load %arg6[%c72_479] : memref<112xf32, #tpu.memory_space<smem>>
    %1396 = vector.broadcast %1395 : f32 to vector<22x16xf32>
    %1397 = arith.mulf %1394, %1396 : vector<22x16xf32>
    %1398 = arith.addf %1380, %1397 : vector<22x16xf32>
    %c73_480 = arith.constant 73 : index
    %1399 = memref.load %arg6[%c73_480] : memref<112xf32, #tpu.memory_space<smem>>
    %1400 = vector.broadcast %1399 : f32 to vector<22x16xf32>
    %1401 = arith.mulf %1394, %1400 : vector<22x16xf32>
    %1402 = arith.addf %1384, %1401 : vector<22x16xf32>
    %c74_481 = arith.constant 74 : index
    %1403 = memref.load %arg6[%c74_481] : memref<112xf32, #tpu.memory_space<smem>>
    %1404 = vector.broadcast %1403 : f32 to vector<22x16xf32>
    %1405 = arith.mulf %1394, %1404 : vector<22x16xf32>
    %1406 = arith.addf %1388, %1405 : vector<22x16xf32>
    %c75_482 = arith.constant 75 : index
    %1407 = memref.load %arg6[%c75_482] : memref<112xf32, #tpu.memory_space<smem>>
    %1408 = vector.broadcast %1407 : f32 to vector<22x16xf32>
    %1409 = arith.mulf %1394, %1408 : vector<22x16xf32>
    %1410 = arith.addf %1392, %1409 : vector<22x16xf32>
    %c3_483 = arith.constant 3 : index
    %c0_484 = arith.constant 0 : index
    %c4_485 = arith.constant 4 : index
    %1411 = vector.load %arg11[%c3_483, %c0_484, %c4_485] : memref<4x22x22xf32, #tpu.memory_space<vmem>>, vector<1x22x16xf32>
    %1412 = vector.shape_cast %1411 : vector<1x22x16xf32> to vector<22x16xf32>
    %c76_486 = arith.constant 76 : index
    %1413 = memref.load %arg6[%c76_486] : memref<112xf32, #tpu.memory_space<smem>>
    %1414 = vector.broadcast %1413 : f32 to vector<22x16xf32>
    %1415 = arith.mulf %1412, %1414 : vector<22x16xf32>
    %1416 = arith.addf %1398, %1415 : vector<22x16xf32>
    %c77_487 = arith.constant 77 : index
    %1417 = memref.load %arg6[%c77_487] : memref<112xf32, #tpu.memory_space<smem>>
    %1418 = vector.broadcast %1417 : f32 to vector<22x16xf32>
    %1419 = arith.mulf %1412, %1418 : vector<22x16xf32>
    %1420 = arith.addf %1402, %1419 : vector<22x16xf32>
    %c78_488 = arith.constant 78 : index
    %1421 = memref.load %arg6[%c78_488] : memref<112xf32, #tpu.memory_space<smem>>
    %1422 = vector.broadcast %1421 : f32 to vector<22x16xf32>
    %1423 = arith.mulf %1412, %1422 : vector<22x16xf32>
    %1424 = arith.addf %1406, %1423 : vector<22x16xf32>
    %c79_489 = arith.constant 79 : index
    %1425 = memref.load %arg6[%c79_489] : memref<112xf32, #tpu.memory_space<smem>>
    %1426 = vector.broadcast %1425 : f32 to vector<22x16xf32>
    %1427 = arith.mulf %1412, %1426 : vector<22x16xf32>
    %1428 = arith.addf %1410, %1427 : vector<22x16xf32>
    %c0_490 = arith.constant 0 : index
    %c0_491 = arith.constant 0 : index
    %c5_492 = arith.constant 5 : index
    %1429 = vector.load %arg11[%c0_490, %c0_491, %c5_492] : memref<4x22x22xf32, #tpu.memory_space<vmem>>, vector<1x22x16xf32>
    %1430 = vector.shape_cast %1429 : vector<1x22x16xf32> to vector<22x16xf32>
    %c80_493 = arith.constant 80 : index
    %1431 = memref.load %arg6[%c80_493] : memref<112xf32, #tpu.memory_space<smem>>
    %1432 = vector.broadcast %1431 : f32 to vector<22x16xf32>
    %1433 = arith.mulf %1430, %1432 : vector<22x16xf32>
    %1434 = arith.addf %1416, %1433 : vector<22x16xf32>
    %c81_494 = arith.constant 81 : index
    %1435 = memref.load %arg6[%c81_494] : memref<112xf32, #tpu.memory_space<smem>>
    %1436 = vector.broadcast %1435 : f32 to vector<22x16xf32>
    %1437 = arith.mulf %1430, %1436 : vector<22x16xf32>
    %1438 = arith.addf %1420, %1437 : vector<22x16xf32>
    %c82_495 = arith.constant 82 : index
    %1439 = memref.load %arg6[%c82_495] : memref<112xf32, #tpu.memory_space<smem>>
    %1440 = vector.broadcast %1439 : f32 to vector<22x16xf32>
    %1441 = arith.mulf %1430, %1440 : vector<22x16xf32>
    %1442 = arith.addf %1424, %1441 : vector<22x16xf32>
    %c83_496 = arith.constant 83 : index
    %1443 = memref.load %arg6[%c83_496] : memref<112xf32, #tpu.memory_space<smem>>
    %1444 = vector.broadcast %1443 : f32 to vector<22x16xf32>
    %1445 = arith.mulf %1430, %1444 : vector<22x16xf32>
    %1446 = arith.addf %1428, %1445 : vector<22x16xf32>
    %c1_497 = arith.constant 1 : index
    %c0_498 = arith.constant 0 : index
    %c5_499 = arith.constant 5 : index
    %1447 = vector.load %arg11[%c1_497, %c0_498, %c5_499] : memref<4x22x22xf32, #tpu.memory_space<vmem>>, vector<1x22x16xf32>
    %1448 = vector.shape_cast %1447 : vector<1x22x16xf32> to vector<22x16xf32>
    %c84_500 = arith.constant 84 : index
    %1449 = memref.load %arg6[%c84_500] : memref<112xf32, #tpu.memory_space<smem>>
    %1450 = vector.broadcast %1449 : f32 to vector<22x16xf32>
    %1451 = arith.mulf %1448, %1450 : vector<22x16xf32>
    %1452 = arith.addf %1434, %1451 : vector<22x16xf32>
    %c85_501 = arith.constant 85 : index
    %1453 = memref.load %arg6[%c85_501] : memref<112xf32, #tpu.memory_space<smem>>
    %1454 = vector.broadcast %1453 : f32 to vector<22x16xf32>
    %1455 = arith.mulf %1448, %1454 : vector<22x16xf32>
    %1456 = arith.addf %1438, %1455 : vector<22x16xf32>
    %c86_502 = arith.constant 86 : index
    %1457 = memref.load %arg6[%c86_502] : memref<112xf32, #tpu.memory_space<smem>>
    %1458 = vector.broadcast %1457 : f32 to vector<22x16xf32>
    %1459 = arith.mulf %1448, %1458 : vector<22x16xf32>
    %1460 = arith.addf %1442, %1459 : vector<22x16xf32>
    %c87_503 = arith.constant 87 : index
    %1461 = memref.load %arg6[%c87_503] : memref<112xf32, #tpu.memory_space<smem>>
    %1462 = vector.broadcast %1461 : f32 to vector<22x16xf32>
    %1463 = arith.mulf %1448, %1462 : vector<22x16xf32>
    %1464 = arith.addf %1446, %1463 : vector<22x16xf32>
    %c2_504 = arith.constant 2 : index
    %c0_505 = arith.constant 0 : index
    %c5_506 = arith.constant 5 : index
    %1465 = vector.load %arg11[%c2_504, %c0_505, %c5_506] : memref<4x22x22xf32, #tpu.memory_space<vmem>>, vector<1x22x16xf32>
    %1466 = vector.shape_cast %1465 : vector<1x22x16xf32> to vector<22x16xf32>
    %c88_507 = arith.constant 88 : index
    %1467 = memref.load %arg6[%c88_507] : memref<112xf32, #tpu.memory_space<smem>>
    %1468 = vector.broadcast %1467 : f32 to vector<22x16xf32>
    %1469 = arith.mulf %1466, %1468 : vector<22x16xf32>
    %1470 = arith.addf %1452, %1469 : vector<22x16xf32>
    %c89_508 = arith.constant 89 : index
    %1471 = memref.load %arg6[%c89_508] : memref<112xf32, #tpu.memory_space<smem>>
    %1472 = vector.broadcast %1471 : f32 to vector<22x16xf32>
    %1473 = arith.mulf %1466, %1472 : vector<22x16xf32>
    %1474 = arith.addf %1456, %1473 : vector<22x16xf32>
    %c90_509 = arith.constant 90 : index
    %1475 = memref.load %arg6[%c90_509] : memref<112xf32, #tpu.memory_space<smem>>
    %1476 = vector.broadcast %1475 : f32 to vector<22x16xf32>
    %1477 = arith.mulf %1466, %1476 : vector<22x16xf32>
    %1478 = arith.addf %1460, %1477 : vector<22x16xf32>
    %c91_510 = arith.constant 91 : index
    %1479 = memref.load %arg6[%c91_510] : memref<112xf32, #tpu.memory_space<smem>>
    %1480 = vector.broadcast %1479 : f32 to vector<22x16xf32>
    %1481 = arith.mulf %1466, %1480 : vector<22x16xf32>
    %1482 = arith.addf %1464, %1481 : vector<22x16xf32>
    %c3_511 = arith.constant 3 : index
    %c0_512 = arith.constant 0 : index
    %c5_513 = arith.constant 5 : index
    %1483 = vector.load %arg11[%c3_511, %c0_512, %c5_513] : memref<4x22x22xf32, #tpu.memory_space<vmem>>, vector<1x22x16xf32>
    %1484 = vector.shape_cast %1483 : vector<1x22x16xf32> to vector<22x16xf32>
    %c92_514 = arith.constant 92 : index
    %1485 = memref.load %arg6[%c92_514] : memref<112xf32, #tpu.memory_space<smem>>
    %1486 = vector.broadcast %1485 : f32 to vector<22x16xf32>
    %1487 = arith.mulf %1484, %1486 : vector<22x16xf32>
    %1488 = arith.addf %1470, %1487 : vector<22x16xf32>
    %c93_515 = arith.constant 93 : index
    %1489 = memref.load %arg6[%c93_515] : memref<112xf32, #tpu.memory_space<smem>>
    %1490 = vector.broadcast %1489 : f32 to vector<22x16xf32>
    %1491 = arith.mulf %1484, %1490 : vector<22x16xf32>
    %1492 = arith.addf %1474, %1491 : vector<22x16xf32>
    %c94_516 = arith.constant 94 : index
    %1493 = memref.load %arg6[%c94_516] : memref<112xf32, #tpu.memory_space<smem>>
    %1494 = vector.broadcast %1493 : f32 to vector<22x16xf32>
    %1495 = arith.mulf %1484, %1494 : vector<22x16xf32>
    %1496 = arith.addf %1478, %1495 : vector<22x16xf32>
    %c95_517 = arith.constant 95 : index
    %1497 = memref.load %arg6[%c95_517] : memref<112xf32, #tpu.memory_space<smem>>
    %1498 = vector.broadcast %1497 : f32 to vector<22x16xf32>
    %1499 = arith.mulf %1484, %1498 : vector<22x16xf32>
    %1500 = arith.addf %1482, %1499 : vector<22x16xf32>
    %c0_518 = arith.constant 0 : index
    %c0_519 = arith.constant 0 : index
    %c6_520 = arith.constant 6 : index
    %1501 = vector.load %arg11[%c0_518, %c0_519, %c6_520] : memref<4x22x22xf32, #tpu.memory_space<vmem>>, vector<1x22x16xf32>
    %1502 = vector.shape_cast %1501 : vector<1x22x16xf32> to vector<22x16xf32>
    %c96_521 = arith.constant 96 : index
    %1503 = memref.load %arg6[%c96_521] : memref<112xf32, #tpu.memory_space<smem>>
    %1504 = vector.broadcast %1503 : f32 to vector<22x16xf32>
    %1505 = arith.mulf %1502, %1504 : vector<22x16xf32>
    %1506 = arith.addf %1488, %1505 : vector<22x16xf32>
    %c97_522 = arith.constant 97 : index
    %1507 = memref.load %arg6[%c97_522] : memref<112xf32, #tpu.memory_space<smem>>
    %1508 = vector.broadcast %1507 : f32 to vector<22x16xf32>
    %1509 = arith.mulf %1502, %1508 : vector<22x16xf32>
    %1510 = arith.addf %1492, %1509 : vector<22x16xf32>
    %c98_523 = arith.constant 98 : index
    %1511 = memref.load %arg6[%c98_523] : memref<112xf32, #tpu.memory_space<smem>>
    %1512 = vector.broadcast %1511 : f32 to vector<22x16xf32>
    %1513 = arith.mulf %1502, %1512 : vector<22x16xf32>
    %1514 = arith.addf %1496, %1513 : vector<22x16xf32>
    %c99_524 = arith.constant 99 : index
    %1515 = memref.load %arg6[%c99_524] : memref<112xf32, #tpu.memory_space<smem>>
    %1516 = vector.broadcast %1515 : f32 to vector<22x16xf32>
    %1517 = arith.mulf %1502, %1516 : vector<22x16xf32>
    %1518 = arith.addf %1500, %1517 : vector<22x16xf32>
    %c1_525 = arith.constant 1 : index
    %c0_526 = arith.constant 0 : index
    %c6_527 = arith.constant 6 : index
    %1519 = vector.load %arg11[%c1_525, %c0_526, %c6_527] : memref<4x22x22xf32, #tpu.memory_space<vmem>>, vector<1x22x16xf32>
    %1520 = vector.shape_cast %1519 : vector<1x22x16xf32> to vector<22x16xf32>
    %c100_528 = arith.constant 100 : index
    %1521 = memref.load %arg6[%c100_528] : memref<112xf32, #tpu.memory_space<smem>>
    %1522 = vector.broadcast %1521 : f32 to vector<22x16xf32>
    %1523 = arith.mulf %1520, %1522 : vector<22x16xf32>
    %1524 = arith.addf %1506, %1523 : vector<22x16xf32>
    %c101_529 = arith.constant 101 : index
    %1525 = memref.load %arg6[%c101_529] : memref<112xf32, #tpu.memory_space<smem>>
    %1526 = vector.broadcast %1525 : f32 to vector<22x16xf32>
    %1527 = arith.mulf %1520, %1526 : vector<22x16xf32>
    %1528 = arith.addf %1510, %1527 : vector<22x16xf32>
    %c102_530 = arith.constant 102 : index
    %1529 = memref.load %arg6[%c102_530] : memref<112xf32, #tpu.memory_space<smem>>
    %1530 = vector.broadcast %1529 : f32 to vector<22x16xf32>
    %1531 = arith.mulf %1520, %1530 : vector<22x16xf32>
    %1532 = arith.addf %1514, %1531 : vector<22x16xf32>
    %c103_531 = arith.constant 103 : index
    %1533 = memref.load %arg6[%c103_531] : memref<112xf32, #tpu.memory_space<smem>>
    %1534 = vector.broadcast %1533 : f32 to vector<22x16xf32>
    %1535 = arith.mulf %1520, %1534 : vector<22x16xf32>
    %1536 = arith.addf %1518, %1535 : vector<22x16xf32>
    %c2_532 = arith.constant 2 : index
    %c0_533 = arith.constant 0 : index
    %c6_534 = arith.constant 6 : index
    %1537 = vector.load %arg11[%c2_532, %c0_533, %c6_534] : memref<4x22x22xf32, #tpu.memory_space<vmem>>, vector<1x22x16xf32>
    %1538 = vector.shape_cast %1537 : vector<1x22x16xf32> to vector<22x16xf32>
    %c104_535 = arith.constant 104 : index
    %1539 = memref.load %arg6[%c104_535] : memref<112xf32, #tpu.memory_space<smem>>
    %1540 = vector.broadcast %1539 : f32 to vector<22x16xf32>
    %1541 = arith.mulf %1538, %1540 : vector<22x16xf32>
    %1542 = arith.addf %1524, %1541 : vector<22x16xf32>
    %c105_536 = arith.constant 105 : index
    %1543 = memref.load %arg6[%c105_536] : memref<112xf32, #tpu.memory_space<smem>>
    %1544 = vector.broadcast %1543 : f32 to vector<22x16xf32>
    %1545 = arith.mulf %1538, %1544 : vector<22x16xf32>
    %1546 = arith.addf %1528, %1545 : vector<22x16xf32>
    %c106_537 = arith.constant 106 : index
    %1547 = memref.load %arg6[%c106_537] : memref<112xf32, #tpu.memory_space<smem>>
    %1548 = vector.broadcast %1547 : f32 to vector<22x16xf32>
    %1549 = arith.mulf %1538, %1548 : vector<22x16xf32>
    %1550 = arith.addf %1532, %1549 : vector<22x16xf32>
    %c107_538 = arith.constant 107 : index
    %1551 = memref.load %arg6[%c107_538] : memref<112xf32, #tpu.memory_space<smem>>
    %1552 = vector.broadcast %1551 : f32 to vector<22x16xf32>
    %1553 = arith.mulf %1538, %1552 : vector<22x16xf32>
    %1554 = arith.addf %1536, %1553 : vector<22x16xf32>
    %c3_539 = arith.constant 3 : index
    %c0_540 = arith.constant 0 : index
    %c6_541 = arith.constant 6 : index
    %1555 = vector.load %arg11[%c3_539, %c0_540, %c6_541] : memref<4x22x22xf32, #tpu.memory_space<vmem>>, vector<1x22x16xf32>
    %1556 = vector.shape_cast %1555 : vector<1x22x16xf32> to vector<22x16xf32>
    %c108_542 = arith.constant 108 : index
    %1557 = memref.load %arg6[%c108_542] : memref<112xf32, #tpu.memory_space<smem>>
    %1558 = vector.broadcast %1557 : f32 to vector<22x16xf32>
    %1559 = arith.mulf %1556, %1558 : vector<22x16xf32>
    %1560 = arith.addf %1542, %1559 : vector<22x16xf32>
    %c109_543 = arith.constant 109 : index
    %1561 = memref.load %arg6[%c109_543] : memref<112xf32, #tpu.memory_space<smem>>
    %1562 = vector.broadcast %1561 : f32 to vector<22x16xf32>
    %1563 = arith.mulf %1556, %1562 : vector<22x16xf32>
    %1564 = arith.addf %1546, %1563 : vector<22x16xf32>
    %c110_544 = arith.constant 110 : index
    %1565 = memref.load %arg6[%c110_544] : memref<112xf32, #tpu.memory_space<smem>>
    %1566 = vector.broadcast %1565 : f32 to vector<22x16xf32>
    %1567 = arith.mulf %1556, %1566 : vector<22x16xf32>
    %1568 = arith.addf %1550, %1567 : vector<22x16xf32>
    %c111_545 = arith.constant 111 : index
    %1569 = memref.load %arg6[%c111_545] : memref<112xf32, #tpu.memory_space<smem>>
    %1570 = vector.broadcast %1569 : f32 to vector<22x16xf32>
    %1571 = arith.mulf %1556, %1570 : vector<22x16xf32>
    %1572 = arith.addf %1554, %1571 : vector<22x16xf32>
    %c0_546 = arith.constant 0 : index
    %c0_547 = arith.constant 0 : index
    %c0_548 = arith.constant 0 : index
    %1573 = vector.load %arg12[%c0_546, %c0_547, %c0_548] : memref<4x22x22xf32, #tpu.memory_space<vmem>>, vector<1x22x16xf32>
    %1574 = vector.shape_cast %1573 : vector<1x22x16xf32> to vector<22x16xf32>
    %1575 = vector.shape_cast %1560 : vector<22x16xf32> to vector<1x22x16xf32>
    tpu.vector_store %arg12[%c0_546, %c0_547, %c0_548], %1575 {strides = array<i32>} : memref<4x22x22xf32, #tpu.memory_space<vmem>>, vector<1x22x16xf32>,
    %c0_549 = arith.constant 0 : index
    %c3_550 = arith.constant 3 : index
    %c0_551 = arith.constant 0 : index
    %1576 = vector.load %arg12[%c0_549, %c3_550, %c0_551] : memref<4x22x22xf32, #tpu.memory_space<vmem>>, vector<1x16x16xf32>
    %1577 = vector.shape_cast %1576 : vector<1x16x16xf32> to vector<16x16xf32>
    %c0_552 = arith.constant 0 : index
    %1578 = memref.load %arg7[%c0_552] : memref<4xf32, #tpu.memory_space<smem>>
    %1579 = vector.broadcast %1578 : f32 to vector<16x16xf32>
    %1580 = arith.addf %1577, %1579 : vector<16x16xf32>
    %c0_553 = arith.constant 0 : index
    %c3_554 = arith.constant 3 : index
    %c0_555 = arith.constant 0 : index
    %1581 = vector.load %arg12[%c0_553, %c3_554, %c0_555] : memref<4x22x22xf32, #tpu.memory_space<vmem>>, vector<1x16x16xf32>
    %1582 = vector.shape_cast %1581 : vector<1x16x16xf32> to vector<16x16xf32>
    %1583 = vector.shape_cast %1580 : vector<16x16xf32> to vector<1x16x16xf32>
    tpu.vector_store %arg12[%c0_553, %c3_554, %c0_555], %1583 {strides = array<i32>} : memref<4x22x22xf32, #tpu.memory_space<vmem>>, vector<1x16x16xf32>,
    %c1_556 = arith.constant 1 : index
    %c0_557 = arith.constant 0 : index
    %c0_558 = arith.constant 0 : index
    %1584 = vector.load %arg12[%c1_556, %c0_557, %c0_558] : memref<4x22x22xf32, #tpu.memory_space<vmem>>, vector<1x22x16xf32>
    %1585 = vector.shape_cast %1584 : vector<1x22x16xf32> to vector<22x16xf32>
    %1586 = vector.shape_cast %1564 : vector<22x16xf32> to vector<1x22x16xf32>
    tpu.vector_store %arg12[%c1_556, %c0_557, %c0_558], %1586 {strides = array<i32>} : memref<4x22x22xf32, #tpu.memory_space<vmem>>, vector<1x22x16xf32>,
    %c1_559 = arith.constant 1 : index
    %c3_560 = arith.constant 3 : index
    %c0_561 = arith.constant 0 : index
    %1587 = vector.load %arg12[%c1_559, %c3_560, %c0_561] : memref<4x22x22xf32, #tpu.memory_space<vmem>>, vector<1x16x16xf32>
    %1588 = vector.shape_cast %1587 : vector<1x16x16xf32> to vector<16x16xf32>
    %c1_562 = arith.constant 1 : index
    %1589 = memref.load %arg7[%c1_562] : memref<4xf32, #tpu.memory_space<smem>>
    %1590 = vector.broadcast %1589 : f32 to vector<16x16xf32>
    %1591 = arith.addf %1588, %1590 : vector<16x16xf32>
    %c1_563 = arith.constant 1 : index
    %c3_564 = arith.constant 3 : index
    %c0_565 = arith.constant 0 : index
    %1592 = vector.load %arg12[%c1_563, %c3_564, %c0_565] : memref<4x22x22xf32, #tpu.memory_space<vmem>>, vector<1x16x16xf32>
    %1593 = vector.shape_cast %1592 : vector<1x16x16xf32> to vector<16x16xf32>
    %1594 = vector.shape_cast %1591 : vector<16x16xf32> to vector<1x16x16xf32>
    tpu.vector_store %arg12[%c1_563, %c3_564, %c0_565], %1594 {strides = array<i32>} : memref<4x22x22xf32, #tpu.memory_space<vmem>>, vector<1x16x16xf32>,
    %c2_566 = arith.constant 2 : index
    %c0_567 = arith.constant 0 : index
    %c0_568 = arith.constant 0 : index
    %1595 = vector.load %arg12[%c2_566, %c0_567, %c0_568] : memref<4x22x22xf32, #tpu.memory_space<vmem>>, vector<1x22x16xf32>
    %1596 = vector.shape_cast %1595 : vector<1x22x16xf32> to vector<22x16xf32>
    %1597 = vector.shape_cast %1568 : vector<22x16xf32> to vector<1x22x16xf32>
    tpu.vector_store %arg12[%c2_566, %c0_567, %c0_568], %1597 {strides = array<i32>} : memref<4x22x22xf32, #tpu.memory_space<vmem>>, vector<1x22x16xf32>,
    %c2_569 = arith.constant 2 : index
    %c3_570 = arith.constant 3 : index
    %c0_571 = arith.constant 0 : index
    %1598 = vector.load %arg12[%c2_569, %c3_570, %c0_571] : memref<4x22x22xf32, #tpu.memory_space<vmem>>, vector<1x16x16xf32>
    %1599 = vector.shape_cast %1598 : vector<1x16x16xf32> to vector<16x16xf32>
    %c2_572 = arith.constant 2 : index
    %1600 = memref.load %arg7[%c2_572] : memref<4xf32, #tpu.memory_space<smem>>
    %1601 = vector.broadcast %1600 : f32 to vector<16x16xf32>
    %1602 = arith.addf %1599, %1601 : vector<16x16xf32>
    %c2_573 = arith.constant 2 : index
    %c3_574 = arith.constant 3 : index
    %c0_575 = arith.constant 0 : index
    %1603 = vector.load %arg12[%c2_573, %c3_574, %c0_575] : memref<4x22x22xf32, #tpu.memory_space<vmem>>, vector<1x16x16xf32>
    %1604 = vector.shape_cast %1603 : vector<1x16x16xf32> to vector<16x16xf32>
    %1605 = vector.shape_cast %1602 : vector<16x16xf32> to vector<1x16x16xf32>
    tpu.vector_store %arg12[%c2_573, %c3_574, %c0_575], %1605 {strides = array<i32>} : memref<4x22x22xf32, #tpu.memory_space<vmem>>, vector<1x16x16xf32>,
    %c3_576 = arith.constant 3 : index
    %c0_577 = arith.constant 0 : index
    %c0_578 = arith.constant 0 : index
    %1606 = vector.load %arg12[%c3_576, %c0_577, %c0_578] : memref<4x22x22xf32, #tpu.memory_space<vmem>>, vector<1x22x16xf32>
    %1607 = vector.shape_cast %1606 : vector<1x22x16xf32> to vector<22x16xf32>
    %1608 = vector.shape_cast %1572 : vector<22x16xf32> to vector<1x22x16xf32>
    tpu.vector_store %arg12[%c3_576, %c0_577, %c0_578], %1608 {strides = array<i32>} : memref<4x22x22xf32, #tpu.memory_space<vmem>>, vector<1x22x16xf32>,
    %c3_579 = arith.constant 3 : index
    %c3_580 = arith.constant 3 : index
    %c0_581 = arith.constant 0 : index
    %1609 = vector.load %arg12[%c3_579, %c3_580, %c0_581] : memref<4x22x22xf32, #tpu.memory_space<vmem>>, vector<1x16x16xf32>
    %1610 = vector.shape_cast %1609 : vector<1x16x16xf32> to vector<16x16xf32>
    %c3_582 = arith.constant 3 : index
    %1611 = memref.load %arg7[%c3_582] : memref<4xf32, #tpu.memory_space<smem>>
    %1612 = vector.broadcast %1611 : f32 to vector<16x16xf32>
    %1613 = arith.addf %1610, %1612 : vector<16x16xf32>
    %c3_583 = arith.constant 3 : index
    %c3_584 = arith.constant 3 : index
    %c0_585 = arith.constant 0 : index
    %1614 = vector.load %arg12[%c3_583, %c3_584, %c0_585] : memref<4x22x22xf32, #tpu.memory_space<vmem>>, vector<1x16x16xf32>
    %1615 = vector.shape_cast %1614 : vector<1x16x16xf32> to vector<16x16xf32>
    %1616 = vector.shape_cast %1613 : vector<16x16xf32> to vector<1x16x16xf32>
    tpu.vector_store %arg12[%c3_583, %c3_584, %c0_585], %1616 {strides = array<i32>} : memref<4x22x22xf32, #tpu.memory_space<vmem>>, vector<1x16x16xf32>,
    %c0_586 = arith.constant 0 : index
    %1617 = memref.load %arg9[%c0_586] : memref<4xf32, #tpu.memory_space<smem>>
    %1618 = vector.broadcast %1617 : f32 to vector<16x16xf32>
    %c1_587 = arith.constant 1 : index
    %1619 = memref.load %arg9[%c1_587] : memref<4xf32, #tpu.memory_space<smem>>
    %1620 = vector.broadcast %1619 : f32 to vector<16x16xf32>
    %c2_588 = arith.constant 2 : index
    %1621 = memref.load %arg9[%c2_588] : memref<4xf32, #tpu.memory_space<smem>>
    %1622 = vector.broadcast %1621 : f32 to vector<16x16xf32>
    %c3_589 = arith.constant 3 : index
    %1623 = memref.load %arg9[%c3_589] : memref<4xf32, #tpu.memory_space<smem>>
    %1624 = vector.broadcast %1623 : f32 to vector<16x16xf32>
    %c0_590 = arith.constant 0 : index
    %c0_591 = arith.constant 0 : index
    %c0_592 = arith.constant 0 : index
    %1625 = vector.load %arg12[%c0_590, %c0_591, %c0_592] : memref<4x22x22xf32, #tpu.memory_space<vmem>>, vector<1x16x16xf32>
    %1626 = vector.shape_cast %1625 : vector<1x16x16xf32> to vector<16x16xf32>
    %c0_593 = arith.constant 0 : index
    %1627 = memref.load %arg8[%c0_593] : memref<112xf32, #tpu.memory_space<smem>>
    %1628 = vector.broadcast %1627 : f32 to vector<16x16xf32>
    %1629 = arith.mulf %1626, %1628 : vector<16x16xf32>
    %1630 = arith.addf %1618, %1629 : vector<16x16xf32>
    %c1_594 = arith.constant 1 : index
    %1631 = memref.load %arg8[%c1_594] : memref<112xf32, #tpu.memory_space<smem>>
    %1632 = vector.broadcast %1631 : f32 to vector<16x16xf32>
    %1633 = arith.mulf %1626, %1632 : vector<16x16xf32>
    %1634 = arith.addf %1620, %1633 : vector<16x16xf32>
    %c2_595 = arith.constant 2 : index
    %1635 = memref.load %arg8[%c2_595] : memref<112xf32, #tpu.memory_space<smem>>
    %1636 = vector.broadcast %1635 : f32 to vector<16x16xf32>
    %1637 = arith.mulf %1626, %1636 : vector<16x16xf32>
    %1638 = arith.addf %1622, %1637 : vector<16x16xf32>
    %c3_596 = arith.constant 3 : index
    %1639 = memref.load %arg8[%c3_596] : memref<112xf32, #tpu.memory_space<smem>>
    %1640 = vector.broadcast %1639 : f32 to vector<16x16xf32>
    %1641 = arith.mulf %1626, %1640 : vector<16x16xf32>
    %1642 = arith.addf %1624, %1641 : vector<16x16xf32>
    %c1_597 = arith.constant 1 : index
    %c0_598 = arith.constant 0 : index
    %c0_599 = arith.constant 0 : index
    %1643 = vector.load %arg12[%c1_597, %c0_598, %c0_599] : memref<4x22x22xf32, #tpu.memory_space<vmem>>, vector<1x16x16xf32>
    %1644 = vector.shape_cast %1643 : vector<1x16x16xf32> to vector<16x16xf32>
    %c4_600 = arith.constant 4 : index
    %1645 = memref.load %arg8[%c4_600] : memref<112xf32, #tpu.memory_space<smem>>
    %1646 = vector.broadcast %1645 : f32 to vector<16x16xf32>
    %1647 = arith.mulf %1644, %1646 : vector<16x16xf32>
    %1648 = arith.addf %1630, %1647 : vector<16x16xf32>
    %c5_601 = arith.constant 5 : index
    %1649 = memref.load %arg8[%c5_601] : memref<112xf32, #tpu.memory_space<smem>>
    %1650 = vector.broadcast %1649 : f32 to vector<16x16xf32>
    %1651 = arith.mulf %1644, %1650 : vector<16x16xf32>
    %1652 = arith.addf %1634, %1651 : vector<16x16xf32>
    %c6_602 = arith.constant 6 : index
    %1653 = memref.load %arg8[%c6_602] : memref<112xf32, #tpu.memory_space<smem>>
    %1654 = vector.broadcast %1653 : f32 to vector<16x16xf32>
    %1655 = arith.mulf %1644, %1654 : vector<16x16xf32>
    %1656 = arith.addf %1638, %1655 : vector<16x16xf32>
    %c7_603 = arith.constant 7 : index
    %1657 = memref.load %arg8[%c7_603] : memref<112xf32, #tpu.memory_space<smem>>
    %1658 = vector.broadcast %1657 : f32 to vector<16x16xf32>
    %1659 = arith.mulf %1644, %1658 : vector<16x16xf32>
    %1660 = arith.addf %1642, %1659 : vector<16x16xf32>
    %c2_604 = arith.constant 2 : index
    %c0_605 = arith.constant 0 : index
    %c0_606 = arith.constant 0 : index
    %1661 = vector.load %arg12[%c2_604, %c0_605, %c0_606] : memref<4x22x22xf32, #tpu.memory_space<vmem>>, vector<1x16x16xf32>
    %1662 = vector.shape_cast %1661 : vector<1x16x16xf32> to vector<16x16xf32>
    %c8_607 = arith.constant 8 : index
    %1663 = memref.load %arg8[%c8_607] : memref<112xf32, #tpu.memory_space<smem>>
    %1664 = vector.broadcast %1663 : f32 to vector<16x16xf32>
    %1665 = arith.mulf %1662, %1664 : vector<16x16xf32>
    %1666 = arith.addf %1648, %1665 : vector<16x16xf32>
    %c9_608 = arith.constant 9 : index
    %1667 = memref.load %arg8[%c9_608] : memref<112xf32, #tpu.memory_space<smem>>
    %1668 = vector.broadcast %1667 : f32 to vector<16x16xf32>
    %1669 = arith.mulf %1662, %1668 : vector<16x16xf32>
    %1670 = arith.addf %1652, %1669 : vector<16x16xf32>
    %c10_609 = arith.constant 10 : index
    %1671 = memref.load %arg8[%c10_609] : memref<112xf32, #tpu.memory_space<smem>>
    %1672 = vector.broadcast %1671 : f32 to vector<16x16xf32>
    %1673 = arith.mulf %1662, %1672 : vector<16x16xf32>
    %1674 = arith.addf %1656, %1673 : vector<16x16xf32>
    %c11_610 = arith.constant 11 : index
    %1675 = memref.load %arg8[%c11_610] : memref<112xf32, #tpu.memory_space<smem>>
    %1676 = vector.broadcast %1675 : f32 to vector<16x16xf32>
    %1677 = arith.mulf %1662, %1676 : vector<16x16xf32>
    %1678 = arith.addf %1660, %1677 : vector<16x16xf32>
    %c3_611 = arith.constant 3 : index
    %c0_612 = arith.constant 0 : index
    %c0_613 = arith.constant 0 : index
    %1679 = vector.load %arg12[%c3_611, %c0_612, %c0_613] : memref<4x22x22xf32, #tpu.memory_space<vmem>>, vector<1x16x16xf32>
    %1680 = vector.shape_cast %1679 : vector<1x16x16xf32> to vector<16x16xf32>
    %c12_614 = arith.constant 12 : index
    %1681 = memref.load %arg8[%c12_614] : memref<112xf32, #tpu.memory_space<smem>>
    %1682 = vector.broadcast %1681 : f32 to vector<16x16xf32>
    %1683 = arith.mulf %1680, %1682 : vector<16x16xf32>
    %1684 = arith.addf %1666, %1683 : vector<16x16xf32>
    %c13_615 = arith.constant 13 : index
    %1685 = memref.load %arg8[%c13_615] : memref<112xf32, #tpu.memory_space<smem>>
    %1686 = vector.broadcast %1685 : f32 to vector<16x16xf32>
    %1687 = arith.mulf %1680, %1686 : vector<16x16xf32>
    %1688 = arith.addf %1670, %1687 : vector<16x16xf32>
    %c14_616 = arith.constant 14 : index
    %1689 = memref.load %arg8[%c14_616] : memref<112xf32, #tpu.memory_space<smem>>
    %1690 = vector.broadcast %1689 : f32 to vector<16x16xf32>
    %1691 = arith.mulf %1680, %1690 : vector<16x16xf32>
    %1692 = arith.addf %1674, %1691 : vector<16x16xf32>
    %c15_617 = arith.constant 15 : index
    %1693 = memref.load %arg8[%c15_617] : memref<112xf32, #tpu.memory_space<smem>>
    %1694 = vector.broadcast %1693 : f32 to vector<16x16xf32>
    %1695 = arith.mulf %1680, %1694 : vector<16x16xf32>
    %1696 = arith.addf %1678, %1695 : vector<16x16xf32>
    %c0_618 = arith.constant 0 : index
    %c1_619 = arith.constant 1 : index
    %c0_620 = arith.constant 0 : index
    %1697 = vector.load %arg12[%c0_618, %c1_619, %c0_620] : memref<4x22x22xf32, #tpu.memory_space<vmem>>, vector<1x16x16xf32>
    %1698 = vector.shape_cast %1697 : vector<1x16x16xf32> to vector<16x16xf32>
    %c16_621 = arith.constant 16 : index
    %1699 = memref.load %arg8[%c16_621] : memref<112xf32, #tpu.memory_space<smem>>
    %1700 = vector.broadcast %1699 : f32 to vector<16x16xf32>
    %1701 = arith.mulf %1698, %1700 : vector<16x16xf32>
    %1702 = arith.addf %1684, %1701 : vector<16x16xf32>
    %c17_622 = arith.constant 17 : index
    %1703 = memref.load %arg8[%c17_622] : memref<112xf32, #tpu.memory_space<smem>>
    %1704 = vector.broadcast %1703 : f32 to vector<16x16xf32>
    %1705 = arith.mulf %1698, %1704 : vector<16x16xf32>
    %1706 = arith.addf %1688, %1705 : vector<16x16xf32>
    %c18_623 = arith.constant 18 : index
    %1707 = memref.load %arg8[%c18_623] : memref<112xf32, #tpu.memory_space<smem>>
    %1708 = vector.broadcast %1707 : f32 to vector<16x16xf32>
    %1709 = arith.mulf %1698, %1708 : vector<16x16xf32>
    %1710 = arith.addf %1692, %1709 : vector<16x16xf32>
    %c19_624 = arith.constant 19 : index
    %1711 = memref.load %arg8[%c19_624] : memref<112xf32, #tpu.memory_space<smem>>
    %1712 = vector.broadcast %1711 : f32 to vector<16x16xf32>
    %1713 = arith.mulf %1698, %1712 : vector<16x16xf32>
    %1714 = arith.addf %1696, %1713 : vector<16x16xf32>
    %c1_625 = arith.constant 1 : index
    %c1_626 = arith.constant 1 : index
    %c0_627 = arith.constant 0 : index
    %1715 = vector.load %arg12[%c1_625, %c1_626, %c0_627] : memref<4x22x22xf32, #tpu.memory_space<vmem>>, vector<1x16x16xf32>
    %1716 = vector.shape_cast %1715 : vector<1x16x16xf32> to vector<16x16xf32>
    %c20_628 = arith.constant 20 : index
    %1717 = memref.load %arg8[%c20_628] : memref<112xf32, #tpu.memory_space<smem>>
    %1718 = vector.broadcast %1717 : f32 to vector<16x16xf32>
    %1719 = arith.mulf %1716, %1718 : vector<16x16xf32>
    %1720 = arith.addf %1702, %1719 : vector<16x16xf32>
    %c21_629 = arith.constant 21 : index
    %1721 = memref.load %arg8[%c21_629] : memref<112xf32, #tpu.memory_space<smem>>
    %1722 = vector.broadcast %1721 : f32 to vector<16x16xf32>
    %1723 = arith.mulf %1716, %1722 : vector<16x16xf32>
    %1724 = arith.addf %1706, %1723 : vector<16x16xf32>
    %c22_630 = arith.constant 22 : index
    %1725 = memref.load %arg8[%c22_630] : memref<112xf32, #tpu.memory_space<smem>>
    %1726 = vector.broadcast %1725 : f32 to vector<16x16xf32>
    %1727 = arith.mulf %1716, %1726 : vector<16x16xf32>
    %1728 = arith.addf %1710, %1727 : vector<16x16xf32>
    %c23_631 = arith.constant 23 : index
    %1729 = memref.load %arg8[%c23_631] : memref<112xf32, #tpu.memory_space<smem>>
    %1730 = vector.broadcast %1729 : f32 to vector<16x16xf32>
    %1731 = arith.mulf %1716, %1730 : vector<16x16xf32>
    %1732 = arith.addf %1714, %1731 : vector<16x16xf32>
    %c2_632 = arith.constant 2 : index
    %c1_633 = arith.constant 1 : index
    %c0_634 = arith.constant 0 : index
    %1733 = vector.load %arg12[%c2_632, %c1_633, %c0_634] : memref<4x22x22xf32, #tpu.memory_space<vmem>>, vector<1x16x16xf32>
    %1734 = vector.shape_cast %1733 : vector<1x16x16xf32> to vector<16x16xf32>
    %c24_635 = arith.constant 24 : index
    %1735 = memref.load %arg8[%c24_635] : memref<112xf32, #tpu.memory_space<smem>>
    %1736 = vector.broadcast %1735 : f32 to vector<16x16xf32>
    %1737 = arith.mulf %1734, %1736 : vector<16x16xf32>
    %1738 = arith.addf %1720, %1737 : vector<16x16xf32>
    %c25_636 = arith.constant 25 : index
    %1739 = memref.load %arg8[%c25_636] : memref<112xf32, #tpu.memory_space<smem>>
    %1740 = vector.broadcast %1739 : f32 to vector<16x16xf32>
    %1741 = arith.mulf %1734, %1740 : vector<16x16xf32>
    %1742 = arith.addf %1724, %1741 : vector<16x16xf32>
    %c26_637 = arith.constant 26 : index
    %1743 = memref.load %arg8[%c26_637] : memref<112xf32, #tpu.memory_space<smem>>
    %1744 = vector.broadcast %1743 : f32 to vector<16x16xf32>
    %1745 = arith.mulf %1734, %1744 : vector<16x16xf32>
    %1746 = arith.addf %1728, %1745 : vector<16x16xf32>
    %c27_638 = arith.constant 27 : index
    %1747 = memref.load %arg8[%c27_638] : memref<112xf32, #tpu.memory_space<smem>>
    %1748 = vector.broadcast %1747 : f32 to vector<16x16xf32>
    %1749 = arith.mulf %1734, %1748 : vector<16x16xf32>
    %1750 = arith.addf %1732, %1749 : vector<16x16xf32>
    %c3_639 = arith.constant 3 : index
    %c1_640 = arith.constant 1 : index
    %c0_641 = arith.constant 0 : index
    %1751 = vector.load %arg12[%c3_639, %c1_640, %c0_641] : memref<4x22x22xf32, #tpu.memory_space<vmem>>, vector<1x16x16xf32>
    %1752 = vector.shape_cast %1751 : vector<1x16x16xf32> to vector<16x16xf32>
    %c28_642 = arith.constant 28 : index
    %1753 = memref.load %arg8[%c28_642] : memref<112xf32, #tpu.memory_space<smem>>
    %1754 = vector.broadcast %1753 : f32 to vector<16x16xf32>
    %1755 = arith.mulf %1752, %1754 : vector<16x16xf32>
    %1756 = arith.addf %1738, %1755 : vector<16x16xf32>
    %c29_643 = arith.constant 29 : index
    %1757 = memref.load %arg8[%c29_643] : memref<112xf32, #tpu.memory_space<smem>>
    %1758 = vector.broadcast %1757 : f32 to vector<16x16xf32>
    %1759 = arith.mulf %1752, %1758 : vector<16x16xf32>
    %1760 = arith.addf %1742, %1759 : vector<16x16xf32>
    %c30_644 = arith.constant 30 : index
    %1761 = memref.load %arg8[%c30_644] : memref<112xf32, #tpu.memory_space<smem>>
    %1762 = vector.broadcast %1761 : f32 to vector<16x16xf32>
    %1763 = arith.mulf %1752, %1762 : vector<16x16xf32>
    %1764 = arith.addf %1746, %1763 : vector<16x16xf32>
    %c31_645 = arith.constant 31 : index
    %1765 = memref.load %arg8[%c31_645] : memref<112xf32, #tpu.memory_space<smem>>
    %1766 = vector.broadcast %1765 : f32 to vector<16x16xf32>
    %1767 = arith.mulf %1752, %1766 : vector<16x16xf32>
    %1768 = arith.addf %1750, %1767 : vector<16x16xf32>
    %c0_646 = arith.constant 0 : index
    %c2_647 = arith.constant 2 : index
    %c0_648 = arith.constant 0 : index
    %1769 = vector.load %arg12[%c0_646, %c2_647, %c0_648] : memref<4x22x22xf32, #tpu.memory_space<vmem>>, vector<1x16x16xf32>
    %1770 = vector.shape_cast %1769 : vector<1x16x16xf32> to vector<16x16xf32>
    %c32_649 = arith.constant 32 : index
    %1771 = memref.load %arg8[%c32_649] : memref<112xf32, #tpu.memory_space<smem>>
    %1772 = vector.broadcast %1771 : f32 to vector<16x16xf32>
    %1773 = arith.mulf %1770, %1772 : vector<16x16xf32>
    %1774 = arith.addf %1756, %1773 : vector<16x16xf32>
    %c33_650 = arith.constant 33 : index
    %1775 = memref.load %arg8[%c33_650] : memref<112xf32, #tpu.memory_space<smem>>
    %1776 = vector.broadcast %1775 : f32 to vector<16x16xf32>
    %1777 = arith.mulf %1770, %1776 : vector<16x16xf32>
    %1778 = arith.addf %1760, %1777 : vector<16x16xf32>
    %c34_651 = arith.constant 34 : index
    %1779 = memref.load %arg8[%c34_651] : memref<112xf32, #tpu.memory_space<smem>>
    %1780 = vector.broadcast %1779 : f32 to vector<16x16xf32>
    %1781 = arith.mulf %1770, %1780 : vector<16x16xf32>
    %1782 = arith.addf %1764, %1781 : vector<16x16xf32>
    %c35_652 = arith.constant 35 : index
    %1783 = memref.load %arg8[%c35_652] : memref<112xf32, #tpu.memory_space<smem>>
    %1784 = vector.broadcast %1783 : f32 to vector<16x16xf32>
    %1785 = arith.mulf %1770, %1784 : vector<16x16xf32>
    %1786 = arith.addf %1768, %1785 : vector<16x16xf32>
    %c1_653 = arith.constant 1 : index
    %c2_654 = arith.constant 2 : index
    %c0_655 = arith.constant 0 : index
    %1787 = vector.load %arg12[%c1_653, %c2_654, %c0_655] : memref<4x22x22xf32, #tpu.memory_space<vmem>>, vector<1x16x16xf32>
    %1788 = vector.shape_cast %1787 : vector<1x16x16xf32> to vector<16x16xf32>
    %c36_656 = arith.constant 36 : index
    %1789 = memref.load %arg8[%c36_656] : memref<112xf32, #tpu.memory_space<smem>>
    %1790 = vector.broadcast %1789 : f32 to vector<16x16xf32>
    %1791 = arith.mulf %1788, %1790 : vector<16x16xf32>
    %1792 = arith.addf %1774, %1791 : vector<16x16xf32>
    %c37_657 = arith.constant 37 : index
    %1793 = memref.load %arg8[%c37_657] : memref<112xf32, #tpu.memory_space<smem>>
    %1794 = vector.broadcast %1793 : f32 to vector<16x16xf32>
    %1795 = arith.mulf %1788, %1794 : vector<16x16xf32>
    %1796 = arith.addf %1778, %1795 : vector<16x16xf32>
    %c38_658 = arith.constant 38 : index
    %1797 = memref.load %arg8[%c38_658] : memref<112xf32, #tpu.memory_space<smem>>
    %1798 = vector.broadcast %1797 : f32 to vector<16x16xf32>
    %1799 = arith.mulf %1788, %1798 : vector<16x16xf32>
    %1800 = arith.addf %1782, %1799 : vector<16x16xf32>
    %c39_659 = arith.constant 39 : index
    %1801 = memref.load %arg8[%c39_659] : memref<112xf32, #tpu.memory_space<smem>>
    %1802 = vector.broadcast %1801 : f32 to vector<16x16xf32>
    %1803 = arith.mulf %1788, %1802 : vector<16x16xf32>
    %1804 = arith.addf %1786, %1803 : vector<16x16xf32>
    %c2_660 = arith.constant 2 : index
    %c2_661 = arith.constant 2 : index
    %c0_662 = arith.constant 0 : index
    %1805 = vector.load %arg12[%c2_660, %c2_661, %c0_662] : memref<4x22x22xf32, #tpu.memory_space<vmem>>, vector<1x16x16xf32>
    %1806 = vector.shape_cast %1805 : vector<1x16x16xf32> to vector<16x16xf32>
    %c40_663 = arith.constant 40 : index
    %1807 = memref.load %arg8[%c40_663] : memref<112xf32, #tpu.memory_space<smem>>
    %1808 = vector.broadcast %1807 : f32 to vector<16x16xf32>
    %1809 = arith.mulf %1806, %1808 : vector<16x16xf32>
    %1810 = arith.addf %1792, %1809 : vector<16x16xf32>
    %c41_664 = arith.constant 41 : index
    %1811 = memref.load %arg8[%c41_664] : memref<112xf32, #tpu.memory_space<smem>>
    %1812 = vector.broadcast %1811 : f32 to vector<16x16xf32>
    %1813 = arith.mulf %1806, %1812 : vector<16x16xf32>
    %1814 = arith.addf %1796, %1813 : vector<16x16xf32>
    %c42_665 = arith.constant 42 : index
    %1815 = memref.load %arg8[%c42_665] : memref<112xf32, #tpu.memory_space<smem>>
    %1816 = vector.broadcast %1815 : f32 to vector<16x16xf32>
    %1817 = arith.mulf %1806, %1816 : vector<16x16xf32>
    %1818 = arith.addf %1800, %1817 : vector<16x16xf32>
    %c43_666 = arith.constant 43 : index
    %1819 = memref.load %arg8[%c43_666] : memref<112xf32, #tpu.memory_space<smem>>
    %1820 = vector.broadcast %1819 : f32 to vector<16x16xf32>
    %1821 = arith.mulf %1806, %1820 : vector<16x16xf32>
    %1822 = arith.addf %1804, %1821 : vector<16x16xf32>
    %c3_667 = arith.constant 3 : index
    %c2_668 = arith.constant 2 : index
    %c0_669 = arith.constant 0 : index
    %1823 = vector.load %arg12[%c3_667, %c2_668, %c0_669] : memref<4x22x22xf32, #tpu.memory_space<vmem>>, vector<1x16x16xf32>
    %1824 = vector.shape_cast %1823 : vector<1x16x16xf32> to vector<16x16xf32>
    %c44_670 = arith.constant 44 : index
    %1825 = memref.load %arg8[%c44_670] : memref<112xf32, #tpu.memory_space<smem>>
    %1826 = vector.broadcast %1825 : f32 to vector<16x16xf32>
    %1827 = arith.mulf %1824, %1826 : vector<16x16xf32>
    %1828 = arith.addf %1810, %1827 : vector<16x16xf32>
    %c45_671 = arith.constant 45 : index
    %1829 = memref.load %arg8[%c45_671] : memref<112xf32, #tpu.memory_space<smem>>
    %1830 = vector.broadcast %1829 : f32 to vector<16x16xf32>
    %1831 = arith.mulf %1824, %1830 : vector<16x16xf32>
    %1832 = arith.addf %1814, %1831 : vector<16x16xf32>
    %c46_672 = arith.constant 46 : index
    %1833 = memref.load %arg8[%c46_672] : memref<112xf32, #tpu.memory_space<smem>>
    %1834 = vector.broadcast %1833 : f32 to vector<16x16xf32>
    %1835 = arith.mulf %1824, %1834 : vector<16x16xf32>
    %1836 = arith.addf %1818, %1835 : vector<16x16xf32>
    %c47_673 = arith.constant 47 : index
    %1837 = memref.load %arg8[%c47_673] : memref<112xf32, #tpu.memory_space<smem>>
    %1838 = vector.broadcast %1837 : f32 to vector<16x16xf32>
    %1839 = arith.mulf %1824, %1838 : vector<16x16xf32>
    %1840 = arith.addf %1822, %1839 : vector<16x16xf32>
    %c0_674 = arith.constant 0 : index
    %c3_675 = arith.constant 3 : index
    %c0_676 = arith.constant 0 : index
    %1841 = vector.load %arg12[%c0_674, %c3_675, %c0_676] : memref<4x22x22xf32, #tpu.memory_space<vmem>>, vector<1x16x16xf32>
    %1842 = vector.shape_cast %1841 : vector<1x16x16xf32> to vector<16x16xf32>
    %c48_677 = arith.constant 48 : index
    %1843 = memref.load %arg8[%c48_677] : memref<112xf32, #tpu.memory_space<smem>>
    %1844 = vector.broadcast %1843 : f32 to vector<16x16xf32>
    %1845 = arith.mulf %1842, %1844 : vector<16x16xf32>
    %1846 = arith.addf %1828, %1845 : vector<16x16xf32>
    %c49_678 = arith.constant 49 : index
    %1847 = memref.load %arg8[%c49_678] : memref<112xf32, #tpu.memory_space<smem>>
    %1848 = vector.broadcast %1847 : f32 to vector<16x16xf32>
    %1849 = arith.mulf %1842, %1848 : vector<16x16xf32>
    %1850 = arith.addf %1832, %1849 : vector<16x16xf32>
    %c50_679 = arith.constant 50 : index
    %1851 = memref.load %arg8[%c50_679] : memref<112xf32, #tpu.memory_space<smem>>
    %1852 = vector.broadcast %1851 : f32 to vector<16x16xf32>
    %1853 = arith.mulf %1842, %1852 : vector<16x16xf32>
    %1854 = arith.addf %1836, %1853 : vector<16x16xf32>
    %c51_680 = arith.constant 51 : index
    %1855 = memref.load %arg8[%c51_680] : memref<112xf32, #tpu.memory_space<smem>>
    %1856 = vector.broadcast %1855 : f32 to vector<16x16xf32>
    %1857 = arith.mulf %1842, %1856 : vector<16x16xf32>
    %1858 = arith.addf %1840, %1857 : vector<16x16xf32>
    %c1_681 = arith.constant 1 : index
    %c3_682 = arith.constant 3 : index
    %c0_683 = arith.constant 0 : index
    %1859 = vector.load %arg12[%c1_681, %c3_682, %c0_683] : memref<4x22x22xf32, #tpu.memory_space<vmem>>, vector<1x16x16xf32>
    %1860 = vector.shape_cast %1859 : vector<1x16x16xf32> to vector<16x16xf32>
    %c52_684 = arith.constant 52 : index
    %1861 = memref.load %arg8[%c52_684] : memref<112xf32, #tpu.memory_space<smem>>
    %1862 = vector.broadcast %1861 : f32 to vector<16x16xf32>
    %1863 = arith.mulf %1860, %1862 : vector<16x16xf32>
    %1864 = arith.addf %1846, %1863 : vector<16x16xf32>
    %c53_685 = arith.constant 53 : index
    %1865 = memref.load %arg8[%c53_685] : memref<112xf32, #tpu.memory_space<smem>>
    %1866 = vector.broadcast %1865 : f32 to vector<16x16xf32>
    %1867 = arith.mulf %1860, %1866 : vector<16x16xf32>
    %1868 = arith.addf %1850, %1867 : vector<16x16xf32>
    %c54_686 = arith.constant 54 : index
    %1869 = memref.load %arg8[%c54_686] : memref<112xf32, #tpu.memory_space<smem>>
    %1870 = vector.broadcast %1869 : f32 to vector<16x16xf32>
    %1871 = arith.mulf %1860, %1870 : vector<16x16xf32>
    %1872 = arith.addf %1854, %1871 : vector<16x16xf32>
    %c55_687 = arith.constant 55 : index
    %1873 = memref.load %arg8[%c55_687] : memref<112xf32, #tpu.memory_space<smem>>
    %1874 = vector.broadcast %1873 : f32 to vector<16x16xf32>
    %1875 = arith.mulf %1860, %1874 : vector<16x16xf32>
    %1876 = arith.addf %1858, %1875 : vector<16x16xf32>
    %c2_688 = arith.constant 2 : index
    %c3_689 = arith.constant 3 : index
    %c0_690 = arith.constant 0 : index
    %1877 = vector.load %arg12[%c2_688, %c3_689, %c0_690] : memref<4x22x22xf32, #tpu.memory_space<vmem>>, vector<1x16x16xf32>
    %1878 = vector.shape_cast %1877 : vector<1x16x16xf32> to vector<16x16xf32>
    %c56_691 = arith.constant 56 : index
    %1879 = memref.load %arg8[%c56_691] : memref<112xf32, #tpu.memory_space<smem>>
    %1880 = vector.broadcast %1879 : f32 to vector<16x16xf32>
    %1881 = arith.mulf %1878, %1880 : vector<16x16xf32>
    %1882 = arith.addf %1864, %1881 : vector<16x16xf32>
    %c57_692 = arith.constant 57 : index
    %1883 = memref.load %arg8[%c57_692] : memref<112xf32, #tpu.memory_space<smem>>
    %1884 = vector.broadcast %1883 : f32 to vector<16x16xf32>
    %1885 = arith.mulf %1878, %1884 : vector<16x16xf32>
    %1886 = arith.addf %1868, %1885 : vector<16x16xf32>
    %c58_693 = arith.constant 58 : index
    %1887 = memref.load %arg8[%c58_693] : memref<112xf32, #tpu.memory_space<smem>>
    %1888 = vector.broadcast %1887 : f32 to vector<16x16xf32>
    %1889 = arith.mulf %1878, %1888 : vector<16x16xf32>
    %1890 = arith.addf %1872, %1889 : vector<16x16xf32>
    %c59_694 = arith.constant 59 : index
    %1891 = memref.load %arg8[%c59_694] : memref<112xf32, #tpu.memory_space<smem>>
    %1892 = vector.broadcast %1891 : f32 to vector<16x16xf32>
    %1893 = arith.mulf %1878, %1892 : vector<16x16xf32>
    %1894 = arith.addf %1876, %1893 : vector<16x16xf32>
    %c3_695 = arith.constant 3 : index
    %c3_696 = arith.constant 3 : index
    %c0_697 = arith.constant 0 : index
    %1895 = vector.load %arg12[%c3_695, %c3_696, %c0_697] : memref<4x22x22xf32, #tpu.memory_space<vmem>>, vector<1x16x16xf32>
    %1896 = vector.shape_cast %1895 : vector<1x16x16xf32> to vector<16x16xf32>
    %c60_698 = arith.constant 60 : index
    %1897 = memref.load %arg8[%c60_698] : memref<112xf32, #tpu.memory_space<smem>>
    %1898 = vector.broadcast %1897 : f32 to vector<16x16xf32>
    %1899 = arith.mulf %1896, %1898 : vector<16x16xf32>
    %1900 = arith.addf %1882, %1899 : vector<16x16xf32>
    %c61_699 = arith.constant 61 : index
    %1901 = memref.load %arg8[%c61_699] : memref<112xf32, #tpu.memory_space<smem>>
    %1902 = vector.broadcast %1901 : f32 to vector<16x16xf32>
    %1903 = arith.mulf %1896, %1902 : vector<16x16xf32>
    %1904 = arith.addf %1886, %1903 : vector<16x16xf32>
    %c62_700 = arith.constant 62 : index
    %1905 = memref.load %arg8[%c62_700] : memref<112xf32, #tpu.memory_space<smem>>
    %1906 = vector.broadcast %1905 : f32 to vector<16x16xf32>
    %1907 = arith.mulf %1896, %1906 : vector<16x16xf32>
    %1908 = arith.addf %1890, %1907 : vector<16x16xf32>
    %c63_701 = arith.constant 63 : index
    %1909 = memref.load %arg8[%c63_701] : memref<112xf32, #tpu.memory_space<smem>>
    %1910 = vector.broadcast %1909 : f32 to vector<16x16xf32>
    %1911 = arith.mulf %1896, %1910 : vector<16x16xf32>
    %1912 = arith.addf %1894, %1911 : vector<16x16xf32>
    %c0_702 = arith.constant 0 : index
    %c4_703 = arith.constant 4 : index
    %c0_704 = arith.constant 0 : index
    %1913 = vector.load %arg12[%c0_702, %c4_703, %c0_704] : memref<4x22x22xf32, #tpu.memory_space<vmem>>, vector<1x16x16xf32>
    %1914 = vector.shape_cast %1913 : vector<1x16x16xf32> to vector<16x16xf32>
    %c64_705 = arith.constant 64 : index
    %1915 = memref.load %arg8[%c64_705] : memref<112xf32, #tpu.memory_space<smem>>
    %1916 = vector.broadcast %1915 : f32 to vector<16x16xf32>
    %1917 = arith.mulf %1914, %1916 : vector<16x16xf32>
    %1918 = arith.addf %1900, %1917 : vector<16x16xf32>
    %c65_706 = arith.constant 65 : index
    %1919 = memref.load %arg8[%c65_706] : memref<112xf32, #tpu.memory_space<smem>>
    %1920 = vector.broadcast %1919 : f32 to vector<16x16xf32>
    %1921 = arith.mulf %1914, %1920 : vector<16x16xf32>
    %1922 = arith.addf %1904, %1921 : vector<16x16xf32>
    %c66_707 = arith.constant 66 : index
    %1923 = memref.load %arg8[%c66_707] : memref<112xf32, #tpu.memory_space<smem>>
    %1924 = vector.broadcast %1923 : f32 to vector<16x16xf32>
    %1925 = arith.mulf %1914, %1924 : vector<16x16xf32>
    %1926 = arith.addf %1908, %1925 : vector<16x16xf32>
    %c67_708 = arith.constant 67 : index
    %1927 = memref.load %arg8[%c67_708] : memref<112xf32, #tpu.memory_space<smem>>
    %1928 = vector.broadcast %1927 : f32 to vector<16x16xf32>
    %1929 = arith.mulf %1914, %1928 : vector<16x16xf32>
    %1930 = arith.addf %1912, %1929 : vector<16x16xf32>
    %c1_709 = arith.constant 1 : index
    %c4_710 = arith.constant 4 : index
    %c0_711 = arith.constant 0 : index
    %1931 = vector.load %arg12[%c1_709, %c4_710, %c0_711] : memref<4x22x22xf32, #tpu.memory_space<vmem>>, vector<1x16x16xf32>
    %1932 = vector.shape_cast %1931 : vector<1x16x16xf32> to vector<16x16xf32>
    %c68_712 = arith.constant 68 : index
    %1933 = memref.load %arg8[%c68_712] : memref<112xf32, #tpu.memory_space<smem>>
    %1934 = vector.broadcast %1933 : f32 to vector<16x16xf32>
    %1935 = arith.mulf %1932, %1934 : vector<16x16xf32>
    %1936 = arith.addf %1918, %1935 : vector<16x16xf32>
    %c69_713 = arith.constant 69 : index
    %1937 = memref.load %arg8[%c69_713] : memref<112xf32, #tpu.memory_space<smem>>
    %1938 = vector.broadcast %1937 : f32 to vector<16x16xf32>
    %1939 = arith.mulf %1932, %1938 : vector<16x16xf32>
    %1940 = arith.addf %1922, %1939 : vector<16x16xf32>
    %c70_714 = arith.constant 70 : index
    %1941 = memref.load %arg8[%c70_714] : memref<112xf32, #tpu.memory_space<smem>>
    %1942 = vector.broadcast %1941 : f32 to vector<16x16xf32>
    %1943 = arith.mulf %1932, %1942 : vector<16x16xf32>
    %1944 = arith.addf %1926, %1943 : vector<16x16xf32>
    %c71_715 = arith.constant 71 : index
    %1945 = memref.load %arg8[%c71_715] : memref<112xf32, #tpu.memory_space<smem>>
    %1946 = vector.broadcast %1945 : f32 to vector<16x16xf32>
    %1947 = arith.mulf %1932, %1946 : vector<16x16xf32>
    %1948 = arith.addf %1930, %1947 : vector<16x16xf32>
    %c2_716 = arith.constant 2 : index
    %c4_717 = arith.constant 4 : index
    %c0_718 = arith.constant 0 : index
    %1949 = vector.load %arg12[%c2_716, %c4_717, %c0_718] : memref<4x22x22xf32, #tpu.memory_space<vmem>>, vector<1x16x16xf32>
    %1950 = vector.shape_cast %1949 : vector<1x16x16xf32> to vector<16x16xf32>
    %c72_719 = arith.constant 72 : index
    %1951 = memref.load %arg8[%c72_719] : memref<112xf32, #tpu.memory_space<smem>>
    %1952 = vector.broadcast %1951 : f32 to vector<16x16xf32>
    %1953 = arith.mulf %1950, %1952 : vector<16x16xf32>
    %1954 = arith.addf %1936, %1953 : vector<16x16xf32>
    %c73_720 = arith.constant 73 : index
    %1955 = memref.load %arg8[%c73_720] : memref<112xf32, #tpu.memory_space<smem>>
    %1956 = vector.broadcast %1955 : f32 to vector<16x16xf32>
    %1957 = arith.mulf %1950, %1956 : vector<16x16xf32>
    %1958 = arith.addf %1940, %1957 : vector<16x16xf32>
    %c74_721 = arith.constant 74 : index
    %1959 = memref.load %arg8[%c74_721] : memref<112xf32, #tpu.memory_space<smem>>
    %1960 = vector.broadcast %1959 : f32 to vector<16x16xf32>
    %1961 = arith.mulf %1950, %1960 : vector<16x16xf32>
    %1962 = arith.addf %1944, %1961 : vector<16x16xf32>
    %c75_722 = arith.constant 75 : index
    %1963 = memref.load %arg8[%c75_722] : memref<112xf32, #tpu.memory_space<smem>>
    %1964 = vector.broadcast %1963 : f32 to vector<16x16xf32>
    %1965 = arith.mulf %1950, %1964 : vector<16x16xf32>
    %1966 = arith.addf %1948, %1965 : vector<16x16xf32>
    %c3_723 = arith.constant 3 : index
    %c4_724 = arith.constant 4 : index
    %c0_725 = arith.constant 0 : index
    %1967 = vector.load %arg12[%c3_723, %c4_724, %c0_725] : memref<4x22x22xf32, #tpu.memory_space<vmem>>, vector<1x16x16xf32>
    %1968 = vector.shape_cast %1967 : vector<1x16x16xf32> to vector<16x16xf32>
    %c76_726 = arith.constant 76 : index
    %1969 = memref.load %arg8[%c76_726] : memref<112xf32, #tpu.memory_space<smem>>
    %1970 = vector.broadcast %1969 : f32 to vector<16x16xf32>
    %1971 = arith.mulf %1968, %1970 : vector<16x16xf32>
    %1972 = arith.addf %1954, %1971 : vector<16x16xf32>
    %c77_727 = arith.constant 77 : index
    %1973 = memref.load %arg8[%c77_727] : memref<112xf32, #tpu.memory_space<smem>>
    %1974 = vector.broadcast %1973 : f32 to vector<16x16xf32>
    %1975 = arith.mulf %1968, %1974 : vector<16x16xf32>
    %1976 = arith.addf %1958, %1975 : vector<16x16xf32>
    %c78_728 = arith.constant 78 : index
    %1977 = memref.load %arg8[%c78_728] : memref<112xf32, #tpu.memory_space<smem>>
    %1978 = vector.broadcast %1977 : f32 to vector<16x16xf32>
    %1979 = arith.mulf %1968, %1978 : vector<16x16xf32>
    %1980 = arith.addf %1962, %1979 : vector<16x16xf32>
    %c79_729 = arith.constant 79 : index
    %1981 = memref.load %arg8[%c79_729] : memref<112xf32, #tpu.memory_space<smem>>
    %1982 = vector.broadcast %1981 : f32 to vector<16x16xf32>
    %1983 = arith.mulf %1968, %1982 : vector<16x16xf32>
    %1984 = arith.addf %1966, %1983 : vector<16x16xf32>
    %c0_730 = arith.constant 0 : index
    %c5_731 = arith.constant 5 : index
    %c0_732 = arith.constant 0 : index
    %1985 = vector.load %arg12[%c0_730, %c5_731, %c0_732] : memref<4x22x22xf32, #tpu.memory_space<vmem>>, vector<1x16x16xf32>
    %1986 = vector.shape_cast %1985 : vector<1x16x16xf32> to vector<16x16xf32>
    %c80_733 = arith.constant 80 : index
    %1987 = memref.load %arg8[%c80_733] : memref<112xf32, #tpu.memory_space<smem>>
    %1988 = vector.broadcast %1987 : f32 to vector<16x16xf32>
    %1989 = arith.mulf %1986, %1988 : vector<16x16xf32>
    %1990 = arith.addf %1972, %1989 : vector<16x16xf32>
    %c81_734 = arith.constant 81 : index
    %1991 = memref.load %arg8[%c81_734] : memref<112xf32, #tpu.memory_space<smem>>
    %1992 = vector.broadcast %1991 : f32 to vector<16x16xf32>
    %1993 = arith.mulf %1986, %1992 : vector<16x16xf32>
    %1994 = arith.addf %1976, %1993 : vector<16x16xf32>
    %c82_735 = arith.constant 82 : index
    %1995 = memref.load %arg8[%c82_735] : memref<112xf32, #tpu.memory_space<smem>>
    %1996 = vector.broadcast %1995 : f32 to vector<16x16xf32>
    %1997 = arith.mulf %1986, %1996 : vector<16x16xf32>
    %1998 = arith.addf %1980, %1997 : vector<16x16xf32>
    %c83_736 = arith.constant 83 : index
    %1999 = memref.load %arg8[%c83_736] : memref<112xf32, #tpu.memory_space<smem>>
    %2000 = vector.broadcast %1999 : f32 to vector<16x16xf32>
    %2001 = arith.mulf %1986, %2000 : vector<16x16xf32>
    %2002 = arith.addf %1984, %2001 : vector<16x16xf32>
    %c1_737 = arith.constant 1 : index
    %c5_738 = arith.constant 5 : index
    %c0_739 = arith.constant 0 : index
    %2003 = vector.load %arg12[%c1_737, %c5_738, %c0_739] : memref<4x22x22xf32, #tpu.memory_space<vmem>>, vector<1x16x16xf32>
    %2004 = vector.shape_cast %2003 : vector<1x16x16xf32> to vector<16x16xf32>
    %c84_740 = arith.constant 84 : index
    %2005 = memref.load %arg8[%c84_740] : memref<112xf32, #tpu.memory_space<smem>>
    %2006 = vector.broadcast %2005 : f32 to vector<16x16xf32>
    %2007 = arith.mulf %2004, %2006 : vector<16x16xf32>
    %2008 = arith.addf %1990, %2007 : vector<16x16xf32>
    %c85_741 = arith.constant 85 : index
    %2009 = memref.load %arg8[%c85_741] : memref<112xf32, #tpu.memory_space<smem>>
    %2010 = vector.broadcast %2009 : f32 to vector<16x16xf32>
    %2011 = arith.mulf %2004, %2010 : vector<16x16xf32>
    %2012 = arith.addf %1994, %2011 : vector<16x16xf32>
    %c86_742 = arith.constant 86 : index
    %2013 = memref.load %arg8[%c86_742] : memref<112xf32, #tpu.memory_space<smem>>
    %2014 = vector.broadcast %2013 : f32 to vector<16x16xf32>
    %2015 = arith.mulf %2004, %2014 : vector<16x16xf32>
    %2016 = arith.addf %1998, %2015 : vector<16x16xf32>
    %c87_743 = arith.constant 87 : index
    %2017 = memref.load %arg8[%c87_743] : memref<112xf32, #tpu.memory_space<smem>>
    %2018 = vector.broadcast %2017 : f32 to vector<16x16xf32>
    %2019 = arith.mulf %2004, %2018 : vector<16x16xf32>
    %2020 = arith.addf %2002, %2019 : vector<16x16xf32>
    %c2_744 = arith.constant 2 : index
    %c5_745 = arith.constant 5 : index
    %c0_746 = arith.constant 0 : index
    %2021 = vector.load %arg12[%c2_744, %c5_745, %c0_746] : memref<4x22x22xf32, #tpu.memory_space<vmem>>, vector<1x16x16xf32>
    %2022 = vector.shape_cast %2021 : vector<1x16x16xf32> to vector<16x16xf32>
    %c88_747 = arith.constant 88 : index
    %2023 = memref.load %arg8[%c88_747] : memref<112xf32, #tpu.memory_space<smem>>
    %2024 = vector.broadcast %2023 : f32 to vector<16x16xf32>
    %2025 = arith.mulf %2022, %2024 : vector<16x16xf32>
    %2026 = arith.addf %2008, %2025 : vector<16x16xf32>
    %c89_748 = arith.constant 89 : index
    %2027 = memref.load %arg8[%c89_748] : memref<112xf32, #tpu.memory_space<smem>>
    %2028 = vector.broadcast %2027 : f32 to vector<16x16xf32>
    %2029 = arith.mulf %2022, %2028 : vector<16x16xf32>
    %2030 = arith.addf %2012, %2029 : vector<16x16xf32>
    %c90_749 = arith.constant 90 : index
    %2031 = memref.load %arg8[%c90_749] : memref<112xf32, #tpu.memory_space<smem>>
    %2032 = vector.broadcast %2031 : f32 to vector<16x16xf32>
    %2033 = arith.mulf %2022, %2032 : vector<16x16xf32>
    %2034 = arith.addf %2016, %2033 : vector<16x16xf32>
    %c91_750 = arith.constant 91 : index
    %2035 = memref.load %arg8[%c91_750] : memref<112xf32, #tpu.memory_space<smem>>
    %2036 = vector.broadcast %2035 : f32 to vector<16x16xf32>
    %2037 = arith.mulf %2022, %2036 : vector<16x16xf32>
    %2038 = arith.addf %2020, %2037 : vector<16x16xf32>
    %c3_751 = arith.constant 3 : index
    %c5_752 = arith.constant 5 : index
    %c0_753 = arith.constant 0 : index
    %2039 = vector.load %arg12[%c3_751, %c5_752, %c0_753] : memref<4x22x22xf32, #tpu.memory_space<vmem>>, vector<1x16x16xf32>
    %2040 = vector.shape_cast %2039 : vector<1x16x16xf32> to vector<16x16xf32>
    %c92_754 = arith.constant 92 : index
    %2041 = memref.load %arg8[%c92_754] : memref<112xf32, #tpu.memory_space<smem>>
    %2042 = vector.broadcast %2041 : f32 to vector<16x16xf32>
    %2043 = arith.mulf %2040, %2042 : vector<16x16xf32>
    %2044 = arith.addf %2026, %2043 : vector<16x16xf32>
    %c93_755 = arith.constant 93 : index
    %2045 = memref.load %arg8[%c93_755] : memref<112xf32, #tpu.memory_space<smem>>
    %2046 = vector.broadcast %2045 : f32 to vector<16x16xf32>
    %2047 = arith.mulf %2040, %2046 : vector<16x16xf32>
    %2048 = arith.addf %2030, %2047 : vector<16x16xf32>
    %c94_756 = arith.constant 94 : index
    %2049 = memref.load %arg8[%c94_756] : memref<112xf32, #tpu.memory_space<smem>>
    %2050 = vector.broadcast %2049 : f32 to vector<16x16xf32>
    %2051 = arith.mulf %2040, %2050 : vector<16x16xf32>
    %2052 = arith.addf %2034, %2051 : vector<16x16xf32>
    %c95_757 = arith.constant 95 : index
    %2053 = memref.load %arg8[%c95_757] : memref<112xf32, #tpu.memory_space<smem>>
    %2054 = vector.broadcast %2053 : f32 to vector<16x16xf32>
    %2055 = arith.mulf %2040, %2054 : vector<16x16xf32>
    %2056 = arith.addf %2038, %2055 : vector<16x16xf32>
    %c0_758 = arith.constant 0 : index
    %c6_759 = arith.constant 6 : index
    %c0_760 = arith.constant 0 : index
    %2057 = vector.load %arg12[%c0_758, %c6_759, %c0_760] : memref<4x22x22xf32, #tpu.memory_space<vmem>>, vector<1x16x16xf32>
    %2058 = vector.shape_cast %2057 : vector<1x16x16xf32> to vector<16x16xf32>
    %c96_761 = arith.constant 96 : index
    %2059 = memref.load %arg8[%c96_761] : memref<112xf32, #tpu.memory_space<smem>>
    %2060 = vector.broadcast %2059 : f32 to vector<16x16xf32>
    %2061 = arith.mulf %2058, %2060 : vector<16x16xf32>
    %2062 = arith.addf %2044, %2061 : vector<16x16xf32>
    %c97_762 = arith.constant 97 : index
    %2063 = memref.load %arg8[%c97_762] : memref<112xf32, #tpu.memory_space<smem>>
    %2064 = vector.broadcast %2063 : f32 to vector<16x16xf32>
    %2065 = arith.mulf %2058, %2064 : vector<16x16xf32>
    %2066 = arith.addf %2048, %2065 : vector<16x16xf32>
    %c98_763 = arith.constant 98 : index
    %2067 = memref.load %arg8[%c98_763] : memref<112xf32, #tpu.memory_space<smem>>
    %2068 = vector.broadcast %2067 : f32 to vector<16x16xf32>
    %2069 = arith.mulf %2058, %2068 : vector<16x16xf32>
    %2070 = arith.addf %2052, %2069 : vector<16x16xf32>
    %c99_764 = arith.constant 99 : index
    %2071 = memref.load %arg8[%c99_764] : memref<112xf32, #tpu.memory_space<smem>>
    %2072 = vector.broadcast %2071 : f32 to vector<16x16xf32>
    %2073 = arith.mulf %2058, %2072 : vector<16x16xf32>
    %2074 = arith.addf %2056, %2073 : vector<16x16xf32>
    %c1_765 = arith.constant 1 : index
    %c6_766 = arith.constant 6 : index
    %c0_767 = arith.constant 0 : index
    %2075 = vector.load %arg12[%c1_765, %c6_766, %c0_767] : memref<4x22x22xf32, #tpu.memory_space<vmem>>, vector<1x16x16xf32>
    %2076 = vector.shape_cast %2075 : vector<1x16x16xf32> to vector<16x16xf32>
    %c100_768 = arith.constant 100 : index
    %2077 = memref.load %arg8[%c100_768] : memref<112xf32, #tpu.memory_space<smem>>
    %2078 = vector.broadcast %2077 : f32 to vector<16x16xf32>
    %2079 = arith.mulf %2076, %2078 : vector<16x16xf32>
    %2080 = arith.addf %2062, %2079 : vector<16x16xf32>
    %c101_769 = arith.constant 101 : index
    %2081 = memref.load %arg8[%c101_769] : memref<112xf32, #tpu.memory_space<smem>>
    %2082 = vector.broadcast %2081 : f32 to vector<16x16xf32>
    %2083 = arith.mulf %2076, %2082 : vector<16x16xf32>
    %2084 = arith.addf %2066, %2083 : vector<16x16xf32>
    %c102_770 = arith.constant 102 : index
    %2085 = memref.load %arg8[%c102_770] : memref<112xf32, #tpu.memory_space<smem>>
    %2086 = vector.broadcast %2085 : f32 to vector<16x16xf32>
    %2087 = arith.mulf %2076, %2086 : vector<16x16xf32>
    %2088 = arith.addf %2070, %2087 : vector<16x16xf32>
    %c103_771 = arith.constant 103 : index
    %2089 = memref.load %arg8[%c103_771] : memref<112xf32, #tpu.memory_space<smem>>
    %2090 = vector.broadcast %2089 : f32 to vector<16x16xf32>
    %2091 = arith.mulf %2076, %2090 : vector<16x16xf32>
    %2092 = arith.addf %2074, %2091 : vector<16x16xf32>
    %c2_772 = arith.constant 2 : index
    %c6_773 = arith.constant 6 : index
    %c0_774 = arith.constant 0 : index
    %2093 = vector.load %arg12[%c2_772, %c6_773, %c0_774] : memref<4x22x22xf32, #tpu.memory_space<vmem>>, vector<1x16x16xf32>
    %2094 = vector.shape_cast %2093 : vector<1x16x16xf32> to vector<16x16xf32>
    %c104_775 = arith.constant 104 : index
    %2095 = memref.load %arg8[%c104_775] : memref<112xf32, #tpu.memory_space<smem>>
    %2096 = vector.broadcast %2095 : f32 to vector<16x16xf32>
    %2097 = arith.mulf %2094, %2096 : vector<16x16xf32>
    %2098 = arith.addf %2080, %2097 : vector<16x16xf32>
    %c105_776 = arith.constant 105 : index
    %2099 = memref.load %arg8[%c105_776] : memref<112xf32, #tpu.memory_space<smem>>
    %2100 = vector.broadcast %2099 : f32 to vector<16x16xf32>
    %2101 = arith.mulf %2094, %2100 : vector<16x16xf32>
    %2102 = arith.addf %2084, %2101 : vector<16x16xf32>
    %c106_777 = arith.constant 106 : index
    %2103 = memref.load %arg8[%c106_777] : memref<112xf32, #tpu.memory_space<smem>>
    %2104 = vector.broadcast %2103 : f32 to vector<16x16xf32>
    %2105 = arith.mulf %2094, %2104 : vector<16x16xf32>
    %2106 = arith.addf %2088, %2105 : vector<16x16xf32>
    %c107_778 = arith.constant 107 : index
    %2107 = memref.load %arg8[%c107_778] : memref<112xf32, #tpu.memory_space<smem>>
    %2108 = vector.broadcast %2107 : f32 to vector<16x16xf32>
    %2109 = arith.mulf %2094, %2108 : vector<16x16xf32>
    %2110 = arith.addf %2092, %2109 : vector<16x16xf32>
    %c3_779 = arith.constant 3 : index
    %c6_780 = arith.constant 6 : index
    %c0_781 = arith.constant 0 : index
    %2111 = vector.load %arg12[%c3_779, %c6_780, %c0_781] : memref<4x22x22xf32, #tpu.memory_space<vmem>>, vector<1x16x16xf32>
    %2112 = vector.shape_cast %2111 : vector<1x16x16xf32> to vector<16x16xf32>
    %c108_782 = arith.constant 108 : index
    %2113 = memref.load %arg8[%c108_782] : memref<112xf32, #tpu.memory_space<smem>>
    %2114 = vector.broadcast %2113 : f32 to vector<16x16xf32>
    %2115 = arith.mulf %2112, %2114 : vector<16x16xf32>
    %2116 = arith.addf %2098, %2115 : vector<16x16xf32>
    %c109_783 = arith.constant 109 : index
    %2117 = memref.load %arg8[%c109_783] : memref<112xf32, #tpu.memory_space<smem>>
    %2118 = vector.broadcast %2117 : f32 to vector<16x16xf32>
    %2119 = arith.mulf %2112, %2118 : vector<16x16xf32>
    %2120 = arith.addf %2102, %2119 : vector<16x16xf32>
    %c110_784 = arith.constant 110 : index
    %2121 = memref.load %arg8[%c110_784] : memref<112xf32, #tpu.memory_space<smem>>
    %2122 = vector.broadcast %2121 : f32 to vector<16x16xf32>
    %2123 = arith.mulf %2112, %2122 : vector<16x16xf32>
    %2124 = arith.addf %2106, %2123 : vector<16x16xf32>
    %c111_785 = arith.constant 111 : index
    %2125 = memref.load %arg8[%c111_785] : memref<112xf32, #tpu.memory_space<smem>>
    %2126 = vector.broadcast %2125 : f32 to vector<16x16xf32>
    %2127 = arith.mulf %2112, %2126 : vector<16x16xf32>
    %2128 = arith.addf %2110, %2127 : vector<16x16xf32>
    %c0_786 = arith.constant 0 : index
    %c0_787 = arith.constant 0 : index
    %c0_788 = arith.constant 0 : index
    %c0_789 = arith.constant 0 : index
    %2129 = vector.load %arg10[%c0_786, %c0_787, %c0_788, %c0_789] : memref<1x4x16x16xf32, #tpu.memory_space<vmem>>, vector<1x1x16x16xf32>
    %2130 = vector.shape_cast %2129 : vector<1x1x16x16xf32> to vector<16x16xf32>
    %2131 = arith.addf %2130, %2116 : vector<16x16xf32>
    %c0_790 = arith.constant 0 : index
    %c0_791 = arith.constant 0 : index
    %c0_792 = arith.constant 0 : index
    %c0_793 = arith.constant 0 : index
    %2132 = vector.load %arg10[%c0_790, %c0_791, %c0_792, %c0_793] : memref<1x4x16x16xf32, #tpu.memory_space<vmem>>, vector<1x1x16x16xf32>
    %2133 = vector.shape_cast %2132 : vector<1x1x16x16xf32> to vector<16x16xf32>
    %2134 = vector.shape_cast %2131 : vector<16x16xf32> to vector<1x1x16x16xf32>
    tpu.vector_store %arg10[%c0_790, %c0_791, %c0_792, %c0_793], %2134 {strides = array<i32>} : memref<1x4x16x16xf32, #tpu.memory_space<vmem>>, vector<1x1x16x16xf32>,
    %c0_794 = arith.constant 0 : index
    %c1_795 = arith.constant 1 : index
    %c0_796 = arith.constant 0 : index
    %c0_797 = arith.constant 0 : index
    %2135 = vector.load %arg10[%c0_794, %c1_795, %c0_796, %c0_797] : memref<1x4x16x16xf32, #tpu.memory_space<vmem>>, vector<1x1x16x16xf32>
    %2136 = vector.shape_cast %2135 : vector<1x1x16x16xf32> to vector<16x16xf32>
    %2137 = arith.addf %2136, %2120 : vector<16x16xf32>
    %c0_798 = arith.constant 0 : index
    %c1_799 = arith.constant 1 : index
    %c0_800 = arith.constant 0 : index
    %c0_801 = arith.constant 0 : index
    %2138 = vector.load %arg10[%c0_798, %c1_799, %c0_800, %c0_801] : memref<1x4x16x16xf32, #tpu.memory_space<vmem>>, vector<1x1x16x16xf32>
    %2139 = vector.shape_cast %2138 : vector<1x1x16x16xf32> to vector<16x16xf32>
    %2140 = vector.shape_cast %2137 : vector<16x16xf32> to vector<1x1x16x16xf32>
    tpu.vector_store %arg10[%c0_798, %c1_799, %c0_800, %c0_801], %2140 {strides = array<i32>} : memref<1x4x16x16xf32, #tpu.memory_space<vmem>>, vector<1x1x16x16xf32>,
    %c0_802 = arith.constant 0 : index
    %c2_803 = arith.constant 2 : index
    %c0_804 = arith.constant 0 : index
    %c0_805 = arith.constant 0 : index
    %2141 = vector.load %arg10[%c0_802, %c2_803, %c0_804, %c0_805] : memref<1x4x16x16xf32, #tpu.memory_space<vmem>>, vector<1x1x16x16xf32>
    %2142 = vector.shape_cast %2141 : vector<1x1x16x16xf32> to vector<16x16xf32>
    %2143 = arith.addf %2142, %2124 : vector<16x16xf32>
    %c0_806 = arith.constant 0 : index
    %c2_807 = arith.constant 2 : index
    %c0_808 = arith.constant 0 : index
    %c0_809 = arith.constant 0 : index
    %2144 = vector.load %arg10[%c0_806, %c2_807, %c0_808, %c0_809] : memref<1x4x16x16xf32, #tpu.memory_space<vmem>>, vector<1x1x16x16xf32>
    %2145 = vector.shape_cast %2144 : vector<1x1x16x16xf32> to vector<16x16xf32>
    %2146 = vector.shape_cast %2143 : vector<16x16xf32> to vector<1x1x16x16xf32>
    tpu.vector_store %arg10[%c0_806, %c2_807, %c0_808, %c0_809], %2146 {strides = array<i32>} : memref<1x4x16x16xf32, #tpu.memory_space<vmem>>, vector<1x1x16x16xf32>,
    %c0_810 = arith.constant 0 : index
    %c3_811 = arith.constant 3 : index
    %c0_812 = arith.constant 0 : index
    %c0_813 = arith.constant 0 : index
    %2147 = vector.load %arg10[%c0_810, %c3_811, %c0_812, %c0_813] : memref<1x4x16x16xf32, #tpu.memory_space<vmem>>, vector<1x1x16x16xf32>
    %2148 = vector.shape_cast %2147 : vector<1x1x16x16xf32> to vector<16x16xf32>
    %2149 = arith.addf %2148, %2128 : vector<16x16xf32>
    %c0_814 = arith.constant 0 : index
    %c3_815 = arith.constant 3 : index
    %c0_816 = arith.constant 0 : index
    %c0_817 = arith.constant 0 : index
    %2150 = vector.load %arg10[%c0_814, %c3_815, %c0_816, %c0_817] : memref<1x4x16x16xf32, #tpu.memory_space<vmem>>, vector<1x1x16x16xf32>
    %2151 = vector.shape_cast %2150 : vector<1x1x16x16xf32> to vector<16x16xf32>
    %2152 = vector.shape_cast %2149 : vector<16x16xf32> to vector<1x1x16x16xf32>
    tpu.vector_store %arg10[%c0_814, %c3_815, %c0_816, %c0_817], %2152 {strides = array<i32>} : memref<1x4x16x16xf32, #tpu.memory_space<vmem>>, vector<1x1x16x16xf32>,
    return
  }
  func.func @transform_0(%arg0: i32) -> (i32, i32, i32, i32) {
    %c0_i32 = arith.constant 0 : i32
    %c0_i32_0 = arith.constant 0 : i32
    %c0_i32_1 = arith.constant 0 : i32
    %c0_i32_2 = arith.constant 0 : i32
    return %arg0, %c0_i32, %c0_i32_0, %c0_i32_1 : i32, i32, i32, i32
  }
  func.func @transform_1(%arg0: i32) -> i32 {
    %c0_i32 = arith.constant 0 : i32
    %c0_i32_0 = arith.constant 0 : i32
    return %c0_i32 : i32
  }
  func.func @transform_2(%arg0: i32) -> i32 {
    %c0_i32 = arith.constant 0 : i32
    %c0_i32_0 = arith.constant 0 : i32
    return %c0_i32 : i32
  }
  func.func @transform_3(%arg0: i32) -> i32 {
    %c0_i32 = arith.constant 0 : i32
    %c0_i32_0 = arith.constant 0 : i32
    return %c0_i32 : i32
  }
  func.func @transform_4(%arg0: i32) -> i32 {
    %c0_i32 = arith.constant 0 : i32
    %c0_i32_0 = arith.constant 0 : i32
    return %c0_i32 : i32
  }
  func.func @transform_5(%arg0: i32) -> i32 {
    %c0_i32 = arith.constant 0 : i32
    %c0_i32_0 = arith.constant 0 : i32
    return %c0_i32 : i32
  }
  func.func @transform_6(%arg0: i32) -> i32 {
    %c0_i32 = arith.constant 0 : i32
    %c0_i32_0 = arith.constant 0 : i32
    return %c0_i32 : i32
  }
  func.func @transform_7(%arg0: i32) -> i32 {
    %c0_i32 = arith.constant 0 : i32
    %c0_i32_0 = arith.constant 0 : i32
    return %c0_i32 : i32
  }
  func.func @transform_8(%arg0: i32) -> i32 {
    %c0_i32 = arith.constant 0 : i32
    %c0_i32_0 = arith.constant 0 : i32
    return %c0_i32 : i32
  }
  func.func @transform_9(%arg0: i32) -> (i32, i32, i32, i32) {
    %c0_i32 = arith.constant 0 : i32
    %c0_i32_0 = arith.constant 0 : i32
    %c0_i32_1 = arith.constant 0 : i32
    %c0_i32_2 = arith.constant 0 : i32
    return %arg0, %c0_i32, %c0_i32_0, %c0_i32_1 : i32, i32, i32, i32
  }
}

</mosaic_0001>

<llo_original>
// kernel: tpu_custom_call.1
$region0: #{tpu_custom_call.1}
  #allocation0 [shape = 'u32[]', space=smem, size = 0x4, offset = 0x4, fixed_abs, tag = 'smem constant byte address 0x4 - core index']
  #allocation1 [shape = 'u32[144,128]{1,0:T(1,128)}', space=vmem, size = 0x12000, scoped, tag = 'internal scratch']
  #allocation2 [shape = 'f32[4,22,22]{2,1,0:T(8,128)}', space=vmem, size = 0xc000, scoped, tag = 'scratch operand']
  #allocation3 [shape = 'f32[4,22,22]{2,1,0:T(8,128)}', space=vmem, size = 0xc000, scoped, tag = 'scratch operand']
  %s0 = inlined_call_operand.hbm [shape: f32[2,4,16,16], index: 0, kind: input, shape index: {}]
  %s1 = inlined_call_operand.vmem [shape: f32[112], index: 1, kind: input, shape index: {}]
  %s2 = inlined_call_operand.vmem [shape: f32[4], index: 2, kind: input, shape index: {}]
  %s3 = inlined_call_operand.vmem [shape: f32[112], index: 3, kind: input, shape index: {}]
  %s4 = inlined_call_operand.vmem [shape: f32[4], index: 4, kind: input, shape index: {}]
  %s5 = inlined_call_operand.vmem [shape: f32[112], index: 5, kind: input, shape index: {}]
  %s6 = inlined_call_operand.vmem [shape: f32[4], index: 6, kind: input, shape index: {}]
  %s7 = inlined_call_operand.vmem [shape: f32[112], index: 7, kind: input, shape index: {}]
  %s8 = inlined_call_operand.vmem [shape: f32[4], index: 8, kind: input, shape index: {}]
  %s9 = inlined_call_operand.hbm [shape: f32[2,4,16,16], index: 9, kind: output, shape index: {}]
  %s10 = sld [smem:[#allocation0]]
  $region105: #{tpu_custom_call.1} parent=0
    _
  %s12 = ssub.s32 1, %s10
  %s13 = scalar_select 0, %s12, %s10
  $region1: #{tpu_custom_call.1} parent=0
    #allocation4 [shape = 'u8[65536]{0}', space=vmem, size = 0x10000, scoped, tag = 'input window, operand 0']
    #allocation5 [shape = 's32[2]{0}', space=sflag, size = 0x8, scoped, tag = 'scoped memory for tpu_custom_call.1']
    #allocation6 [shape = 's32[2]{0}', space=sflag, size = 0x8, scoped, tag = 'scoped memory for tpu_custom_call.1']
    #allocation7 [shape = 's32[2]{0}', space=sflag, size = 0x8, scoped, tag = 'scoped memory for tpu_custom_call.1']
    #allocation8 [shape = 'u8[512]{0}', space=smem, size = 0x200, scoped, tag = 'input window, operand 1, single buffered']
    #allocation9 [shape = 'u8[512]{0}', space=smem, size = 0x200, scoped, tag = 'input window, operand 2, single buffered']
    #allocation10 [shape = 's32[1]{0}', space=sflag, size = 0x4, scoped, tag = 'scoped memory for tpu_custom_call.1']
    #allocation11 [shape = 'u8[512]{0}', space=smem, size = 0x200, scoped, tag = 'input window, operand 3, single buffered']
    #allocation12 [shape = 'u8[512]{0}', space=smem, size = 0x200, scoped, tag = 'input window, operand 4, single buffered']
    #allocation13 [shape = 's32[1]{0}', space=sflag, size = 0x4, scoped, tag = 'scoped memory for tpu_custom_call.1']
    #allocation14 [shape = 'u8[512]{0}', space=smem, size = 0x200, scoped, tag = 'input window, operand 5, single buffered']
    #allocation15 [shape = 'u8[512]{0}', space=smem, size = 0x200, scoped, tag = 'input window, operand 6, single buffered']
    #allocation16 [shape = 's32[1]{0}', space=sflag, size = 0x4, scoped, tag = 'scoped memory for tpu_custom_call.1']
    #allocation17 [shape = 'u8[512]{0}', space=smem, size = 0x200, scoped, tag = 'input window, operand 7, single buffered']
    #allocation18 [shape = 'u8[512]{0}', space=smem, size = 0x200, scoped, tag = 'input window, operand 8, single buffered']
    #allocation19 [shape = 's32[1]{0}', space=sflag, size = 0x4, scoped, tag = 'scoped memory for tpu_custom_call.1']
    #allocation20 [shape = 'u8[65536]{0}', space=vmem, size = 0x10000, scoped, tag = 'output window, operand 0']
    %14 = vsyncpa [#allocation5], 0
    %s15 = scalar_lea.sflag [#allocation5], 1
    %16 = vsyncpa %s15, 0
    %17 = vsyncpa [#allocation7], 0
    %18 = vsyncpa [#allocation10], 0
    %19 = vsyncpa [#allocation13], 0
    %20 = vsyncpa [#allocation16], 0
    %21 = vsyncpa [#allocation19], 0
    %22 = vsyncpa [#allocation6], 0
    %s23 = scalar_lea.sflag [#allocation6], 1
    %24 = vsyncpa %s23, 0
    loop: start=0, step=1, limit=4
    $region2: #{tpu_custom_call.1} parent=1 // loop_pre_header
      _
    $region3: #{tpu_custom_call.1} parent=1 // loop_header
      %s26 = sphi 0, %s30
      %p27 = scmp.ge.s32.totalorder %s26, 4
      %s36 = sphi 0, %s38
      %s39 = sphi 0, %s36
      %s40 = sphi 0, %s39
      %s56 = sphi 0, %s40
      %s60 = sphi 0, %s60
      %s62 = sphi 0, %s60
      %s63 = sphi 0, %s62
      %s77 = sphi 0, %s63
      %s81 = sphi 0, %s81
      %s83 = sphi 0, %s81
      %s84 = sphi 0, %s83
      %s98 = sphi 0, %s84
      %s102 = sphi 0, %s102
      %s104 = sphi 0, %s102
      %s105 = sphi 0, %s104
      %s119 = sphi 0, %s105
      %s123 = sphi 0, %s123
      %s125 = sphi 0, %s123
      %s126 = sphi 0, %s125
      %s140 = sphi 0, %s126
      %s144 = sphi 0, %s144
      %s146 = sphi 0, %s144
      %s147 = sphi 0, %s146
      %s161 = sphi 0, %s147
      %s165 = sphi 0, %s165
      %s167 = sphi 0, %s165
      %s168 = sphi 0, %s167
      %s182 = sphi 0, %s168
      %s186 = sphi 0, %s186
      %s188 = sphi 0, %s186
      %s189 = sphi 0, %s188
      %s203 = sphi 0, %s189
      %s207 = sphi 0, %s207
      %s209 = sphi 0, %s207
      %s210 = sphi 0, %s209
      %s224 = sphi 0, %s210
      %s230 = sphi 0, %s232
      %s233 = sphi 0, %s230
      %s234 = sphi 0, %s233
      %s250 = sphi 0, %s234
    $region4: #{tpu_custom_call.1} parent=1 // loop_header_branch
      %29 = sbr.rel (%p27) target = $region8
    $region5: #{tpu_custom_call.1} parent=1 // loop_body
      %s31 = ssub.s32 %s26, 1
      %s32 = ssub.s32 %s26, 2
      %s33 = sadd.s32 %s26, 1
      %s34 = ssub.s32 %s26, %s33
      %p35 = scmp.eq.s32.totalorder %s34, 0
      %s37 = sadd.s32 %s36, 1
      %s38 = scalar_select %p35, %s36, %s37
      %p41 = pneg %p35
      %p42 = scmp.eq.s32.totalorder %s26, 1
      %p43 = por %p41, %p42
      %p44 = scmp.ne.s32.totalorder %s36, %s39
      %p45 = scmp.eq.s32.totalorder %s26, 0
      %p46 = por %p44, %p45
      %p47 = scmp.ne.s32.totalorder %s36, %s39
      %p48 = scmp.eq.s32.totalorder %s31, 1
      %p49 = por %p47, %p48
      %p50 = scmp.ne.s32.totalorder %s39, %s40
      %p51 = scmp.eq.s32.totalorder %s31, 0
      %p52 = por %p50, %p51
      %p53 = scmp.ne.s32.totalorder %s39, %s40
      %p54 = scmp.eq.s32.totalorder %s32, 1
      %p55 = por %p53, %p54
      %p57 = scmp.ne.s32.totalorder %s40, %s56
      %p58 = scmp.eq.s32.totalorder %s32, 0
      %p59 = por %p57, %p58
      %s61 = sadd.s32 %s60, 1
      %p64 = scmp.eq.s32.totalorder %s26, 1
      %p65 = scmp.ne.s32.totalorder %s60, %s62
      %p66 = scmp.eq.s32.totalorder %s26, 0
      %p67 = por %p65, %p66
      %p68 = scmp.ne.s32.totalorder %s60, %s62
      %p69 = scmp.eq.s32.totalorder %s31, 1
      %p70 = por %p68, %p69
      %p71 = scmp.ne.s32.totalorder %s62, %s63
      %p72 = scmp.eq.s32.totalorder %s31, 0
      %p73 = por %p71, %p72
      %p74 = scmp.ne.s32.totalorder %s62, %s63
      %p75 = scmp.eq.s32.totalorder %s32, 1
      %p76 = por %p74, %p75
      %p78 = scmp.ne.s32.totalorder %s63, %s77
      %p79 = scmp.eq.s32.totalorder %s32, 0
      %p80 = por %p78, %p79
      %s82 = sadd.s32 %s81, 1
      %p85 = scmp.eq.s32.totalorder %s26, 1
      %p86 = scmp.ne.s32.totalorder %s81, %s83
      %p87 = scmp.eq.s32.totalorder %s26, 0
      %p88 = por %p86, %p87
      %p89 = scmp.ne.s32.totalorder %s81, %s83
      %p90 = scmp.eq.s32.totalorder %s31, 1
      %p91 = por %p89, %p90
      %p92 = scmp.ne.s32.totalorder %s83, %s84
      %p93 = scmp.eq.s32.totalorder %s31, 0
      %p94 = por %p92, %p93
      %p95 = scmp.ne.s32.totalorder %s83, %s84
      %p96 = scmp.eq.s32.totalorder %s32, 1
      %p97 = por %p95, %p96
      %p99 = scmp.ne.s32.totalorder %s84, %s98
      %p100 = scmp.eq.s32.totalorder %s32, 0
      %p101 = por %p99, %p100
      %s103 = sadd.s32 %s102, 1
      %p106 = scmp.eq.s32.totalorder %s26, 1
      %p107 = scmp.ne.s32.totalorder %s102, %s104
      %p108 = scmp.eq.s32.totalorder %s26, 0
      %p109 = por %p107, %p108
      %p110 = scmp.ne.s32.totalorder %s102, %s104
      %p111 = scmp.eq.s32.totalorder %s31, 1
      %p112 = por %p110, %p111
      %p113 = scmp.ne.s32.totalorder %s104, %s105
      %p114 = scmp.eq.s32.totalorder %s31, 0
      %p115 = por %p113, %p114
      %p116 = scmp.ne.s32.totalorder %s104, %s105
      %p117 = scmp.eq.s32.totalorder %s32, 1
      %p118 = por %p116, %p117
      %p120 = scmp.ne.s32.totalorder %s105, %s119
      %p121 = scmp.eq.s32.totalorder %s32, 0
      %p122 = por %p120, %p121
      %s124 = sadd.s32 %s123, 1
      %p127 = scmp.eq.s32.totalorder %s26, 1
      %p128 = scmp.ne.s32.totalorder %s123, %s125
      %p129 = scmp.eq.s32.totalorder %s26, 0
      %p130 = por %p128, %p129
      %p131 = scmp.ne.s32.totalorder %s123, %s125
      %p132 = scmp.eq.s32.totalorder %s31, 1
      %p133 = por %p131, %p132
      %p134 = scmp.ne.s32.totalorder %s125, %s126
      %p135 = scmp.eq.s32.totalorder %s31, 0
      %p136 = por %p134, %p135
      %p137 = scmp.ne.s32.totalorder %s125, %s126
      %p138 = scmp.eq.s32.totalorder %s32, 1
      %p139 = por %p137, %p138
      %p141 = scmp.ne.s32.totalorder %s126, %s140
      %p142 = scmp.eq.s32.totalorder %s32, 0
      %p143 = por %p141, %p142
      %s145 = sadd.s32 %s144, 1
      %p148 = scmp.eq.s32.totalorder %s26, 1
      %p149 = scmp.ne.s32.totalorder %s144, %s146
      %p150 = scmp.eq.s32.totalorder %s26, 0
      %p151 = por %p149, %p150
      %p152 = scmp.ne.s32.totalorder %s144, %s146
      %p153 = scmp.eq.s32.totalorder %s31, 1
      %p154 = por %p152, %p153
      %p155 = scmp.ne.s32.totalorder %s146, %s147
      %p156 = scmp.eq.s32.totalorder %s31, 0
      %p157 = por %p155, %p156
      %p158 = scmp.ne.s32.totalorder %s146, %s147
      %p159 = scmp.eq.s32.totalorder %s32, 1
      %p160 = por %p158, %p159
      %p162 = scmp.ne.s32.totalorder %s147, %s161
      %p163 = scmp.eq.s32.totalorder %s32, 0
      %p164 = por %p162, %p163
      %s166 = sadd.s32 %s165, 1
      %p169 = scmp.eq.s32.totalorder %s26, 1
      %p170 = scmp.ne.s32.totalorder %s165, %s167
      %p171 = scmp.eq.s32.totalorder %s26, 0
      %p172 = por %p170, %p171
      %p173 = scmp.ne.s32.totalorder %s165, %s167
      %p174 = scmp.eq.s32.totalorder %s31, 1
      %p175 = por %p173, %p174
      %p176 = scmp.ne.s32.totalorder %s167, %s168
      %p177 = scmp.eq.s32.totalorder %s31, 0
      %p178 = por %p176, %p177
      %p179 = scmp.ne.s32.totalorder %s167, %s168
      %p180 = scmp.eq.s32.totalorder %s32, 1
      %p181 = por %p179, %p180
      %p183 = scmp.ne.s32.totalorder %s168, %s182
      %p184 = scmp.eq.s32.totalorder %s32, 0
      %p185 = por %p183, %p184
      %s187 = sadd.s32 %s186, 1
      %p190 = scmp.eq.s32.totalorder %s26, 1
      %p191 = scmp.ne.s32.totalorder %s186, %s188
      %p192 = scmp.eq.s32.totalorder %s26, 0
      %p193 = por %p191, %p192
      %p194 = scmp.ne.s32.totalorder %s186, %s188
      %p195 = scmp.eq.s32.totalorder %s31, 1
      %p196 = por %p194, %p195
      %p197 = scmp.ne.s32.totalorder %s188, %s189
      %p198 = scmp.eq.s32.totalorder %s31, 0
      %p199 = por %p197, %p198
      %p200 = scmp.ne.s32.totalorder %s188, %s189
      %p201 = scmp.eq.s32.totalorder %s32, 1
      %p202 = por %p200, %p201
      %p204 = scmp.ne.s32.totalorder %s189, %s203
      %p205 = scmp.eq.s32.totalorder %s32, 0
      %p206 = por %p204, %p205
      %s208 = sadd.s32 %s207, 1
      %p211 = scmp.eq.s32.totalorder %s26, 1
      %p212 = scmp.ne.s32.totalorder %s207, %s209
      %p213 = scmp.eq.s32.totalorder %s26, 0
      %p214 = por %p212, %p213
      %p215 = scmp.ne.s32.totalorder %s207, %s209
      %p216 = scmp.eq.s32.totalorder %s31, 1
      %p217 = por %p215, %p216
      %p218 = scmp.ne.s32.totalorder %s209, %s210
      %p219 = scmp.eq.s32.totalorder %s31, 0
      %p220 = por %p218, %p219
      %p221 = scmp.ne.s32.totalorder %s209, %s210
      %p222 = scmp.eq.s32.totalorder %s32, 1
      %p223 = por %p221, %p222
      %p225 = scmp.ne.s32.totalorder %s210, %s224
      %p226 = scmp.eq.s32.totalorder %s32, 0
      %p227 = por %p225, %p226
      %s228 = ssub.s32 %s26, %s33
      %p229 = scmp.eq.s32.totalorder %s228, 0
      %s231 = sadd.s32 %s230, 1
      %s232 = scalar_select %p229, %s230, %s231
      %p235 = pneg %p229
      %p236 = scmp.eq.s32.totalorder %s26, 1
      %p237 = por %p235, %p236
      %p238 = scmp.ne.s32.totalorder %s230, %s233
      %p239 = scmp.eq.s32.totalorder %s26, 0
      %p240 = por %p238, %p239
      %p241 = scmp.ne.s32.totalorder %s230, %s233
      %p242 = scmp.eq.s32.totalorder %s31, 1
      %p243 = por %p241, %p242
      %p244 = scmp.ne.s32.totalorder %s233, %s234
      %p245 = scmp.eq.s32.totalorder %s31, 0
      %p246 = por %p244, %p245
      %p247 = scmp.ne.s32.totalorder %s233, %s234
      %p248 = scmp.eq.s32.totalorder %s32, 1
      %p249 = por %p247, %p248
      %p251 = scmp.ne.s32.totalorder %s234, %s250
      %p252 = scmp.eq.s32.totalorder %s32, 0
      %p253 = por %p251, %p252
      %p254 = scmp.le.s32.totalorder 1, %s26
      %p255 = scmp.lt.s32.totalorder %s26, 3
      %p256 = pnand %p254, %p255
      %p257 = pneg %p256
      // Predicated region
      $region9: #{tpu_custom_call.1} parent=5 // pred_check
        _
      $region10: #{tpu_custom_call.1} parent=5 // pred_check_branch
        %259 = sbr.rel (%p256) target = $region12
      $region11: #{tpu_custom_call.1} parent=5 // pred_region
        %s260 = ssub.s32 %s26, 1
        // Predicated region
        $region13: #{tpu_custom_call.1} parent=11 // pred_check
          %p261 = pneg %p73
        $region14: #{tpu_custom_call.1} parent=11 // pred_check_branch
          %263 = sbr.rel (%p261) target = $region16
        $region15: #{tpu_custom_call.1} parent=11 // pred_region
          %s265 = ssub.s32 16, 16
          %266 = vsyncadd [#allocation7], %s265
          %s268 = sshll.u32 %s1, 4
          %s269 = int_to_ptr.vmem [resolvable:$true] %s268
          %271 = dma.vmem_to_smem %s269, 16, [#allocation8], [#allocation7]
        $region16: #{tpu_custom_call.1} parent=11 // pred_fallthru
          _
        // Predicated region
        $region17: #{tpu_custom_call.1} parent=11 // pred_check
          %p272 = pneg %p94
        $region18: #{tpu_custom_call.1} parent=11 // pred_check_branch
          %274 = sbr.rel (%p272) target = $region20
        $region19: #{tpu_custom_call.1} parent=11 // pred_region
          %s276 = ssub.s32 16, 16
          %277 = vsyncadd [#allocation10], %s276
          %s279 = sshll.u32 %s2, 4
          %s280 = int_to_ptr.vmem [resolvable:$true] %s279
          %282 = dma.vmem_to_smem %s280, 16, [#allocation9], [#allocation10]
        $region20: #{tpu_custom_call.1} parent=11 // pred_fallthru
          _
        // Predicated region
        $region21: #{tpu_custom_call.1} parent=11 // pred_check
          %p283 = pneg %p115
        $region22: #{tpu_custom_call.1} parent=11 // pred_check_branch
          %285 = sbr.rel (%p283) target = $region24
        $region23: #{tpu_custom_call.1} parent=11 // pred_region
          %s287 = ssub.s32 16, 16
          %288 = vsyncadd [#allocation10], %s287
          %s290 = sshll.u32 %s3, 4
          %s291 = int_to_ptr.vmem [resolvable:$true] %s290
          %293 = dma.vmem_to_smem %s291, 16, [#allocation11], [#allocation10]
        $region24: #{tpu_custom_call.1} parent=11 // pred_fallthru
          _
        // Predicated region
        $region25: #{tpu_custom_call.1} parent=11 // pred_check
          %p294 = pneg %p136
        $region26: #{tpu_custom_call.1} parent=11 // pred_check_branch
          %296 = sbr.rel (%p294) target = $region28
        $region27: #{tpu_custom_call.1} parent=11 // pred_region
          %s298 = ssub.s32 16, 16
          %299 = vsyncadd [#allocation13], %s298
          %s301 = sshll.u32 %s4, 4
          %s302 = int_to_ptr.vmem [resolvable:$true] %s301
          %304 = dma.vmem_to_smem %s302, 16, [#allocation12], [#allocation13]
        $region28: #{tpu_custom_call.1} parent=11 // pred_fallthru
          _
        // Predicated region
        $region29: #{tpu_custom_call.1} parent=11 // pred_check
          %p305 = pneg %p157
        $region30: #{tpu_custom_call.1} parent=11 // pred_check_branch
          %307 = sbr.rel (%p305) target = $region32
        $region31: #{tpu_custom_call.1} parent=11 // pred_region
          %s309 = ssub.s32 16, 16
          %310 = vsyncadd [#allocation13], %s309
          %s312 = sshll.u32 %s5, 4
          %s313 = int_to_ptr.vmem [resolvable:$true] %s312
          %315 = dma.vmem_to_smem %s313, 16, [#allocation14], [#allocation13]
        $region32: #{tpu_custom_call.1} parent=11 // pred_fallthru
          _
        // Predicated region
        $region33: #{tpu_custom_call.1} parent=11 // pred_check
          %p316 = pneg %p178
        $region34: #{tpu_custom_call.1} parent=11 // pred_check_branch
          %318 = sbr.rel (%p316) target = $region36
        $region35: #{tpu_custom_call.1} parent=11 // pred_region
          %s320 = ssub.s32 16, 16
          %321 = vsyncadd [#allocation16], %s320
          %s323 = sshll.u32 %s6, 4
          %s324 = int_to_ptr.vmem [resolvable:$true] %s323
          %326 = dma.vmem_to_smem %s324, 16, [#allocation15], [#allocation16]
        $region36: #{tpu_custom_call.1} parent=11 // pred_fallthru
          _
        // Predicated region
        $region37: #{tpu_custom_call.1} parent=11 // pred_check
          %p327 = pneg %p199
        $region38: #{tpu_custom_call.1} parent=11 // pred_check_branch
          %329 = sbr.rel (%p327) target = $region40
        $region39: #{tpu_custom_call.1} parent=11 // pred_region
          %s331 = ssub.s32 16, 16
          %332 = vsyncadd [#allocation16], %s331
          %s334 = sshll.u32 %s7, 4
          %s335 = int_to_ptr.vmem [resolvable:$true] %s334
          %337 = dma.vmem_to_smem %s335, 16, [#allocation17], [#allocation16]
        $region40: #{tpu_custom_call.1} parent=11 // pred_fallthru
          _
        // Predicated region
        $region41: #{tpu_custom_call.1} parent=11 // pred_check
          %p338 = pneg %p220
        $region42: #{tpu_custom_call.1} parent=11 // pred_check_branch
          %340 = sbr.rel (%p338) target = $region44
        $region43: #{tpu_custom_call.1} parent=11 // pred_region
          %s342 = ssub.s32 16, 16
          %343 = vsyncadd [#allocation19], %s342
          %s345 = sshll.u32 %s8, 4
          %s346 = int_to_ptr.vmem [resolvable:$true] %s345
          %348 = dma.vmem_to_smem %s346, 16, [#allocation18], [#allocation19]
        $region44: #{tpu_custom_call.1} parent=11 // pred_fallthru
          _
      $region12: #{tpu_custom_call.1} parent=5 // pred_fallthru
        _
      %p349 = scmp.lt.s32.totalorder %s26, 2
      // Predicated region
      $region45: #{tpu_custom_call.1} parent=5 // pred_check
        %p350 = pneg %p349
      $region46: #{tpu_custom_call.1} parent=5 // pred_check_branch
        %352 = sbr.rel (%p350) target = $region48
      $region47: #{tpu_custom_call.1} parent=5 // pred_region
        // Predicated region
        $region49: #{tpu_custom_call.1} parent=47 // pred_check
          %p353 = pneg %p46
        $region50: #{tpu_custom_call.1} parent=47 // pred_check_branch
          %355 = sbr.rel (%p353) target = $region52
        $region51: #{tpu_custom_call.1} parent=47 // pred_region
          %s356 = sand.u32 %s36, 1
          %s357 = scalar_lea.sflag [#allocation5], %s356
          %s358 = sand.u32 %s36, 1
          %s359 = smul.addr %s358, 64
          %s360 = scalar_lea.vmem [#allocation4], %s359
          %s362 = ssub.s32 1024, 1024
          %363 = vsyncadd %s357, %s362
          %s364 = smul.addr %s26, 8
          %s365 = smul.addr %s364, 128
          %s366 = scalar_lea.hbm %s0, %s365
          %s367 = sshll.u32 %s360, 4
          %s368 = int_to_ptr.vmem [resolvable:$true] %s367
          %373 = dma.hbm_to_vmem [thread:$0]  %s366, 1024, %s368, %s357, 128, 128, 8
        $region52: #{tpu_custom_call.1} parent=47 // pred_fallthru
          _
      $region48: #{tpu_custom_call.1} parent=5 // pred_fallthru
        _
      %p374 = scmp.le.s32.totalorder 1, %s26
      %p375 = scmp.lt.s32.totalorder %s26, 3
      %p376 = pnand %p374, %p375
      %p377 = pneg %p376
      // Predicated region
      $region53: #{tpu_custom_call.1} parent=5 // pred_check
        _
      $region54: #{tpu_custom_call.1} parent=5 // pred_check_branch
        %379 = sbr.rel (%p376) target = $region56
      $region55: #{tpu_custom_call.1} parent=5 // pred_region
        %s380 = ssub.s32 %s26, 1
        %s381 = sand.u32 %s39, 1
        %s382 = scalar_lea.sflag [#allocation5], %s381
        %s383 = sand.u32 %s39, 1
        %s384 = smul.addr %s383, 64
        %s385 = scalar_lea.vmem [#allocation4], %s384
        // Predicated region
        $region57: #{tpu_custom_call.1} parent=55 // pred_check
          %p386 = pneg %p52
        $region58: #{tpu_custom_call.1} parent=55 // pred_check_branch
          %388 = sbr.rel (%p386) target = $region60
        $region59: #{tpu_custom_call.1} parent=55 // pred_region
          %389 = dma.done %s382, 1024
        $region60: #{tpu_custom_call.1} parent=55 // pred_fallthru
          _
        // Predicated region
        $region61: #{tpu_custom_call.1} parent=55 // pred_check
          %p390 = pneg %p73
        $region62: #{tpu_custom_call.1} parent=55 // pred_check_branch
          %392 = sbr.rel (%p390) target = $region64
        $region63: #{tpu_custom_call.1} parent=55 // pred_region
          %393 = dma.done [#allocation7], 16
        $region64: #{tpu_custom_call.1} parent=55 // pred_fallthru
          _
        // Predicated region
        $region65: #{tpu_custom_call.1} parent=55 // pred_check
          %p394 = pneg %p94
        $region66: #{tpu_custom_call.1} parent=55 // pred_check_branch
          %396 = sbr.rel (%p394) target = $region68
        $region67: #{tpu_custom_call.1} parent=55 // pred_region
          %397 = dma.done [#allocation10], 16
        $region68: #{tpu_custom_call.1} parent=55 // pred_fallthru
          _
        // Predicated region
        $region69: #{tpu_custom_call.1} parent=55 // pred_check
          %p398 = pneg %p115
        $region70: #{tpu_custom_call.1} parent=55 // pred_check_branch
          %400 = sbr.rel (%p398) target = $region72
        $region71: #{tpu_custom_call.1} parent=55 // pred_region
          %401 = dma.done [#allocation10], 16
        $region72: #{tpu_custom_call.1} parent=55 // pred_fallthru
          _
        // Predicated region
        $region73: #{tpu_custom_call.1} parent=55 // pred_check
          %p402 = pneg %p136
        $region74: #{tpu_custom_call.1} parent=55 // pred_check_branch
          %404 = sbr.rel (%p402) target = $region76
        $region75: #{tpu_custom_call.1} parent=55 // pred_region
          %405 = dma.done [#allocation13], 16
        $region76: #{tpu_custom_call.1} parent=55 // pred_fallthru
          _
        // Predicated region
        $region77: #{tpu_custom_call.1} parent=55 // pred_check
          %p406 = pneg %p157
        $region78: #{tpu_custom_call.1} parent=55 // pred_check_branch
          %408 = sbr.rel (%p406) target = $region80
        $region79: #{tpu_custom_call.1} parent=55 // pred_region
          %409 = dma.done [#allocation13], 16
        $region80: #{tpu_custom_call.1} parent=55 // pred_fallthru
          _
        // Predicated region
        $region81: #{tpu_custom_call.1} parent=55 // pred_check
          %p410 = pneg %p178
        $region82: #{tpu_custom_call.1} parent=55 // pred_check_branch
          %412 = sbr.rel (%p410) target = $region84
        $region83: #{tpu_custom_call.1} parent=55 // pred_region
          %413 = dma.done [#allocation16], 16
        $region84: #{tpu_custom_call.1} parent=55 // pred_fallthru
          _
        // Predicated region
        $region85: #{tpu_custom_call.1} parent=55 // pred_check
          %p414 = pneg %p199
        $region86: #{tpu_custom_call.1} parent=55 // pred_check_branch
          %416 = sbr.rel (%p414) target = $region88
        $region87: #{tpu_custom_call.1} parent=55 // pred_region
          %417 = dma.done [#allocation16], 16
        $region88: #{tpu_custom_call.1} parent=55 // pred_fallthru
          _
        // Predicated region
        $region89: #{tpu_custom_call.1} parent=55 // pred_check
          %p418 = pneg %p220
        $region90: #{tpu_custom_call.1} parent=55 // pred_check_branch
          %420 = sbr.rel (%p418) target = $region92
        $region91: #{tpu_custom_call.1} parent=55 // pred_region
          %421 = dma.done [#allocation19], 16
        $region92: #{tpu_custom_call.1} parent=55 // pred_fallthru
          _
        %422 = sfence
        %s423 = sand.u32 %s39, 1
        %s424 = scalar_lea.sflag [#allocation5], %s423
        %s425 = sand.u32 %s39, 1
        %s426 = smul.addr %s425, 64
        %s427 = scalar_lea.vmem [#allocation4], %s426
        %p428 = pneg %p52
        %p429 = pneg %p49
        %p430 = pneg %p73
        %p431 = pneg %p70
        %p432 = pneg %p94
        %p433 = pneg %p91
        %p434 = pneg %p115
        %p435 = pneg %p112
        %p436 = pneg %p136
        %p437 = pneg %p133
        %p438 = pneg %p157
        %p439 = pneg %p154
        %p440 = pneg %p178
        %p441 = pneg %p175
        %p442 = pneg %p199
        %p443 = pneg %p196
        %p444 = pneg %p220
        %p445 = pneg %p217
        %p446 = pneg %p246
        %p447 = pneg %p243
        %s448 = sand.u32 %s233, 1
        %s449 = scalar_lea.sflag [#allocation6], %s448
        %s450 = sand.u32 %s233, 1
        %s451 = smul.addr %s450, 64
        %s452 = scalar_lea.vmem [#allocation20], %s451
        %vm453 = vcmask 179200
        %454 = vst.msk [vmem:[#allocation2] sm:$0xff] %vm453, 0.0
        %455 = vst.msk [vmem:[#allocation2 + $0x8] sm:$0xff] %vm453, 0.0
        %vm456 = vcmask 177152
        %457 = vst.msk [vmem:[#allocation2 + $0x10] sm:$0x3f] %vm456, 0.0
        %458 = vst.msk [vmem:[#allocation2 + $0x18] sm:$0xff] %vm453, 0.0
        %459 = vst.msk [vmem:[#allocation2 + $0x20] sm:$0xff] %vm453, 0.0
        %460 = vst.msk [vmem:[#allocation2 + $0x28] sm:$0x3f] %vm456, 0.0
        %461 = vst.msk [vmem:[#allocation2 + $0x30] sm:$0xff] %vm453, 0.0
        %462 = vst.msk [vmem:[#allocation2 + $0x38] sm:$0xff] %vm453, 0.0
        %463 = vst.msk [vmem:[#allocation2 + $0x40] sm:$0x3f] %vm456, 0.0
        %464 = vst.msk [vmem:[#allocation2 + $0x48] sm:$0xff] %vm453, 0.0
        %465 = vst.msk [vmem:[#allocation2 + $0x50] sm:$0xff] %vm453, 0.0
        %466 = vst.msk [vmem:[#allocation2 + $0x58] sm:$0x3f] %vm456, 0.0
        %v467 = vld [vmem:[%s385] sm:$0xff]
        %v468 = vld [vmem:[%s385 + $0x8] sm:$0xff]
        %v469 = vld [vmem:[%s385 + $0x10] sm:$0xff]
        %v470 = vld [vmem:[%s385 + $0x18] sm:$0xff]
        %v471 = vld [vmem:[%s385 + $0x20] sm:$0xff]
        %v472 = vld [vmem:[%s385 + $0x28] sm:$0xff]
        %v473 = vld [vmem:[%s385 + $0x30] sm:$0xff]
        %v474 = vld [vmem:[%s385 + $0x38] sm:$0xff]
        %483 = vrot.lane.b32.xlu0 %v467, 3
        %v484 = vpop.permute.xlu0 %483
        %485 = vrot.lane.b32.xlu0 %v468, 3
        %v486 = vpop.permute.xlu0 %485
        %487 = vrot.lane.b32.xlu0 %v469, 3
        %v488 = vpop.permute.xlu0 %487
        %489 = vrot.lane.b32.xlu0 %v470, 3
        %v490 = vpop.permute.xlu0 %489
        %491 = vrot.lane.b32.xlu0 %v471, 3
        %v492 = vpop.permute.xlu0 %491
        %493 = vrot.lane.b32.xlu0 %v472, 3
        %v494 = vpop.permute.xlu0 %493
        %495 = vrot.lane.b32.xlu0 %v473, 3
        %v496 = vpop.permute.xlu0 %495
        %497 = vrot.lane.b32.xlu0 %v474, 3
        %v498 = vpop.permute.xlu0 %497
        %vm507 = vcmask 154648
        %508 = vst.msk [vmem:[#allocation2 + $0x3] sm:$0xff] %vm507, %v484
        %509 = vst.msk [vmem:[#allocation2 + $0xb] sm:$0xff] %vm507, %v486
        %510 = vst.msk [vmem:[#allocation2 + $0x1b] sm:$0xff] %vm507, %v488
        %511 = vst.msk [vmem:[#allocation2 + $0x23] sm:$0xff] %vm507, %v490
        %512 = vst.msk [vmem:[#allocation2 + $0x33] sm:$0xff] %vm507, %v492
        %513 = vst.msk [vmem:[#allocation2 + $0x3b] sm:$0xff] %vm507, %v494
        %514 = vst.msk [vmem:[#allocation2 + $0x4b] sm:$0xff] %vm507, %v496
        %515 = vst.msk [vmem:[#allocation2 + $0x53] sm:$0xff] %vm507, %v498
        %v516 = vld [vmem:[#allocation2] sm:$0xff]
        %v517 = vld [vmem:[#allocation2 + $0x8] sm:$0xff]
        %s518 = sld [smem:[#allocation8]]
        %v519 = vstv %s518
        %v520 = vmul.f32 %v516, %v519
        %v521 = vmul.f32 %v517, %v519
        %s522 = sld [smem:[#allocation8 + $0x1]]
        %v523 = vstv %s522
        %v524 = vmul.f32 %v516, %v523
        %v525 = vmul.f32 %v517, %v523
        %s526 = sld [smem:[#allocation8 + $0x2]]
        %v527 = vstv %s526
        %v528 = vmul.f32 %v516, %v527
        %v529 = vmul.f32 %v517, %v527
        %s530 = sld [smem:[#allocation8 + $0x3]]
        %v531 = vstv %s530
        %v532 = vmul.f32 %v516, %v531
        %v533 = vmul.f32 %v517, %v531
        %s534 = scalar_lea.vmem [#allocation2], 24
        %v535 = vld [vmem:[%s534] sm:$0xff]
        %v536 = vld [vmem:[%s534 + $0x8] sm:$0xff]
        %s537 = sld [smem:[#allocation8 + $0x4]]
        %v538 = vstv %s537
        %v539 = vmul.f32 %v535, %v538
        %v540 = vmul.f32 %v536, %v538
        %v541 = vadd.f32 %v520, %v539
        %v542 = vadd.f32 %v521, %v540
        %s543 = sld [smem:[#allocation8 + $0x5]]
        %v544 = vstv %s543
        %v545 = vmul.f32 %v535, %v544
        %v546 = vmul.f32 %v536, %v544
        %v547 = vadd.f32 %v524, %v545
        %v548 = vadd.f32 %v525, %v546
        %s549 = sld [smem:[#allocation8 + $0x6]]
        %v550 = vstv %s549
        %v551 = vmul.f32 %v535, %v550
        %v552 = vmul.f32 %v536, %v550
        %v553 = vadd.f32 %v528, %v551
        %v554 = vadd.f32 %v529, %v552
        %s555 = sld [smem:[#allocation8 + $0x7]]
        %v556 = vstv %s555
        %v557 = vmul.f32 %v535, %v556
        %v558 = vmul.f32 %v536, %v556
        %v559 = vadd.f32 %v532, %v557
        %v560 = vadd.f32 %v533, %v558
        %s561 = scalar_lea.vmem [#allocation2], 48
        %v562 = vld [vmem:[%s561] sm:$0xff]
        %v563 = vld [vmem:[%s561 + $0x8] sm:$0xff]
        %s564 = sld [smem:[#allocation8 + $0x8]]
        %v565 = vstv %s564
        %v566 = vmul.f32 %v562, %v565
        %v567 = vmul.f32 %v563, %v565
        %v568 = vadd.f32 %v541, %v566
        %v569 = vadd.f32 %v542, %v567
        %s570 = sld [smem:[#allocation8 + $0x9]]
        %v571 = vstv %s570
        %v572 = vmul.f32 %v562, %v571
        %v573 = vmul.f32 %v563, %v571
        %v574 = vadd.f32 %v547, %v572
        %v575 = vadd.f32 %v548, %v573
        %s576 = sld [smem:[#allocation8 + $0xa]]
        %v577 = vstv %s576
        %v578 = vmul.f32 %v562, %v577
        %v579 = vmul.f32 %v563, %v577
        %v580 = vadd.f32 %v553, %v578
        %v581 = vadd.f32 %v554, %v579
        %s582 = sld [smem:[#allocation8 + $0xb]]
        %v583 = vstv %s582
        %v584 = vmul.f32 %v562, %v583
        %v585 = vmul.f32 %v563, %v583
        %v586 = vadd.f32 %v559, %v584
        %v587 = vadd.f32 %v560, %v585
        %s588 = scalar_lea.vmem [#allocation2], 72
        %v589 = vld [vmem:[%s588] sm:$0xff]
        %v590 = vld [vmem:[%s588 + $0x8] sm:$0xff]
        %s591 = sld [smem:[#allocation8 + $0xc]]
        %v592 = vstv %s591
        %v593 = vmul.f32 %v589, %v592
        %v594 = vmul.f32 %v590, %v592
        %v595 = vadd.f32 %v568, %v593
        %v596 = vadd.f32 %v569, %v594
        %s597 = sld [smem:[#allocation8 + $0xd]]
        %v598 = vstv %s597
        %v599 = vmul.f32 %v589, %v598
        %v600 = vmul.f32 %v590, %v598
        %v601 = vadd.f32 %v574, %v599
        %v602 = vadd.f32 %v575, %v600
        %s603 = sld [smem:[#allocation8 + $0xe]]
        %v604 = vstv %s603
        %v605 = vmul.f32 %v589, %v604
        %v606 = vmul.f32 %v590, %v604
        %v607 = vadd.f32 %v580, %v605
        %v608 = vadd.f32 %v581, %v606
        %s609 = sld [smem:[#allocation8 + $0xf]]
        %v610 = vstv %s609
        %v611 = vmul.f32 %v589, %v610
        %v612 = vmul.f32 %v590, %v610
        %v613 = vadd.f32 %v586, %v611
        %v614 = vadd.f32 %v587, %v612
        %v615 = vld [vmem:[#allocation2 + $0x1] sm:$0xff]
        %v616 = vld [vmem:[#allocation2 + $0x9] sm:$0xff]
        %s617 = sld [smem:[#allocation8 + $0x10]]
        %v618 = vstv %s617
        %v619 = vmul.f32 %v615, %v618
        %v620 = vmul.f32 %v616, %v618
        %v621 = vadd.f32 %v595, %v619
        %v622 = vadd.f32 %v596, %v620
        %s623 = sld [smem:[#allocation8 + $0x11]]
        %v624 = vstv %s623
        %v625 = vmul.f32 %v615, %v624
        %v626 = vmul.f32 %v616, %v624
        %v627 = vadd.f32 %v601, %v625
        %v628 = vadd.f32 %v602, %v626
        %s629 = sld [smem:[#allocation8 + $0x12]]
        %v630 = vstv %s629
        %v631 = vmul.f32 %v615, %v630
        %v632 = vmul.f32 %v616, %v630
        %v633 = vadd.f32 %v607, %v631
        %v634 = vadd.f32 %v608, %v632
        %s635 = sld [smem:[#allocation8 + $0x13]]
        %v636 = vstv %s635
        %v637 = vmul.f32 %v615, %v636
        %v638 = vmul.f32 %v616, %v636
        %v639 = vadd.f32 %v613, %v637
        %v640 = vadd.f32 %v614, %v638
        %v641 = vld [vmem:[%s534 + $0x1] sm:$0xff]
        %v642 = vld [vmem:[%s534 + $0x9] sm:$0xff]
        %s643 = sld [smem:[#allocation8 + $0x14]]
        %v644 = vstv %s643
        %v645 = vmul.f32 %v641, %v644
        %v646 = vmul.f32 %v642, %v644
        %v647 = vadd.f32 %v621, %v645
        %v648 = vadd.f32 %v622, %v646
        %s649 = sld [smem:[#allocation8 + $0x15]]
        %v650 = vstv %s649
        %v651 = vmul.f32 %v641, %v650
        %v652 = vmul.f32 %v642, %v650
        %v653 = vadd.f32 %v627, %v651
        %v654 = vadd.f32 %v628, %v652
        %s655 = sld [smem:[#allocation8 + $0x16]]
        %v656 = vstv %s655
        %v657 = vmul.f32 %v641, %v656
        %v658 = vmul.f32 %v642, %v656
        %v659 = vadd.f32 %v633, %v657
        %v660 = vadd.f32 %v634, %v658
        %s661 = sld [smem:[#allocation8 + $0x17]]
        %v662 = vstv %s661
        %v663 = vmul.f32 %v641, %v662
        %v664 = vmul.f32 %v642, %v662
        %v665 = vadd.f32 %v639, %v663
        %v666 = vadd.f32 %v640, %v664
        %v667 = vld [vmem:[%s561 + $0x1] sm:$0xff]
        %v668 = vld [vmem:[%s561 + $0x9] sm:$0xff]
        %s669 = sld [smem:[#allocation8 + $0x18]]
        %v670 = vstv %s669
        %v671 = vmul.f32 %v667, %v670
        %v672 = vmul.f32 %v668, %v670
        %v673 = vadd.f32 %v647, %v671
        %v674 = vadd.f32 %v648, %v672
        %s675 = sld [smem:[#allocation8 + $0x19]]
        %v676 = vstv %s675
        %v677 = vmul.f32 %v667, %v676
        %v678 = vmul.f32 %v668, %v676
        %v679 = vadd.f32 %v653, %v677
        %v680 = vadd.f32 %v654, %v678
        %s681 = sld [smem:[#allocation8 + $0x1a]]
        %v682 = vstv %s681
        %v683 = vmul.f32 %v667, %v682
        %v684 = vmul.f32 %v668, %v682
        %v685 = vadd.f32 %v659, %v683
        %v686 = vadd.f32 %v660, %v684
        %s687 = sld [smem:[#allocation8 + $0x1b]]
        %v688 = vstv %s687
        %v689 = vmul.f32 %v667, %v688
        %v690 = vmul.f32 %v668, %v688
        %v691 = vadd.f32 %v665, %v689
        %v692 = vadd.f32 %v666, %v690
        %v693 = vld [vmem:[%s588 + $0x1] sm:$0xff]
        %v694 = vld [vmem:[%s588 + $0x9] sm:$0xff]
        %s695 = sld [smem:[#allocation8 + $0x1c]]
        %v696 = vstv %s695
        %v697 = vmul.f32 %v693, %v696
        %v698 = vmul.f32 %v694, %v696
        %v699 = vadd.f32 %v673, %v697
        %v700 = vadd.f32 %v674, %v698
        %s701 = sld [smem:[#allocation8 + $0x1d]]
        %v702 = vstv %s701
        %v703 = vmul.f32 %v693, %v702
        %v704 = vmul.f32 %v694, %v702
        %v705 = vadd.f32 %v679, %v703
        %v706 = vadd.f32 %v680, %v704
        %s707 = sld [smem:[#allocation8 + $0x1e]]
        %v708 = vstv %s707
        %v709 = vmul.f32 %v693, %v708
        %v710 = vmul.f32 %v694, %v708
        %v711 = vadd.f32 %v685, %v709
        %v712 = vadd.f32 %v686, %v710
        %s713 = sld [smem:[#allocation8 + $0x1f]]
        %v714 = vstv %s713
        %v715 = vmul.f32 %v693, %v714
        %v716 = vmul.f32 %v694, %v714
        %v717 = vadd.f32 %v691, %v715
        %v718 = vadd.f32 %v692, %v716
        %v719 = vld [vmem:[#allocation2 + $0x2] sm:$0xff]
        %v720 = vld [vmem:[#allocation2 + $0xa] sm:$0xff]
        %s721 = sld [smem:[#allocation8 + $0x20]]
        %v722 = vstv %s721
        %v723 = vmul.f32 %v719, %v722
        %v724 = vmul.f32 %v720, %v722
        %v725 = vadd.f32 %v699, %v723
        %v726 = vadd.f32 %v700, %v724
        %s727 = sld [smem:[#allocation8 + $0x21]]
        %v728 = vstv %s727
        %v729 = vmul.f32 %v719, %v728
        %v730 = vmul.f32 %v720, %v728
        %v731 = vadd.f32 %v705, %v729
        %v732 = vadd.f32 %v706, %v730
        %s733 = sld [smem:[#allocation8 + $0x22]]
        %v734 = vstv %s733
        %v735 = vmul.f32 %v719, %v734
        %v736 = vmul.f32 %v720, %v734
        %v737 = vadd.f32 %v711, %v735
        %v738 = vadd.f32 %v712, %v736
        %s739 = sld [smem:[#allocation8 + $0x23]]
        %v740 = vstv %s739
        %v741 = vmul.f32 %v719, %v740
        %v742 = vmul.f32 %v720, %v740
        %v743 = vadd.f32 %v717, %v741
        %v744 = vadd.f32 %v718, %v742
        %v745 = vld [vmem:[%s534 + $0x2] sm:$0xff]
        %v746 = vld [vmem:[%s534 + $0xa] sm:$0xff]
        %s747 = sld [smem:[#allocation8 + $0x24]]
        %v748 = vstv %s747
        %v749 = vmul.f32 %v745, %v748
        %v750 = vmul.f32 %v746, %v748
        %v751 = vadd.f32 %v725, %v749
        %v752 = vadd.f32 %v726, %v750
        %s753 = sld [smem:[#allocation8 + $0x25]]
        %v754 = vstv %s753
        %v755 = vmul.f32 %v745, %v754
        %v756 = vmul.f32 %v746, %v754
        %v757 = vadd.f32 %v731, %v755
        %v758 = vadd.f32 %v732, %v756
        %s759 = sld [smem:[#allocation8 + $0x26]]
        %v760 = vstv %s759
        %v761 = vmul.f32 %v745, %v760
        %v762 = vmul.f32 %v746, %v760
        %v763 = vadd.f32 %v737, %v761
        %v764 = vadd.f32 %v738, %v762
        %s765 = sld [smem:[#allocation8 + $0x27]]
        %v766 = vstv %s765
        %v767 = vmul.f32 %v745, %v766
        %v768 = vmul.f32 %v746, %v766
        %v769 = vadd.f32 %v743, %v767
        %v770 = vadd.f32 %v744, %v768
        %v771 = vld [vmem:[%s561 + $0x2] sm:$0xff]
        %v772 = vld [vmem:[%s561 + $0xa] sm:$0xff]
        %s773 = sld [smem:[#allocation8 + $0x28]]
        %v774 = vstv %s773
        %v775 = vmul.f32 %v771, %v774
        %v776 = vmul.f32 %v772, %v774
        %v777 = vadd.f32 %v751, %v775
        %v778 = vadd.f32 %v752, %v776
        %s779 = sld [smem:[#allocation8 + $0x29]]
        %v780 = vstv %s779
        %v781 = vmul.f32 %v771, %v780
        %v782 = vmul.f32 %v772, %v780
        %v783 = vadd.f32 %v757, %v781
        %v784 = vadd.f32 %v758, %v782
        %s785 = sld [smem:[#allocation8 + $0x2a]]
        %v786 = vstv %s785
        %v787 = vmul.f32 %v771, %v786
        %v788 = vmul.f32 %v772, %v786
        %v789 = vadd.f32 %v763, %v787
        %v790 = vadd.f32 %v764, %v788
        %s791 = sld [smem:[#allocation8 + $0x2b]]
        %v792 = vstv %s791
        %v793 = vmul.f32 %v771, %v792
        %v794 = vmul.f32 %v772, %v792
        %v795 = vadd.f32 %v769, %v793
        %v796 = vadd.f32 %v770, %v794
        %v797 = vld [vmem:[%s588 + $0x2] sm:$0xff]
        %v798 = vld [vmem:[%s588 + $0xa] sm:$0xff]
        %s799 = sld [smem:[#allocation8 + $0x2c]]
        %v800 = vstv %s799
        %v801 = vmul.f32 %v797, %v800
        %v802 = vmul.f32 %v798, %v800
        %v803 = vadd.f32 %v777, %v801
        %v804 = vadd.f32 %v778, %v802
        %s805 = sld [smem:[#allocation8 + $0x2d]]
        %v806 = vstv %s805
        %v807 = vmul.f32 %v797, %v806
        %v808 = vmul.f32 %v798, %v806
        %v809 = vadd.f32 %v783, %v807
        %v810 = vadd.f32 %v784, %v808
        %s811 = sld [smem:[#allocation8 + $0x2e]]
        %v812 = vstv %s811
        %v813 = vmul.f32 %v797, %v812
        %v814 = vmul.f32 %v798, %v812
        %v815 = vadd.f32 %v789, %v813
        %v816 = vadd.f32 %v790, %v814
        %s817 = sld [smem:[#allocation8 + $0x2f]]
        %v818 = vstv %s817
        %v819 = vmul.f32 %v797, %v818
        %v820 = vmul.f32 %v798, %v818
        %v821 = vadd.f32 %v795, %v819
        %v822 = vadd.f32 %v796, %v820
        %v823 = vld [vmem:[#allocation2 + $0x3] sm:$0xff]
        %v824 = vld [vmem:[#allocation2 + $0xb] sm:$0xff]
        %s825 = sld [smem:[#allocation8 + $0x30]]
        %v826 = vstv %s825
        %v827 = vmul.f32 %v823, %v826
        %v828 = vmul.f32 %v824, %v826
        %v829 = vadd.f32 %v803, %v827
        %v830 = vadd.f32 %v804, %v828
        %s831 = sld [smem:[#allocation8 + $0x31]]
        %v832 = vstv %s831
        %v833 = vmul.f32 %v823, %v832
        %v834 = vmul.f32 %v824, %v832
        %v835 = vadd.f32 %v809, %v833
        %v836 = vadd.f32 %v810, %v834
        %s837 = sld [smem:[#allocation8 + $0x32]]
        %v838 = vstv %s837
        %v839 = vmul.f32 %v823, %v838
        %v840 = vmul.f32 %v824, %v838
        %v841 = vadd.f32 %v815, %v839
        %v842 = vadd.f32 %v816, %v840
        %s843 = sld [smem:[#allocation8 + $0x33]]
        %v844 = vstv %s843
        %v845 = vmul.f32 %v823, %v844
        %v846 = vmul.f32 %v824, %v844
        %v847 = vadd.f32 %v821, %v845
        %v848 = vadd.f32 %v822, %v846
        %v849 = vld [vmem:[%s534 + $0x3] sm:$0xff]
        %v850 = vld [vmem:[%s534 + $0xb] sm:$0xff]
        %s851 = sld [smem:[#allocation8 + $0x34]]
        %v852 = vstv %s851
        %v853 = vmul.f32 %v849, %v852
        %v854 = vmul.f32 %v850, %v852
        %v855 = vadd.f32 %v829, %v853
        %v856 = vadd.f32 %v830, %v854
        %s857 = sld [smem:[#allocation8 + $0x35]]
        %v858 = vstv %s857
        %v859 = vmul.f32 %v849, %v858
        %v860 = vmul.f32 %v850, %v858
        %v861 = vadd.f32 %v835, %v859
        %v862 = vadd.f32 %v836, %v860
        %s863 = sld [smem:[#allocation8 + $0x36]]
        %v864 = vstv %s863
        %v865 = vmul.f32 %v849, %v864
        %v866 = vmul.f32 %v850, %v864
        %v867 = vadd.f32 %v841, %v865
        %v868 = vadd.f32 %v842, %v866
        %s869 = sld [smem:[#allocation8 + $0x37]]
        %v870 = vstv %s869
        %v871 = vmul.f32 %v849, %v870
        %v872 = vmul.f32 %v850, %v870
        %v873 = vadd.f32 %v847, %v871
        %v874 = vadd.f32 %v848, %v872
        %v875 = vld [vmem:[%s561 + $0x3] sm:$0xff]
        %v876 = vld [vmem:[%s561 + $0xb] sm:$0xff]
        %s877 = sld [smem:[#allocation8 + $0x38]]
        %v878 = vstv %s877
        %v879 = vmul.f32 %v875, %v878
        %v880 = vmul.f32 %v876, %v878
        %v881 = vadd.f32 %v855, %v879
        %v882 = vadd.f32 %v856, %v880
        %s883 = sld [smem:[#allocation8 + $0x39]]
        %v884 = vstv %s883
        %v885 = vmul.f32 %v875, %v884
        %v886 = vmul.f32 %v876, %v884
        %v887 = vadd.f32 %v861, %v885
        %v888 = vadd.f32 %v862, %v886
        %s889 = sld [smem:[#allocation8 + $0x3a]]
        %v890 = vstv %s889
        %v891 = vmul.f32 %v875, %v890
        %v892 = vmul.f32 %v876, %v890
        %v893 = vadd.f32 %v867, %v891
        %v894 = vadd.f32 %v868, %v892
        %s895 = sld [smem:[#allocation8 + $0x3b]]
        %v896 = vstv %s895
        %v897 = vmul.f32 %v875, %v896
        %v898 = vmul.f32 %v876, %v896
        %v899 = vadd.f32 %v873, %v897
        %v900 = vadd.f32 %v874, %v898
        %v901 = vld [vmem:[%s588 + $0x3] sm:$0xff]
        %v902 = vld [vmem:[%s588 + $0xb] sm:$0xff]
        %s903 = sld [smem:[#allocation8 + $0x3c]]
        %v904 = vstv %s903
        %v905 = vmul.f32 %v901, %v904
        %v906 = vmul.f32 %v902, %v904
        %v907 = vadd.f32 %v881, %v905
        %v908 = vadd.f32 %v882, %v906
        %s909 = sld [smem:[#allocation8 + $0x3d]]
        %v910 = vstv %s909
        %v911 = vmul.f32 %v901, %v910
        %v912 = vmul.f32 %v902, %v910
        %v913 = vadd.f32 %v887, %v911
        %v914 = vadd.f32 %v888, %v912
        %s915 = sld [smem:[#allocation8 + $0x3e]]
        %v916 = vstv %s915
        %v917 = vmul.f32 %v901, %v916
        %v918 = vmul.f32 %v902, %v916
        %v919 = vadd.f32 %v893, %v917
        %v920 = vadd.f32 %v894, %v918
        %s921 = sld [smem:[#allocation8 + $0x3f]]
        %v922 = vstv %s921
        %v923 = vmul.f32 %v901, %v922
        %v924 = vmul.f32 %v902, %v922
        %v925 = vadd.f32 %v899, %v923
        %v926 = vadd.f32 %v900, %v924
        %v927 = vld [vmem:[#allocation2 + $0x4] sm:$0xff]
        %v928 = vld [vmem:[#allocation2 + $0xc] sm:$0xff]
        %s929 = sld [smem:[#allocation8 + $0x40]]
        %v930 = vstv %s929
        %v931 = vmul.f32 %v927, %v930
        %v932 = vmul.f32 %v928, %v930
        %v933 = vadd.f32 %v907, %v931
        %v934 = vadd.f32 %v908, %v932
        %s935 = sld [smem:[#allocation8 + $0x41]]
        %v936 = vstv %s935
        %v937 = vmul.f32 %v927, %v936
        %v938 = vmul.f32 %v928, %v936
        %v939 = vadd.f32 %v913, %v937
        %v940 = vadd.f32 %v914, %v938
        %s941 = sld [smem:[#allocation8 + $0x42]]
        %v942 = vstv %s941
        %v943 = vmul.f32 %v927, %v942
        %v944 = vmul.f32 %v928, %v942
        %v945 = vadd.f32 %v919, %v943
        %v946 = vadd.f32 %v920, %v944
        %s947 = sld [smem:[#allocation8 + $0x43]]
        %v948 = vstv %s947
        %v949 = vmul.f32 %v927, %v948
        %v950 = vmul.f32 %v928, %v948
        %v951 = vadd.f32 %v925, %v949
        %v952 = vadd.f32 %v926, %v950
        %v953 = vld [vmem:[%s534 + $0x4] sm:$0xff]
        %v954 = vld [vmem:[%s534 + $0xc] sm:$0xff]
        %s955 = sld [smem:[#allocation8 + $0x44]]
        %v956 = vstv %s955
        %v957 = vmul.f32 %v953, %v956
        %v958 = vmul.f32 %v954, %v956
        %v959 = vadd.f32 %v933, %v957
        %v960 = vadd.f32 %v934, %v958
        %s961 = sld [smem:[#allocation8 + $0x45]]
        %v962 = vstv %s961
        %v963 = vmul.f32 %v953, %v962
        %v964 = vmul.f32 %v954, %v962
        %v965 = vadd.f32 %v939, %v963
        %v966 = vadd.f32 %v940, %v964
        %s967 = sld [smem:[#allocation8 + $0x46]]
        %v968 = vstv %s967
        %v969 = vmul.f32 %v953, %v968
        %v970 = vmul.f32 %v954, %v968
        %v971 = vadd.f32 %v945, %v969
        %v972 = vadd.f32 %v946, %v970
        %s973 = sld [smem:[#allocation8 + $0x47]]
        %v974 = vstv %s973
        %v975 = vmul.f32 %v953, %v974
        %v976 = vmul.f32 %v954, %v974
        %v977 = vadd.f32 %v951, %v975
        %v978 = vadd.f32 %v952, %v976
        %v979 = vld [vmem:[%s561 + $0x4] sm:$0xff]
        %v980 = vld [vmem:[%s561 + $0xc] sm:$0xff]
        %s981 = sld [smem:[#allocation8 + $0x48]]
        %v982 = vstv %s981
        %v983 = vmul.f32 %v979, %v982
        %v984 = vmul.f32 %v980, %v982
        %v985 = vadd.f32 %v959, %v983
        %v986 = vadd.f32 %v960, %v984
        %s987 = sld [smem:[#allocation8 + $0x49]]
        %v988 = vstv %s987
        %v989 = vmul.f32 %v979, %v988
        %v990 = vmul.f32 %v980, %v988
        %v991 = vadd.f32 %v965, %v989
        %v992 = vadd.f32 %v966, %v990
        %s993 = sld [smem:[#allocation8 + $0x4a]]
        %v994 = vstv %s993
        %v995 = vmul.f32 %v979, %v994
        %v996 = vmul.f32 %v980, %v994
        %v997 = vadd.f32 %v971, %v995
        %v998 = vadd.f32 %v972, %v996
        %s999 = sld [smem:[#allocation8 + $0x4b]]
        %v1000 = vstv %s999
        %v1001 = vmul.f32 %v979, %v1000
        %v1002 = vmul.f32 %v980, %v1000
        %v1003 = vadd.f32 %v977, %v1001
        %v1004 = vadd.f32 %v978, %v1002
        %v1005 = vld [vmem:[%s588 + $0x4] sm:$0xff]
        %v1006 = vld [vmem:[%s588 + $0xc] sm:$0xff]
        %s1007 = sld [smem:[#allocation8 + $0x4c]]
        %v1008 = vstv %s1007
        %v1009 = vmul.f32 %v1005, %v1008
        %v1010 = vmul.f32 %v1006, %v1008
        %v1011 = vadd.f32 %v985, %v1009
        %v1012 = vadd.f32 %v986, %v1010
        %s1013 = sld [smem:[#allocation8 + $0x4d]]
        %v1014 = vstv %s1013
        %v1015 = vmul.f32 %v1005, %v1014
        %v1016 = vmul.f32 %v1006, %v1014
        %v1017 = vadd.f32 %v991, %v1015
        %v1018 = vadd.f32 %v992, %v1016
        %s1019 = sld [smem:[#allocation8 + $0x4e]]
        %v1020 = vstv %s1019
        %v1021 = vmul.f32 %v1005, %v1020
        %v1022 = vmul.f32 %v1006, %v1020
        %v1023 = vadd.f32 %v997, %v1021
        %v1024 = vadd.f32 %v998, %v1022
        %s1025 = sld [smem:[#allocation8 + $0x4f]]
        %v1026 = vstv %s1025
        %v1027 = vmul.f32 %v1005, %v1026
        %v1028 = vmul.f32 %v1006, %v1026
        %v1029 = vadd.f32 %v1003, %v1027
        %v1030 = vadd.f32 %v1004, %v1028
        %v1031 = vld [vmem:[#allocation2 + $0x5] sm:$0xff]
        %v1032 = vld [vmem:[#allocation2 + $0xd] sm:$0xff]
        %s1033 = sld [smem:[#allocation8 + $0x50]]
        %v1034 = vstv %s1033
        %v1035 = vmul.f32 %v1031, %v1034
        %v1036 = vmul.f32 %v1032, %v1034
        %v1037 = vadd.f32 %v1011, %v1035
        %v1038 = vadd.f32 %v1012, %v1036
        %s1039 = sld [smem:[#allocation8 + $0x51]]
        %v1040 = vstv %s1039
        %v1041 = vmul.f32 %v1031, %v1040
        %v1042 = vmul.f32 %v1032, %v1040
        %v1043 = vadd.f32 %v1017, %v1041
        %v1044 = vadd.f32 %v1018, %v1042
        %s1045 = sld [smem:[#allocation8 + $0x52]]
        %v1046 = vstv %s1045
        %v1047 = vmul.f32 %v1031, %v1046
        %v1048 = vmul.f32 %v1032, %v1046
        %v1049 = vadd.f32 %v1023, %v1047
        %v1050 = vadd.f32 %v1024, %v1048
        %s1051 = sld [smem:[#allocation8 + $0x53]]
        %v1052 = vstv %s1051
        %v1053 = vmul.f32 %v1031, %v1052
        %v1054 = vmul.f32 %v1032, %v1052
        %v1055 = vadd.f32 %v1029, %v1053
        %v1056 = vadd.f32 %v1030, %v1054
        %v1057 = vld [vmem:[%s534 + $0x5] sm:$0xff]
        %v1058 = vld [vmem:[%s534 + $0xd] sm:$0xff]
        %s1059 = sld [smem:[#allocation8 + $0x54]]
        %v1060 = vstv %s1059
        %v1061 = vmul.f32 %v1057, %v1060
        %v1062 = vmul.f32 %v1058, %v1060
        %v1063 = vadd.f32 %v1037, %v1061
        %v1064 = vadd.f32 %v1038, %v1062
        %s1065 = sld [smem:[#allocation8 + $0x55]]
        %v1066 = vstv %s1065
        %v1067 = vmul.f32 %v1057, %v1066
        %v1068 = vmul.f32 %v1058, %v1066
        %v1069 = vadd.f32 %v1043, %v1067
        %v1070 = vadd.f32 %v1044, %v1068
        %s1071 = sld [smem:[#allocation8 + $0x56]]
        %v1072 = vstv %s1071
        %v1073 = vmul.f32 %v1057, %v1072
        %v1074 = vmul.f32 %v1058, %v1072
        %v1075 = vadd.f32 %v1049, %v1073
        %v1076 = vadd.f32 %v1050, %v1074
        %s1077 = sld [smem:[#allocation8 + $0x57]]
        %v1078 = vstv %s1077
        %v1079 = vmul.f32 %v1057, %v1078
        %v1080 = vmul.f32 %v1058, %v1078
        %v1081 = vadd.f32 %v1055, %v1079
        %v1082 = vadd.f32 %v1056, %v1080
        %v1083 = vld [vmem:[%s561 + $0x5] sm:$0xff]
        %v1084 = vld [vmem:[%s561 + $0xd] sm:$0xff]
        %s1085 = sld [smem:[#allocation8 + $0x58]]
        %v1086 = vstv %s1085
        %v1087 = vmul.f32 %v1083, %v1086
        %v1088 = vmul.f32 %v1084, %v1086
        %v1089 = vadd.f32 %v1063, %v1087
        %v1090 = vadd.f32 %v1064, %v1088
        %s1091 = sld [smem:[#allocation8 + $0x59]]
        %v1092 = vstv %s1091
        %v1093 = vmul.f32 %v1083, %v1092
        %v1094 = vmul.f32 %v1084, %v1092
        %v1095 = vadd.f32 %v1069, %v1093
        %v1096 = vadd.f32 %v1070, %v1094
        %s1097 = sld [smem:[#allocation8 + $0x5a]]
        %v1098 = vstv %s1097
        %v1099 = vmul.f32 %v1083, %v1098
        %v1100 = vmul.f32 %v1084, %v1098
        %v1101 = vadd.f32 %v1075, %v1099
        %v1102 = vadd.f32 %v1076, %v1100
        %s1103 = sld [smem:[#allocation8 + $0x5b]]
        %v1104 = vstv %s1103
        %v1105 = vmul.f32 %v1083, %v1104
        %v1106 = vmul.f32 %v1084, %v1104
        %v1107 = vadd.f32 %v1081, %v1105
        %v1108 = vadd.f32 %v1082, %v1106
        %v1109 = vld [vmem:[%s588 + $0x5] sm:$0xff]
        %v1110 = vld [vmem:[%s588 + $0xd] sm:$0xff]
        %s1111 = sld [smem:[#allocation8 + $0x5c]]
        %v1112 = vstv %s1111
        %v1113 = vmul.f32 %v1109, %v1112
        %v1114 = vmul.f32 %v1110, %v1112
        %v1115 = vadd.f32 %v1089, %v1113
        %v1116 = vadd.f32 %v1090, %v1114
        %s1117 = sld [smem:[#allocation8 + $0x5d]]
        %v1118 = vstv %s1117
        %v1119 = vmul.f32 %v1109, %v1118
        %v1120 = vmul.f32 %v1110, %v1118
        %v1121 = vadd.f32 %v1095, %v1119
        %v1122 = vadd.f32 %v1096, %v1120
        %s1123 = sld [smem:[#allocation8 + $0x5e]]
        %v1124 = vstv %s1123
        %v1125 = vmul.f32 %v1109, %v1124
        %v1126 = vmul.f32 %v1110, %v1124
        %v1127 = vadd.f32 %v1101, %v1125
        %v1128 = vadd.f32 %v1102, %v1126
        %s1129 = sld [smem:[#allocation8 + $0x5f]]
        %v1130 = vstv %s1129
        %v1131 = vmul.f32 %v1109, %v1130
        %v1132 = vmul.f32 %v1110, %v1130
        %v1133 = vadd.f32 %v1107, %v1131
        %v1134 = vadd.f32 %v1108, %v1132
        %v1135 = vld [vmem:[#allocation2 + $0x6] sm:$0xff]
        %v1136 = vld [vmem:[#allocation2 + $0xe] sm:$0xff]
        %s1137 = sld [smem:[#allocation8 + $0x60]]
        %v1138 = vstv %s1137
        %v1139 = vmul.f32 %v1135, %v1138
        %v1140 = vmul.f32 %v1136, %v1138
        %v1141 = vadd.f32 %v1115, %v1139
        %v1142 = vadd.f32 %v1116, %v1140
        %s1143 = sld [smem:[#allocation8 + $0x61]]
        %v1144 = vstv %s1143
        %v1145 = vmul.f32 %v1135, %v1144
        %v1146 = vmul.f32 %v1136, %v1144
        %v1147 = vadd.f32 %v1121, %v1145
        %v1148 = vadd.f32 %v1122, %v1146
        %s1149 = sld [smem:[#allocation8 + $0x62]]
        %v1150 = vstv %s1149
        %v1151 = vmul.f32 %v1135, %v1150
        %v1152 = vmul.f32 %v1136, %v1150
        %v1153 = vadd.f32 %v1127, %v1151
        %v1154 = vadd.f32 %v1128, %v1152
        %s1155 = sld [smem:[#allocation8 + $0x63]]
        %v1156 = vstv %s1155
        %v1157 = vmul.f32 %v1135, %v1156
        %v1158 = vmul.f32 %v1136, %v1156
        %v1159 = vadd.f32 %v1133, %v1157
        %v1160 = vadd.f32 %v1134, %v1158
        %v1161 = vld [vmem:[%s534 + $0x6] sm:$0xff]
        %v1162 = vld [vmem:[%s534 + $0xe] sm:$0xff]
        %s1163 = sld [smem:[#allocation8 + $0x64]]
        %v1164 = vstv %s1163
        %v1165 = vmul.f32 %v1161, %v1164
        %v1166 = vmul.f32 %v1162, %v1164
        %v1167 = vadd.f32 %v1141, %v1165
        %v1168 = vadd.f32 %v1142, %v1166
        %s1169 = sld [smem:[#allocation8 + $0x65]]
        %v1170 = vstv %s1169
        %v1171 = vmul.f32 %v1161, %v1170
        %v1172 = vmul.f32 %v1162, %v1170
        %v1173 = vadd.f32 %v1147, %v1171
        %v1174 = vadd.f32 %v1148, %v1172
        %s1175 = sld [smem:[#allocation8 + $0x66]]
        %v1176 = vstv %s1175
        %v1177 = vmul.f32 %v1161, %v1176
        %v1178 = vmul.f32 %v1162, %v1176
        %v1179 = vadd.f32 %v1153, %v1177
        %v1180 = vadd.f32 %v1154, %v1178
        %s1181 = sld [smem:[#allocation8 + $0x67]]
        %v1182 = vstv %s1181
        %v1183 = vmul.f32 %v1161, %v1182
        %v1184 = vmul.f32 %v1162, %v1182
        %v1185 = vadd.f32 %v1159, %v1183
        %v1186 = vadd.f32 %v1160, %v1184
        %v1187 = vld [vmem:[%s561 + $0x6] sm:$0xff]
        %v1188 = vld [vmem:[%s561 + $0xe] sm:$0xff]
        %s1189 = sld [smem:[#allocation8 + $0x68]]
        %v1190 = vstv %s1189
        %v1191 = vmul.f32 %v1187, %v1190
        %v1192 = vmul.f32 %v1188, %v1190
        %v1193 = vadd.f32 %v1167, %v1191
        %v1194 = vadd.f32 %v1168, %v1192
        %s1195 = sld [smem:[#allocation8 + $0x69]]
        %v1196 = vstv %s1195
        %v1197 = vmul.f32 %v1187, %v1196
        %v1198 = vmul.f32 %v1188, %v1196
        %v1199 = vadd.f32 %v1173, %v1197
        %v1200 = vadd.f32 %v1174, %v1198
        %s1201 = sld [smem:[#allocation8 + $0x6a]]
        %v1202 = vstv %s1201
        %v1203 = vmul.f32 %v1187, %v1202
        %v1204 = vmul.f32 %v1188, %v1202
        %v1205 = vadd.f32 %v1179, %v1203
        %v1206 = vadd.f32 %v1180, %v1204
        %s1207 = sld [smem:[#allocation8 + $0x6b]]
        %v1208 = vstv %s1207
        %v1209 = vmul.f32 %v1187, %v1208
        %v1210 = vmul.f32 %v1188, %v1208
        %v1211 = vadd.f32 %v1185, %v1209
        %v1212 = vadd.f32 %v1186, %v1210
        %v1213 = vld [vmem:[%s588 + $0x6] sm:$0xff]
        %v1214 = vld [vmem:[%s588 + $0xe] sm:$0xff]
        %s1215 = sld [smem:[#allocation8 + $0x6c]]
        %v1216 = vstv %s1215
        %v1217 = vmul.f32 %v1213, %v1216
        %v1218 = vmul.f32 %v1214, %v1216
        %v1219 = vadd.f32 %v1193, %v1217
        %v1220 = vadd.f32 %v1194, %v1218
        %s1221 = sld [smem:[#allocation8 + $0x6d]]
        %v1222 = vstv %s1221
        %v1223 = vmul.f32 %v1213, %v1222
        %v1224 = vmul.f32 %v1214, %v1222
        %v1225 = vadd.f32 %v1199, %v1223
        %v1226 = vadd.f32 %v1200, %v1224
        %s1227 = sld [smem:[#allocation8 + $0x6e]]
        %v1228 = vstv %s1227
        %v1229 = vmul.f32 %v1213, %v1228
        %v1230 = vmul.f32 %v1214, %v1228
        %v1231 = vadd.f32 %v1205, %v1229
        %v1232 = vadd.f32 %v1206, %v1230
        %s1233 = sld [smem:[#allocation8 + $0x6f]]
        %v1234 = vstv %s1233
        %v1235 = vmul.f32 %v1213, %v1234
        %v1236 = vmul.f32 %v1214, %v1234
        %v1237 = vadd.f32 %v1211, %v1235
        %v1238 = vadd.f32 %v1212, %v1236
        %1239 = vst.msk [vmem:[#allocation3] sm:$0xff] %vm453, %v1219
        %1240 = vst.msk [vmem:[#allocation3 + $0x8] sm:$0xff] %vm453, %v1220
        %v1241 = vld [vmem:[#allocation3] sm:$0xff]
        %v1242 = vld [vmem:[#allocation3 + $0x8] sm:$0xff]
        %s1243 = sld [smem:[#allocation9]]
        %v1244 = vstv %s1243
        %v1245 = vadd.f32 %v1241, %v1244
        %v1246 = vadd.f32 %v1242, %v1244
        %1247 = vst.msk [vmem:[#allocation3] sm:$0xff] %vm507, %v1245
        %1248 = vst.msk [vmem:[#allocation3 + $0x8] sm:$0xff] %vm507, %v1246
        %s1249 = scalar_lea.vmem [#allocation3], 24
        %1250 = vst.msk [vmem:[%s1249] sm:$0xff] %vm453, %v1225
        %1251 = vst.msk [vmem:[%s1249 + $0x8] sm:$0xff] %vm453, %v1226
        %v1252 = vld [vmem:[%s1249] sm:$0xff]
        %v1253 = vld [vmem:[%s1249 + $0x8] sm:$0xff]
        %s1254 = sld [smem:[#allocation9 + $0x1]]
        %v1255 = vstv %s1254
        %v1256 = vadd.f32 %v1252, %v1255
        %v1257 = vadd.f32 %v1253, %v1255
        %1258 = vst.msk [vmem:[%s1249] sm:$0xff] %vm507, %v1256
        %1259 = vst.msk [vmem:[%s1249 + $0x8] sm:$0xff] %vm507, %v1257
        %s1260 = scalar_lea.vmem [#allocation3], 48
        %1261 = vst.msk [vmem:[%s1260] sm:$0xff] %vm453, %v1231
        %1262 = vst.msk [vmem:[%s1260 + $0x8] sm:$0xff] %vm453, %v1232
        %v1263 = vld [vmem:[%s1260] sm:$0xff]
        %v1264 = vld [vmem:[%s1260 + $0x8] sm:$0xff]
        %s1265 = sld [smem:[#allocation9 + $0x2]]
        %v1266 = vstv %s1265
        %v1267 = vadd.f32 %v1263, %v1266
        %v1268 = vadd.f32 %v1264, %v1266
        %1269 = vst.msk [vmem:[%s1260] sm:$0xff] %vm507, %v1267
        %1270 = vst.msk [vmem:[%s1260 + $0x8] sm:$0xff] %vm507, %v1268
        %s1271 = scalar_lea.vmem [#allocation3], 72
        %1272 = vst.msk [vmem:[%s1271] sm:$0xff] %vm453, %v1237
        %1273 = vst.msk [vmem:[%s1271 + $0x8] sm:$0xff] %vm453, %v1238
        %v1274 = vld [vmem:[%s1271] sm:$0xff]
        %v1275 = vld [vmem:[%s1271 + $0x8] sm:$0xff]
        %s1276 = sld [smem:[#allocation9 + $0x3]]
        %v1277 = vstv %s1276
        %v1278 = vadd.f32 %v1274, %v1277
        %v1279 = vadd.f32 %v1275, %v1277
        %1280 = vst.msk [vmem:[%s1271] sm:$0xff] %vm507, %v1278
        %1281 = vst.msk [vmem:[%s1271 + $0x8] sm:$0xff] %vm507, %v1279
        %s1282 = sld [smem:[#allocation12]]
        %v1283 = vstv %s1282
        %s1284 = sld [smem:[#allocation12 + $0x1]]
        %v1285 = vstv %s1284
        %s1286 = sld [smem:[#allocation12 + $0x2]]
        %v1287 = vstv %s1286
        %s1288 = sld [smem:[#allocation12 + $0x3]]
        %v1289 = vstv %s1288
        %v1290 = vld [vmem:[#allocation3] sm:$0xff]
        %v1291 = vld [vmem:[#allocation3 + $0x8] sm:$0xff]
        %s1292 = sld [smem:[#allocation11]]
        %v1293 = vstv %s1292
        %v1294 = vmul.f32 %v1290, %v1293
        %v1295 = vmul.f32 %v1291, %v1293
        %v1296 = vadd.f32 %v1283, %v1294
        %v1297 = vadd.f32 %v1283, %v1295
        %s1298 = sld [smem:[#allocation11 + $0x1]]
        %v1299 = vstv %s1298
        %v1300 = vmul.f32 %v1290, %v1299
        %v1301 = vmul.f32 %v1291, %v1299
        %v1302 = vadd.f32 %v1285, %v1300
        %v1303 = vadd.f32 %v1285, %v1301
        %s1304 = sld [smem:[#allocation11 + $0x2]]
        %v1305 = vstv %s1304
        %v1306 = vmul.f32 %v1290, %v1305
        %v1307 = vmul.f32 %v1291, %v1305
        %v1308 = vadd.f32 %v1287, %v1306
        %v1309 = vadd.f32 %v1287, %v1307
        %s1310 = sld [smem:[#allocation11 + $0x3]]
        %v1311 = vstv %s1310
        %v1312 = vmul.f32 %v1290, %v1311
        %v1313 = vmul.f32 %v1291, %v1311
        %v1314 = vadd.f32 %v1289, %v1312
        %v1315 = vadd.f32 %v1289, %v1313
        %v1316 = vld [vmem:[%s1249] sm:$0xff]
        %v1317 = vld [vmem:[%s1249 + $0x8] sm:$0xff]
        %s1318 = sld [smem:[#allocation11 + $0x4]]
        %v1319 = vstv %s1318
        %v1320 = vmul.f32 %v1316, %v1319
        %v1321 = vmul.f32 %v1317, %v1319
        %v1322 = vadd.f32 %v1296, %v1320
        %v1323 = vadd.f32 %v1297, %v1321
        %s1324 = sld [smem:[#allocation11 + $0x5]]
        %v1325 = vstv %s1324
        %v1326 = vmul.f32 %v1316, %v1325
        %v1327 = vmul.f32 %v1317, %v1325
        %v1328 = vadd.f32 %v1302, %v1326
        %v1329 = vadd.f32 %v1303, %v1327
        %s1330 = sld [smem:[#allocation11 + $0x6]]
        %v1331 = vstv %s1330
        %v1332 = vmul.f32 %v1316, %v1331
        %v1333 = vmul.f32 %v1317, %v1331
        %v1334 = vadd.f32 %v1308, %v1332
        %v1335 = vadd.f32 %v1309, %v1333
        %s1336 = sld [smem:[#allocation11 + $0x7]]
        %v1337 = vstv %s1336
        %v1338 = vmul.f32 %v1316, %v1337
        %v1339 = vmul.f32 %v1317, %v1337
        %v1340 = vadd.f32 %v1314, %v1338
        %v1341 = vadd.f32 %v1315, %v1339
        %v1342 = vld [vmem:[%s1260] sm:$0xff]
        %v1343 = vld [vmem:[%s1260 + $0x8] sm:$0xff]
        %s1344 = sld [smem:[#allocation11 + $0x8]]
        %v1345 = vstv %s1344
        %v1346 = vmul.f32 %v1342, %v1345
        %v1347 = vmul.f32 %v1343, %v1345
        %v1348 = vadd.f32 %v1322, %v1346
        %v1349 = vadd.f32 %v1323, %v1347
        %s1350 = sld [smem:[#allocation11 + $0x9]]
        %v1351 = vstv %s1350
        %v1352 = vmul.f32 %v1342, %v1351
        %v1353 = vmul.f32 %v1343, %v1351
        %v1354 = vadd.f32 %v1328, %v1352
        %v1355 = vadd.f32 %v1329, %v1353
        %s1356 = sld [smem:[#allocation11 + $0xa]]
        %v1357 = vstv %s1356
        %v1358 = vmul.f32 %v1342, %v1357
        %v1359 = vmul.f32 %v1343, %v1357
        %v1360 = vadd.f32 %v1334, %v1358
        %v1361 = vadd.f32 %v1335, %v1359
        %s1362 = sld [smem:[#allocation11 + $0xb]]
        %v1363 = vstv %s1362
        %v1364 = vmul.f32 %v1342, %v1363
        %v1365 = vmul.f32 %v1343, %v1363
        %v1366 = vadd.f32 %v1340, %v1364
        %v1367 = vadd.f32 %v1341, %v1365
        %v1368 = vld [vmem:[%s1271] sm:$0xff]
        %v1369 = vld [vmem:[%s1271 + $0x8] sm:$0xff]
        %s1370 = sld [smem:[#allocation11 + $0xc]]
        %v1371 = vstv %s1370
        %v1372 = vmul.f32 %v1368, %v1371
        %v1373 = vmul.f32 %v1369, %v1371
        %v1374 = vadd.f32 %v1348, %v1372
        %v1375 = vadd.f32 %v1349, %v1373
        %s1376 = sld [smem:[#allocation11 + $0xd]]
        %v1377 = vstv %s1376
        %v1378 = vmul.f32 %v1368, %v1377
        %v1379 = vmul.f32 %v1369, %v1377
        %v1380 = vadd.f32 %v1354, %v1378
        %v1381 = vadd.f32 %v1355, %v1379
        %s1382 = sld [smem:[#allocation11 + $0xe]]
        %v1383 = vstv %s1382
        %v1384 = vmul.f32 %v1368, %v1383
        %v1385 = vmul.f32 %v1369, %v1383
        %v1386 = vadd.f32 %v1360, %v1384
        %v1387 = vadd.f32 %v1361, %v1385
        %s1388 = sld [smem:[#allocation11 + $0xf]]
        %v1389 = vstv %s1388
        %v1390 = vmul.f32 %v1368, %v1389
        %v1391 = vmul.f32 %v1369, %v1389
        %v1392 = vadd.f32 %v1366, %v1390
        %v1393 = vadd.f32 %v1367, %v1391
        %s1394 = sld [smem:[#allocation11 + $0x10]]
        %v1395 = vstv %s1394
        %v1396 = vmul.f32 %v1290, %v1395
        %v1397 = vmul.f32 %v1291, %v1395
        %1400 = vrot.lane.b32.xlu0 %v1396, 127
        %v1401 = vpop.permute.xlu0 %1400
        %1402 = vrot.lane.b32.xlu0 %v1397, 127
        %v1403 = vpop.permute.xlu0 %1402
        %v1406 = vadd.f32 %v1374, %v1401
        %v1407 = vadd.f32 %v1375, %v1403
        %s1408 = sld [smem:[#allocation11 + $0x11]]
        %v1409 = vstv %s1408
        %v1410 = vmul.f32 %v1290, %v1409
        %v1411 = vmul.f32 %v1291, %v1409
        %1414 = vrot.lane.b32.xlu0 %v1410, 127
        %v1415 = vpop.permute.xlu0 %1414
        %1416 = vrot.lane.b32.xlu0 %v1411, 127
        %v1417 = vpop.permute.xlu0 %1416
        %v1420 = vadd.f32 %v1380, %v1415
        %v1421 = vadd.f32 %v1381, %v1417
        %s1422 = sld [smem:[#allocation11 + $0x12]]
        %v1423 = vstv %s1422
        %v1424 = vmul.f32 %v1290, %v1423
        %v1425 = vmul.f32 %v1291, %v1423
        %1428 = vrot.lane.b32.xlu0 %v1424, 127
        %v1429 = vpop.permute.xlu0 %1428
        %1430 = vrot.lane.b32.xlu0 %v1425, 127
        %v1431 = vpop.permute.xlu0 %1430
        %v1434 = vadd.f32 %v1386, %v1429
        %v1435 = vadd.f32 %v1387, %v1431
        %s1436 = sld [smem:[#allocation11 + $0x13]]
        %v1437 = vstv %s1436
        %v1438 = vmul.f32 %v1290, %v1437
        %v1439 = vmul.f32 %v1291, %v1437
        %1442 = vrot.lane.b32.xlu0 %v1438, 127
        %v1443 = vpop.permute.xlu0 %1442
        %1444 = vrot.lane.b32.xlu0 %v1439, 127
        %v1445 = vpop.permute.xlu0 %1444
        %v1448 = vadd.f32 %v1392, %v1443
        %v1449 = vadd.f32 %v1393, %v1445
        %s1450 = sld [smem:[#allocation11 + $0x14]]
        %v1451 = vstv %s1450
        %v1452 = vmul.f32 %v1316, %v1451
        %v1453 = vmul.f32 %v1317, %v1451
        %1456 = vrot.lane.b32.xlu0 %v1452, 127
        %v1457 = vpop.permute.xlu0 %1456
        %1458 = vrot.lane.b32.xlu0 %v1453, 127
        %v1459 = vpop.permute.xlu0 %1458
        %v1462 = vadd.f32 %v1406, %v1457
        %v1463 = vadd.f32 %v1407, %v1459
        %s1464 = sld [smem:[#allocation11 + $0x15]]
        %v1465 = vstv %s1464
        %v1466 = vmul.f32 %v1316, %v1465
        %v1467 = vmul.f32 %v1317, %v1465
        %1470 = vrot.lane.b32.xlu0 %v1466, 127
        %v1471 = vpop.permute.xlu0 %1470
        %1472 = vrot.lane.b32.xlu0 %v1467, 127
        %v1473 = vpop.permute.xlu0 %1472
        %v1476 = vadd.f32 %v1420, %v1471
        %v1477 = vadd.f32 %v1421, %v1473
        %s1478 = sld [smem:[#allocation11 + $0x16]]
        %v1479 = vstv %s1478
        %v1480 = vmul.f32 %v1316, %v1479
        %v1481 = vmul.f32 %v1317, %v1479
        %1484 = vrot.lane.b32.xlu0 %v1480, 127
        %v1485 = vpop.permute.xlu0 %1484
        %1486 = vrot.lane.b32.xlu0 %v1481, 127
        %v1487 = vpop.permute.xlu0 %1486
        %v1490 = vadd.f32 %v1434, %v1485
        %v1491 = vadd.f32 %v1435, %v1487
        %s1492 = sld [smem:[#allocation11 + $0x17]]
        %v1493 = vstv %s1492
        %v1494 = vmul.f32 %v1316, %v1493
        %v1495 = vmul.f32 %v1317, %v1493
        %1498 = vrot.lane.b32.xlu0 %v1494, 127
        %v1499 = vpop.permute.xlu0 %1498
        %1500 = vrot.lane.b32.xlu0 %v1495, 127
        %v1501 = vpop.permute.xlu0 %1500
        %v1504 = vadd.f32 %v1448, %v1499
        %v1505 = vadd.f32 %v1449, %v1501
        %s1506 = sld [smem:[#allocation11 + $0x18]]
        %v1507 = vstv %s1506
        %v1508 = vmul.f32 %v1342, %v1507
        %v1509 = vmul.f32 %v1343, %v1507
        %1512 = vrot.lane.b32.xlu0 %v1508, 127
        %v1513 = vpop.permute.xlu0 %1512
        %1514 = vrot.lane.b32.xlu0 %v1509, 127
        %v1515 = vpop.permute.xlu0 %1514
        %v1518 = vadd.f32 %v1462, %v1513
        %v1519 = vadd.f32 %v1463, %v1515
        %s1520 = sld [smem:[#allocation11 + $0x19]]
        %v1521 = vstv %s1520
        %v1522 = vmul.f32 %v1342, %v1521
        %v1523 = vmul.f32 %v1343, %v1521
        %1526 = vrot.lane.b32.xlu0 %v1522, 127
        %v1527 = vpop.permute.xlu0 %1526
        %1528 = vrot.lane.b32.xlu0 %v1523, 127
        %v1529 = vpop.permute.xlu0 %1528
        %v1532 = vadd.f32 %v1476, %v1527
        %v1533 = vadd.f32 %v1477, %v1529
        %s1534 = sld [smem:[#allocation11 + $0x1a]]
        %v1535 = vstv %s1534
        %v1536 = vmul.f32 %v1342, %v1535
        %v1537 = vmul.f32 %v1343, %v1535
        %1540 = vrot.lane.b32.xlu0 %v1536, 127
        %v1541 = vpop.permute.xlu0 %1540
        %1542 = vrot.lane.b32.xlu0 %v1537, 127
        %v1543 = vpop.permute.xlu0 %1542
        %v1546 = vadd.f32 %v1490, %v1541
        %v1547 = vadd.f32 %v1491, %v1543
        %s1548 = sld [smem:[#allocation11 + $0x1b]]
        %v1549 = vstv %s1548
        %v1550 = vmul.f32 %v1342, %v1549
        %v1551 = vmul.f32 %v1343, %v1549
        %1554 = vrot.lane.b32.xlu0 %v1550, 127
        %v1555 = vpop.permute.xlu0 %1554
        %1556 = vrot.lane.b32.xlu0 %v1551, 127
        %v1557 = vpop.permute.xlu0 %1556
        %v1560 = vadd.f32 %v1504, %v1555
        %v1561 = vadd.f32 %v1505, %v1557
        %s1562 = sld [smem:[#allocation11 + $0x1c]]
        %v1563 = vstv %s1562
        %v1564 = vmul.f32 %v1368, %v1563
        %v1565 = vmul.f32 %v1369, %v1563
        %1568 = vrot.lane.b32.xlu0 %v1564, 127
        %v1569 = vpop.permute.xlu0 %1568
        %1570 = vrot.lane.b32.xlu0 %v1565, 127
        %v1571 = vpop.permute.xlu0 %1570
        %v1574 = vadd.f32 %v1518, %v1569
        %v1575 = vadd.f32 %v1519, %v1571
        %s1576 = sld [smem:[#allocation11 + $0x1d]]
        %v1577 = vstv %s1576
        %v1578 = vmul.f32 %v1368, %v1577
        %v1579 = vmul.f32 %v1369, %v1577
        %1582 = vrot.lane.b32.xlu0 %v1578, 127
        %v1583 = vpop.permute.xlu0 %1582
        %1584 = vrot.lane.b32.xlu0 %v1579, 127
        %v1585 = vpop.permute.xlu0 %1584
        %v1588 = vadd.f32 %v1532, %v1583
        %v1589 = vadd.f32 %v1533, %v1585
        %s1590 = sld [smem:[#allocation11 + $0x1e]]
        %v1591 = vstv %s1590
        %v1592 = vmul.f32 %v1368, %v1591
        %v1593 = vmul.f32 %v1369, %v1591
        %1596 = vrot.lane.b32.xlu0 %v1592, 127
        %v1597 = vpop.permute.xlu0 %1596
        %1598 = vrot.lane.b32.xlu0 %v1593, 127
        %v1599 = vpop.permute.xlu0 %1598
        %v1602 = vadd.f32 %v1546, %v1597
        %v1603 = vadd.f32 %v1547, %v1599
        %s1604 = sld [smem:[#allocation11 + $0x1f]]
        %v1605 = vstv %s1604
        %v1606 = vmul.f32 %v1368, %v1605
        %v1607 = vmul.f32 %v1369, %v1605
        %1610 = vrot.lane.b32.xlu0 %v1606, 127
        %v1611 = vpop.permute.xlu0 %1610
        %1612 = vrot.lane.b32.xlu0 %v1607, 127
        %v1613 = vpop.permute.xlu0 %1612
        %v1616 = vadd.f32 %v1560, %v1611
        %v1617 = vadd.f32 %v1561, %v1613
        %s1618 = sld [smem:[#allocation11 + $0x20]]
        %v1619 = vstv %s1618
        %v1620 = vmul.f32 %v1290, %v1619
        %v1621 = vmul.f32 %v1291, %v1619
        %1624 = vrot.lane.b32.xlu0 %v1620, 126
        %v1625 = vpop.permute.xlu0 %1624
        %1626 = vrot.lane.b32.xlu0 %v1621, 126
        %v1627 = vpop.permute.xlu0 %1626
        %v1630 = vadd.f32 %v1574, %v1625
        %v1631 = vadd.f32 %v1575, %v1627
        %s1632 = sld [smem:[#allocation11 + $0x21]]
        %v1633 = vstv %s1632
        %v1634 = vmul.f32 %v1290, %v1633
        %v1635 = vmul.f32 %v1291, %v1633
        %1638 = vrot.lane.b32.xlu0 %v1634, 126
        %v1639 = vpop.permute.xlu0 %1638
        %1640 = vrot.lane.b32.xlu0 %v1635, 126
        %v1641 = vpop.permute.xlu0 %1640
        %v1644 = vadd.f32 %v1588, %v1639
        %v1645 = vadd.f32 %v1589, %v1641
        %s1646 = sld [smem:[#allocation11 + $0x22]]
        %v1647 = vstv %s1646
        %v1648 = vmul.f32 %v1290, %v1647
        %v1649 = vmul.f32 %v1291, %v1647
        %1652 = vrot.lane.b32.xlu0 %v1648, 126
        %v1653 = vpop.permute.xlu0 %1652
        %1654 = vrot.lane.b32.xlu0 %v1649, 126
        %v1655 = vpop.permute.xlu0 %1654
        %v1658 = vadd.f32 %v1602, %v1653
        %v1659 = vadd.f32 %v1603, %v1655
        %s1660 = sld [smem:[#allocation11 + $0x23]]
        %v1661 = vstv %s1660
        %v1662 = vmul.f32 %v1290, %v1661
        %v1663 = vmul.f32 %v1291, %v1661
        %1666 = vrot.lane.b32.xlu0 %v1662, 126
        %v1667 = vpop.permute.xlu0 %1666
        %1668 = vrot.lane.b32.xlu0 %v1663, 126
        %v1669 = vpop.permute.xlu0 %1668
        %v1672 = vadd.f32 %v1616, %v1667
        %v1673 = vadd.f32 %v1617, %v1669
        %s1674 = sld [smem:[#allocation11 + $0x24]]
        %v1675 = vstv %s1674
        %v1676 = vmul.f32 %v1316, %v1675
        %v1677 = vmul.f32 %v1317, %v1675
        %1680 = vrot.lane.b32.xlu0 %v1676, 126
        %v1681 = vpop.permute.xlu0 %1680
        %1682 = vrot.lane.b32.xlu0 %v1677, 126
        %v1683 = vpop.permute.xlu0 %1682
        %v1686 = vadd.f32 %v1630, %v1681
        %v1687 = vadd.f32 %v1631, %v1683
        %s1688 = sld [smem:[#allocation11 + $0x25]]
        %v1689 = vstv %s1688
        %v1690 = vmul.f32 %v1316, %v1689
        %v1691 = vmul.f32 %v1317, %v1689
        %1694 = vrot.lane.b32.xlu0 %v1690, 126
        %v1695 = vpop.permute.xlu0 %1694
        %1696 = vrot.lane.b32.xlu0 %v1691, 126
        %v1697 = vpop.permute.xlu0 %1696
        %v1700 = vadd.f32 %v1644, %v1695
        %v1701 = vadd.f32 %v1645, %v1697
        %s1702 = sld [smem:[#allocation11 + $0x26]]
        %v1703 = vstv %s1702
        %v1704 = vmul.f32 %v1316, %v1703
        %v1705 = vmul.f32 %v1317, %v1703
        %1708 = vrot.lane.b32.xlu0 %v1704, 126
        %v1709 = vpop.permute.xlu0 %1708
        %1710 = vrot.lane.b32.xlu0 %v1705, 126
        %v1711 = vpop.permute.xlu0 %1710
        %v1714 = vadd.f32 %v1658, %v1709
        %v1715 = vadd.f32 %v1659, %v1711
        %s1716 = sld [smem:[#allocation11 + $0x27]]
        %v1717 = vstv %s1716
        %v1718 = vmul.f32 %v1316, %v1717
        %v1719 = vmul.f32 %v1317, %v1717
        %1722 = vrot.lane.b32.xlu0 %v1718, 126
        %v1723 = vpop.permute.xlu0 %1722
        %1724 = vrot.lane.b32.xlu0 %v1719, 126
        %v1725 = vpop.permute.xlu0 %1724
        %v1728 = vadd.f32 %v1672, %v1723
        %v1729 = vadd.f32 %v1673, %v1725
        %s1730 = sld [smem:[#allocation11 + $0x28]]
        %v1731 = vstv %s1730
        %v1732 = vmul.f32 %v1342, %v1731
        %v1733 = vmul.f32 %v1343, %v1731
        %1736 = vrot.lane.b32.xlu0 %v1732, 126
        %v1737 = vpop.permute.xlu0 %1736
        %1738 = vrot.lane.b32.xlu0 %v1733, 126
        %v1739 = vpop.permute.xlu0 %1738
        %v1742 = vadd.f32 %v1686, %v1737
        %v1743 = vadd.f32 %v1687, %v1739
        %s1744 = sld [smem:[#allocation11 + $0x29]]
        %v1745 = vstv %s1744
        %v1746 = vmul.f32 %v1342, %v1745
        %v1747 = vmul.f32 %v1343, %v1745
        %1750 = vrot.lane.b32.xlu0 %v1746, 126
        %v1751 = vpop.permute.xlu0 %1750
        %1752 = vrot.lane.b32.xlu0 %v1747, 126
        %v1753 = vpop.permute.xlu0 %1752
        %v1756 = vadd.f32 %v1700, %v1751
        %v1757 = vadd.f32 %v1701, %v1753
        %s1758 = sld [smem:[#allocation11 + $0x2a]]
        %v1759 = vstv %s1758
        %v1760 = vmul.f32 %v1342, %v1759
        %v1761 = vmul.f32 %v1343, %v1759
        %1764 = vrot.lane.b32.xlu0 %v1760, 126
        %v1765 = vpop.permute.xlu0 %1764
        %1766 = vrot.lane.b32.xlu0 %v1761, 126
        %v1767 = vpop.permute.xlu0 %1766
        %v1770 = vadd.f32 %v1714, %v1765
        %v1771 = vadd.f32 %v1715, %v1767
        %s1772 = sld [smem:[#allocation11 + $0x2b]]
        %v1773 = vstv %s1772
        %v1774 = vmul.f32 %v1342, %v1773
        %v1775 = vmul.f32 %v1343, %v1773
        %1778 = vrot.lane.b32.xlu0 %v1774, 126
        %v1779 = vpop.permute.xlu0 %1778
        %1780 = vrot.lane.b32.xlu0 %v1775, 126
        %v1781 = vpop.permute.xlu0 %1780
        %v1784 = vadd.f32 %v1728, %v1779
        %v1785 = vadd.f32 %v1729, %v1781
        %s1786 = sld [smem:[#allocation11 + $0x2c]]
        %v1787 = vstv %s1786
        %v1788 = vmul.f32 %v1368, %v1787
        %v1789 = vmul.f32 %v1369, %v1787
        %1792 = vrot.lane.b32.xlu0 %v1788, 126
        %v1793 = vpop.permute.xlu0 %1792
        %1794 = vrot.lane.b32.xlu0 %v1789, 126
        %v1795 = vpop.permute.xlu0 %1794
        %v1798 = vadd.f32 %v1742, %v1793
        %v1799 = vadd.f32 %v1743, %v1795
        %s1800 = sld [smem:[#allocation11 + $0x2d]]
        %v1801 = vstv %s1800
        %v1802 = vmul.f32 %v1368, %v1801
        %v1803 = vmul.f32 %v1369, %v1801
        %1806 = vrot.lane.b32.xlu0 %v1802, 126
        %v1807 = vpop.permute.xlu0 %1806
        %1808 = vrot.lane.b32.xlu0 %v1803, 126
        %v1809 = vpop.permute.xlu0 %1808
        %v1812 = vadd.f32 %v1756, %v1807
        %v1813 = vadd.f32 %v1757, %v1809
        %s1814 = sld [smem:[#allocation11 + $0x2e]]
        %v1815 = vstv %s1814
        %v1816 = vmul.f32 %v1368, %v1815
        %v1817 = vmul.f32 %v1369, %v1815
        %1820 = vrot.lane.b32.xlu0 %v1816, 126
        %v1821 = vpop.permute.xlu0 %1820
        %1822 = vrot.lane.b32.xlu0 %v1817, 126
        %v1823 = vpop.permute.xlu0 %1822
        %v1826 = vadd.f32 %v1770, %v1821
        %v1827 = vadd.f32 %v1771, %v1823
        %s1828 = sld [smem:[#allocation11 + $0x2f]]
        %v1829 = vstv %s1828
        %v1830 = vmul.f32 %v1368, %v1829
        %v1831 = vmul.f32 %v1369, %v1829
        %1834 = vrot.lane.b32.xlu0 %v1830, 126
        %v1835 = vpop.permute.xlu0 %1834
        %1836 = vrot.lane.b32.xlu0 %v1831, 126
        %v1837 = vpop.permute.xlu0 %1836
        %v1840 = vadd.f32 %v1784, %v1835
        %v1841 = vadd.f32 %v1785, %v1837
        %s1842 = sld [smem:[#allocation11 + $0x30]]
        %v1843 = vstv %s1842
        %v1844 = vmul.f32 %v1290, %v1843
        %v1845 = vmul.f32 %v1291, %v1843
        %1848 = vrot.lane.b32.xlu0 %v1844, 125
        %v1849 = vpop.permute.xlu0 %1848
        %1850 = vrot.lane.b32.xlu0 %v1845, 125
        %v1851 = vpop.permute.xlu0 %1850
        %v1854 = vadd.f32 %v1798, %v1849
        %v1855 = vadd.f32 %v1799, %v1851
        %s1856 = sld [smem:[#allocation11 + $0x31]]
        %v1857 = vstv %s1856
        %v1858 = vmul.f32 %v1290, %v1857
        %v1859 = vmul.f32 %v1291, %v1857
        %1862 = vrot.lane.b32.xlu0 %v1858, 125
        %v1863 = vpop.permute.xlu0 %1862
        %1864 = vrot.lane.b32.xlu0 %v1859, 125
        %v1865 = vpop.permute.xlu0 %1864
        %v1868 = vadd.f32 %v1812, %v1863
        %v1869 = vadd.f32 %v1813, %v1865
        %s1870 = sld [smem:[#allocation11 + $0x32]]
        %v1871 = vstv %s1870
        %v1872 = vmul.f32 %v1290, %v1871
        %v1873 = vmul.f32 %v1291, %v1871
        %1876 = vrot.lane.b32.xlu0 %v1872, 125
        %v1877 = vpop.permute.xlu0 %1876
        %1878 = vrot.lane.b32.xlu0 %v1873, 125
        %v1879 = vpop.permute.xlu0 %1878
        %v1882 = vadd.f32 %v1826, %v1877
        %v1883 = vadd.f32 %v1827, %v1879
        %s1884 = sld [smem:[#allocation11 + $0x33]]
        %v1885 = vstv %s1884
        %v1886 = vmul.f32 %v1290, %v1885
        %v1887 = vmul.f32 %v1291, %v1885
        %1890 = vrot.lane.b32.xlu0 %v1886, 125
        %v1891 = vpop.permute.xlu0 %1890
        %1892 = vrot.lane.b32.xlu0 %v1887, 125
        %v1893 = vpop.permute.xlu0 %1892
        %v1896 = vadd.f32 %v1840, %v1891
        %v1897 = vadd.f32 %v1841, %v1893
        %s1898 = sld [smem:[#allocation11 + $0x34]]
        %v1899 = vstv %s1898
        %v1900 = vmul.f32 %v1316, %v1899
        %v1901 = vmul.f32 %v1317, %v1899
        %1904 = vrot.lane.b32.xlu0 %v1900, 125
        %v1905 = vpop.permute.xlu0 %1904
        %1906 = vrot.lane.b32.xlu0 %v1901, 125
        %v1907 = vpop.permute.xlu0 %1906
        %v1910 = vadd.f32 %v1854, %v1905
        %v1911 = vadd.f32 %v1855, %v1907
        %s1912 = sld [smem:[#allocation11 + $0x35]]
        %v1913 = vstv %s1912
        %v1914 = vmul.f32 %v1316, %v1913
        %v1915 = vmul.f32 %v1317, %v1913
        %1918 = vrot.lane.b32.xlu0 %v1914, 125
        %v1919 = vpop.permute.xlu0 %1918
        %1920 = vrot.lane.b32.xlu0 %v1915, 125
        %v1921 = vpop.permute.xlu0 %1920
        %v1924 = vadd.f32 %v1868, %v1919
        %v1925 = vadd.f32 %v1869, %v1921
        %s1926 = sld [smem:[#allocation11 + $0x36]]
        %v1927 = vstv %s1926
        %v1928 = vmul.f32 %v1316, %v1927
        %v1929 = vmul.f32 %v1317, %v1927
        %1932 = vrot.lane.b32.xlu0 %v1928, 125
        %v1933 = vpop.permute.xlu0 %1932
        %1934 = vrot.lane.b32.xlu0 %v1929, 125
        %v1935 = vpop.permute.xlu0 %1934
        %v1938 = vadd.f32 %v1882, %v1933
        %v1939 = vadd.f32 %v1883, %v1935
        %s1940 = sld [smem:[#allocation11 + $0x37]]
        %v1941 = vstv %s1940
        %v1942 = vmul.f32 %v1316, %v1941
        %v1943 = vmul.f32 %v1317, %v1941
        %1946 = vrot.lane.b32.xlu0 %v1942, 125
        %v1947 = vpop.permute.xlu0 %1946
        %1948 = vrot.lane.b32.xlu0 %v1943, 125
        %v1949 = vpop.permute.xlu0 %1948
        %v1952 = vadd.f32 %v1896, %v1947
        %v1953 = vadd.f32 %v1897, %v1949
        %s1954 = sld [smem:[#allocation11 + $0x38]]
        %v1955 = vstv %s1954
        %v1956 = vmul.f32 %v1342, %v1955
        %v1957 = vmul.f32 %v1343, %v1955
        %1960 = vrot.lane.b32.xlu0 %v1956, 125
        %v1961 = vpop.permute.xlu0 %1960
        %1962 = vrot.lane.b32.xlu0 %v1957, 125
        %v1963 = vpop.permute.xlu0 %1962
        %v1966 = vadd.f32 %v1910, %v1961
        %v1967 = vadd.f32 %v1911, %v1963
        %s1968 = sld [smem:[#allocation11 + $0x39]]
        %v1969 = vstv %s1968
        %v1970 = vmul.f32 %v1342, %v1969
        %v1971 = vmul.f32 %v1343, %v1969
        %1974 = vrot.lane.b32.xlu0 %v1970, 125
        %v1975 = vpop.permute.xlu0 %1974
        %1976 = vrot.lane.b32.xlu0 %v1971, 125
        %v1977 = vpop.permute.xlu0 %1976
        %v1980 = vadd.f32 %v1924, %v1975
        %v1981 = vadd.f32 %v1925, %v1977
        %s1982 = sld [smem:[#allocation11 + $0x3a]]
        %v1983 = vstv %s1982
        %v1984 = vmul.f32 %v1342, %v1983
        %v1985 = vmul.f32 %v1343, %v1983
        %1988 = vrot.lane.b32.xlu0 %v1984, 125
        %v1989 = vpop.permute.xlu0 %1988
        %1990 = vrot.lane.b32.xlu0 %v1985, 125
        %v1991 = vpop.permute.xlu0 %1990
        %v1994 = vadd.f32 %v1938, %v1989
        %v1995 = vadd.f32 %v1939, %v1991
        %s1996 = sld [smem:[#allocation11 + $0x3b]]
        %v1997 = vstv %s1996
        %v1998 = vmul.f32 %v1342, %v1997
        %v1999 = vmul.f32 %v1343, %v1997
        %2002 = vrot.lane.b32.xlu0 %v1998, 125
        %v2003 = vpop.permute.xlu0 %2002
        %2004 = vrot.lane.b32.xlu0 %v1999, 125
        %v2005 = vpop.permute.xlu0 %2004
        %v2008 = vadd.f32 %v1952, %v2003
        %v2009 = vadd.f32 %v1953, %v2005
        %s2010 = sld [smem:[#allocation11 + $0x3c]]
        %v2011 = vstv %s2010
        %v2012 = vmul.f32 %v1368, %v2011
        %v2013 = vmul.f32 %v1369, %v2011
        %2016 = vrot.lane.b32.xlu0 %v2012, 125
        %v2017 = vpop.permute.xlu0 %2016
        %2018 = vrot.lane.b32.xlu0 %v2013, 125
        %v2019 = vpop.permute.xlu0 %2018
        %v2022 = vadd.f32 %v1966, %v2017
        %v2023 = vadd.f32 %v1967, %v2019
        %s2024 = sld [smem:[#allocation11 + $0x3d]]
        %v2025 = vstv %s2024
        %v2026 = vmul.f32 %v1368, %v2025
        %v2027 = vmul.f32 %v1369, %v2025
        %2030 = vrot.lane.b32.xlu0 %v2026, 125
        %v2031 = vpop.permute.xlu0 %2030
        %2032 = vrot.lane.b32.xlu0 %v2027, 125
        %v2033 = vpop.permute.xlu0 %2032
        %v2036 = vadd.f32 %v1980, %v2031
        %v2037 = vadd.f32 %v1981, %v2033
        %s2038 = sld [smem:[#allocation11 + $0x3e]]
        %v2039 = vstv %s2038
        %v2040 = vmul.f32 %v1368, %v2039
        %v2041 = vmul.f32 %v1369, %v2039
        %2044 = vrot.lane.b32.xlu0 %v2040, 125
        %v2045 = vpop.permute.xlu0 %2044
        %2046 = vrot.lane.b32.xlu0 %v2041, 125
        %v2047 = vpop.permute.xlu0 %2046
        %v2050 = vadd.f32 %v1994, %v2045
        %v2051 = vadd.f32 %v1995, %v2047
        %s2052 = sld [smem:[#allocation11 + $0x3f]]
        %v2053 = vstv %s2052
        %v2054 = vmul.f32 %v1368, %v2053
        %v2055 = vmul.f32 %v1369, %v2053
        %2058 = vrot.lane.b32.xlu0 %v2054, 125
        %v2059 = vpop.permute.xlu0 %2058
        %2060 = vrot.lane.b32.xlu0 %v2055, 125
        %v2061 = vpop.permute.xlu0 %2060
        %v2064 = vadd.f32 %v2008, %v2059
        %v2065 = vadd.f32 %v2009, %v2061
        %s2066 = sld [smem:[#allocation11 + $0x40]]
        %v2067 = vstv %s2066
        %v2068 = vmul.f32 %v1290, %v2067
        %v2069 = vmul.f32 %v1291, %v2067
        %2072 = vrot.lane.b32.xlu0 %v2068, 124
        %v2073 = vpop.permute.xlu0 %2072
        %2074 = vrot.lane.b32.xlu0 %v2069, 124
        %v2075 = vpop.permute.xlu0 %2074
        %v2078 = vadd.f32 %v2022, %v2073
        %v2079 = vadd.f32 %v2023, %v2075
        %s2080 = sld [smem:[#allocation11 + $0x41]]
        %v2081 = vstv %s2080
        %v2082 = vmul.f32 %v1290, %v2081
        %v2083 = vmul.f32 %v1291, %v2081
        %2086 = vrot.lane.b32.xlu0 %v2082, 124
        %v2087 = vpop.permute.xlu0 %2086
        %2088 = vrot.lane.b32.xlu0 %v2083, 124
        %v2089 = vpop.permute.xlu0 %2088
        %v2092 = vadd.f32 %v2036, %v2087
        %v2093 = vadd.f32 %v2037, %v2089
        %s2094 = sld [smem:[#allocation11 + $0x42]]
        %v2095 = vstv %s2094
        %v2096 = vmul.f32 %v1290, %v2095
        %v2097 = vmul.f32 %v1291, %v2095
        %2100 = vrot.lane.b32.xlu0 %v2096, 124
        %v2101 = vpop.permute.xlu0 %2100
        %2102 = vrot.lane.b32.xlu0 %v2097, 124
        %v2103 = vpop.permute.xlu0 %2102
        %v2106 = vadd.f32 %v2050, %v2101
        %v2107 = vadd.f32 %v2051, %v2103
        %s2108 = sld [smem:[#allocation11 + $0x43]]
        %v2109 = vstv %s2108
        %v2110 = vmul.f32 %v1290, %v2109
        %v2111 = vmul.f32 %v1291, %v2109
        %2114 = vrot.lane.b32.xlu0 %v2110, 124
        %v2115 = vpop.permute.xlu0 %2114
        %2116 = vrot.lane.b32.xlu0 %v2111, 124
        %v2117 = vpop.permute.xlu0 %2116
        %v2120 = vadd.f32 %v2064, %v2115
        %v2121 = vadd.f32 %v2065, %v2117
        %s2122 = sld [smem:[#allocation11 + $0x44]]
        %v2123 = vstv %s2122
        %v2124 = vmul.f32 %v1316, %v2123
        %v2125 = vmul.f32 %v1317, %v2123
        %2128 = vrot.lane.b32.xlu0 %v2124, 124
        %v2129 = vpop.permute.xlu0 %2128
        %2130 = vrot.lane.b32.xlu0 %v2125, 124
        %v2131 = vpop.permute.xlu0 %2130
        %v2134 = vadd.f32 %v2078, %v2129
        %v2135 = vadd.f32 %v2079, %v2131
        %s2136 = sld [smem:[#allocation11 + $0x45]]
        %v2137 = vstv %s2136
        %v2138 = vmul.f32 %v1316, %v2137
        %v2139 = vmul.f32 %v1317, %v2137
        %2142 = vrot.lane.b32.xlu0 %v2138, 124
        %v2143 = vpop.permute.xlu0 %2142
        %2144 = vrot.lane.b32.xlu0 %v2139, 124
        %v2145 = vpop.permute.xlu0 %2144
        %v2148 = vadd.f32 %v2092, %v2143
        %v2149 = vadd.f32 %v2093, %v2145
        %s2150 = sld [smem:[#allocation11 + $0x46]]
        %v2151 = vstv %s2150
        %v2152 = vmul.f32 %v1316, %v2151
        %v2153 = vmul.f32 %v1317, %v2151
        %2156 = vrot.lane.b32.xlu0 %v2152, 124
        %v2157 = vpop.permute.xlu0 %2156
        %2158 = vrot.lane.b32.xlu0 %v2153, 124
        %v2159 = vpop.permute.xlu0 %2158
        %v2162 = vadd.f32 %v2106, %v2157
        %v2163 = vadd.f32 %v2107, %v2159
        %s2164 = sld [smem:[#allocation11 + $0x47]]
        %v2165 = vstv %s2164
        %v2166 = vmul.f32 %v1316, %v2165
        %v2167 = vmul.f32 %v1317, %v2165
        %2170 = vrot.lane.b32.xlu0 %v2166, 124
        %v2171 = vpop.permute.xlu0 %2170
        %2172 = vrot.lane.b32.xlu0 %v2167, 124
        %v2173 = vpop.permute.xlu0 %2172
        %v2176 = vadd.f32 %v2120, %v2171
        %v2177 = vadd.f32 %v2121, %v2173
        %s2178 = sld [smem:[#allocation11 + $0x48]]
        %v2179 = vstv %s2178
        %v2180 = vmul.f32 %v1342, %v2179
        %v2181 = vmul.f32 %v1343, %v2179
        %2184 = vrot.lane.b32.xlu0 %v2180, 124
        %v2185 = vpop.permute.xlu0 %2184
        %2186 = vrot.lane.b32.xlu0 %v2181, 124
        %v2187 = vpop.permute.xlu0 %2186
        %v2190 = vadd.f32 %v2134, %v2185
        %v2191 = vadd.f32 %v2135, %v2187
        %s2192 = sld [smem:[#allocation11 + $0x49]]
        %v2193 = vstv %s2192
        %v2194 = vmul.f32 %v1342, %v2193
        %v2195 = vmul.f32 %v1343, %v2193
        %2198 = vrot.lane.b32.xlu0 %v2194, 124
        %v2199 = vpop.permute.xlu0 %2198
        %2200 = vrot.lane.b32.xlu0 %v2195, 124
        %v2201 = vpop.permute.xlu0 %2200
        %v2204 = vadd.f32 %v2148, %v2199
        %v2205 = vadd.f32 %v2149, %v2201
        %s2206 = sld [smem:[#allocation11 + $0x4a]]
        %v2207 = vstv %s2206
        %v2208 = vmul.f32 %v1342, %v2207
        %v2209 = vmul.f32 %v1343, %v2207
        %2212 = vrot.lane.b32.xlu0 %v2208, 124
        %v2213 = vpop.permute.xlu0 %2212
        %2214 = vrot.lane.b32.xlu0 %v2209, 124
        %v2215 = vpop.permute.xlu0 %2214
        %v2218 = vadd.f32 %v2162, %v2213
        %v2219 = vadd.f32 %v2163, %v2215
        %s2220 = sld [smem:[#allocation11 + $0x4b]]
        %v2221 = vstv %s2220
        %v2222 = vmul.f32 %v1342, %v2221
        %v2223 = vmul.f32 %v1343, %v2221
        %2226 = vrot.lane.b32.xlu0 %v2222, 124
        %v2227 = vpop.permute.xlu0 %2226
        %2228 = vrot.lane.b32.xlu0 %v2223, 124
        %v2229 = vpop.permute.xlu0 %2228
        %v2232 = vadd.f32 %v2176, %v2227
        %v2233 = vadd.f32 %v2177, %v2229
        %s2234 = sld [smem:[#allocation11 + $0x4c]]
        %v2235 = vstv %s2234
        %v2236 = vmul.f32 %v1368, %v2235
        %v2237 = vmul.f32 %v1369, %v2235
        %2240 = vrot.lane.b32.xlu0 %v2236, 124
        %v2241 = vpop.permute.xlu0 %2240
        %2242 = vrot.lane.b32.xlu0 %v2237, 124
        %v2243 = vpop.permute.xlu0 %2242
        %v2246 = vadd.f32 %v2190, %v2241
        %v2247 = vadd.f32 %v2191, %v2243
        %s2248 = sld [smem:[#allocation11 + $0x4d]]
        %v2249 = vstv %s2248
        %v2250 = vmul.f32 %v1368, %v2249
        %v2251 = vmul.f32 %v1369, %v2249
        %2254 = vrot.lane.b32.xlu0 %v2250, 124
        %v2255 = vpop.permute.xlu0 %2254
        %2256 = vrot.lane.b32.xlu0 %v2251, 124
        %v2257 = vpop.permute.xlu0 %2256
        %v2260 = vadd.f32 %v2204, %v2255
        %v2261 = vadd.f32 %v2205, %v2257
        %s2262 = sld [smem:[#allocation11 + $0x4e]]
        %v2263 = vstv %s2262
        %v2264 = vmul.f32 %v1368, %v2263
        %v2265 = vmul.f32 %v1369, %v2263
        %2268 = vrot.lane.b32.xlu0 %v2264, 124
        %v2269 = vpop.permute.xlu0 %2268
        %2270 = vrot.lane.b32.xlu0 %v2265, 124
        %v2271 = vpop.permute.xlu0 %2270
        %v2274 = vadd.f32 %v2218, %v2269
        %v2275 = vadd.f32 %v2219, %v2271
        %s2276 = sld [smem:[#allocation11 + $0x4f]]
        %v2277 = vstv %s2276
        %v2278 = vmul.f32 %v1368, %v2277
        %v2279 = vmul.f32 %v1369, %v2277
        %2282 = vrot.lane.b32.xlu0 %v2278, 124
        %v2283 = vpop.permute.xlu0 %2282
        %2284 = vrot.lane.b32.xlu0 %v2279, 124
        %v2285 = vpop.permute.xlu0 %2284
        %v2288 = vadd.f32 %v2232, %v2283
        %v2289 = vadd.f32 %v2233, %v2285
        %s2290 = sld [smem:[#allocation11 + $0x50]]
        %v2291 = vstv %s2290
        %v2292 = vmul.f32 %v1290, %v2291
        %v2293 = vmul.f32 %v1291, %v2291
        %2296 = vrot.lane.b32.xlu0 %v2292, 123
        %v2297 = vpop.permute.xlu0 %2296
        %2298 = vrot.lane.b32.xlu0 %v2293, 123
        %v2299 = vpop.permute.xlu0 %2298
        %v2302 = vadd.f32 %v2246, %v2297
        %v2303 = vadd.f32 %v2247, %v2299
        %s2304 = sld [smem:[#allocation11 + $0x51]]
        %v2305 = vstv %s2304
        %v2306 = vmul.f32 %v1290, %v2305
        %v2307 = vmul.f32 %v1291, %v2305
        %2310 = vrot.lane.b32.xlu0 %v2306, 123
        %v2311 = vpop.permute.xlu0 %2310
        %2312 = vrot.lane.b32.xlu0 %v2307, 123
        %v2313 = vpop.permute.xlu0 %2312
        %v2316 = vadd.f32 %v2260, %v2311
        %v2317 = vadd.f32 %v2261, %v2313
        %s2318 = sld [smem:[#allocation11 + $0x52]]
        %v2319 = vstv %s2318
        %v2320 = vmul.f32 %v1290, %v2319
        %v2321 = vmul.f32 %v1291, %v2319
        %2324 = vrot.lane.b32.xlu0 %v2320, 123
        %v2325 = vpop.permute.xlu0 %2324
        %2326 = vrot.lane.b32.xlu0 %v2321, 123
        %v2327 = vpop.permute.xlu0 %2326
        %v2330 = vadd.f32 %v2274, %v2325
        %v2331 = vadd.f32 %v2275, %v2327
        %s2332 = sld [smem:[#allocation11 + $0x53]]
        %v2333 = vstv %s2332
        %v2334 = vmul.f32 %v1290, %v2333
        %v2335 = vmul.f32 %v1291, %v2333
        %2338 = vrot.lane.b32.xlu0 %v2334, 123
        %v2339 = vpop.permute.xlu0 %2338
        %2340 = vrot.lane.b32.xlu0 %v2335, 123
        %v2341 = vpop.permute.xlu0 %2340
        %v2344 = vadd.f32 %v2288, %v2339
        %v2345 = vadd.f32 %v2289, %v2341
        %s2346 = sld [smem:[#allocation11 + $0x54]]
        %v2347 = vstv %s2346
        %v2348 = vmul.f32 %v1316, %v2347
        %v2349 = vmul.f32 %v1317, %v2347
        %2352 = vrot.lane.b32.xlu0 %v2348, 123
        %v2353 = vpop.permute.xlu0 %2352
        %2354 = vrot.lane.b32.xlu0 %v2349, 123
        %v2355 = vpop.permute.xlu0 %2354
        %v2358 = vadd.f32 %v2302, %v2353
        %v2359 = vadd.f32 %v2303, %v2355
        %s2360 = sld [smem:[#allocation11 + $0x55]]
        %v2361 = vstv %s2360
        %v2362 = vmul.f32 %v1316, %v2361
        %v2363 = vmul.f32 %v1317, %v2361
        %2366 = vrot.lane.b32.xlu0 %v2362, 123
        %v2367 = vpop.permute.xlu0 %2366
        %2368 = vrot.lane.b32.xlu0 %v2363, 123
        %v2369 = vpop.permute.xlu0 %2368
        %v2372 = vadd.f32 %v2316, %v2367
        %v2373 = vadd.f32 %v2317, %v2369
        %s2374 = sld [smem:[#allocation11 + $0x56]]
        %v2375 = vstv %s2374
        %v2376 = vmul.f32 %v1316, %v2375
        %v2377 = vmul.f32 %v1317, %v2375
        %2380 = vrot.lane.b32.xlu0 %v2376, 123
        %v2381 = vpop.permute.xlu0 %2380
        %2382 = vrot.lane.b32.xlu0 %v2377, 123
        %v2383 = vpop.permute.xlu0 %2382
        %v2386 = vadd.f32 %v2330, %v2381
        %v2387 = vadd.f32 %v2331, %v2383
        %s2388 = sld [smem:[#allocation11 + $0x57]]
        %v2389 = vstv %s2388
        %v2390 = vmul.f32 %v1316, %v2389
        %v2391 = vmul.f32 %v1317, %v2389
        %2394 = vrot.lane.b32.xlu0 %v2390, 123
        %v2395 = vpop.permute.xlu0 %2394
        %2396 = vrot.lane.b32.xlu0 %v2391, 123
        %v2397 = vpop.permute.xlu0 %2396
        %v2400 = vadd.f32 %v2344, %v2395
        %v2401 = vadd.f32 %v2345, %v2397
        %s2402 = sld [smem:[#allocation11 + $0x58]]
        %v2403 = vstv %s2402
        %v2404 = vmul.f32 %v1342, %v2403
        %v2405 = vmul.f32 %v1343, %v2403
        %2408 = vrot.lane.b32.xlu0 %v2404, 123
        %v2409 = vpop.permute.xlu0 %2408
        %2410 = vrot.lane.b32.xlu0 %v2405, 123
        %v2411 = vpop.permute.xlu0 %2410
        %v2414 = vadd.f32 %v2358, %v2409
        %v2415 = vadd.f32 %v2359, %v2411
        %s2416 = sld [smem:[#allocation11 + $0x59]]
        %v2417 = vstv %s2416
        %v2418 = vmul.f32 %v1342, %v2417
        %v2419 = vmul.f32 %v1343, %v2417
        %2422 = vrot.lane.b32.xlu0 %v2418, 123
        %v2423 = vpop.permute.xlu0 %2422
        %2424 = vrot.lane.b32.xlu0 %v2419, 123
        %v2425 = vpop.permute.xlu0 %2424
        %v2428 = vadd.f32 %v2372, %v2423
        %v2429 = vadd.f32 %v2373, %v2425
        %s2430 = sld [smem:[#allocation11 + $0x5a]]
        %v2431 = vstv %s2430
        %v2432 = vmul.f32 %v1342, %v2431
        %v2433 = vmul.f32 %v1343, %v2431
        %2436 = vrot.lane.b32.xlu0 %v2432, 123
        %v2437 = vpop.permute.xlu0 %2436
        %2438 = vrot.lane.b32.xlu0 %v2433, 123
        %v2439 = vpop.permute.xlu0 %2438
        %v2442 = vadd.f32 %v2386, %v2437
        %v2443 = vadd.f32 %v2387, %v2439
        %s2444 = sld [smem:[#allocation11 + $0x5b]]
        %v2445 = vstv %s2444
        %v2446 = vmul.f32 %v1342, %v2445
        %v2447 = vmul.f32 %v1343, %v2445
        %2450 = vrot.lane.b32.xlu0 %v2446, 123
        %v2451 = vpop.permute.xlu0 %2450
        %2452 = vrot.lane.b32.xlu0 %v2447, 123
        %v2453 = vpop.permute.xlu0 %2452
        %v2456 = vadd.f32 %v2400, %v2451
        %v2457 = vadd.f32 %v2401, %v2453
        %s2458 = sld [smem:[#allocation11 + $0x5c]]
        %v2459 = vstv %s2458
        %v2460 = vmul.f32 %v1368, %v2459
        %v2461 = vmul.f32 %v1369, %v2459
        %2464 = vrot.lane.b32.xlu0 %v2460, 123
        %v2465 = vpop.permute.xlu0 %2464
        %2466 = vrot.lane.b32.xlu0 %v2461, 123
        %v2467 = vpop.permute.xlu0 %2466
        %v2470 = vadd.f32 %v2414, %v2465
        %v2471 = vadd.f32 %v2415, %v2467
        %s2472 = sld [smem:[#allocation11 + $0x5d]]
        %v2473 = vstv %s2472
        %v2474 = vmul.f32 %v1368, %v2473
        %v2475 = vmul.f32 %v1369, %v2473
        %2478 = vrot.lane.b32.xlu0 %v2474, 123
        %v2479 = vpop.permute.xlu0 %2478
        %2480 = vrot.lane.b32.xlu0 %v2475, 123
        %v2481 = vpop.permute.xlu0 %2480
        %v2484 = vadd.f32 %v2428, %v2479
        %v2485 = vadd.f32 %v2429, %v2481
        %s2486 = sld [smem:[#allocation11 + $0x5e]]
        %v2487 = vstv %s2486
        %v2488 = vmul.f32 %v1368, %v2487
        %v2489 = vmul.f32 %v1369, %v2487
        %2492 = vrot.lane.b32.xlu0 %v2488, 123
        %v2493 = vpop.permute.xlu0 %2492
        %2494 = vrot.lane.b32.xlu0 %v2489, 123
        %v2495 = vpop.permute.xlu0 %2494
        %v2498 = vadd.f32 %v2442, %v2493
        %v2499 = vadd.f32 %v2443, %v2495
        %s2500 = sld [smem:[#allocation11 + $0x5f]]
        %v2501 = vstv %s2500
        %v2502 = vmul.f32 %v1368, %v2501
        %v2503 = vmul.f32 %v1369, %v2501
        %2506 = vrot.lane.b32.xlu0 %v2502, 123
        %v2507 = vpop.permute.xlu0 %2506
        %2508 = vrot.lane.b32.xlu0 %v2503, 123
        %v2509 = vpop.permute.xlu0 %2508
        %v2512 = vadd.f32 %v2456, %v2507
        %v2513 = vadd.f32 %v2457, %v2509
        %s2514 = sld [smem:[#allocation11 + $0x60]]
        %v2515 = vstv %s2514
        %v2516 = vmul.f32 %v1290, %v2515
        %v2517 = vmul.f32 %v1291, %v2515
        %2520 = vrot.lane.b32.xlu0 %v2516, 122
        %v2521 = vpop.permute.xlu0 %2520
        %2522 = vrot.lane.b32.xlu0 %v2517, 122
        %v2523 = vpop.permute.xlu0 %2522
        %v2526 = vadd.f32 %v2470, %v2521
        %v2527 = vadd.f32 %v2471, %v2523
        %s2528 = sld [smem:[#allocation11 + $0x61]]
        %v2529 = vstv %s2528
        %v2530 = vmul.f32 %v1290, %v2529
        %v2531 = vmul.f32 %v1291, %v2529
        %2534 = vrot.lane.b32.xlu0 %v2530, 122
        %v2535 = vpop.permute.xlu0 %2534
        %2536 = vrot.lane.b32.xlu0 %v2531, 122
        %v2537 = vpop.permute.xlu0 %2536
        %v2540 = vadd.f32 %v2484, %v2535
        %v2541 = vadd.f32 %v2485, %v2537
        %s2542 = sld [smem:[#allocation11 + $0x62]]
        %v2543 = vstv %s2542
        %v2544 = vmul.f32 %v1290, %v2543
        %v2545 = vmul.f32 %v1291, %v2543
        %2548 = vrot.lane.b32.xlu0 %v2544, 122
        %v2549 = vpop.permute.xlu0 %2548
        %2550 = vrot.lane.b32.xlu0 %v2545, 122
        %v2551 = vpop.permute.xlu0 %2550
        %v2554 = vadd.f32 %v2498, %v2549
        %v2555 = vadd.f32 %v2499, %v2551
        %s2556 = sld [smem:[#allocation11 + $0x63]]
        %v2557 = vstv %s2556
        %v2558 = vmul.f32 %v1290, %v2557
        %v2559 = vmul.f32 %v1291, %v2557
        %2562 = vrot.lane.b32.xlu0 %v2558, 122
        %v2563 = vpop.permute.xlu0 %2562
        %2564 = vrot.lane.b32.xlu0 %v2559, 122
        %v2565 = vpop.permute.xlu0 %2564
        %v2568 = vadd.f32 %v2512, %v2563
        %v2569 = vadd.f32 %v2513, %v2565
        %s2570 = sld [smem:[#allocation11 + $0x64]]
        %v2571 = vstv %s2570
        %v2572 = vmul.f32 %v1316, %v2571
        %v2573 = vmul.f32 %v1317, %v2571
        %2576 = vrot.lane.b32.xlu0 %v2572, 122
        %v2577 = vpop.permute.xlu0 %2576
        %2578 = vrot.lane.b32.xlu0 %v2573, 122
        %v2579 = vpop.permute.xlu0 %2578
        %v2582 = vadd.f32 %v2526, %v2577
        %v2583 = vadd.f32 %v2527, %v2579
        %s2584 = sld [smem:[#allocation11 + $0x65]]
        %v2585 = vstv %s2584
        %v2586 = vmul.f32 %v1316, %v2585
        %v2587 = vmul.f32 %v1317, %v2585
        %2590 = vrot.lane.b32.xlu0 %v2586, 122
        %v2591 = vpop.permute.xlu0 %2590
        %2592 = vrot.lane.b32.xlu0 %v2587, 122
        %v2593 = vpop.permute.xlu0 %2592
        %v2596 = vadd.f32 %v2540, %v2591
        %v2597 = vadd.f32 %v2541, %v2593
        %s2598 = sld [smem:[#allocation11 + $0x66]]
        %v2599 = vstv %s2598
        %v2600 = vmul.f32 %v1316, %v2599
        %v2601 = vmul.f32 %v1317, %v2599
        %2604 = vrot.lane.b32.xlu0 %v2600, 122
        %v2605 = vpop.permute.xlu0 %2604
        %2606 = vrot.lane.b32.xlu0 %v2601, 122
        %v2607 = vpop.permute.xlu0 %2606
        %v2610 = vadd.f32 %v2554, %v2605
        %v2611 = vadd.f32 %v2555, %v2607
        %s2612 = sld [smem:[#allocation11 + $0x67]]
        %v2613 = vstv %s2612
        %v2614 = vmul.f32 %v1316, %v2613
        %v2615 = vmul.f32 %v1317, %v2613
        %2618 = vrot.lane.b32.xlu0 %v2614, 122
        %v2619 = vpop.permute.xlu0 %2618
        %2620 = vrot.lane.b32.xlu0 %v2615, 122
        %v2621 = vpop.permute.xlu0 %2620
        %v2624 = vadd.f32 %v2568, %v2619
        %v2625 = vadd.f32 %v2569, %v2621
        %s2626 = sld [smem:[#allocation11 + $0x68]]
        %v2627 = vstv %s2626
        %v2628 = vmul.f32 %v1342, %v2627
        %v2629 = vmul.f32 %v1343, %v2627
        %2632 = vrot.lane.b32.xlu0 %v2628, 122
        %v2633 = vpop.permute.xlu0 %2632
        %2634 = vrot.lane.b32.xlu0 %v2629, 122
        %v2635 = vpop.permute.xlu0 %2634
        %v2638 = vadd.f32 %v2582, %v2633
        %v2639 = vadd.f32 %v2583, %v2635
        %s2640 = sld [smem:[#allocation11 + $0x69]]
        %v2641 = vstv %s2640
        %v2642 = vmul.f32 %v1342, %v2641
        %v2643 = vmul.f32 %v1343, %v2641
        %2646 = vrot.lane.b32.xlu0 %v2642, 122
        %v2647 = vpop.permute.xlu0 %2646
        %2648 = vrot.lane.b32.xlu0 %v2643, 122
        %v2649 = vpop.permute.xlu0 %2648
        %v2652 = vadd.f32 %v2596, %v2647
        %v2653 = vadd.f32 %v2597, %v2649
        %s2654 = sld [smem:[#allocation11 + $0x6a]]
        %v2655 = vstv %s2654
        %v2656 = vmul.f32 %v1342, %v2655
        %v2657 = vmul.f32 %v1343, %v2655
        %2660 = vrot.lane.b32.xlu0 %v2656, 122
        %v2661 = vpop.permute.xlu0 %2660
        %2662 = vrot.lane.b32.xlu0 %v2657, 122
        %v2663 = vpop.permute.xlu0 %2662
        %v2666 = vadd.f32 %v2610, %v2661
        %v2667 = vadd.f32 %v2611, %v2663
        %s2668 = sld [smem:[#allocation11 + $0x6b]]
        %v2669 = vstv %s2668
        %v2670 = vmul.f32 %v1342, %v2669
        %v2671 = vmul.f32 %v1343, %v2669
        %2674 = vrot.lane.b32.xlu0 %v2670, 122
        %v2675 = vpop.permute.xlu0 %2674
        %2676 = vrot.lane.b32.xlu0 %v2671, 122
        %v2677 = vpop.permute.xlu0 %2676
        %v2680 = vadd.f32 %v2624, %v2675
        %v2681 = vadd.f32 %v2625, %v2677
        %s2682 = sld [smem:[#allocation11 + $0x6c]]
        %v2683 = vstv %s2682
        %v2684 = vmul.f32 %v1368, %v2683
        %v2685 = vmul.f32 %v1369, %v2683
        %2688 = vrot.lane.b32.xlu0 %v2684, 122
        %v2689 = vpop.permute.xlu0 %2688
        %2690 = vrot.lane.b32.xlu0 %v2685, 122
        %v2691 = vpop.permute.xlu0 %2690
        %v2694 = vadd.f32 %v2638, %v2689
        %v2695 = vadd.f32 %v2639, %v2691
        %s2696 = sld [smem:[#allocation11 + $0x6d]]
        %v2697 = vstv %s2696
        %v2698 = vmul.f32 %v1368, %v2697
        %v2699 = vmul.f32 %v1369, %v2697
        %2702 = vrot.lane.b32.xlu0 %v2698, 122
        %v2703 = vpop.permute.xlu0 %2702
        %2704 = vrot.lane.b32.xlu0 %v2699, 122
        %v2705 = vpop.permute.xlu0 %2704
        %v2708 = vadd.f32 %v2652, %v2703
        %v2709 = vadd.f32 %v2653, %v2705
        %s2710 = sld [smem:[#allocation11 + $0x6e]]
        %v2711 = vstv %s2710
        %v2712 = vmul.f32 %v1368, %v2711
        %v2713 = vmul.f32 %v1369, %v2711
        %2716 = vrot.lane.b32.xlu0 %v2712, 122
        %v2717 = vpop.permute.xlu0 %2716
        %2718 = vrot.lane.b32.xlu0 %v2713, 122
        %v2719 = vpop.permute.xlu0 %2718
        %v2722 = vadd.f32 %v2666, %v2717
        %v2723 = vadd.f32 %v2667, %v2719
        %s2724 = sld [smem:[#allocation11 + $0x6f]]
        %v2725 = vstv %s2724
        %v2726 = vmul.f32 %v1368, %v2725
        %v2727 = vmul.f32 %v1369, %v2725
        %2730 = vrot.lane.b32.xlu0 %v2726, 122
        %v2731 = vpop.permute.xlu0 %2730
        %2732 = vrot.lane.b32.xlu0 %v2727, 122
        %v2733 = vpop.permute.xlu0 %2732
        %v2736 = vadd.f32 %v2680, %v2731
        %v2737 = vadd.f32 %v2681, %v2733
        %vm2738 = vcmask 130048
        %2739 = vst.msk [vmem:[%s452] sm:$0xff] %vm2738, %v2694
        %2740 = vst.msk [vmem:[%s452 + $0x8] sm:$0xff] %vm2738, %v2695
        %s2741 = scalar_lea.vmem %s452, 16 [#allocation20]
        %2742 = vst.msk [vmem:[%s2741] sm:$0xff] %vm2738, %v2708
        %2743 = vst.msk [vmem:[%s2741 + $0x8] sm:$0xff] %vm2738, %v2709
        %s2744 = scalar_lea.vmem %s452, 32 [#allocation20]
        %2745 = vst.msk [vmem:[%s2744] sm:$0xff] %vm2738, %v2722
        %2746 = vst.msk [vmem:[%s2744 + $0x8] sm:$0xff] %vm2738, %v2723
        %s2747 = scalar_lea.vmem %s452, 48 [#allocation20]
        %2748 = vst.msk [vmem:[%s2747] sm:$0xff] %vm2738, %v2736
        %2749 = vst.msk [vmem:[%s2747 + $0x8] sm:$0xff] %vm2738, %v2737
        %v2750 = vld [vmem:[#allocation2] sm:$0xff]
        %v2751 = vld [vmem:[#allocation2 + $0x8] sm:$0xff]
        %v2752 = vld [vmem:[#allocation2 + $0x10] sm:$0x3f]
        %s2753 = sld [smem:[#allocation14]]
        %v2754 = vstv %s2753
        %v2755 = vmul.f32 %v2750, %v2754
        %v2756 = vmul.f32 %v2751, %v2754
        %v2757 = vmul.f32 %v2752, %v2754
        %s2758 = sld [smem:[#allocation14 + $0x1]]
        %v2759 = vstv %s2758
        %v2760 = vmul.f32 %v2750, %v2759
        %v2761 = vmul.f32 %v2751, %v2759
        %v2762 = vmul.f32 %v2752, %v2759
        %s2763 = sld [smem:[#allocation14 + $0x2]]
        %v2764 = vstv %s2763
        %v2765 = vmul.f32 %v2750, %v2764
        %v2766 = vmul.f32 %v2751, %v2764
        %v2767 = vmul.f32 %v2752, %v2764
        %s2768 = sld [smem:[#allocation14 + $0x3]]
        %v2769 = vstv %s2768
        %v2770 = vmul.f32 %v2750, %v2769
        %v2771 = vmul.f32 %v2751, %v2769
        %v2772 = vmul.f32 %v2752, %v2769
        %v2773 = vld [vmem:[%s534] sm:$0xff]
        %v2774 = vld [vmem:[%s534 + $0x8] sm:$0xff]
        %v2775 = vld [vmem:[%s534 + $0x10] sm:$0x3f]
        %s2776 = sld [smem:[#allocation14 + $0x4]]
        %v2777 = vstv %s2776
        %v2778 = vmul.f32 %v2773, %v2777
        %v2779 = vmul.f32 %v2774, %v2777
        %v2780 = vmul.f32 %v2775, %v2777
        %v2781 = vadd.f32 %v2755, %v2778
        %v2782 = vadd.f32 %v2756, %v2779
        %v2783 = vadd.f32 %v2757, %v2780
        %s2784 = sld [smem:[#allocation14 + $0x5]]
        %v2785 = vstv %s2784
        %v2786 = vmul.f32 %v2773, %v2785
        %v2787 = vmul.f32 %v2774, %v2785
        %v2788 = vmul.f32 %v2775, %v2785
        %v2789 = vadd.f32 %v2760, %v2786
        %v2790 = vadd.f32 %v2761, %v2787
        %v2791 = vadd.f32 %v2762, %v2788
        %s2792 = sld [smem:[#allocation14 + $0x6]]
        %v2793 = vstv %s2792
        %v2794 = vmul.f32 %v2773, %v2793
        %v2795 = vmul.f32 %v2774, %v2793
        %v2796 = vmul.f32 %v2775, %v2793
        %v2797 = vadd.f32 %v2765, %v2794
        %v2798 = vadd.f32 %v2766, %v2795
        %v2799 = vadd.f32 %v2767, %v2796
        %s2800 = sld [smem:[#allocation14 + $0x7]]
        %v2801 = vstv %s2800
        %v2802 = vmul.f32 %v2773, %v2801
        %v2803 = vmul.f32 %v2774, %v2801
        %v2804 = vmul.f32 %v2775, %v2801
        %v2805 = vadd.f32 %v2770, %v2802
        %v2806 = vadd.f32 %v2771, %v2803
        %v2807 = vadd.f32 %v2772, %v2804
        %v2808 = vld [vmem:[%s561] sm:$0xff]
        %v2809 = vld [vmem:[%s561 + $0x8] sm:$0xff]
        %v2810 = vld [vmem:[%s561 + $0x10] sm:$0x3f]
        %s2811 = sld [smem:[#allocation14 + $0x8]]
        %v2812 = vstv %s2811
        %v2813 = vmul.f32 %v2808, %v2812
        %v2814 = vmul.f32 %v2809, %v2812
        %v2815 = vmul.f32 %v2810, %v2812
        %v2816 = vadd.f32 %v2781, %v2813
        %v2817 = vadd.f32 %v2782, %v2814
        %v2818 = vadd.f32 %v2783, %v2815
        %s2819 = sld [smem:[#allocation14 + $0x9]]
        %v2820 = vstv %s2819
        %v2821 = vmul.f32 %v2808, %v2820
        %v2822 = vmul.f32 %v2809, %v2820
        %v2823 = vmul.f32 %v2810, %v2820
        %v2824 = vadd.f32 %v2789, %v2821
        %v2825 = vadd.f32 %v2790, %v2822
        %v2826 = vadd.f32 %v2791, %v2823
        %s2827 = sld [smem:[#allocation14 + $0xa]]
        %v2828 = vstv %s2827
        %v2829 = vmul.f32 %v2808, %v2828
        %v2830 = vmul.f32 %v2809, %v2828
        %v2831 = vmul.f32 %v2810, %v2828
        %v2832 = vadd.f32 %v2797, %v2829
        %v2833 = vadd.f32 %v2798, %v2830
        %v2834 = vadd.f32 %v2799, %v2831
        %s2835 = sld [smem:[#allocation14 + $0xb]]
        %v2836 = vstv %s2835
        %v2837 = vmul.f32 %v2808, %v2836
        %v2838 = vmul.f32 %v2809, %v2836
        %v2839 = vmul.f32 %v2810, %v2836
        %v2840 = vadd.f32 %v2805, %v2837
        %v2841 = vadd.f32 %v2806, %v2838
        %v2842 = vadd.f32 %v2807, %v2839
        %v2843 = vld [vmem:[%s588] sm:$0xff]
        %v2844 = vld [vmem:[%s588 + $0x8] sm:$0xff]
        %v2845 = vld [vmem:[%s588 + $0x10] sm:$0x3f]
        %s2846 = sld [smem:[#allocation14 + $0xc]]
        %v2847 = vstv %s2846
        %v2848 = vmul.f32 %v2843, %v2847
        %v2849 = vmul.f32 %v2844, %v2847
        %v2850 = vmul.f32 %v2845, %v2847
        %v2851 = vadd.f32 %v2816, %v2848
        %v2852 = vadd.f32 %v2817, %v2849
        %v2853 = vadd.f32 %v2818, %v2850
        %s2854 = sld [smem:[#allocation14 + $0xd]]
        %v2855 = vstv %s2854
        %v2856 = vmul.f32 %v2843, %v2855
        %v2857 = vmul.f32 %v2844, %v2855
        %v2858 = vmul.f32 %v2845, %v2855
        %v2859 = vadd.f32 %v2824, %v2856
        %v2860 = vadd.f32 %v2825, %v2857
        %v2861 = vadd.f32 %v2826, %v2858
        %s2862 = sld [smem:[#allocation14 + $0xe]]
        %v2863 = vstv %s2862
        %v2864 = vmul.f32 %v2843, %v2863
        %v2865 = vmul.f32 %v2844, %v2863
        %v2866 = vmul.f32 %v2845, %v2863
        %v2867 = vadd.f32 %v2832, %v2864
        %v2868 = vadd.f32 %v2833, %v2865
        %v2869 = vadd.f32 %v2834, %v2866
        %s2870 = sld [smem:[#allocation14 + $0xf]]
        %v2871 = vstv %s2870
        %v2872 = vmul.f32 %v2843, %v2871
        %v2873 = vmul.f32 %v2844, %v2871
        %v2874 = vmul.f32 %v2845, %v2871
        %v2875 = vadd.f32 %v2840, %v2872
        %v2876 = vadd.f32 %v2841, %v2873
        %v2877 = vadd.f32 %v2842, %v2874
        %s2878 = sld [smem:[#allocation14 + $0x10]]
        %v2879 = vstv %s2878
        %v2880 = vmul.f32 %v2750, %v2879
        %v2881 = vmul.f32 %v2751, %v2879
        %v2882 = vmul.f32 %v2752, %v2879
        %2886 = vrot.lane.b32.xlu0 %v2880, 127
        %v2887 = vpop.permute.xlu0 %2886
        %2888 = vrot.lane.b32.xlu0 %v2881, 127
        %v2889 = vpop.permute.xlu0 %2888
        %2890 = vrot.lane.b32.xlu0 %v2882, 127
        %v2891 = vpop.permute.xlu0 %2890
        %v2895 = vadd.f32 %v2851, %v2887
        %v2896 = vadd.f32 %v2852, %v2889
        %v2897 = vadd.f32 %v2853, %v2891
        %s2898 = sld [smem:[#allocation14 + $0x11]]
        %v2899 = vstv %s2898
        %v2900 = vmul.f32 %v2750, %v2899
        %v2901 = vmul.f32 %v2751, %v2899
        %v2902 = vmul.f32 %v2752, %v2899
        %2906 = vrot.lane.b32.xlu0 %v2900, 127
        %v2907 = vpop.permute.xlu0 %2906
        %2908 = vrot.lane.b32.xlu0 %v2901, 127
        %v2909 = vpop.permute.xlu0 %2908
        %2910 = vrot.lane.b32.xlu0 %v2902, 127
        %v2911 = vpop.permute.xlu0 %2910
        %v2915 = vadd.f32 %v2859, %v2907
        %v2916 = vadd.f32 %v2860, %v2909
        %v2917 = vadd.f32 %v2861, %v2911
        %s2918 = sld [smem:[#allocation14 + $0x12]]
        %v2919 = vstv %s2918
        %v2920 = vmul.f32 %v2750, %v2919
        %v2921 = vmul.f32 %v2751, %v2919
        %v2922 = vmul.f32 %v2752, %v2919
        %2926 = vrot.lane.b32.xlu0 %v2920, 127
        %v2927 = vpop.permute.xlu0 %2926
        %2928 = vrot.lane.b32.xlu0 %v2921, 127
        %v2929 = vpop.permute.xlu0 %2928
        %2930 = vrot.lane.b32.xlu0 %v2922, 127
        %v2931 = vpop.permute.xlu0 %2930
        %v2935 = vadd.f32 %v2867, %v2927
        %v2936 = vadd.f32 %v2868, %v2929
        %v2937 = vadd.f32 %v2869, %v2931
        %s2938 = sld [smem:[#allocation14 + $0x13]]
        %v2939 = vstv %s2938
        %v2940 = vmul.f32 %v2750, %v2939
        %v2941 = vmul.f32 %v2751, %v2939
        %v2942 = vmul.f32 %v2752, %v2939
        %2946 = vrot.lane.b32.xlu0 %v2940, 127
        %v2947 = vpop.permute.xlu0 %2946
        %2948 = vrot.lane.b32.xlu0 %v2941, 127
        %v2949 = vpop.permute.xlu0 %2948
        %2950 = vrot.lane.b32.xlu0 %v2942, 127
        %v2951 = vpop.permute.xlu0 %2950
        %v2955 = vadd.f32 %v2875, %v2947
        %v2956 = vadd.f32 %v2876, %v2949
        %v2957 = vadd.f32 %v2877, %v2951
        %s2958 = sld [smem:[#allocation14 + $0x14]]
        %v2959 = vstv %s2958
        %v2960 = vmul.f32 %v2773, %v2959
        %v2961 = vmul.f32 %v2774, %v2959
        %v2962 = vmul.f32 %v2775, %v2959
        %2966 = vrot.lane.b32.xlu0 %v2960, 127
        %v2967 = vpop.permute.xlu0 %2966
        %2968 = vrot.lane.b32.xlu0 %v2961, 127
        %v2969 = vpop.permute.xlu0 %2968
        %2970 = vrot.lane.b32.xlu0 %v2962, 127
        %v2971 = vpop.permute.xlu0 %2970
        %v2975 = vadd.f32 %v2895, %v2967
        %v2976 = vadd.f32 %v2896, %v2969
        %v2977 = vadd.f32 %v2897, %v2971
        %s2978 = sld [smem:[#allocation14 + $0x15]]
        %v2979 = vstv %s2978
        %v2980 = vmul.f32 %v2773, %v2979
        %v2981 = vmul.f32 %v2774, %v2979
        %v2982 = vmul.f32 %v2775, %v2979
        %2986 = vrot.lane.b32.xlu0 %v2980, 127
        %v2987 = vpop.permute.xlu0 %2986
        %2988 = vrot.lane.b32.xlu0 %v2981, 127
        %v2989 = vpop.permute.xlu0 %2988
        %2990 = vrot.lane.b32.xlu0 %v2982, 127
        %v2991 = vpop.permute.xlu0 %2990
        %v2995 = vadd.f32 %v2915, %v2987
        %v2996 = vadd.f32 %v2916, %v2989
        %v2997 = vadd.f32 %v2917, %v2991
        %s2998 = sld [smem:[#allocation14 + $0x16]]
        %v2999 = vstv %s2998
        %v3000 = vmul.f32 %v2773, %v2999
        %v3001 = vmul.f32 %v2774, %v2999
        %v3002 = vmul.f32 %v2775, %v2999
        %3006 = vrot.lane.b32.xlu0 %v3000, 127
        %v3007 = vpop.permute.xlu0 %3006
        %3008 = vrot.lane.b32.xlu0 %v3001, 127
        %v3009 = vpop.permute.xlu0 %3008
        %3010 = vrot.lane.b32.xlu0 %v3002, 127
        %v3011 = vpop.permute.xlu0 %3010
        %v3015 = vadd.f32 %v2935, %v3007
        %v3016 = vadd.f32 %v2936, %v3009
        %v3017 = vadd.f32 %v2937, %v3011
        %s3018 = sld [smem:[#allocation14 + $0x17]]
        %v3019 = vstv %s3018
        %v3020 = vmul.f32 %v2773, %v3019
        %v3021 = vmul.f32 %v2774, %v3019
        %v3022 = vmul.f32 %v2775, %v3019
        %3026 = vrot.lane.b32.xlu0 %v3020, 127
        %v3027 = vpop.permute.xlu0 %3026
        %3028 = vrot.lane.b32.xlu0 %v3021, 127
        %v3029 = vpop.permute.xlu0 %3028
        %3030 = vrot.lane.b32.xlu0 %v3022, 127
        %v3031 = vpop.permute.xlu0 %3030
        %v3035 = vadd.f32 %v2955, %v3027
        %v3036 = vadd.f32 %v2956, %v3029
        %v3037 = vadd.f32 %v2957, %v3031
        %s3038 = sld [smem:[#allocation14 + $0x18]]
        %v3039 = vstv %s3038
        %v3040 = vmul.f32 %v2808, %v3039
        %v3041 = vmul.f32 %v2809, %v3039
        %v3042 = vmul.f32 %v2810, %v3039
        %3046 = vrot.lane.b32.xlu0 %v3040, 127
        %v3047 = vpop.permute.xlu0 %3046
        %3048 = vrot.lane.b32.xlu0 %v3041, 127
        %v3049 = vpop.permute.xlu0 %3048
        %3050 = vrot.lane.b32.xlu0 %v3042, 127
        %v3051 = vpop.permute.xlu0 %3050
        %v3055 = vadd.f32 %v2975, %v3047
        %v3056 = vadd.f32 %v2976, %v3049
        %v3057 = vadd.f32 %v2977, %v3051
        %s3058 = sld [smem:[#allocation14 + $0x19]]
        %v3059 = vstv %s3058
        %v3060 = vmul.f32 %v2808, %v3059
        %v3061 = vmul.f32 %v2809, %v3059
        %v3062 = vmul.f32 %v2810, %v3059
        %3066 = vrot.lane.b32.xlu0 %v3060, 127
        %v3067 = vpop.permute.xlu0 %3066
        %3068 = vrot.lane.b32.xlu0 %v3061, 127
        %v3069 = vpop.permute.xlu0 %3068
        %3070 = vrot.lane.b32.xlu0 %v3062, 127
        %v3071 = vpop.permute.xlu0 %3070
        %v3075 = vadd.f32 %v2995, %v3067
        %v3076 = vadd.f32 %v2996, %v3069
        %v3077 = vadd.f32 %v2997, %v3071
        %s3078 = sld [smem:[#allocation14 + $0x1a]]
        %v3079 = vstv %s3078
        %v3080 = vmul.f32 %v2808, %v3079
        %v3081 = vmul.f32 %v2809, %v3079
        %v3082 = vmul.f32 %v2810, %v3079
        %3086 = vrot.lane.b32.xlu0 %v3080, 127
        %v3087 = vpop.permute.xlu0 %3086
        %3088 = vrot.lane.b32.xlu0 %v3081, 127
        %v3089 = vpop.permute.xlu0 %3088
        %3090 = vrot.lane.b32.xlu0 %v3082, 127
        %v3091 = vpop.permute.xlu0 %3090
        %v3095 = vadd.f32 %v3015, %v3087
        %v3096 = vadd.f32 %v3016, %v3089
        %v3097 = vadd.f32 %v3017, %v3091
        %s3098 = sld [smem:[#allocation14 + $0x1b]]
        %v3099 = vstv %s3098
        %v3100 = vmul.f32 %v2808, %v3099
        %v3101 = vmul.f32 %v2809, %v3099
        %v3102 = vmul.f32 %v2810, %v3099
        %3106 = vrot.lane.b32.xlu0 %v3100, 127
        %v3107 = vpop.permute.xlu0 %3106
        %3108 = vrot.lane.b32.xlu0 %v3101, 127
        %v3109 = vpop.permute.xlu0 %3108
        %3110 = vrot.lane.b32.xlu0 %v3102, 127
        %v3111 = vpop.permute.xlu0 %3110
        %v3115 = vadd.f32 %v3035, %v3107
        %v3116 = vadd.f32 %v3036, %v3109
        %v3117 = vadd.f32 %v3037, %v3111
        %s3118 = sld [smem:[#allocation14 + $0x1c]]
        %v3119 = vstv %s3118
        %v3120 = vmul.f32 %v2843, %v3119
        %v3121 = vmul.f32 %v2844, %v3119
        %v3122 = vmul.f32 %v2845, %v3119
        %3126 = vrot.lane.b32.xlu0 %v3120, 127
        %v3127 = vpop.permute.xlu0 %3126
        %3128 = vrot.lane.b32.xlu0 %v3121, 127
        %v3129 = vpop.permute.xlu0 %3128
        %3130 = vrot.lane.b32.xlu0 %v3122, 127
        %v3131 = vpop.permute.xlu0 %3130
        %v3135 = vadd.f32 %v3055, %v3127
        %v3136 = vadd.f32 %v3056, %v3129
        %v3137 = vadd.f32 %v3057, %v3131
        %s3138 = sld [smem:[#allocation14 + $0x1d]]
        %v3139 = vstv %s3138
        %v3140 = vmul.f32 %v2843, %v3139
        %v3141 = vmul.f32 %v2844, %v3139
        %v3142 = vmul.f32 %v2845, %v3139
        %3146 = vrot.lane.b32.xlu0 %v3140, 127
        %v3147 = vpop.permute.xlu0 %3146
        %3148 = vrot.lane.b32.xlu0 %v3141, 127
        %v3149 = vpop.permute.xlu0 %3148
        %3150 = vrot.lane.b32.xlu0 %v3142, 127
        %v3151 = vpop.permute.xlu0 %3150
        %v3155 = vadd.f32 %v3075, %v3147
        %v3156 = vadd.f32 %v3076, %v3149
        %v3157 = vadd.f32 %v3077, %v3151
        %s3158 = sld [smem:[#allocation14 + $0x1e]]
        %v3159 = vstv %s3158
        %v3160 = vmul.f32 %v2843, %v3159
        %v3161 = vmul.f32 %v2844, %v3159
        %v3162 = vmul.f32 %v2845, %v3159
        %3166 = vrot.lane.b32.xlu0 %v3160, 127
        %v3167 = vpop.permute.xlu0 %3166
        %3168 = vrot.lane.b32.xlu0 %v3161, 127
        %v3169 = vpop.permute.xlu0 %3168
        %3170 = vrot.lane.b32.xlu0 %v3162, 127
        %v3171 = vpop.permute.xlu0 %3170
        %v3175 = vadd.f32 %v3095, %v3167
        %v3176 = vadd.f32 %v3096, %v3169
        %v3177 = vadd.f32 %v3097, %v3171
        %s3178 = sld [smem:[#allocation14 + $0x1f]]
        %v3179 = vstv %s3178
        %v3180 = vmul.f32 %v2843, %v3179
        %v3181 = vmul.f32 %v2844, %v3179
        %v3182 = vmul.f32 %v2845, %v3179
        %3186 = vrot.lane.b32.xlu0 %v3180, 127
        %v3187 = vpop.permute.xlu0 %3186
        %3188 = vrot.lane.b32.xlu0 %v3181, 127
        %v3189 = vpop.permute.xlu0 %3188
        %3190 = vrot.lane.b32.xlu0 %v3182, 127
        %v3191 = vpop.permute.xlu0 %3190
        %v3195 = vadd.f32 %v3115, %v3187
        %v3196 = vadd.f32 %v3116, %v3189
        %v3197 = vadd.f32 %v3117, %v3191
        %s3198 = sld [smem:[#allocation14 + $0x20]]
        %v3199 = vstv %s3198
        %v3200 = vmul.f32 %v2750, %v3199
        %v3201 = vmul.f32 %v2751, %v3199
        %v3202 = vmul.f32 %v2752, %v3199
        %3206 = vrot.lane.b32.xlu0 %v3200, 126
        %v3207 = vpop.permute.xlu0 %3206
        %3208 = vrot.lane.b32.xlu0 %v3201, 126
        %v3209 = vpop.permute.xlu0 %3208
        %3210 = vrot.lane.b32.xlu0 %v3202, 126
        %v3211 = vpop.permute.xlu0 %3210
        %v3215 = vadd.f32 %v3135, %v3207
        %v3216 = vadd.f32 %v3136, %v3209
        %v3217 = vadd.f32 %v3137, %v3211
        %s3218 = sld [smem:[#allocation14 + $0x21]]
        %v3219 = vstv %s3218
        %v3220 = vmul.f32 %v2750, %v3219
        %v3221 = vmul.f32 %v2751, %v3219
        %v3222 = vmul.f32 %v2752, %v3219
        %3226 = vrot.lane.b32.xlu0 %v3220, 126
        %v3227 = vpop.permute.xlu0 %3226
        %3228 = vrot.lane.b32.xlu0 %v3221, 126
        %v3229 = vpop.permute.xlu0 %3228
        %3230 = vrot.lane.b32.xlu0 %v3222, 126
        %v3231 = vpop.permute.xlu0 %3230
        %v3235 = vadd.f32 %v3155, %v3227
        %v3236 = vadd.f32 %v3156, %v3229
        %v3237 = vadd.f32 %v3157, %v3231
        %s3238 = sld [smem:[#allocation14 + $0x22]]
        %v3239 = vstv %s3238
        %v3240 = vmul.f32 %v2750, %v3239
        %v3241 = vmul.f32 %v2751, %v3239
        %v3242 = vmul.f32 %v2752, %v3239
        %3246 = vrot.lane.b32.xlu0 %v3240, 126
        %v3247 = vpop.permute.xlu0 %3246
        %3248 = vrot.lane.b32.xlu0 %v3241, 126
        %v3249 = vpop.permute.xlu0 %3248
        %3250 = vrot.lane.b32.xlu0 %v3242, 126
        %v3251 = vpop.permute.xlu0 %3250
        %v3255 = vadd.f32 %v3175, %v3247
        %v3256 = vadd.f32 %v3176, %v3249
        %v3257 = vadd.f32 %v3177, %v3251
        %s3258 = sld [smem:[#allocation14 + $0x23]]
        %v3259 = vstv %s3258
        %v3260 = vmul.f32 %v2750, %v3259
        %v3261 = vmul.f32 %v2751, %v3259
        %v3262 = vmul.f32 %v2752, %v3259
        %3266 = vrot.lane.b32.xlu0 %v3260, 126
        %v3267 = vpop.permute.xlu0 %3266
        %3268 = vrot.lane.b32.xlu0 %v3261, 126
        %v3269 = vpop.permute.xlu0 %3268
        %3270 = vrot.lane.b32.xlu0 %v3262, 126
        %v3271 = vpop.permute.xlu0 %3270
        %v3275 = vadd.f32 %v3195, %v3267
        %v3276 = vadd.f32 %v3196, %v3269
        %v3277 = vadd.f32 %v3197, %v3271
        %s3278 = sld [smem:[#allocation14 + $0x24]]
        %v3279 = vstv %s3278
        %v3280 = vmul.f32 %v2773, %v3279
        %v3281 = vmul.f32 %v2774, %v3279
        %v3282 = vmul.f32 %v2775, %v3279
        %3286 = vrot.lane.b32.xlu0 %v3280, 126
        %v3287 = vpop.permute.xlu0 %3286
        %3288 = vrot.lane.b32.xlu0 %v3281, 126
        %v3289 = vpop.permute.xlu0 %3288
        %3290 = vrot.lane.b32.xlu0 %v3282, 126
        %v3291 = vpop.permute.xlu0 %3290
        %v3295 = vadd.f32 %v3215, %v3287
        %v3296 = vadd.f32 %v3216, %v3289
        %v3297 = vadd.f32 %v3217, %v3291
        %s3298 = sld [smem:[#allocation14 + $0x25]]
        %v3299 = vstv %s3298
        %v3300 = vmul.f32 %v2773, %v3299
        %v3301 = vmul.f32 %v2774, %v3299
        %v3302 = vmul.f32 %v2775, %v3299
        %3306 = vrot.lane.b32.xlu0 %v3300, 126
        %v3307 = vpop.permute.xlu0 %3306
        %3308 = vrot.lane.b32.xlu0 %v3301, 126
        %v3309 = vpop.permute.xlu0 %3308
        %3310 = vrot.lane.b32.xlu0 %v3302, 126
        %v3311 = vpop.permute.xlu0 %3310
        %v3315 = vadd.f32 %v3235, %v3307
        %v3316 = vadd.f32 %v3236, %v3309
        %v3317 = vadd.f32 %v3237, %v3311
        %s3318 = sld [smem:[#allocation14 + $0x26]]
        %v3319 = vstv %s3318
        %v3320 = vmul.f32 %v2773, %v3319
        %v3321 = vmul.f32 %v2774, %v3319
        %v3322 = vmul.f32 %v2775, %v3319
        %3326 = vrot.lane.b32.xlu0 %v3320, 126
        %v3327 = vpop.permute.xlu0 %3326
        %3328 = vrot.lane.b32.xlu0 %v3321, 126
        %v3329 = vpop.permute.xlu0 %3328
        %3330 = vrot.lane.b32.xlu0 %v3322, 126
        %v3331 = vpop.permute.xlu0 %3330
        %v3335 = vadd.f32 %v3255, %v3327
        %v3336 = vadd.f32 %v3256, %v3329
        %v3337 = vadd.f32 %v3257, %v3331
        %s3338 = sld [smem:[#allocation14 + $0x27]]
        %v3339 = vstv %s3338
        %v3340 = vmul.f32 %v2773, %v3339
        %v3341 = vmul.f32 %v2774, %v3339
        %v3342 = vmul.f32 %v2775, %v3339
        %3346 = vrot.lane.b32.xlu0 %v3340, 126
        %v3347 = vpop.permute.xlu0 %3346
        %3348 = vrot.lane.b32.xlu0 %v3341, 126
        %v3349 = vpop.permute.xlu0 %3348
        %3350 = vrot.lane.b32.xlu0 %v3342, 126
        %v3351 = vpop.permute.xlu0 %3350
        %v3355 = vadd.f32 %v3275, %v3347
        %v3356 = vadd.f32 %v3276, %v3349
        %v3357 = vadd.f32 %v3277, %v3351
        %s3358 = sld [smem:[#allocation14 + $0x28]]
        %v3359 = vstv %s3358
        %v3360 = vmul.f32 %v2808, %v3359
        %v3361 = vmul.f32 %v2809, %v3359
        %v3362 = vmul.f32 %v2810, %v3359
        %3366 = vrot.lane.b32.xlu0 %v3360, 126
        %v3367 = vpop.permute.xlu0 %3366
        %3368 = vrot.lane.b32.xlu0 %v3361, 126
        %v3369 = vpop.permute.xlu0 %3368
        %3370 = vrot.lane.b32.xlu0 %v3362, 126
        %v3371 = vpop.permute.xlu0 %3370
        %v3375 = vadd.f32 %v3295, %v3367
        %v3376 = vadd.f32 %v3296, %v3369
        %v3377 = vadd.f32 %v3297, %v3371
        %s3378 = sld [smem:[#allocation14 + $0x29]]
        %v3379 = vstv %s3378
        %v3380 = vmul.f32 %v2808, %v3379
        %v3381 = vmul.f32 %v2809, %v3379
        %v3382 = vmul.f32 %v2810, %v3379
        %3386 = vrot.lane.b32.xlu0 %v3380, 126
        %v3387 = vpop.permute.xlu0 %3386
        %3388 = vrot.lane.b32.xlu0 %v3381, 126
        %v3389 = vpop.permute.xlu0 %3388
        %3390 = vrot.lane.b32.xlu0 %v3382, 126
        %v3391 = vpop.permute.xlu0 %3390
        %v3395 = vadd.f32 %v3315, %v3387
        %v3396 = vadd.f32 %v3316, %v3389
        %v3397 = vadd.f32 %v3317, %v3391
        %s3398 = sld [smem:[#allocation14 + $0x2a]]
        %v3399 = vstv %s3398
        %v3400 = vmul.f32 %v2808, %v3399
        %v3401 = vmul.f32 %v2809, %v3399
        %v3402 = vmul.f32 %v2810, %v3399
        %3406 = vrot.lane.b32.xlu0 %v3400, 126
        %v3407 = vpop.permute.xlu0 %3406
        %3408 = vrot.lane.b32.xlu0 %v3401, 126
        %v3409 = vpop.permute.xlu0 %3408
        %3410 = vrot.lane.b32.xlu0 %v3402, 126
        %v3411 = vpop.permute.xlu0 %3410
        %v3415 = vadd.f32 %v3335, %v3407
        %v3416 = vadd.f32 %v3336, %v3409
        %v3417 = vadd.f32 %v3337, %v3411
        %s3418 = sld [smem:[#allocation14 + $0x2b]]
        %v3419 = vstv %s3418
        %v3420 = vmul.f32 %v2808, %v3419
        %v3421 = vmul.f32 %v2809, %v3419
        %v3422 = vmul.f32 %v2810, %v3419
        %3426 = vrot.lane.b32.xlu0 %v3420, 126
        %v3427 = vpop.permute.xlu0 %3426
        %3428 = vrot.lane.b32.xlu0 %v3421, 126
        %v3429 = vpop.permute.xlu0 %3428
        %3430 = vrot.lane.b32.xlu0 %v3422, 126
        %v3431 = vpop.permute.xlu0 %3430
        %v3435 = vadd.f32 %v3355, %v3427
        %v3436 = vadd.f32 %v3356, %v3429
        %v3437 = vadd.f32 %v3357, %v3431
        %s3438 = sld [smem:[#allocation14 + $0x2c]]
        %v3439 = vstv %s3438
        %v3440 = vmul.f32 %v2843, %v3439
        %v3441 = vmul.f32 %v2844, %v3439
        %v3442 = vmul.f32 %v2845, %v3439
        %3446 = vrot.lane.b32.xlu0 %v3440, 126
        %v3447 = vpop.permute.xlu0 %3446
        %3448 = vrot.lane.b32.xlu0 %v3441, 126
        %v3449 = vpop.permute.xlu0 %3448
        %3450 = vrot.lane.b32.xlu0 %v3442, 126
        %v3451 = vpop.permute.xlu0 %3450
        %v3455 = vadd.f32 %v3375, %v3447
        %v3456 = vadd.f32 %v3376, %v3449
        %v3457 = vadd.f32 %v3377, %v3451
        %s3458 = sld [smem:[#allocation14 + $0x2d]]
        %v3459 = vstv %s3458
        %v3460 = vmul.f32 %v2843, %v3459
        %v3461 = vmul.f32 %v2844, %v3459
        %v3462 = vmul.f32 %v2845, %v3459
        %3466 = vrot.lane.b32.xlu0 %v3460, 126
        %v3467 = vpop.permute.xlu0 %3466
        %3468 = vrot.lane.b32.xlu0 %v3461, 126
        %v3469 = vpop.permute.xlu0 %3468
        %3470 = vrot.lane.b32.xlu0 %v3462, 126
        %v3471 = vpop.permute.xlu0 %3470
        %v3475 = vadd.f32 %v3395, %v3467
        %v3476 = vadd.f32 %v3396, %v3469
        %v3477 = vadd.f32 %v3397, %v3471
        %s3478 = sld [smem:[#allocation14 + $0x2e]]
        %v3479 = vstv %s3478
        %v3480 = vmul.f32 %v2843, %v3479
        %v3481 = vmul.f32 %v2844, %v3479
        %v3482 = vmul.f32 %v2845, %v3479
        %3486 = vrot.lane.b32.xlu0 %v3480, 126
        %v3487 = vpop.permute.xlu0 %3486
        %3488 = vrot.lane.b32.xlu0 %v3481, 126
        %v3489 = vpop.permute.xlu0 %3488
        %3490 = vrot.lane.b32.xlu0 %v3482, 126
        %v3491 = vpop.permute.xlu0 %3490
        %v3495 = vadd.f32 %v3415, %v3487
        %v3496 = vadd.f32 %v3416, %v3489
        %v3497 = vadd.f32 %v3417, %v3491
        %s3498 = sld [smem:[#allocation14 + $0x2f]]
        %v3499 = vstv %s3498
        %v3500 = vmul.f32 %v2843, %v3499
        %v3501 = vmul.f32 %v2844, %v3499
        %v3502 = vmul.f32 %v2845, %v3499
        %3506 = vrot.lane.b32.xlu0 %v3500, 126
        %v3507 = vpop.permute.xlu0 %3506
        %3508 = vrot.lane.b32.xlu0 %v3501, 126
        %v3509 = vpop.permute.xlu0 %3508
        %3510 = vrot.lane.b32.xlu0 %v3502, 126
        %v3511 = vpop.permute.xlu0 %3510
        %v3515 = vadd.f32 %v3435, %v3507
        %v3516 = vadd.f32 %v3436, %v3509
        %v3517 = vadd.f32 %v3437, %v3511
        %s3518 = sld [smem:[#allocation14 + $0x30]]
        %v3519 = vstv %s3518
        %v3520 = vmul.f32 %v2750, %v3519
        %v3521 = vmul.f32 %v2751, %v3519
        %v3522 = vmul.f32 %v2752, %v3519
        %3526 = vrot.lane.b32.xlu0 %v3520, 125
        %v3527 = vpop.permute.xlu0 %3526
        %3528 = vrot.lane.b32.xlu0 %v3521, 125
        %v3529 = vpop.permute.xlu0 %3528
        %3530 = vrot.lane.b32.xlu0 %v3522, 125
        %v3531 = vpop.permute.xlu0 %3530
        %v3535 = vadd.f32 %v3455, %v3527
        %v3536 = vadd.f32 %v3456, %v3529
        %v3537 = vadd.f32 %v3457, %v3531
        %s3538 = sld [smem:[#allocation14 + $0x31]]
        %v3539 = vstv %s3538
        %v3540 = vmul.f32 %v2750, %v3539
        %v3541 = vmul.f32 %v2751, %v3539
        %v3542 = vmul.f32 %v2752, %v3539
        %3546 = vrot.lane.b32.xlu0 %v3540, 125
        %v3547 = vpop.permute.xlu0 %3546
        %3548 = vrot.lane.b32.xlu0 %v3541, 125
        %v3549 = vpop.permute.xlu0 %3548
        %3550 = vrot.lane.b32.xlu0 %v3542, 125
        %v3551 = vpop.permute.xlu0 %3550
        %v3555 = vadd.f32 %v3475, %v3547
        %v3556 = vadd.f32 %v3476, %v3549
        %v3557 = vadd.f32 %v3477, %v3551
        %s3558 = sld [smem:[#allocation14 + $0x32]]
        %v3559 = vstv %s3558
        %v3560 = vmul.f32 %v2750, %v3559
        %v3561 = vmul.f32 %v2751, %v3559
        %v3562 = vmul.f32 %v2752, %v3559
        %3566 = vrot.lane.b32.xlu0 %v3560, 125
        %v3567 = vpop.permute.xlu0 %3566
        %3568 = vrot.lane.b32.xlu0 %v3561, 125
        %v3569 = vpop.permute.xlu0 %3568
        %3570 = vrot.lane.b32.xlu0 %v3562, 125
        %v3571 = vpop.permute.xlu0 %3570
        %v3575 = vadd.f32 %v3495, %v3567
        %v3576 = vadd.f32 %v3496, %v3569
        %v3577 = vadd.f32 %v3497, %v3571
        %s3578 = sld [smem:[#allocation14 + $0x33]]
        %v3579 = vstv %s3578
        %v3580 = vmul.f32 %v2750, %v3579
        %v3581 = vmul.f32 %v2751, %v3579
        %v3582 = vmul.f32 %v2752, %v3579
        %3586 = vrot.lane.b32.xlu0 %v3580, 125
        %v3587 = vpop.permute.xlu0 %3586
        %3588 = vrot.lane.b32.xlu0 %v3581, 125
        %v3589 = vpop.permute.xlu0 %3588
        %3590 = vrot.lane.b32.xlu0 %v3582, 125
        %v3591 = vpop.permute.xlu0 %3590
        %v3595 = vadd.f32 %v3515, %v3587
        %v3596 = vadd.f32 %v3516, %v3589
        %v3597 = vadd.f32 %v3517, %v3591
        %s3598 = sld [smem:[#allocation14 + $0x34]]
        %v3599 = vstv %s3598
        %v3600 = vmul.f32 %v2773, %v3599
        %v3601 = vmul.f32 %v2774, %v3599
        %v3602 = vmul.f32 %v2775, %v3599
        %3606 = vrot.lane.b32.xlu0 %v3600, 125
        %v3607 = vpop.permute.xlu0 %3606
        %3608 = vrot.lane.b32.xlu0 %v3601, 125
        %v3609 = vpop.permute.xlu0 %3608
        %3610 = vrot.lane.b32.xlu0 %v3602, 125
        %v3611 = vpop.permute.xlu0 %3610
        %v3615 = vadd.f32 %v3535, %v3607
        %v3616 = vadd.f32 %v3536, %v3609
        %v3617 = vadd.f32 %v3537, %v3611
        %s3618 = sld [smem:[#allocation14 + $0x35]]
        %v3619 = vstv %s3618
        %v3620 = vmul.f32 %v2773, %v3619
        %v3621 = vmul.f32 %v2774, %v3619
        %v3622 = vmul.f32 %v2775, %v3619
        %3626 = vrot.lane.b32.xlu0 %v3620, 125
        %v3627 = vpop.permute.xlu0 %3626
        %3628 = vrot.lane.b32.xlu0 %v3621, 125
        %v3629 = vpop.permute.xlu0 %3628
        %3630 = vrot.lane.b32.xlu0 %v3622, 125
        %v3631 = vpop.permute.xlu0 %3630
        %v3635 = vadd.f32 %v3555, %v3627
        %v3636 = vadd.f32 %v3556, %v3629
        %v3637 = vadd.f32 %v3557, %v3631
        %s3638 = sld [smem:[#allocation14 + $0x36]]
        %v3639 = vstv %s3638
        %v3640 = vmul.f32 %v2773, %v3639
        %v3641 = vmul.f32 %v2774, %v3639
        %v3642 = vmul.f32 %v2775, %v3639
        %3646 = vrot.lane.b32.xlu0 %v3640, 125
        %v3647 = vpop.permute.xlu0 %3646
        %3648 = vrot.lane.b32.xlu0 %v3641, 125
        %v3649 = vpop.permute.xlu0 %3648
        %3650 = vrot.lane.b32.xlu0 %v3642, 125
        %v3651 = vpop.permute.xlu0 %3650
        %v3655 = vadd.f32 %v3575, %v3647
        %v3656 = vadd.f32 %v3576, %v3649
        %v3657 = vadd.f32 %v3577, %v3651
        %s3658 = sld [smem:[#allocation14 + $0x37]]
        %v3659 = vstv %s3658
        %v3660 = vmul.f32 %v2773, %v3659
        %v3661 = vmul.f32 %v2774, %v3659
        %v3662 = vmul.f32 %v2775, %v3659
        %3666 = vrot.lane.b32.xlu0 %v3660, 125
        %v3667 = vpop.permute.xlu0 %3666
        %3668 = vrot.lane.b32.xlu0 %v3661, 125
        %v3669 = vpop.permute.xlu0 %3668
        %3670 = vrot.lane.b32.xlu0 %v3662, 125
        %v3671 = vpop.permute.xlu0 %3670
        %v3675 = vadd.f32 %v3595, %v3667
        %v3676 = vadd.f32 %v3596, %v3669
        %v3677 = vadd.f32 %v3597, %v3671
        %s3678 = sld [smem:[#allocation14 + $0x38]]
        %v3679 = vstv %s3678
        %v3680 = vmul.f32 %v2808, %v3679
        %v3681 = vmul.f32 %v2809, %v3679
        %v3682 = vmul.f32 %v2810, %v3679
        %3686 = vrot.lane.b32.xlu0 %v3680, 125
        %v3687 = vpop.permute.xlu0 %3686
        %3688 = vrot.lane.b32.xlu0 %v3681, 125
        %v3689 = vpop.permute.xlu0 %3688
        %3690 = vrot.lane.b32.xlu0 %v3682, 125
        %v3691 = vpop.permute.xlu0 %3690
        %v3695 = vadd.f32 %v3615, %v3687
        %v3696 = vadd.f32 %v3616, %v3689
        %v3697 = vadd.f32 %v3617, %v3691
        %s3698 = sld [smem:[#allocation14 + $0x39]]
        %v3699 = vstv %s3698
        %v3700 = vmul.f32 %v2808, %v3699
        %v3701 = vmul.f32 %v2809, %v3699
        %v3702 = vmul.f32 %v2810, %v3699
        %3706 = vrot.lane.b32.xlu0 %v3700, 125
        %v3707 = vpop.permute.xlu0 %3706
        %3708 = vrot.lane.b32.xlu0 %v3701, 125
        %v3709 = vpop.permute.xlu0 %3708
        %3710 = vrot.lane.b32.xlu0 %v3702, 125
        %v3711 = vpop.permute.xlu0 %3710
        %v3715 = vadd.f32 %v3635, %v3707
        %v3716 = vadd.f32 %v3636, %v3709
        %v3717 = vadd.f32 %v3637, %v3711
        %s3718 = sld [smem:[#allocation14 + $0x3a]]
        %v3719 = vstv %s3718
        %v3720 = vmul.f32 %v2808, %v3719
        %v3721 = vmul.f32 %v2809, %v3719
        %v3722 = vmul.f32 %v2810, %v3719
        %3726 = vrot.lane.b32.xlu0 %v3720, 125
        %v3727 = vpop.permute.xlu0 %3726
        %3728 = vrot.lane.b32.xlu0 %v3721, 125
        %v3729 = vpop.permute.xlu0 %3728
        %3730 = vrot.lane.b32.xlu0 %v3722, 125
        %v3731 = vpop.permute.xlu0 %3730
        %v3735 = vadd.f32 %v3655, %v3727
        %v3736 = vadd.f32 %v3656, %v3729
        %v3737 = vadd.f32 %v3657, %v3731
        %s3738 = sld [smem:[#allocation14 + $0x3b]]
        %v3739 = vstv %s3738
        %v3740 = vmul.f32 %v2808, %v3739
        %v3741 = vmul.f32 %v2809, %v3739
        %v3742 = vmul.f32 %v2810, %v3739
        %3746 = vrot.lane.b32.xlu0 %v3740, 125
        %v3747 = vpop.permute.xlu0 %3746
        %3748 = vrot.lane.b32.xlu0 %v3741, 125
        %v3749 = vpop.permute.xlu0 %3748
        %3750 = vrot.lane.b32.xlu0 %v3742, 125
        %v3751 = vpop.permute.xlu0 %3750
        %v3755 = vadd.f32 %v3675, %v3747
        %v3756 = vadd.f32 %v3676, %v3749
        %v3757 = vadd.f32 %v3677, %v3751
        %s3758 = sld [smem:[#allocation14 + $0x3c]]
        %v3759 = vstv %s3758
        %v3760 = vmul.f32 %v2843, %v3759
        %v3761 = vmul.f32 %v2844, %v3759
        %v3762 = vmul.f32 %v2845, %v3759
        %3766 = vrot.lane.b32.xlu0 %v3760, 125
        %v3767 = vpop.permute.xlu0 %3766
        %3768 = vrot.lane.b32.xlu0 %v3761, 125
        %v3769 = vpop.permute.xlu0 %3768
        %3770 = vrot.lane.b32.xlu0 %v3762, 125
        %v3771 = vpop.permute.xlu0 %3770
        %v3775 = vadd.f32 %v3695, %v3767
        %v3776 = vadd.f32 %v3696, %v3769
        %v3777 = vadd.f32 %v3697, %v3771
        %s3778 = sld [smem:[#allocation14 + $0x3d]]
        %v3779 = vstv %s3778
        %v3780 = vmul.f32 %v2843, %v3779
        %v3781 = vmul.f32 %v2844, %v3779
        %v3782 = vmul.f32 %v2845, %v3779
        %3786 = vrot.lane.b32.xlu0 %v3780, 125
        %v3787 = vpop.permute.xlu0 %3786
        %3788 = vrot.lane.b32.xlu0 %v3781, 125
        %v3789 = vpop.permute.xlu0 %3788
        %3790 = vrot.lane.b32.xlu0 %v3782, 125
        %v3791 = vpop.permute.xlu0 %3790
        %v3795 = vadd.f32 %v3715, %v3787
        %v3796 = vadd.f32 %v3716, %v3789
        %v3797 = vadd.f32 %v3717, %v3791
        %s3798 = sld [smem:[#allocation14 + $0x3e]]
        %v3799 = vstv %s3798
        %v3800 = vmul.f32 %v2843, %v3799
        %v3801 = vmul.f32 %v2844, %v3799
        %v3802 = vmul.f32 %v2845, %v3799
        %3806 = vrot.lane.b32.xlu0 %v3800, 125
        %v3807 = vpop.permute.xlu0 %3806
        %3808 = vrot.lane.b32.xlu0 %v3801, 125
        %v3809 = vpop.permute.xlu0 %3808
        %3810 = vrot.lane.b32.xlu0 %v3802, 125
        %v3811 = vpop.permute.xlu0 %3810
        %v3815 = vadd.f32 %v3735, %v3807
        %v3816 = vadd.f32 %v3736, %v3809
        %v3817 = vadd.f32 %v3737, %v3811
        %s3818 = sld [smem:[#allocation14 + $0x3f]]
        %v3819 = vstv %s3818
        %v3820 = vmul.f32 %v2843, %v3819
        %v3821 = vmul.f32 %v2844, %v3819
        %v3822 = vmul.f32 %v2845, %v3819
        %3826 = vrot.lane.b32.xlu0 %v3820, 125
        %v3827 = vpop.permute.xlu0 %3826
        %3828 = vrot.lane.b32.xlu0 %v3821, 125
        %v3829 = vpop.permute.xlu0 %3828
        %3830 = vrot.lane.b32.xlu0 %v3822, 125
        %v3831 = vpop.permute.xlu0 %3830
        %v3835 = vadd.f32 %v3755, %v3827
        %v3836 = vadd.f32 %v3756, %v3829
        %v3837 = vadd.f32 %v3757, %v3831
        %s3838 = sld [smem:[#allocation14 + $0x40]]
        %v3839 = vstv %s3838
        %v3840 = vmul.f32 %v2750, %v3839
        %v3841 = vmul.f32 %v2751, %v3839
        %v3842 = vmul.f32 %v2752, %v3839
        %3846 = vrot.lane.b32.xlu0 %v3840, 124
        %v3847 = vpop.permute.xlu0 %3846
        %3848 = vrot.lane.b32.xlu0 %v3841, 124
        %v3849 = vpop.permute.xlu0 %3848
        %3850 = vrot.lane.b32.xlu0 %v3842, 124
        %v3851 = vpop.permute.xlu0 %3850
        %v3855 = vadd.f32 %v3775, %v3847
        %v3856 = vadd.f32 %v3776, %v3849
        %v3857 = vadd.f32 %v3777, %v3851
        %s3858 = sld [smem:[#allocation14 + $0x41]]
        %v3859 = vstv %s3858
        %v3860 = vmul.f32 %v2750, %v3859
        %v3861 = vmul.f32 %v2751, %v3859
        %v3862 = vmul.f32 %v2752, %v3859
        %3866 = vrot.lane.b32.xlu0 %v3860, 124
        %v3867 = vpop.permute.xlu0 %3866
        %3868 = vrot.lane.b32.xlu0 %v3861, 124
        %v3869 = vpop.permute.xlu0 %3868
        %3870 = vrot.lane.b32.xlu0 %v3862, 124
        %v3871 = vpop.permute.xlu0 %3870
        %v3875 = vadd.f32 %v3795, %v3867
        %v3876 = vadd.f32 %v3796, %v3869
        %v3877 = vadd.f32 %v3797, %v3871
        %s3878 = sld [smem:[#allocation14 + $0x42]]
        %v3879 = vstv %s3878
        %v3880 = vmul.f32 %v2750, %v3879
        %v3881 = vmul.f32 %v2751, %v3879
        %v3882 = vmul.f32 %v2752, %v3879
        %3886 = vrot.lane.b32.xlu0 %v3880, 124
        %v3887 = vpop.permute.xlu0 %3886
        %3888 = vrot.lane.b32.xlu0 %v3881, 124
        %v3889 = vpop.permute.xlu0 %3888
        %3890 = vrot.lane.b32.xlu0 %v3882, 124
        %v3891 = vpop.permute.xlu0 %3890
        %v3895 = vadd.f32 %v3815, %v3887
        %v3896 = vadd.f32 %v3816, %v3889
        %v3897 = vadd.f32 %v3817, %v3891
        %s3898 = sld [smem:[#allocation14 + $0x43]]
        %v3899 = vstv %s3898
        %v3900 = vmul.f32 %v2750, %v3899
        %v3901 = vmul.f32 %v2751, %v3899
        %v3902 = vmul.f32 %v2752, %v3899
        %3906 = vrot.lane.b32.xlu0 %v3900, 124
        %v3907 = vpop.permute.xlu0 %3906
        %3908 = vrot.lane.b32.xlu0 %v3901, 124
        %v3909 = vpop.permute.xlu0 %3908
        %3910 = vrot.lane.b32.xlu0 %v3902, 124
        %v3911 = vpop.permute.xlu0 %3910
        %v3915 = vadd.f32 %v3835, %v3907
        %v3916 = vadd.f32 %v3836, %v3909
        %v3917 = vadd.f32 %v3837, %v3911
        %s3918 = sld [smem:[#allocation14 + $0x44]]
        %v3919 = vstv %s3918
        %v3920 = vmul.f32 %v2773, %v3919
        %v3921 = vmul.f32 %v2774, %v3919
        %v3922 = vmul.f32 %v2775, %v3919
        %3926 = vrot.lane.b32.xlu0 %v3920, 124
        %v3927 = vpop.permute.xlu0 %3926
        %3928 = vrot.lane.b32.xlu0 %v3921, 124
        %v3929 = vpop.permute.xlu0 %3928
        %3930 = vrot.lane.b32.xlu0 %v3922, 124
        %v3931 = vpop.permute.xlu0 %3930
        %v3935 = vadd.f32 %v3855, %v3927
        %v3936 = vadd.f32 %v3856, %v3929
        %v3937 = vadd.f32 %v3857, %v3931
        %s3938 = sld [smem:[#allocation14 + $0x45]]
        %v3939 = vstv %s3938
        %v3940 = vmul.f32 %v2773, %v3939
        %v3941 = vmul.f32 %v2774, %v3939
        %v3942 = vmul.f32 %v2775, %v3939
        %3946 = vrot.lane.b32.xlu0 %v3940, 124
        %v3947 = vpop.permute.xlu0 %3946
        %3948 = vrot.lane.b32.xlu0 %v3941, 124
        %v3949 = vpop.permute.xlu0 %3948
        %3950 = vrot.lane.b32.xlu0 %v3942, 124
        %v3951 = vpop.permute.xlu0 %3950
        %v3955 = vadd.f32 %v3875, %v3947
        %v3956 = vadd.f32 %v3876, %v3949
        %v3957 = vadd.f32 %v3877, %v3951
        %s3958 = sld [smem:[#allocation14 + $0x46]]
        %v3959 = vstv %s3958
        %v3960 = vmul.f32 %v2773, %v3959
        %v3961 = vmul.f32 %v2774, %v3959
        %v3962 = vmul.f32 %v2775, %v3959
        %3966 = vrot.lane.b32.xlu0 %v3960, 124
        %v3967 = vpop.permute.xlu0 %3966
        %3968 = vrot.lane.b32.xlu0 %v3961, 124
        %v3969 = vpop.permute.xlu0 %3968
        %3970 = vrot.lane.b32.xlu0 %v3962, 124
        %v3971 = vpop.permute.xlu0 %3970
        %v3975 = vadd.f32 %v3895, %v3967
        %v3976 = vadd.f32 %v3896, %v3969
        %v3977 = vadd.f32 %v3897, %v3971
        %s3978 = sld [smem:[#allocation14 + $0x47]]
        %v3979 = vstv %s3978
        %v3980 = vmul.f32 %v2773, %v3979
        %v3981 = vmul.f32 %v2774, %v3979
        %v3982 = vmul.f32 %v2775, %v3979
        %3986 = vrot.lane.b32.xlu0 %v3980, 124
        %v3987 = vpop.permute.xlu0 %3986
        %3988 = vrot.lane.b32.xlu0 %v3981, 124
        %v3989 = vpop.permute.xlu0 %3988
        %3990 = vrot.lane.b32.xlu0 %v3982, 124
        %v3991 = vpop.permute.xlu0 %3990
        %v3995 = vadd.f32 %v3915, %v3987
        %v3996 = vadd.f32 %v3916, %v3989
        %v3997 = vadd.f32 %v3917, %v3991
        %s3998 = sld [smem:[#allocation14 + $0x48]]
        %v3999 = vstv %s3998
        %v4000 = vmul.f32 %v2808, %v3999
        %v4001 = vmul.f32 %v2809, %v3999
        %v4002 = vmul.f32 %v2810, %v3999
        %4006 = vrot.lane.b32.xlu0 %v4000, 124
        %v4007 = vpop.permute.xlu0 %4006
        %4008 = vrot.lane.b32.xlu0 %v4001, 124
        %v4009 = vpop.permute.xlu0 %4008
        %4010 = vrot.lane.b32.xlu0 %v4002, 124
        %v4011 = vpop.permute.xlu0 %4010
        %v4015 = vadd.f32 %v3935, %v4007
        %v4016 = vadd.f32 %v3936, %v4009
        %v4017 = vadd.f32 %v3937, %v4011
        %s4018 = sld [smem:[#allocation14 + $0x49]]
        %v4019 = vstv %s4018
        %v4020 = vmul.f32 %v2808, %v4019
        %v4021 = vmul.f32 %v2809, %v4019
        %v4022 = vmul.f32 %v2810, %v4019
        %4026 = vrot.lane.b32.xlu0 %v4020, 124
        %v4027 = vpop.permute.xlu0 %4026
        %4028 = vrot.lane.b32.xlu0 %v4021, 124
        %v4029 = vpop.permute.xlu0 %4028
        %4030 = vrot.lane.b32.xlu0 %v4022, 124
        %v4031 = vpop.permute.xlu0 %4030
        %v4035 = vadd.f32 %v3955, %v4027
        %v4036 = vadd.f32 %v3956, %v4029
        %v4037 = vadd.f32 %v3957, %v4031
        %s4038 = sld [smem:[#allocation14 + $0x4a]]
        %v4039 = vstv %s4038
        %v4040 = vmul.f32 %v2808, %v4039
        %v4041 = vmul.f32 %v2809, %v4039
        %v4042 = vmul.f32 %v2810, %v4039
        %4046 = vrot.lane.b32.xlu0 %v4040, 124
        %v4047 = vpop.permute.xlu0 %4046
        %4048 = vrot.lane.b32.xlu0 %v4041, 124
        %v4049 = vpop.permute.xlu0 %4048
        %4050 = vrot.lane.b32.xlu0 %v4042, 124
        %v4051 = vpop.permute.xlu0 %4050
        %v4055 = vadd.f32 %v3975, %v4047
        %v4056 = vadd.f32 %v3976, %v4049
        %v4057 = vadd.f32 %v3977, %v4051
        %s4058 = sld [smem:[#allocation14 + $0x4b]]
        %v4059 = vstv %s4058
        %v4060 = vmul.f32 %v2808, %v4059
        %v4061 = vmul.f32 %v2809, %v4059
        %v4062 = vmul.f32 %v2810, %v4059
        %4066 = vrot.lane.b32.xlu0 %v4060, 124
        %v4067 = vpop.permute.xlu0 %4066
        %4068 = vrot.lane.b32.xlu0 %v4061, 124
        %v4069 = vpop.permute.xlu0 %4068
        %4070 = vrot.lane.b32.xlu0 %v4062, 124
        %v4071 = vpop.permute.xlu0 %4070
        %v4075 = vadd.f32 %v3995, %v4067
        %v4076 = vadd.f32 %v3996, %v4069
        %v4077 = vadd.f32 %v3997, %v4071
        %s4078 = sld [smem:[#allocation14 + $0x4c]]
        %v4079 = vstv %s4078
        %v4080 = vmul.f32 %v2843, %v4079
        %v4081 = vmul.f32 %v2844, %v4079
        %v4082 = vmul.f32 %v2845, %v4079
        %4086 = vrot.lane.b32.xlu0 %v4080, 124
        %v4087 = vpop.permute.xlu0 %4086
        %4088 = vrot.lane.b32.xlu0 %v4081, 124
        %v4089 = vpop.permute.xlu0 %4088
        %4090 = vrot.lane.b32.xlu0 %v4082, 124
        %v4091 = vpop.permute.xlu0 %4090
        %v4095 = vadd.f32 %v4015, %v4087
        %v4096 = vadd.f32 %v4016, %v4089
        %v4097 = vadd.f32 %v4017, %v4091
        %s4098 = sld [smem:[#allocation14 + $0x4d]]
        %v4099 = vstv %s4098
        %v4100 = vmul.f32 %v2843, %v4099
        %v4101 = vmul.f32 %v2844, %v4099
        %v4102 = vmul.f32 %v2845, %v4099
        %4106 = vrot.lane.b32.xlu0 %v4100, 124
        %v4107 = vpop.permute.xlu0 %4106
        %4108 = vrot.lane.b32.xlu0 %v4101, 124
        %v4109 = vpop.permute.xlu0 %4108
        %4110 = vrot.lane.b32.xlu0 %v4102, 124
        %v4111 = vpop.permute.xlu0 %4110
        %v4115 = vadd.f32 %v4035, %v4107
        %v4116 = vadd.f32 %v4036, %v4109
        %v4117 = vadd.f32 %v4037, %v4111
        %s4118 = sld [smem:[#allocation14 + $0x4e]]
        %v4119 = vstv %s4118
        %v4120 = vmul.f32 %v2843, %v4119
        %v4121 = vmul.f32 %v2844, %v4119
        %v4122 = vmul.f32 %v2845, %v4119
        %4126 = vrot.lane.b32.xlu0 %v4120, 124
        %v4127 = vpop.permute.xlu0 %4126
        %4128 = vrot.lane.b32.xlu0 %v4121, 124
        %v4129 = vpop.permute.xlu0 %4128
        %4130 = vrot.lane.b32.xlu0 %v4122, 124
        %v4131 = vpop.permute.xlu0 %4130
        %v4135 = vadd.f32 %v4055, %v4127
        %v4136 = vadd.f32 %v4056, %v4129
        %v4137 = vadd.f32 %v4057, %v4131
        %s4138 = sld [smem:[#allocation14 + $0x4f]]
        %v4139 = vstv %s4138
        %v4140 = vmul.f32 %v2843, %v4139
        %v4141 = vmul.f32 %v2844, %v4139
        %v4142 = vmul.f32 %v2845, %v4139
        %4146 = vrot.lane.b32.xlu0 %v4140, 124
        %v4147 = vpop.permute.xlu0 %4146
        %4148 = vrot.lane.b32.xlu0 %v4141, 124
        %v4149 = vpop.permute.xlu0 %4148
        %4150 = vrot.lane.b32.xlu0 %v4142, 124
        %v4151 = vpop.permute.xlu0 %4150
        %v4155 = vadd.f32 %v4075, %v4147
        %v4156 = vadd.f32 %v4076, %v4149
        %v4157 = vadd.f32 %v4077, %v4151
        %s4158 = sld [smem:[#allocation14 + $0x50]]
        %v4159 = vstv %s4158
        %v4160 = vmul.f32 %v2750, %v4159
        %v4161 = vmul.f32 %v2751, %v4159
        %v4162 = vmul.f32 %v2752, %v4159
        %4166 = vrot.lane.b32.xlu0 %v4160, 123
        %v4167 = vpop.permute.xlu0 %4166
        %4168 = vrot.lane.b32.xlu0 %v4161, 123
        %v4169 = vpop.permute.xlu0 %4168
        %4170 = vrot.lane.b32.xlu0 %v4162, 123
        %v4171 = vpop.permute.xlu0 %4170
        %v4175 = vadd.f32 %v4095, %v4167
        %v4176 = vadd.f32 %v4096, %v4169
        %v4177 = vadd.f32 %v4097, %v4171
        %s4178 = sld [smem:[#allocation14 + $0x51]]
        %v4179 = vstv %s4178
        %v4180 = vmul.f32 %v2750, %v4179
        %v4181 = vmul.f32 %v2751, %v4179
        %v4182 = vmul.f32 %v2752, %v4179
        %4186 = vrot.lane.b32.xlu0 %v4180, 123
        %v4187 = vpop.permute.xlu0 %4186
        %4188 = vrot.lane.b32.xlu0 %v4181, 123
        %v4189 = vpop.permute.xlu0 %4188
        %4190 = vrot.lane.b32.xlu0 %v4182, 123
        %v4191 = vpop.permute.xlu0 %4190
        %v4195 = vadd.f32 %v4115, %v4187
        %v4196 = vadd.f32 %v4116, %v4189
        %v4197 = vadd.f32 %v4117, %v4191
        %s4198 = sld [smem:[#allocation14 + $0x52]]
        %v4199 = vstv %s4198
        %v4200 = vmul.f32 %v2750, %v4199
        %v4201 = vmul.f32 %v2751, %v4199
        %v4202 = vmul.f32 %v2752, %v4199
        %4206 = vrot.lane.b32.xlu0 %v4200, 123
        %v4207 = vpop.permute.xlu0 %4206
        %4208 = vrot.lane.b32.xlu0 %v4201, 123
        %v4209 = vpop.permute.xlu0 %4208
        %4210 = vrot.lane.b32.xlu0 %v4202, 123
        %v4211 = vpop.permute.xlu0 %4210
        %v4215 = vadd.f32 %v4135, %v4207
        %v4216 = vadd.f32 %v4136, %v4209
        %v4217 = vadd.f32 %v4137, %v4211
        %s4218 = sld [smem:[#allocation14 + $0x53]]
        %v4219 = vstv %s4218
        %v4220 = vmul.f32 %v2750, %v4219
        %v4221 = vmul.f32 %v2751, %v4219
        %v4222 = vmul.f32 %v2752, %v4219
        %4226 = vrot.lane.b32.xlu0 %v4220, 123
        %v4227 = vpop.permute.xlu0 %4226
        %4228 = vrot.lane.b32.xlu0 %v4221, 123
        %v4229 = vpop.permute.xlu0 %4228
        %4230 = vrot.lane.b32.xlu0 %v4222, 123
        %v4231 = vpop.permute.xlu0 %4230
        %v4235 = vadd.f32 %v4155, %v4227
        %v4236 = vadd.f32 %v4156, %v4229
        %v4237 = vadd.f32 %v4157, %v4231
        %s4238 = sld [smem:[#allocation14 + $0x54]]
        %v4239 = vstv %s4238
        %v4240 = vmul.f32 %v2773, %v4239
        %v4241 = vmul.f32 %v2774, %v4239
        %v4242 = vmul.f32 %v2775, %v4239
        %4246 = vrot.lane.b32.xlu0 %v4240, 123
        %v4247 = vpop.permute.xlu0 %4246
        %4248 = vrot.lane.b32.xlu0 %v4241, 123
        %v4249 = vpop.permute.xlu0 %4248
        %4250 = vrot.lane.b32.xlu0 %v4242, 123
        %v4251 = vpop.permute.xlu0 %4250
        %v4255 = vadd.f32 %v4175, %v4247
        %v4256 = vadd.f32 %v4176, %v4249
        %v4257 = vadd.f32 %v4177, %v4251
        %s4258 = sld [smem:[#allocation14 + $0x55]]
        %v4259 = vstv %s4258
        %v4260 = vmul.f32 %v2773, %v4259
        %v4261 = vmul.f32 %v2774, %v4259
        %v4262 = vmul.f32 %v2775, %v4259
        %4266 = vrot.lane.b32.xlu0 %v4260, 123
        %v4267 = vpop.permute.xlu0 %4266
        %4268 = vrot.lane.b32.xlu0 %v4261, 123
        %v4269 = vpop.permute.xlu0 %4268
        %4270 = vrot.lane.b32.xlu0 %v4262, 123
        %v4271 = vpop.permute.xlu0 %4270
        %v4275 = vadd.f32 %v4195, %v4267
        %v4276 = vadd.f32 %v4196, %v4269
        %v4277 = vadd.f32 %v4197, %v4271
        %s4278 = sld [smem:[#allocation14 + $0x56]]
        %v4279 = vstv %s4278
        %v4280 = vmul.f32 %v2773, %v4279
        %v4281 = vmul.f32 %v2774, %v4279
        %v4282 = vmul.f32 %v2775, %v4279
        %4286 = vrot.lane.b32.xlu0 %v4280, 123
        %v4287 = vpop.permute.xlu0 %4286
        %4288 = vrot.lane.b32.xlu0 %v4281, 123
        %v4289 = vpop.permute.xlu0 %4288
        %4290 = vrot.lane.b32.xlu0 %v4282, 123
        %v4291 = vpop.permute.xlu0 %4290
        %v4295 = vadd.f32 %v4215, %v4287
        %v4296 = vadd.f32 %v4216, %v4289
        %v4297 = vadd.f32 %v4217, %v4291
        %s4298 = sld [smem:[#allocation14 + $0x57]]
        %v4299 = vstv %s4298
        %v4300 = vmul.f32 %v2773, %v4299
        %v4301 = vmul.f32 %v2774, %v4299
        %v4302 = vmul.f32 %v2775, %v4299
        %4306 = vrot.lane.b32.xlu0 %v4300, 123
        %v4307 = vpop.permute.xlu0 %4306
        %4308 = vrot.lane.b32.xlu0 %v4301, 123
        %v4309 = vpop.permute.xlu0 %4308
        %4310 = vrot.lane.b32.xlu0 %v4302, 123
        %v4311 = vpop.permute.xlu0 %4310
        %v4315 = vadd.f32 %v4235, %v4307
        %v4316 = vadd.f32 %v4236, %v4309
        %v4317 = vadd.f32 %v4237, %v4311
        %s4318 = sld [smem:[#allocation14 + $0x58]]
        %v4319 = vstv %s4318
        %v4320 = vmul.f32 %v2808, %v4319
        %v4321 = vmul.f32 %v2809, %v4319
        %v4322 = vmul.f32 %v2810, %v4319
        %4326 = vrot.lane.b32.xlu0 %v4320, 123
        %v4327 = vpop.permute.xlu0 %4326
        %4328 = vrot.lane.b32.xlu0 %v4321, 123
        %v4329 = vpop.permute.xlu0 %4328
        %4330 = vrot.lane.b32.xlu0 %v4322, 123
        %v4331 = vpop.permute.xlu0 %4330
        %v4335 = vadd.f32 %v4255, %v4327
        %v4336 = vadd.f32 %v4256, %v4329
        %v4337 = vadd.f32 %v4257, %v4331
        %s4338 = sld [smem:[#allocation14 + $0x59]]
        %v4339 = vstv %s4338
        %v4340 = vmul.f32 %v2808, %v4339
        %v4341 = vmul.f32 %v2809, %v4339
        %v4342 = vmul.f32 %v2810, %v4339
        %4346 = vrot.lane.b32.xlu0 %v4340, 123
        %v4347 = vpop.permute.xlu0 %4346
        %4348 = vrot.lane.b32.xlu0 %v4341, 123
        %v4349 = vpop.permute.xlu0 %4348
        %4350 = vrot.lane.b32.xlu0 %v4342, 123
        %v4351 = vpop.permute.xlu0 %4350
        %v4355 = vadd.f32 %v4275, %v4347
        %v4356 = vadd.f32 %v4276, %v4349
        %v4357 = vadd.f32 %v4277, %v4351
        %s4358 = sld [smem:[#allocation14 + $0x5a]]
        %v4359 = vstv %s4358
        %v4360 = vmul.f32 %v2808, %v4359
        %v4361 = vmul.f32 %v2809, %v4359
        %v4362 = vmul.f32 %v2810, %v4359
        %4366 = vrot.lane.b32.xlu0 %v4360, 123
        %v4367 = vpop.permute.xlu0 %4366
        %4368 = vrot.lane.b32.xlu0 %v4361, 123
        %v4369 = vpop.permute.xlu0 %4368
        %4370 = vrot.lane.b32.xlu0 %v4362, 123
        %v4371 = vpop.permute.xlu0 %4370
        %v4375 = vadd.f32 %v4295, %v4367
        %v4376 = vadd.f32 %v4296, %v4369
        %v4377 = vadd.f32 %v4297, %v4371
        %s4378 = sld [smem:[#allocation14 + $0x5b]]
        %v4379 = vstv %s4378
        %v4380 = vmul.f32 %v2808, %v4379
        %v4381 = vmul.f32 %v2809, %v4379
        %v4382 = vmul.f32 %v2810, %v4379
        %4386 = vrot.lane.b32.xlu0 %v4380, 123
        %v4387 = vpop.permute.xlu0 %4386
        %4388 = vrot.lane.b32.xlu0 %v4381, 123
        %v4389 = vpop.permute.xlu0 %4388
        %4390 = vrot.lane.b32.xlu0 %v4382, 123
        %v4391 = vpop.permute.xlu0 %4390
        %v4395 = vadd.f32 %v4315, %v4387
        %v4396 = vadd.f32 %v4316, %v4389
        %v4397 = vadd.f32 %v4317, %v4391
        %s4398 = sld [smem:[#allocation14 + $0x5c]]
        %v4399 = vstv %s4398
        %v4400 = vmul.f32 %v2843, %v4399
        %v4401 = vmul.f32 %v2844, %v4399
        %v4402 = vmul.f32 %v2845, %v4399
        %4406 = vrot.lane.b32.xlu0 %v4400, 123
        %v4407 = vpop.permute.xlu0 %4406
        %4408 = vrot.lane.b32.xlu0 %v4401, 123
        %v4409 = vpop.permute.xlu0 %4408
        %4410 = vrot.lane.b32.xlu0 %v4402, 123
        %v4411 = vpop.permute.xlu0 %4410
        %v4415 = vadd.f32 %v4335, %v4407
        %v4416 = vadd.f32 %v4336, %v4409
        %v4417 = vadd.f32 %v4337, %v4411
        %s4418 = sld [smem:[#allocation14 + $0x5d]]
        %v4419 = vstv %s4418
        %v4420 = vmul.f32 %v2843, %v4419
        %v4421 = vmul.f32 %v2844, %v4419
        %v4422 = vmul.f32 %v2845, %v4419
        %4426 = vrot.lane.b32.xlu0 %v4420, 123
        %v4427 = vpop.permute.xlu0 %4426
        %4428 = vrot.lane.b32.xlu0 %v4421, 123
        %v4429 = vpop.permute.xlu0 %4428
        %4430 = vrot.lane.b32.xlu0 %v4422, 123
        %v4431 = vpop.permute.xlu0 %4430
        %v4435 = vadd.f32 %v4355, %v4427
        %v4436 = vadd.f32 %v4356, %v4429
        %v4437 = vadd.f32 %v4357, %v4431
        %s4438 = sld [smem:[#allocation14 + $0x5e]]
        %v4439 = vstv %s4438
        %v4440 = vmul.f32 %v2843, %v4439
        %v4441 = vmul.f32 %v2844, %v4439
        %v4442 = vmul.f32 %v2845, %v4439
        %4446 = vrot.lane.b32.xlu0 %v4440, 123
        %v4447 = vpop.permute.xlu0 %4446
        %4448 = vrot.lane.b32.xlu0 %v4441, 123
        %v4449 = vpop.permute.xlu0 %4448
        %4450 = vrot.lane.b32.xlu0 %v4442, 123
        %v4451 = vpop.permute.xlu0 %4450
        %v4455 = vadd.f32 %v4375, %v4447
        %v4456 = vadd.f32 %v4376, %v4449
        %v4457 = vadd.f32 %v4377, %v4451
        %s4458 = sld [smem:[#allocation14 + $0x5f]]
        %v4459 = vstv %s4458
        %v4460 = vmul.f32 %v2843, %v4459
        %v4461 = vmul.f32 %v2844, %v4459
        %v4462 = vmul.f32 %v2845, %v4459
        %4466 = vrot.lane.b32.xlu0 %v4460, 123
        %v4467 = vpop.permute.xlu0 %4466
        %4468 = vrot.lane.b32.xlu0 %v4461, 123
        %v4469 = vpop.permute.xlu0 %4468
        %4470 = vrot.lane.b32.xlu0 %v4462, 123
        %v4471 = vpop.permute.xlu0 %4470
        %v4475 = vadd.f32 %v4395, %v4467
        %v4476 = vadd.f32 %v4396, %v4469
        %v4477 = vadd.f32 %v4397, %v4471
        %s4478 = sld [smem:[#allocation14 + $0x60]]
        %v4479 = vstv %s4478
        %v4480 = vmul.f32 %v2750, %v4479
        %v4481 = vmul.f32 %v2751, %v4479
        %v4482 = vmul.f32 %v2752, %v4479
        %4486 = vrot.lane.b32.xlu0 %v4480, 122
        %v4487 = vpop.permute.xlu0 %4486
        %4488 = vrot.lane.b32.xlu0 %v4481, 122
        %v4489 = vpop.permute.xlu0 %4488
        %4490 = vrot.lane.b32.xlu0 %v4482, 122
        %v4491 = vpop.permute.xlu0 %4490
        %v4495 = vadd.f32 %v4415, %v4487
        %v4496 = vadd.f32 %v4416, %v4489
        %v4497 = vadd.f32 %v4417, %v4491
        %s4498 = sld [smem:[#allocation14 + $0x61]]
        %v4499 = vstv %s4498
        %v4500 = vmul.f32 %v2750, %v4499
        %v4501 = vmul.f32 %v2751, %v4499
        %v4502 = vmul.f32 %v2752, %v4499
        %4506 = vrot.lane.b32.xlu0 %v4500, 122
        %v4507 = vpop.permute.xlu0 %4506
        %4508 = vrot.lane.b32.xlu0 %v4501, 122
        %v4509 = vpop.permute.xlu0 %4508
        %4510 = vrot.lane.b32.xlu0 %v4502, 122
        %v4511 = vpop.permute.xlu0 %4510
        %v4515 = vadd.f32 %v4435, %v4507
        %v4516 = vadd.f32 %v4436, %v4509
        %v4517 = vadd.f32 %v4437, %v4511
        %s4518 = sld [smem:[#allocation14 + $0x62]]
        %v4519 = vstv %s4518
        %v4520 = vmul.f32 %v2750, %v4519
        %v4521 = vmul.f32 %v2751, %v4519
        %v4522 = vmul.f32 %v2752, %v4519
        %4526 = vrot.lane.b32.xlu0 %v4520, 122
        %v4527 = vpop.permute.xlu0 %4526
        %4528 = vrot.lane.b32.xlu0 %v4521, 122
        %v4529 = vpop.permute.xlu0 %4528
        %4530 = vrot.lane.b32.xlu0 %v4522, 122
        %v4531 = vpop.permute.xlu0 %4530
        %v4535 = vadd.f32 %v4455, %v4527
        %v4536 = vadd.f32 %v4456, %v4529
        %v4537 = vadd.f32 %v4457, %v4531
        %s4538 = sld [smem:[#allocation14 + $0x63]]
        %v4539 = vstv %s4538
        %v4540 = vmul.f32 %v2750, %v4539
        %v4541 = vmul.f32 %v2751, %v4539
        %v4542 = vmul.f32 %v2752, %v4539
        %4546 = vrot.lane.b32.xlu0 %v4540, 122
        %v4547 = vpop.permute.xlu0 %4546
        %4548 = vrot.lane.b32.xlu0 %v4541, 122
        %v4549 = vpop.permute.xlu0 %4548
        %4550 = vrot.lane.b32.xlu0 %v4542, 122
        %v4551 = vpop.permute.xlu0 %4550
        %v4555 = vadd.f32 %v4475, %v4547
        %v4556 = vadd.f32 %v4476, %v4549
        %v4557 = vadd.f32 %v4477, %v4551
        %s4558 = sld [smem:[#allocation14 + $0x64]]
        %v4559 = vstv %s4558
        %v4560 = vmul.f32 %v2773, %v4559
        %v4561 = vmul.f32 %v2774, %v4559
        %v4562 = vmul.f32 %v2775, %v4559
        %4566 = vrot.lane.b32.xlu0 %v4560, 122
        %v4567 = vpop.permute.xlu0 %4566
        %4568 = vrot.lane.b32.xlu0 %v4561, 122
        %v4569 = vpop.permute.xlu0 %4568
        %4570 = vrot.lane.b32.xlu0 %v4562, 122
        %v4571 = vpop.permute.xlu0 %4570
        %v4575 = vadd.f32 %v4495, %v4567
        %v4576 = vadd.f32 %v4496, %v4569
        %v4577 = vadd.f32 %v4497, %v4571
        %s4578 = sld [smem:[#allocation14 + $0x65]]
        %v4579 = vstv %s4578
        %v4580 = vmul.f32 %v2773, %v4579
        %v4581 = vmul.f32 %v2774, %v4579
        %v4582 = vmul.f32 %v2775, %v4579
        %4586 = vrot.lane.b32.xlu0 %v4580, 122
        %v4587 = vpop.permute.xlu0 %4586
        %4588 = vrot.lane.b32.xlu0 %v4581, 122
        %v4589 = vpop.permute.xlu0 %4588
        %4590 = vrot.lane.b32.xlu0 %v4582, 122
        %v4591 = vpop.permute.xlu0 %4590
        %v4595 = vadd.f32 %v4515, %v4587
        %v4596 = vadd.f32 %v4516, %v4589
        %v4597 = vadd.f32 %v4517, %v4591
        %s4598 = sld [smem:[#allocation14 + $0x66]]
        %v4599 = vstv %s4598
        %v4600 = vmul.f32 %v2773, %v4599
        %v4601 = vmul.f32 %v2774, %v4599
        %v4602 = vmul.f32 %v2775, %v4599
        %4606 = vrot.lane.b32.xlu0 %v4600, 122
        %v4607 = vpop.permute.xlu0 %4606
        %4608 = vrot.lane.b32.xlu0 %v4601, 122
        %v4609 = vpop.permute.xlu0 %4608
        %4610 = vrot.lane.b32.xlu0 %v4602, 122
        %v4611 = vpop.permute.xlu0 %4610
        %v4615 = vadd.f32 %v4535, %v4607
        %v4616 = vadd.f32 %v4536, %v4609
        %v4617 = vadd.f32 %v4537, %v4611
        %s4618 = sld [smem:[#allocation14 + $0x67]]
        %v4619 = vstv %s4618
        %v4620 = vmul.f32 %v2773, %v4619
        %v4621 = vmul.f32 %v2774, %v4619
        %v4622 = vmul.f32 %v2775, %v4619
        %4626 = vrot.lane.b32.xlu0 %v4620, 122
        %v4627 = vpop.permute.xlu0 %4626
        %4628 = vrot.lane.b32.xlu0 %v4621, 122
        %v4629 = vpop.permute.xlu0 %4628
        %4630 = vrot.lane.b32.xlu0 %v4622, 122
        %v4631 = vpop.permute.xlu0 %4630
        %v4635 = vadd.f32 %v4555, %v4627
        %v4636 = vadd.f32 %v4556, %v4629
        %v4637 = vadd.f32 %v4557, %v4631
        %s4638 = sld [smem:[#allocation14 + $0x68]]
        %v4639 = vstv %s4638
        %v4640 = vmul.f32 %v2808, %v4639
        %v4641 = vmul.f32 %v2809, %v4639
        %v4642 = vmul.f32 %v2810, %v4639
        %4646 = vrot.lane.b32.xlu0 %v4640, 122
        %v4647 = vpop.permute.xlu0 %4646
        %4648 = vrot.lane.b32.xlu0 %v4641, 122
        %v4649 = vpop.permute.xlu0 %4648
        %4650 = vrot.lane.b32.xlu0 %v4642, 122
        %v4651 = vpop.permute.xlu0 %4650
        %v4655 = vadd.f32 %v4575, %v4647
        %v4656 = vadd.f32 %v4576, %v4649
        %v4657 = vadd.f32 %v4577, %v4651
        %s4658 = sld [smem:[#allocation14 + $0x69]]
        %v4659 = vstv %s4658
        %v4660 = vmul.f32 %v2808, %v4659
        %v4661 = vmul.f32 %v2809, %v4659
        %v4662 = vmul.f32 %v2810, %v4659
        %4666 = vrot.lane.b32.xlu0 %v4660, 122
        %v4667 = vpop.permute.xlu0 %4666
        %4668 = vrot.lane.b32.xlu0 %v4661, 122
        %v4669 = vpop.permute.xlu0 %4668
        %4670 = vrot.lane.b32.xlu0 %v4662, 122
        %v4671 = vpop.permute.xlu0 %4670
        %v4675 = vadd.f32 %v4595, %v4667
        %v4676 = vadd.f32 %v4596, %v4669
        %v4677 = vadd.f32 %v4597, %v4671
        %s4678 = sld [smem:[#allocation14 + $0x6a]]
        %v4679 = vstv %s4678
        %v4680 = vmul.f32 %v2808, %v4679
        %v4681 = vmul.f32 %v2809, %v4679
        %v4682 = vmul.f32 %v2810, %v4679
        %4686 = vrot.lane.b32.xlu0 %v4680, 122
        %v4687 = vpop.permute.xlu0 %4686
        %4688 = vrot.lane.b32.xlu0 %v4681, 122
        %v4689 = vpop.permute.xlu0 %4688
        %4690 = vrot.lane.b32.xlu0 %v4682, 122
        %v4691 = vpop.permute.xlu0 %4690
        %v4695 = vadd.f32 %v4615, %v4687
        %v4696 = vadd.f32 %v4616, %v4689
        %v4697 = vadd.f32 %v4617, %v4691
        %s4698 = sld [smem:[#allocation14 + $0x6b]]
        %v4699 = vstv %s4698
        %v4700 = vmul.f32 %v2808, %v4699
        %v4701 = vmul.f32 %v2809, %v4699
        %v4702 = vmul.f32 %v2810, %v4699
        %4706 = vrot.lane.b32.xlu0 %v4700, 122
        %v4707 = vpop.permute.xlu0 %4706
        %4708 = vrot.lane.b32.xlu0 %v4701, 122
        %v4709 = vpop.permute.xlu0 %4708
        %4710 = vrot.lane.b32.xlu0 %v4702, 122
        %v4711 = vpop.permute.xlu0 %4710
        %v4715 = vadd.f32 %v4635, %v4707
        %v4716 = vadd.f32 %v4636, %v4709
        %v4717 = vadd.f32 %v4637, %v4711
        %s4718 = sld [smem:[#allocation14 + $0x6c]]
        %v4719 = vstv %s4718
        %v4720 = vmul.f32 %v2843, %v4719
        %v4721 = vmul.f32 %v2844, %v4719
        %v4722 = vmul.f32 %v2845, %v4719
        %4726 = vrot.lane.b32.xlu0 %v4720, 122
        %v4727 = vpop.permute.xlu0 %4726
        %4728 = vrot.lane.b32.xlu0 %v4721, 122
        %v4729 = vpop.permute.xlu0 %4728
        %4730 = vrot.lane.b32.xlu0 %v4722, 122
        %v4731 = vpop.permute.xlu0 %4730
        %v4735 = vadd.f32 %v4655, %v4727
        %v4736 = vadd.f32 %v4656, %v4729
        %v4737 = vadd.f32 %v4657, %v4731
        %s4738 = sld [smem:[#allocation14 + $0x6d]]
        %v4739 = vstv %s4738
        %v4740 = vmul.f32 %v2843, %v4739
        %v4741 = vmul.f32 %v2844, %v4739
        %v4742 = vmul.f32 %v2845, %v4739
        %4746 = vrot.lane.b32.xlu0 %v4740, 122
        %v4747 = vpop.permute.xlu0 %4746
        %4748 = vrot.lane.b32.xlu0 %v4741, 122
        %v4749 = vpop.permute.xlu0 %4748
        %4750 = vrot.lane.b32.xlu0 %v4742, 122
        %v4751 = vpop.permute.xlu0 %4750
        %v4755 = vadd.f32 %v4675, %v4747
        %v4756 = vadd.f32 %v4676, %v4749
        %v4757 = vadd.f32 %v4677, %v4751
        %s4758 = sld [smem:[#allocation14 + $0x6e]]
        %v4759 = vstv %s4758
        %v4760 = vmul.f32 %v2843, %v4759
        %v4761 = vmul.f32 %v2844, %v4759
        %v4762 = vmul.f32 %v2845, %v4759
        %4766 = vrot.lane.b32.xlu0 %v4760, 122
        %v4767 = vpop.permute.xlu0 %4766
        %4768 = vrot.lane.b32.xlu0 %v4761, 122
        %v4769 = vpop.permute.xlu0 %4768
        %4770 = vrot.lane.b32.xlu0 %v4762, 122
        %v4771 = vpop.permute.xlu0 %4770
        %v4775 = vadd.f32 %v4695, %v4767
        %v4776 = vadd.f32 %v4696, %v4769
        %v4777 = vadd.f32 %v4697, %v4771
        %s4778 = sld [smem:[#allocation14 + $0x6f]]
        %v4779 = vstv %s4778
        %v4780 = vmul.f32 %v2843, %v4779
        %v4781 = vmul.f32 %v2844, %v4779
        %v4782 = vmul.f32 %v2845, %v4779
        %4786 = vrot.lane.b32.xlu0 %v4780, 122
        %v4787 = vpop.permute.xlu0 %4786
        %4788 = vrot.lane.b32.xlu0 %v4781, 122
        %v4789 = vpop.permute.xlu0 %4788
        %4790 = vrot.lane.b32.xlu0 %v4782, 122
        %v4791 = vpop.permute.xlu0 %4790
        %v4795 = vadd.f32 %v4715, %v4787
        %v4796 = vadd.f32 %v4716, %v4789
        %v4797 = vadd.f32 %v4717, %v4791
        %4798 = vst.msk [vmem:[#allocation3] sm:$0xff] %vm2738, %v4735
        %4799 = vst.msk [vmem:[#allocation3 + $0x8] sm:$0xff] %vm2738, %v4736
        %vm4800 = vcmask 128000
        %4801 = vst.msk [vmem:[#allocation3 + $0x10] sm:$0x3f] %vm4800, %v4737
        %v4802 = vld [vmem:[#allocation3 + $0x3] sm:$0xff]
        %v4803 = vld [vmem:[#allocation3 + $0xb] sm:$0xff]
        %s4804 = sld [smem:[#allocation15]]
        %v4805 = vstv %s4804
        %v4806 = vadd.f32 %v4802, %v4805
        %v4807 = vadd.f32 %v4803, %v4805
        %4808 = vst.msk [vmem:[#allocation3 + $0x3] sm:$0xff] %vm2738, %v4806
        %4809 = vst.msk [vmem:[#allocation3 + $0xb] sm:$0xff] %vm2738, %v4807
        %4810 = vst.msk [vmem:[%s1249] sm:$0xff] %vm2738, %v4755
        %4811 = vst.msk [vmem:[%s1249 + $0x8] sm:$0xff] %vm2738, %v4756
        %4812 = vst.msk [vmem:[%s1249 + $0x10] sm:$0x3f] %vm4800, %v4757
        %v4813 = vld [vmem:[%s1249 + $0x3] sm:$0xff]
        %v4814 = vld [vmem:[%s1249 + $0xb] sm:$0xff]
        %s4815 = sld [smem:[#allocation15 + $0x1]]
        %v4816 = vstv %s4815
        %v4817 = vadd.f32 %v4813, %v4816
        %v4818 = vadd.f32 %v4814, %v4816
        %4819 = vst.msk [vmem:[%s1249 + $0x3] sm:$0xff] %vm2738, %v4817
        %4820 = vst.msk [vmem:[%s1249 + $0xb] sm:$0xff] %vm2738, %v4818
        %4821 = vst.msk [vmem:[%s1260] sm:$0xff] %vm2738, %v4775
        %4822 = vst.msk [vmem:[%s1260 + $0x8] sm:$0xff] %vm2738, %v4776
        %4823 = vst.msk [vmem:[%s1260 + $0x10] sm:$0x3f] %vm4800, %v4777
        %v4824 = vld [vmem:[%s1260 + $0x3] sm:$0xff]
        %v4825 = vld [vmem:[%s1260 + $0xb] sm:$0xff]
        %s4826 = sld [smem:[#allocation15 + $0x2]]
        %v4827 = vstv %s4826
        %v4828 = vadd.f32 %v4824, %v4827
        %v4829 = vadd.f32 %v4825, %v4827
        %4830 = vst.msk [vmem:[%s1260 + $0x3] sm:$0xff] %vm2738, %v4828
        %4831 = vst.msk [vmem:[%s1260 + $0xb] sm:$0xff] %vm2738, %v4829
        %4832 = vst.msk [vmem:[%s1271] sm:$0xff] %vm2738, %v4795
        %4833 = vst.msk [vmem:[%s1271 + $0x8] sm:$0xff] %vm2738, %v4796
        %4834 = vst.msk [vmem:[%s1271 + $0x10] sm:$0x3f] %vm4800, %v4797
        %v4835 = vld [vmem:[%s1271 + $0x3] sm:$0xff]
        %v4836 = vld [vmem:[%s1271 + $0xb] sm:$0xff]
        %s4837 = sld [smem:[#allocation15 + $0x3]]
        %v4838 = vstv %s4837
        %v4839 = vadd.f32 %v4835, %v4838
        %v4840 = vadd.f32 %v4836, %v4838
        %4841 = vst.msk [vmem:[%s1271 + $0x3] sm:$0xff] %vm2738, %v4839
        %4842 = vst.msk [vmem:[%s1271 + $0xb] sm:$0xff] %vm2738, %v4840
        %s4843 = sld [smem:[#allocation18]]
        %v4844 = vstv %s4843
        %s4845 = sld [smem:[#allocation18 + $0x1]]
        %v4846 = vstv %s4845
        %s4847 = sld [smem:[#allocation18 + $0x2]]
        %v4848 = vstv %s4847
        %s4849 = sld [smem:[#allocation18 + $0x3]]
        %v4850 = vstv %s4849
        %v4851 = vld [vmem:[#allocation3] sm:$0xff]
        %v4852 = vld [vmem:[#allocation3 + $0x8] sm:$0xff]
        %s4853 = sld [smem:[#allocation17]]
        %v4854 = vstv %s4853
        %v4855 = vmul.f32 %v4851, %v4854
        %v4856 = vmul.f32 %v4852, %v4854
        %v4857 = vadd.f32 %v4844, %v4855
        %v4858 = vadd.f32 %v4844, %v4856
        %s4859 = sld [smem:[#allocation17 + $0x1]]
        %v4860 = vstv %s4859
        %v4861 = vmul.f32 %v4851, %v4860
        %v4862 = vmul.f32 %v4852, %v4860
        %v4863 = vadd.f32 %v4846, %v4861
        %v4864 = vadd.f32 %v4846, %v4862
        %s4865 = sld [smem:[#allocation17 + $0x2]]
        %v4866 = vstv %s4865
        %v4867 = vmul.f32 %v4851, %v4866
        %v4868 = vmul.f32 %v4852, %v4866
        %v4869 = vadd.f32 %v4848, %v4867
        %v4870 = vadd.f32 %v4848, %v4868
        %s4871 = sld [smem:[#allocation17 + $0x3]]
        %v4872 = vstv %s4871
        %v4873 = vmul.f32 %v4851, %v4872
        %v4874 = vmul.f32 %v4852, %v4872
        %v4875 = vadd.f32 %v4850, %v4873
        %v4876 = vadd.f32 %v4850, %v4874
        %v4877 = vld [vmem:[%s1249] sm:$0xff]
        %v4878 = vld [vmem:[%s1249 + $0x8] sm:$0xff]
        %s4879 = sld [smem:[#allocation17 + $0x4]]
        %v4880 = vstv %s4879
        %v4881 = vmul.f32 %v4877, %v4880
        %v4882 = vmul.f32 %v4878, %v4880
        %v4883 = vadd.f32 %v4857, %v4881
        %v4884 = vadd.f32 %v4858, %v4882
        %s4885 = sld [smem:[#allocation17 + $0x5]]
        %v4886 = vstv %s4885
        %v4887 = vmul.f32 %v4877, %v4886
        %v4888 = vmul.f32 %v4878, %v4886
        %v4889 = vadd.f32 %v4863, %v4887
        %v4890 = vadd.f32 %v4864, %v4888
        %s4891 = sld [smem:[#allocation17 + $0x6]]
        %v4892 = vstv %s4891
        %v4893 = vmul.f32 %v4877, %v4892
        %v4894 = vmul.f32 %v4878, %v4892
        %v4895 = vadd.f32 %v4869, %v4893
        %v4896 = vadd.f32 %v4870, %v4894
        %s4897 = sld [smem:[#allocation17 + $0x7]]
        %v4898 = vstv %s4897
        %v4899 = vmul.f32 %v4877, %v4898
        %v4900 = vmul.f32 %v4878, %v4898
        %v4901 = vadd.f32 %v4875, %v4899
        %v4902 = vadd.f32 %v4876, %v4900
        %v4903 = vld [vmem:[%s1260] sm:$0xff]
        %v4904 = vld [vmem:[%s1260 + $0x8] sm:$0xff]
        %s4905 = sld [smem:[#allocation17 + $0x8]]
        %v4906 = vstv %s4905
        %v4907 = vmul.f32 %v4903, %v4906
        %v4908 = vmul.f32 %v4904, %v4906
        %v4909 = vadd.f32 %v4883, %v4907
        %v4910 = vadd.f32 %v4884, %v4908
        %s4911 = sld [smem:[#allocation17 + $0x9]]
        %v4912 = vstv %s4911
        %v4913 = vmul.f32 %v4903, %v4912
        %v4914 = vmul.f32 %v4904, %v4912
        %v4915 = vadd.f32 %v4889, %v4913
        %v4916 = vadd.f32 %v4890, %v4914
        %s4917 = sld [smem:[#allocation17 + $0xa]]
        %v4918 = vstv %s4917
        %v4919 = vmul.f32 %v4903, %v4918
        %v4920 = vmul.f32 %v4904, %v4918
        %v4921 = vadd.f32 %v4895, %v4919
        %v4922 = vadd.f32 %v4896, %v4920
        %s4923 = sld [smem:[#allocation17 + $0xb]]
        %v4924 = vstv %s4923
        %v4925 = vmul.f32 %v4903, %v4924
        %v4926 = vmul.f32 %v4904, %v4924
        %v4927 = vadd.f32 %v4901, %v4925
        %v4928 = vadd.f32 %v4902, %v4926
        %v4929 = vld [vmem:[%s1271] sm:$0xff]
        %v4930 = vld [vmem:[%s1271 + $0x8] sm:$0xff]
        %s4931 = sld [smem:[#allocation17 + $0xc]]
        %v4932 = vstv %s4931
        %v4933 = vmul.f32 %v4929, %v4932
        %v4934 = vmul.f32 %v4930, %v4932
        %v4935 = vadd.f32 %v4909, %v4933
        %v4936 = vadd.f32 %v4910, %v4934
        %s4937 = sld [smem:[#allocation17 + $0xd]]
        %v4938 = vstv %s4937
        %v4939 = vmul.f32 %v4929, %v4938
        %v4940 = vmul.f32 %v4930, %v4938
        %v4941 = vadd.f32 %v4915, %v4939
        %v4942 = vadd.f32 %v4916, %v4940
        %s4943 = sld [smem:[#allocation17 + $0xe]]
        %v4944 = vstv %s4943
        %v4945 = vmul.f32 %v4929, %v4944
        %v4946 = vmul.f32 %v4930, %v4944
        %v4947 = vadd.f32 %v4921, %v4945
        %v4948 = vadd.f32 %v4922, %v4946
        %s4949 = sld [smem:[#allocation17 + $0xf]]
        %v4950 = vstv %s4949
        %v4951 = vmul.f32 %v4929, %v4950
        %v4952 = vmul.f32 %v4930, %v4950
        %v4953 = vadd.f32 %v4927, %v4951
        %v4954 = vadd.f32 %v4928, %v4952
        %v4955 = vld [vmem:[#allocation3 + $0x1] sm:$0xff]
        %v4956 = vld [vmem:[#allocation3 + $0x9] sm:$0xff]
        %s4957 = sld [smem:[#allocation17 + $0x10]]
        %v4958 = vstv %s4957
        %v4959 = vmul.f32 %v4955, %v4958
        %v4960 = vmul.f32 %v4956, %v4958
        %v4961 = vadd.f32 %v4935, %v4959
        %v4962 = vadd.f32 %v4936, %v4960
        %s4963 = sld [smem:[#allocation17 + $0x11]]
        %v4964 = vstv %s4963
        %v4965 = vmul.f32 %v4955, %v4964
        %v4966 = vmul.f32 %v4956, %v4964
        %v4967 = vadd.f32 %v4941, %v4965
        %v4968 = vadd.f32 %v4942, %v4966
        %s4969 = sld [smem:[#allocation17 + $0x12]]
        %v4970 = vstv %s4969
        %v4971 = vmul.f32 %v4955, %v4970
        %v4972 = vmul.f32 %v4956, %v4970
        %v4973 = vadd.f32 %v4947, %v4971
        %v4974 = vadd.f32 %v4948, %v4972
        %s4975 = sld [smem:[#allocation17 + $0x13]]
        %v4976 = vstv %s4975
        %v4977 = vmul.f32 %v4955, %v4976
        %v4978 = vmul.f32 %v4956, %v4976
        %v4979 = vadd.f32 %v4953, %v4977
        %v4980 = vadd.f32 %v4954, %v4978
        %v4981 = vld [vmem:[%s1249 + $0x1] sm:$0xff]
        %v4982 = vld [vmem:[%s1249 + $0x9] sm:$0xff]
        %s4983 = sld [smem:[#allocation17 + $0x14]]
        %v4984 = vstv %s4983
        %v4985 = vmul.f32 %v4981, %v4984
        %v4986 = vmul.f32 %v4982, %v4984
        %v4987 = vadd.f32 %v4961, %v4985
        %v4988 = vadd.f32 %v4962, %v4986
        %s4989 = sld [smem:[#allocation17 + $0x15]]
        %v4990 = vstv %s4989
        %v4991 = vmul.f32 %v4981, %v4990
        %v4992 = vmul.f32 %v4982, %v4990
        %v4993 = vadd.f32 %v4967, %v4991
        %v4994 = vadd.f32 %v4968, %v4992
        %s4995 = sld [smem:[#allocation17 + $0x16]]
        %v4996 = vstv %s4995
        %v4997 = vmul.f32 %v4981, %v4996
        %v4998 = vmul.f32 %v4982, %v4996
        %v4999 = vadd.f32 %v4973, %v4997
        %v5000 = vadd.f32 %v4974, %v4998
        %s5001 = sld [smem:[#allocation17 + $0x17]]
        %v5002 = vstv %s5001
        %v5003 = vmul.f32 %v4981, %v5002
        %v5004 = vmul.f32 %v4982, %v5002
        %v5005 = vadd.f32 %v4979, %v5003
        %v5006 = vadd.f32 %v4980, %v5004
        %v5007 = vld [vmem:[%s1260 + $0x1] sm:$0xff]
        %v5008 = vld [vmem:[%s1260 + $0x9] sm:$0xff]
        %s5009 = sld [smem:[#allocation17 + $0x18]]
        %v5010 = vstv %s5009
        %v5011 = vmul.f32 %v5007, %v5010
        %v5012 = vmul.f32 %v5008, %v5010
        %v5013 = vadd.f32 %v4987, %v5011
        %v5014 = vadd.f32 %v4988, %v5012
        %s5015 = sld [smem:[#allocation17 + $0x19]]
        %v5016 = vstv %s5015
        %v5017 = vmul.f32 %v5007, %v5016
        %v5018 = vmul.f32 %v5008, %v5016
        %v5019 = vadd.f32 %v4993, %v5017
        %v5020 = vadd.f32 %v4994, %v5018
        %s5021 = sld [smem:[#allocation17 + $0x1a]]
        %v5022 = vstv %s5021
        %v5023 = vmul.f32 %v5007, %v5022
        %v5024 = vmul.f32 %v5008, %v5022
        %v5025 = vadd.f32 %v4999, %v5023
        %v5026 = vadd.f32 %v5000, %v5024
        %s5027 = sld [smem:[#allocation17 + $0x1b]]
        %v5028 = vstv %s5027
        %v5029 = vmul.f32 %v5007, %v5028
        %v5030 = vmul.f32 %v5008, %v5028
        %v5031 = vadd.f32 %v5005, %v5029
        %v5032 = vadd.f32 %v5006, %v5030
        %v5033 = vld [vmem:[%s1271 + $0x1] sm:$0xff]
        %v5034 = vld [vmem:[%s1271 + $0x9] sm:$0xff]
        %s5035 = sld [smem:[#allocation17 + $0x1c]]
        %v5036 = vstv %s5035
        %v5037 = vmul.f32 %v5033, %v5036
        %v5038 = vmul.f32 %v5034, %v5036
        %v5039 = vadd.f32 %v5013, %v5037
        %v5040 = vadd.f32 %v5014, %v5038
        %s5041 = sld [smem:[#allocation17 + $0x1d]]
        %v5042 = vstv %s5041
        %v5043 = vmul.f32 %v5033, %v5042
        %v5044 = vmul.f32 %v5034, %v5042
        %v5045 = vadd.f32 %v5019, %v5043
        %v5046 = vadd.f32 %v5020, %v5044
        %s5047 = sld [smem:[#allocation17 + $0x1e]]
        %v5048 = vstv %s5047
        %v5049 = vmul.f32 %v5033, %v5048
        %v5050 = vmul.f32 %v5034, %v5048
        %v5051 = vadd.f32 %v5025, %v5049
        %v5052 = vadd.f32 %v5026, %v5050
        %s5053 = sld [smem:[#allocation17 + $0x1f]]
        %v5054 = vstv %s5053
        %v5055 = vmul.f32 %v5033, %v5054
        %v5056 = vmul.f32 %v5034, %v5054
        %v5057 = vadd.f32 %v5031, %v5055
        %v5058 = vadd.f32 %v5032, %v5056
        %v5059 = vld [vmem:[#allocation3 + $0x2] sm:$0xff]
        %v5060 = vld [vmem:[#allocation3 + $0xa] sm:$0xff]
        %s5061 = sld [smem:[#allocation17 + $0x20]]
        %v5062 = vstv %s5061
        %v5063 = vmul.f32 %v5059, %v5062
        %v5064 = vmul.f32 %v5060, %v5062
        %v5065 = vadd.f32 %v5039, %v5063
        %v5066 = vadd.f32 %v5040, %v5064
        %s5067 = sld [smem:[#allocation17 + $0x21]]
        %v5068 = vstv %s5067
        %v5069 = vmul.f32 %v5059, %v5068
        %v5070 = vmul.f32 %v5060, %v5068
        %v5071 = vadd.f32 %v5045, %v5069
        %v5072 = vadd.f32 %v5046, %v5070
        %s5073 = sld [smem:[#allocation17 + $0x22]]
        %v5074 = vstv %s5073
        %v5075 = vmul.f32 %v5059, %v5074
        %v5076 = vmul.f32 %v5060, %v5074
        %v5077 = vadd.f32 %v5051, %v5075
        %v5078 = vadd.f32 %v5052, %v5076
        %s5079 = sld [smem:[#allocation17 + $0x23]]
        %v5080 = vstv %s5079
        %v5081 = vmul.f32 %v5059, %v5080
        %v5082 = vmul.f32 %v5060, %v5080
        %v5083 = vadd.f32 %v5057, %v5081
        %v5084 = vadd.f32 %v5058, %v5082
        %v5085 = vld [vmem:[%s1249 + $0x2] sm:$0xff]
        %v5086 = vld [vmem:[%s1249 + $0xa] sm:$0xff]
        %s5087 = sld [smem:[#allocation17 + $0x24]]
        %v5088 = vstv %s5087
        %v5089 = vmul.f32 %v5085, %v5088
        %v5090 = vmul.f32 %v5086, %v5088
        %v5091 = vadd.f32 %v5065, %v5089
        %v5092 = vadd.f32 %v5066, %v5090
        %s5093 = sld [smem:[#allocation17 + $0x25]]
        %v5094 = vstv %s5093
        %v5095 = vmul.f32 %v5085, %v5094
        %v5096 = vmul.f32 %v5086, %v5094
        %v5097 = vadd.f32 %v5071, %v5095
        %v5098 = vadd.f32 %v5072, %v5096
        %s5099 = sld [smem:[#allocation17 + $0x26]]
        %v5100 = vstv %s5099
        %v5101 = vmul.f32 %v5085, %v5100
        %v5102 = vmul.f32 %v5086, %v5100
        %v5103 = vadd.f32 %v5077, %v5101
        %v5104 = vadd.f32 %v5078, %v5102
        %s5105 = sld [smem:[#allocation17 + $0x27]]
        %v5106 = vstv %s5105
        %v5107 = vmul.f32 %v5085, %v5106
        %v5108 = vmul.f32 %v5086, %v5106
        %v5109 = vadd.f32 %v5083, %v5107
        %v5110 = vadd.f32 %v5084, %v5108
        %v5111 = vld [vmem:[%s1260 + $0x2] sm:$0xff]
        %v5112 = vld [vmem:[%s1260 + $0xa] sm:$0xff]
        %s5113 = sld [smem:[#allocation17 + $0x28]]
        %v5114 = vstv %s5113
        %v5115 = vmul.f32 %v5111, %v5114
        %v5116 = vmul.f32 %v5112, %v5114
        %v5117 = vadd.f32 %v5091, %v5115
        %v5118 = vadd.f32 %v5092, %v5116
        %s5119 = sld [smem:[#allocation17 + $0x29]]
        %v5120 = vstv %s5119
        %v5121 = vmul.f32 %v5111, %v5120
        %v5122 = vmul.f32 %v5112, %v5120
        %v5123 = vadd.f32 %v5097, %v5121
        %v5124 = vadd.f32 %v5098, %v5122
        %s5125 = sld [smem:[#allocation17 + $0x2a]]
        %v5126 = vstv %s5125
        %v5127 = vmul.f32 %v5111, %v5126
        %v5128 = vmul.f32 %v5112, %v5126
        %v5129 = vadd.f32 %v5103, %v5127
        %v5130 = vadd.f32 %v5104, %v5128
        %s5131 = sld [smem:[#allocation17 + $0x2b]]
        %v5132 = vstv %s5131
        %v5133 = vmul.f32 %v5111, %v5132
        %v5134 = vmul.f32 %v5112, %v5132
        %v5135 = vadd.f32 %v5109, %v5133
        %v5136 = vadd.f32 %v5110, %v5134
        %v5137 = vld [vmem:[%s1271 + $0x2] sm:$0xff]
        %v5138 = vld [vmem:[%s1271 + $0xa] sm:$0xff]
        %s5139 = sld [smem:[#allocation17 + $0x2c]]
        %v5140 = vstv %s5139
        %v5141 = vmul.f32 %v5137, %v5140
        %v5142 = vmul.f32 %v5138, %v5140
        %v5143 = vadd.f32 %v5117, %v5141
        %v5144 = vadd.f32 %v5118, %v5142
        %s5145 = sld [smem:[#allocation17 + $0x2d]]
        %v5146 = vstv %s5145
        %v5147 = vmul.f32 %v5137, %v5146
        %v5148 = vmul.f32 %v5138, %v5146
        %v5149 = vadd.f32 %v5123, %v5147
        %v5150 = vadd.f32 %v5124, %v5148
        %s5151 = sld [smem:[#allocation17 + $0x2e]]
        %v5152 = vstv %s5151
        %v5153 = vmul.f32 %v5137, %v5152
        %v5154 = vmul.f32 %v5138, %v5152
        %v5155 = vadd.f32 %v5129, %v5153
        %v5156 = vadd.f32 %v5130, %v5154
        %s5157 = sld [smem:[#allocation17 + $0x2f]]
        %v5158 = vstv %s5157
        %v5159 = vmul.f32 %v5137, %v5158
        %v5160 = vmul.f32 %v5138, %v5158
        %v5161 = vadd.f32 %v5135, %v5159
        %v5162 = vadd.f32 %v5136, %v5160
        %v5163 = vld [vmem:[#allocation3 + $0x3] sm:$0xff]
        %v5164 = vld [vmem:[#allocation3 + $0xb] sm:$0xff]
        %s5165 = sld [smem:[#allocation17 + $0x30]]
        %v5166 = vstv %s5165
        %v5167 = vmul.f32 %v5163, %v5166
        %v5168 = vmul.f32 %v5164, %v5166
        %v5169 = vadd.f32 %v5143, %v5167
        %v5170 = vadd.f32 %v5144, %v5168
        %s5171 = sld [smem:[#allocation17 + $0x31]]
        %v5172 = vstv %s5171
        %v5173 = vmul.f32 %v5163, %v5172
        %v5174 = vmul.f32 %v5164, %v5172
        %v5175 = vadd.f32 %v5149, %v5173
        %v5176 = vadd.f32 %v5150, %v5174
        %s5177 = sld [smem:[#allocation17 + $0x32]]
        %v5178 = vstv %s5177
        %v5179 = vmul.f32 %v5163, %v5178
        %v5180 = vmul.f32 %v5164, %v5178
        %v5181 = vadd.f32 %v5155, %v5179
        %v5182 = vadd.f32 %v5156, %v5180
        %s5183 = sld [smem:[#allocation17 + $0x33]]
        %v5184 = vstv %s5183
        %v5185 = vmul.f32 %v5163, %v5184
        %v5186 = vmul.f32 %v5164, %v5184
        %v5187 = vadd.f32 %v5161, %v5185
        %v5188 = vadd.f32 %v5162, %v5186
        %v5189 = vld [vmem:[%s1249 + $0x3] sm:$0xff]
        %v5190 = vld [vmem:[%s1249 + $0xb] sm:$0xff]
        %s5191 = sld [smem:[#allocation17 + $0x34]]
        %v5192 = vstv %s5191
        %v5193 = vmul.f32 %v5189, %v5192
        %v5194 = vmul.f32 %v5190, %v5192
        %v5195 = vadd.f32 %v5169, %v5193
        %v5196 = vadd.f32 %v5170, %v5194
        %s5197 = sld [smem:[#allocation17 + $0x35]]
        %v5198 = vstv %s5197
        %v5199 = vmul.f32 %v5189, %v5198
        %v5200 = vmul.f32 %v5190, %v5198
        %v5201 = vadd.f32 %v5175, %v5199
        %v5202 = vadd.f32 %v5176, %v5200
        %s5203 = sld [smem:[#allocation17 + $0x36]]
        %v5204 = vstv %s5203
        %v5205 = vmul.f32 %v5189, %v5204
        %v5206 = vmul.f32 %v5190, %v5204
        %v5207 = vadd.f32 %v5181, %v5205
        %v5208 = vadd.f32 %v5182, %v5206
        %s5209 = sld [smem:[#allocation17 + $0x37]]
        %v5210 = vstv %s5209
        %v5211 = vmul.f32 %v5189, %v5210
        %v5212 = vmul.f32 %v5190, %v5210
        %v5213 = vadd.f32 %v5187, %v5211
        %v5214 = vadd.f32 %v5188, %v5212
        %v5215 = vld [vmem:[%s1260 + $0x3] sm:$0xff]
        %v5216 = vld [vmem:[%s1260 + $0xb] sm:$0xff]
        %s5217 = sld [smem:[#allocation17 + $0x38]]
        %v5218 = vstv %s5217
        %v5219 = vmul.f32 %v5215, %v5218
        %v5220 = vmul.f32 %v5216, %v5218
        %v5221 = vadd.f32 %v5195, %v5219
        %v5222 = vadd.f32 %v5196, %v5220
        %s5223 = sld [smem:[#allocation17 + $0x39]]
        %v5224 = vstv %s5223
        %v5225 = vmul.f32 %v5215, %v5224
        %v5226 = vmul.f32 %v5216, %v5224
        %v5227 = vadd.f32 %v5201, %v5225
        %v5228 = vadd.f32 %v5202, %v5226
        %s5229 = sld [smem:[#allocation17 + $0x3a]]
        %v5230 = vstv %s5229
        %v5231 = vmul.f32 %v5215, %v5230
        %v5232 = vmul.f32 %v5216, %v5230
        %v5233 = vadd.f32 %v5207, %v5231
        %v5234 = vadd.f32 %v5208, %v5232
        %s5235 = sld [smem:[#allocation17 + $0x3b]]
        %v5236 = vstv %s5235
        %v5237 = vmul.f32 %v5215, %v5236
        %v5238 = vmul.f32 %v5216, %v5236
        %v5239 = vadd.f32 %v5213, %v5237
        %v5240 = vadd.f32 %v5214, %v5238
        %v5241 = vld [vmem:[%s1271 + $0x3] sm:$0xff]
        %v5242 = vld [vmem:[%s1271 + $0xb] sm:$0xff]
        %s5243 = sld [smem:[#allocation17 + $0x3c]]
        %v5244 = vstv %s5243
        %v5245 = vmul.f32 %v5241, %v5244
        %v5246 = vmul.f32 %v5242, %v5244
        %v5247 = vadd.f32 %v5221, %v5245
        %v5248 = vadd.f32 %v5222, %v5246
        %s5249 = sld [smem:[#allocation17 + $0x3d]]
        %v5250 = vstv %s5249
        %v5251 = vmul.f32 %v5241, %v5250
        %v5252 = vmul.f32 %v5242, %v5250
        %v5253 = vadd.f32 %v5227, %v5251
        %v5254 = vadd.f32 %v5228, %v5252
        %s5255 = sld [smem:[#allocation17 + $0x3e]]
        %v5256 = vstv %s5255
        %v5257 = vmul.f32 %v5241, %v5256
        %v5258 = vmul.f32 %v5242, %v5256
        %v5259 = vadd.f32 %v5233, %v5257
        %v5260 = vadd.f32 %v5234, %v5258
        %s5261 = sld [smem:[#allocation17 + $0x3f]]
        %v5262 = vstv %s5261
        %v5263 = vmul.f32 %v5241, %v5262
        %v5264 = vmul.f32 %v5242, %v5262
        %v5265 = vadd.f32 %v5239, %v5263
        %v5266 = vadd.f32 %v5240, %v5264
        %v5267 = vld [vmem:[#allocation3 + $0x4] sm:$0xff]
        %v5268 = vld [vmem:[#allocation3 + $0xc] sm:$0xff]
        %s5269 = sld [smem:[#allocation17 + $0x40]]
        %v5270 = vstv %s5269
        %v5271 = vmul.f32 %v5267, %v5270
        %v5272 = vmul.f32 %v5268, %v5270
        %v5273 = vadd.f32 %v5247, %v5271
        %v5274 = vadd.f32 %v5248, %v5272
        %s5275 = sld [smem:[#allocation17 + $0x41]]
        %v5276 = vstv %s5275
        %v5277 = vmul.f32 %v5267, %v5276
        %v5278 = vmul.f32 %v5268, %v5276
        %v5279 = vadd.f32 %v5253, %v5277
        %v5280 = vadd.f32 %v5254, %v5278
        %s5281 = sld [smem:[#allocation17 + $0x42]]
        %v5282 = vstv %s5281
        %v5283 = vmul.f32 %v5267, %v5282
        %v5284 = vmul.f32 %v5268, %v5282
        %v5285 = vadd.f32 %v5259, %v5283
        %v5286 = vadd.f32 %v5260, %v5284
        %s5287 = sld [smem:[#allocation17 + $0x43]]
        %v5288 = vstv %s5287
        %v5289 = vmul.f32 %v5267, %v5288
        %v5290 = vmul.f32 %v5268, %v5288
        %v5291 = vadd.f32 %v5265, %v5289
        %v5292 = vadd.f32 %v5266, %v5290
        %v5293 = vld [vmem:[%s1249 + $0x4] sm:$0xff]
        %v5294 = vld [vmem:[%s1249 + $0xc] sm:$0xff]
        %s5295 = sld [smem:[#allocation17 + $0x44]]
        %v5296 = vstv %s5295
        %v5297 = vmul.f32 %v5293, %v5296
        %v5298 = vmul.f32 %v5294, %v5296
        %v5299 = vadd.f32 %v5273, %v5297
        %v5300 = vadd.f32 %v5274, %v5298
        %s5301 = sld [smem:[#allocation17 + $0x45]]
        %v5302 = vstv %s5301
        %v5303 = vmul.f32 %v5293, %v5302
        %v5304 = vmul.f32 %v5294, %v5302
        %v5305 = vadd.f32 %v5279, %v5303
        %v5306 = vadd.f32 %v5280, %v5304
        %s5307 = sld [smem:[#allocation17 + $0x46]]
        %v5308 = vstv %s5307
        %v5309 = vmul.f32 %v5293, %v5308
        %v5310 = vmul.f32 %v5294, %v5308
        %v5311 = vadd.f32 %v5285, %v5309
        %v5312 = vadd.f32 %v5286, %v5310
        %s5313 = sld [smem:[#allocation17 + $0x47]]
        %v5314 = vstv %s5313
        %v5315 = vmul.f32 %v5293, %v5314
        %v5316 = vmul.f32 %v5294, %v5314
        %v5317 = vadd.f32 %v5291, %v5315
        %v5318 = vadd.f32 %v5292, %v5316
        %v5319 = vld [vmem:[%s1260 + $0x4] sm:$0xff]
        %v5320 = vld [vmem:[%s1260 + $0xc] sm:$0xff]
        %s5321 = sld [smem:[#allocation17 + $0x48]]
        %v5322 = vstv %s5321
        %v5323 = vmul.f32 %v5319, %v5322
        %v5324 = vmul.f32 %v5320, %v5322
        %v5325 = vadd.f32 %v5299, %v5323
        %v5326 = vadd.f32 %v5300, %v5324
        %s5327 = sld [smem:[#allocation17 + $0x49]]
        %v5328 = vstv %s5327
        %v5329 = vmul.f32 %v5319, %v5328
        %v5330 = vmul.f32 %v5320, %v5328
        %v5331 = vadd.f32 %v5305, %v5329
        %v5332 = vadd.f32 %v5306, %v5330
        %s5333 = sld [smem:[#allocation17 + $0x4a]]
        %v5334 = vstv %s5333
        %v5335 = vmul.f32 %v5319, %v5334
        %v5336 = vmul.f32 %v5320, %v5334
        %v5337 = vadd.f32 %v5311, %v5335
        %v5338 = vadd.f32 %v5312, %v5336
        %s5339 = sld [smem:[#allocation17 + $0x4b]]
        %v5340 = vstv %s5339
        %v5341 = vmul.f32 %v5319, %v5340
        %v5342 = vmul.f32 %v5320, %v5340
        %v5343 = vadd.f32 %v5317, %v5341
        %v5344 = vadd.f32 %v5318, %v5342
        %v5345 = vld [vmem:[%s1271 + $0x4] sm:$0xff]
        %v5346 = vld [vmem:[%s1271 + $0xc] sm:$0xff]
        %s5347 = sld [smem:[#allocation17 + $0x4c]]
        %v5348 = vstv %s5347
        %v5349 = vmul.f32 %v5345, %v5348
        %v5350 = vmul.f32 %v5346, %v5348
        %v5351 = vadd.f32 %v5325, %v5349
        %v5352 = vadd.f32 %v5326, %v5350
        %s5353 = sld [smem:[#allocation17 + $0x4d]]
        %v5354 = vstv %s5353
        %v5355 = vmul.f32 %v5345, %v5354
        %v5356 = vmul.f32 %v5346, %v5354
        %v5357 = vadd.f32 %v5331, %v5355
        %v5358 = vadd.f32 %v5332, %v5356
        %s5359 = sld [smem:[#allocation17 + $0x4e]]
        %v5360 = vstv %s5359
        %v5361 = vmul.f32 %v5345, %v5360
        %v5362 = vmul.f32 %v5346, %v5360
        %v5363 = vadd.f32 %v5337, %v5361
        %v5364 = vadd.f32 %v5338, %v5362
        %s5365 = sld [smem:[#allocation17 + $0x4f]]
        %v5366 = vstv %s5365
        %v5367 = vmul.f32 %v5345, %v5366
        %v5368 = vmul.f32 %v5346, %v5366
        %v5369 = vadd.f32 %v5343, %v5367
        %v5370 = vadd.f32 %v5344, %v5368
        %v5371 = vld [vmem:[#allocation3 + $0x5] sm:$0xff]
        %v5372 = vld [vmem:[#allocation3 + $0xd] sm:$0xff]
        %s5373 = sld [smem:[#allocation17 + $0x50]]
        %v5374 = vstv %s5373
        %v5375 = vmul.f32 %v5371, %v5374
        %v5376 = vmul.f32 %v5372, %v5374
        %v5377 = vadd.f32 %v5351, %v5375
        %v5378 = vadd.f32 %v5352, %v5376
        %s5379 = sld [smem:[#allocation17 + $0x51]]
        %v5380 = vstv %s5379
        %v5381 = vmul.f32 %v5371, %v5380
        %v5382 = vmul.f32 %v5372, %v5380
        %v5383 = vadd.f32 %v5357, %v5381
        %v5384 = vadd.f32 %v5358, %v5382
        %s5385 = sld [smem:[#allocation17 + $0x52]]
        %v5386 = vstv %s5385
        %v5387 = vmul.f32 %v5371, %v5386
        %v5388 = vmul.f32 %v5372, %v5386
        %v5389 = vadd.f32 %v5363, %v5387
        %v5390 = vadd.f32 %v5364, %v5388
        %s5391 = sld [smem:[#allocation17 + $0x53]]
        %v5392 = vstv %s5391
        %v5393 = vmul.f32 %v5371, %v5392
        %v5394 = vmul.f32 %v5372, %v5392
        %v5395 = vadd.f32 %v5369, %v5393
        %v5396 = vadd.f32 %v5370, %v5394
        %v5397 = vld [vmem:[%s1249 + $0x5] sm:$0xff]
        %v5398 = vld [vmem:[%s1249 + $0xd] sm:$0xff]
        %s5399 = sld [smem:[#allocation17 + $0x54]]
        %v5400 = vstv %s5399
        %v5401 = vmul.f32 %v5397, %v5400
        %v5402 = vmul.f32 %v5398, %v5400
        %v5403 = vadd.f32 %v5377, %v5401
        %v5404 = vadd.f32 %v5378, %v5402
        %s5405 = sld [smem:[#allocation17 + $0x55]]
        %v5406 = vstv %s5405
        %v5407 = vmul.f32 %v5397, %v5406
        %v5408 = vmul.f32 %v5398, %v5406
        %v5409 = vadd.f32 %v5383, %v5407
        %v5410 = vadd.f32 %v5384, %v5408
        %s5411 = sld [smem:[#allocation17 + $0x56]]
        %v5412 = vstv %s5411
        %v5413 = vmul.f32 %v5397, %v5412
        %v5414 = vmul.f32 %v5398, %v5412
        %v5415 = vadd.f32 %v5389, %v5413
        %v5416 = vadd.f32 %v5390, %v5414
        %s5417 = sld [smem:[#allocation17 + $0x57]]
        %v5418 = vstv %s5417
        %v5419 = vmul.f32 %v5397, %v5418
        %v5420 = vmul.f32 %v5398, %v5418
        %v5421 = vadd.f32 %v5395, %v5419
        %v5422 = vadd.f32 %v5396, %v5420
        %v5423 = vld [vmem:[%s1260 + $0x5] sm:$0xff]
        %v5424 = vld [vmem:[%s1260 + $0xd] sm:$0xff]
        %s5425 = sld [smem:[#allocation17 + $0x58]]
        %v5426 = vstv %s5425
        %v5427 = vmul.f32 %v5423, %v5426
        %v5428 = vmul.f32 %v5424, %v5426
        %v5429 = vadd.f32 %v5403, %v5427
        %v5430 = vadd.f32 %v5404, %v5428
        %s5431 = sld [smem:[#allocation17 + $0x59]]
        %v5432 = vstv %s5431
        %v5433 = vmul.f32 %v5423, %v5432
        %v5434 = vmul.f32 %v5424, %v5432
        %v5435 = vadd.f32 %v5409, %v5433
        %v5436 = vadd.f32 %v5410, %v5434
        %s5437 = sld [smem:[#allocation17 + $0x5a]]
        %v5438 = vstv %s5437
        %v5439 = vmul.f32 %v5423, %v5438
        %v5440 = vmul.f32 %v5424, %v5438
        %v5441 = vadd.f32 %v5415, %v5439
        %v5442 = vadd.f32 %v5416, %v5440
        %s5443 = sld [smem:[#allocation17 + $0x5b]]
        %v5444 = vstv %s5443
        %v5445 = vmul.f32 %v5423, %v5444
        %v5446 = vmul.f32 %v5424, %v5444
        %v5447 = vadd.f32 %v5421, %v5445
        %v5448 = vadd.f32 %v5422, %v5446
        %v5449 = vld [vmem:[%s1271 + $0x5] sm:$0xff]
        %v5450 = vld [vmem:[%s1271 + $0xd] sm:$0xff]
        %s5451 = sld [smem:[#allocation17 + $0x5c]]
        %v5452 = vstv %s5451
        %v5453 = vmul.f32 %v5449, %v5452
        %v5454 = vmul.f32 %v5450, %v5452
        %v5455 = vadd.f32 %v5429, %v5453
        %v5456 = vadd.f32 %v5430, %v5454
        %s5457 = sld [smem:[#allocation17 + $0x5d]]
        %v5458 = vstv %s5457
        %v5459 = vmul.f32 %v5449, %v5458
        %v5460 = vmul.f32 %v5450, %v5458
        %v5461 = vadd.f32 %v5435, %v5459
        %v5462 = vadd.f32 %v5436, %v5460
        %s5463 = sld [smem:[#allocation17 + $0x5e]]
        %v5464 = vstv %s5463
        %v5465 = vmul.f32 %v5449, %v5464
        %v5466 = vmul.f32 %v5450, %v5464
        %v5467 = vadd.f32 %v5441, %v5465
        %v5468 = vadd.f32 %v5442, %v5466
        %s5469 = sld [smem:[#allocation17 + $0x5f]]
        %v5470 = vstv %s5469
        %v5471 = vmul.f32 %v5449, %v5470
        %v5472 = vmul.f32 %v5450, %v5470
        %v5473 = vadd.f32 %v5447, %v5471
        %v5474 = vadd.f32 %v5448, %v5472
        %v5475 = vld [vmem:[#allocation3 + $0x6] sm:$0xff]
        %v5476 = vld [vmem:[#allocation3 + $0xe] sm:$0xff]
        %s5477 = sld [smem:[#allocation17 + $0x60]]
        %v5478 = vstv %s5477
        %v5479 = vmul.f32 %v5475, %v5478
        %v5480 = vmul.f32 %v5476, %v5478
        %v5481 = vadd.f32 %v5455, %v5479
        %v5482 = vadd.f32 %v5456, %v5480
        %s5483 = sld [smem:[#allocation17 + $0x61]]
        %v5484 = vstv %s5483
        %v5485 = vmul.f32 %v5475, %v5484
        %v5486 = vmul.f32 %v5476, %v5484
        %v5487 = vadd.f32 %v5461, %v5485
        %v5488 = vadd.f32 %v5462, %v5486
        %s5489 = sld [smem:[#allocation17 + $0x62]]
        %v5490 = vstv %s5489
        %v5491 = vmul.f32 %v5475, %v5490
        %v5492 = vmul.f32 %v5476, %v5490
        %v5493 = vadd.f32 %v5467, %v5491
        %v5494 = vadd.f32 %v5468, %v5492
        %s5495 = sld [smem:[#allocation17 + $0x63]]
        %v5496 = vstv %s5495
        %v5497 = vmul.f32 %v5475, %v5496
        %v5498 = vmul.f32 %v5476, %v5496
        %v5499 = vadd.f32 %v5473, %v5497
        %v5500 = vadd.f32 %v5474, %v5498
        %v5501 = vld [vmem:[%s1249 + $0x6] sm:$0xff]
        %v5502 = vld [vmem:[%s1249 + $0xe] sm:$0xff]
        %s5503 = sld [smem:[#allocation17 + $0x64]]
        %v5504 = vstv %s5503
        %v5505 = vmul.f32 %v5501, %v5504
        %v5506 = vmul.f32 %v5502, %v5504
        %v5507 = vadd.f32 %v5481, %v5505
        %v5508 = vadd.f32 %v5482, %v5506
        %s5509 = sld [smem:[#allocation17 + $0x65]]
        %v5510 = vstv %s5509
        %v5511 = vmul.f32 %v5501, %v5510
        %v5512 = vmul.f32 %v5502, %v5510
        %v5513 = vadd.f32 %v5487, %v5511
        %v5514 = vadd.f32 %v5488, %v5512
        %s5515 = sld [smem:[#allocation17 + $0x66]]
        %v5516 = vstv %s5515
        %v5517 = vmul.f32 %v5501, %v5516
        %v5518 = vmul.f32 %v5502, %v5516
        %v5519 = vadd.f32 %v5493, %v5517
        %v5520 = vadd.f32 %v5494, %v5518
        %s5521 = sld [smem:[#allocation17 + $0x67]]
        %v5522 = vstv %s5521
        %v5523 = vmul.f32 %v5501, %v5522
        %v5524 = vmul.f32 %v5502, %v5522
        %v5525 = vadd.f32 %v5499, %v5523
        %v5526 = vadd.f32 %v5500, %v5524
        %v5527 = vld [vmem:[%s1260 + $0x6] sm:$0xff]
        %v5528 = vld [vmem:[%s1260 + $0xe] sm:$0xff]
        %s5529 = sld [smem:[#allocation17 + $0x68]]
        %v5530 = vstv %s5529
        %v5531 = vmul.f32 %v5527, %v5530
        %v5532 = vmul.f32 %v5528, %v5530
        %v5533 = vadd.f32 %v5507, %v5531
        %v5534 = vadd.f32 %v5508, %v5532
        %s5535 = sld [smem:[#allocation17 + $0x69]]
        %v5536 = vstv %s5535
        %v5537 = vmul.f32 %v5527, %v5536
        %v5538 = vmul.f32 %v5528, %v5536
        %v5539 = vadd.f32 %v5513, %v5537
        %v5540 = vadd.f32 %v5514, %v5538
        %s5541 = sld [smem:[#allocation17 + $0x6a]]
        %v5542 = vstv %s5541
        %v5543 = vmul.f32 %v5527, %v5542
        %v5544 = vmul.f32 %v5528, %v5542
        %v5545 = vadd.f32 %v5519, %v5543
        %v5546 = vadd.f32 %v5520, %v5544
        %s5547 = sld [smem:[#allocation17 + $0x6b]]
        %v5548 = vstv %s5547
        %v5549 = vmul.f32 %v5527, %v5548
        %v5550 = vmul.f32 %v5528, %v5548
        %v5551 = vadd.f32 %v5525, %v5549
        %v5552 = vadd.f32 %v5526, %v5550
        %v5553 = vld [vmem:[%s1271 + $0x6] sm:$0xff]
        %v5554 = vld [vmem:[%s1271 + $0xe] sm:$0xff]
        %s5555 = sld [smem:[#allocation17 + $0x6c]]
        %v5556 = vstv %s5555
        %v5557 = vmul.f32 %v5553, %v5556
        %v5558 = vmul.f32 %v5554, %v5556
        %v5559 = vadd.f32 %v5533, %v5557
        %v5560 = vadd.f32 %v5534, %v5558
        %s5561 = sld [smem:[#allocation17 + $0x6d]]
        %v5562 = vstv %s5561
        %v5563 = vmul.f32 %v5553, %v5562
        %v5564 = vmul.f32 %v5554, %v5562
        %v5565 = vadd.f32 %v5539, %v5563
        %v5566 = vadd.f32 %v5540, %v5564
        %s5567 = sld [smem:[#allocation17 + $0x6e]]
        %v5568 = vstv %s5567
        %v5569 = vmul.f32 %v5553, %v5568
        %v5570 = vmul.f32 %v5554, %v5568
        %v5571 = vadd.f32 %v5545, %v5569
        %v5572 = vadd.f32 %v5546, %v5570
        %s5573 = sld [smem:[#allocation17 + $0x6f]]
        %v5574 = vstv %s5573
        %v5575 = vmul.f32 %v5553, %v5574
        %v5576 = vmul.f32 %v5554, %v5574
        %v5577 = vadd.f32 %v5551, %v5575
        %v5578 = vadd.f32 %v5552, %v5576
        %v5579 = vld [vmem:[%s452] sm:$0xff]
        %v5580 = vld [vmem:[%s452 + $0x8] sm:$0xff]
        %v5581 = vadd.f32 %v5579, %v5559
        %v5582 = vadd.f32 %v5580, %v5560
        %5583 = vst.msk [vmem:[%s452] sm:$0xff] %vm2738, %v5581
        %5584 = vst.msk [vmem:[%s452 + $0x8] sm:$0xff] %vm2738, %v5582
        %v5585 = vld [vmem:[%s2741] sm:$0xff]
        %v5586 = vld [vmem:[%s2741 + $0x8] sm:$0xff]
        %v5587 = vadd.f32 %v5585, %v5565
        %v5588 = vadd.f32 %v5586, %v5566
        %5589 = vst.msk [vmem:[%s2741] sm:$0xff] %vm2738, %v5587
        %5590 = vst.msk [vmem:[%s2741 + $0x8] sm:$0xff] %vm2738, %v5588
        %v5591 = vld [vmem:[%s2744] sm:$0xff]
        %v5592 = vld [vmem:[%s2744 + $0x8] sm:$0xff]
        %v5593 = vadd.f32 %v5591, %v5571
        %v5594 = vadd.f32 %v5592, %v5572
        %5595 = vst.msk [vmem:[%s2744] sm:$0xff] %vm2738, %v5593
        %5596 = vst.msk [vmem:[%s2744 + $0x8] sm:$0xff] %vm2738, %v5594
        %v5597 = vld [vmem:[%s2747] sm:$0xff]
        %v5598 = vld [vmem:[%s2747 + $0x8] sm:$0xff]
        %v5599 = vadd.f32 %v5597, %v5577
        %v5600 = vadd.f32 %v5598, %v5578
        %5601 = vst.msk [vmem:[%s2747] sm:$0xff] %vm2738, %v5599
        %5602 = vst.msk [vmem:[%s2747 + $0x8] sm:$0xff] %vm2738, %v5600
        %s5603 = sand.u32 %s233, 1
        %s5604 = scalar_lea.sflag [#allocation6], %s5603
        %s5605 = sand.u32 %s233, 1
        %s5606 = smul.addr %s5605, 64
        %s5607 = scalar_lea.vmem [#allocation20], %s5606
        // Predicated region
        $region93: #{tpu_custom_call.1} parent=55 // pred_check
          %p5608 = pneg %p243
        $region94: #{tpu_custom_call.1} parent=55 // pred_check_branch
          %5610 = sbr.rel (%p5608) target = $region96
        $region95: #{tpu_custom_call.1} parent=55 // pred_region
          %s5612 = ssub.s32 1024, 1024
          %5613 = vsyncadd %s5604, %s5612
          %s5614 = smul.addr %s31, 8
          %s5615 = smul.addr %s5614, 128
          %s5616 = scalar_lea.hbm %s9, %s5615
          %s5617 = sshll.u32 %s5607, 4
          %s5618 = int_to_ptr.vmem [resolvable:$true] %s5617
          %5623 = dma.vmem_to_hbm [thread:$0]  %s5618, 1024, %s5616, %s5604, 128, 128, 8
        $region96: #{tpu_custom_call.1} parent=55 // pred_fallthru
          _
      $region56: #{tpu_custom_call.1} parent=5 // pred_fallthru
        _
      %p5624 = scmp.le.s32.totalorder 2, %s26
      // Predicated region
      $region97: #{tpu_custom_call.1} parent=5 // pred_check
        %p5625 = pneg %p5624
      $region98: #{tpu_custom_call.1} parent=5 // pred_check_branch
        %5627 = sbr.rel (%p5625) target = $region100
      $region99: #{tpu_custom_call.1} parent=5 // pred_region
        %s5628 = ssub.s32 %s26, 2
        // Predicated region
        $region101: #{tpu_custom_call.1} parent=99 // pred_check
          %p5629 = pneg %p249
        $region102: #{tpu_custom_call.1} parent=99 // pred_check_branch
          %5631 = sbr.rel (%p5629) target = $region104
        $region103: #{tpu_custom_call.1} parent=99 // pred_region
          %s5632 = sand.u32 %s234, 1
          %s5633 = scalar_lea.sflag [#allocation6], %s5632
          %s5634 = sand.u32 %s234, 1
          %s5635 = smul.addr %s5634, 64
          %s5636 = scalar_lea.vmem [#allocation20], %s5635
          %5637 = dma.done %s5633, 1024
        $region104: #{tpu_custom_call.1} parent=99 // pred_fallthru
          _
      $region100: #{tpu_custom_call.1} parent=5 // pred_fallthru
        _
    $region6: #{tpu_custom_call.1} parent=1 // loop_footer
      %s30 = sadd.s32 1, %s26
    $region7: #{tpu_custom_call.1} parent=1 // loop_footer_branch
      %25 = sbr.rel target = $region3
    $region8: #{tpu_custom_call.1} parent=1 // loop_exit
      _
    %5638 = vsyncpa [#allocation5], 1
    %s5639 = scalar_lea.sflag [#allocation5], 1
    %5640 = vsyncpa %s5639, 1
    %5641 = vsyncpa [#allocation6], 1
    %s5642 = scalar_lea.sflag [#allocation6], 1
    %5643 = vsyncpa %s5642, 1
    %5644 = vsyncpa [#allocation7], 1
    %s5645 = scalar_lea.sflag [#allocation7], 1
    %5646 = vsyncpa %s5645, 1
    %5647 = vsyncpa [#allocation10], 1
    %5648 = vsyncpa [#allocation13], 1
    %5649 = vsyncpa [#allocation16], 1
    %5650 = vsyncpa [#allocation19], 1

</llo_original>
